<compile_context>
chip_gen: v7x
topology: tpu7x:2x2x1
jax: 0.10.0
libtpu: 0.0.40
codegen_flags: <defaults>
</compile_context>

<pallas_src>
import functools
import math

import numpy as np
import jax
import jax.numpy as jnp
from jax.experimental import pallas as pl
from jax.experimental.pallas import tpu as pltpu


# ------------------------------- fused kernel -------------------------------

def _cdg_kernel(
    x_ref,                                   # (1, C, H*W)
    pool_ref,                                # (H*W, H+W)  row/col-mean matrix
    hgt1_w_ref, hgt1_s_ref, hgt1_b_ref,      # (3, CO, C), (CO,1), (CO,1)
    hgt2_w_ref, hgt2_s_ref, hgt2_b_ref,
    pred1_w_ref, pred1_b_ref,                # (3, NC, CO), (NC,1)
    pred2_w_ref, pred2_b_ref,
    up1_w_ref, up1_b_ref,                    # (K, C, CO), (C,1)
    up2_w_ref, up2_b_ref,
    bh_ref, bw_ref,                          # (H, H*W), (W, H*W) broadcast mats
    gamma_ref, beta_ref,                     # (1,) scalars in SMEM
    cmb_w_ref, cmb_s_ref, cmb_b_ref,         # (9, C, 3C), (C,1), (C,1)
    mask_ref,                                # (9, 1, H*W) 3x3-tap boundary masks
    out_ref, hp_ref, wp_ref,                 # (1, C, H*W), (1, NC, H), (1, NC, W)
    padh_ref, padw_ref, padh2_ref, padw2_ref, cat_ref,   # VMEM scratch
    *, C, H, W, K, POFF, CPAD,
):
    HW = H * W
    x = x_ref[0].astype(jnp.float32)                           # (C, HW)

    # ---- adaptive row / col pooling as matmuls (lane-dense, MXU) -----------
    fh0 = jnp.dot(x, pool_ref[:, 0:H], preferred_element_type=jnp.float32)      # (C, H)
    fw0 = jnp.dot(x, pool_ref[:, H:H + W], preferred_element_type=jnp.float32)  # (C, W)

    padh_ref[...] = jnp.zeros(padh_ref.shape, jnp.float32)
    padw_ref[...] = jnp.zeros(padw_ref.shape, jnp.float32)
    padh_ref[:, POFF:POFF + H] = fh0
    padw_ref[:, POFF:POFF + W] = fw0

    def conv1d(src_ref, w_ref, scale, bias, k, length, act):
        """Conv1d(pad=k//2) over a zero-padded VMEM scratch + scale/bias + act."""
        pad = k // 2
        cout = w_ref.shape[1]
        acc = jnp.zeros((cout, length), jnp.float32)
        for kk in range(k):                                    # static unroll
            lo = POFF - pad + kk
            acc = acc + jnp.dot(w_ref[kk], src_ref[:, lo:lo + length],
                                preferred_element_type=jnp.float32)
        y = acc * scale + bias
        if act == "relu":
            return jnp.maximum(y, 0.0)
        return jax.nn.sigmoid(y)

    # ---- conv_hgt1 / conv_hgt2: Conv1d(k=3, no bias) + folded BN + ReLU ----
    fh1 = conv1d(padh_ref, hgt1_w_ref, hgt1_s_ref[...], hgt1_b_ref[...], 3, H, "relu")
    fw1 = conv1d(padw_ref, hgt2_w_ref, hgt2_s_ref[...], hgt2_b_ref[...], 3, W, "relu")

    padh2_ref[...] = jnp.zeros(padh2_ref.shape, jnp.float32)
    padw2_ref[...] = jnp.zeros(padw2_ref.shape, jnp.float32)
    padh2_ref[:, POFF:POFF + H] = fh1
    padw2_ref[:, POFF:POFF + W] = fw1

    # ---- conv_hwPred1/2: Conv1d(k=3, bias) + Sigmoid -> outputs ------------
    hp = conv1d(padh2_ref, pred1_w_ref, 1.0, pred1_b_ref[...], 3, H, "sigmoid")
    wp = conv1d(padw2_ref, pred2_w_ref, 1.0, pred2_b_ref[...], 3, W, "sigmoid")
    hp_ref[0] = hp.astype(hp_ref.dtype)
    wp_ref[0] = wp.astype(wp_ref.dtype)

    # ---- conv_upDim1/2: Conv1d(k=K, bias) + Sigmoid ------------------------
    fhu = conv1d(padh2_ref, up1_w_ref, 1.0, up1_b_ref[...], K, H, "sigmoid")    # (C, H)
    fwu = conv1d(padw2_ref, up2_w_ref, 1.0, up2_b_ref[...], K, W, "sigmoid")    # (C, W)

    # ---- bilinear(align_corners) upsample == broadcast, done as matmul -----
    hw_h = jnp.dot(fhu, bh_ref[...], preferred_element_type=jnp.float32)        # (C, HW)
    hw_w = jnp.dot(fwu, bw_ref[...], preferred_element_type=jnp.float32)        # (C, HW)
    fea_hw = beta_ref[0] * hw_w + gamma_ref[0] * hw_h
    fea_aug = x * fea_hw

    # ---- cmbFea: 3x3 Conv2d over cat([fea, aug, hw]) + folded BN + ReLU ----
    # cat lives only in a zero-padded VMEM scratch (no HBM concat).
    cat_ref[...] = jnp.zeros(cat_ref.shape, jnp.float32)
    cat_ref[0:C, CPAD:CPAD + HW] = x
    cat_ref[C:2 * C, CPAD:CPAD + HW] = fea_aug
    cat_ref[2 * C:3 * C, CPAD:CPAD + HW] = fea_hw

    acc = jnp.zeros((C, HW), jnp.float32)
    t = 0
    for dh in (-1, 0, 1):                                      # 9 taps, static
        for dw in (-1, 0, 1):
            lo = CPAD + dh * W + dw
            patch = cat_ref[:, lo:lo + HW] * mask_ref[t]       # (3C, HW)
            acc = acc + jnp.dot(cmb_w_ref[t], patch,
                                preferred_element_type=jnp.float32)
            t += 1
    y = acc * cmb_s_ref[...] + cmb_b_ref[...]
    out_ref[0] = jnp.maximum(y, 0.0).astype(out_ref.dtype)


# ------------------------------ constants ------------------------------------

def _make_constants(h, w):
    hw = h * w
    pool = np.zeros((hw, h + w), np.float32)    # [:, :h] row-mean, [:, h:] col-mean
    bh = np.zeros((h, hw), np.float32)          # broadcast along width
    bw = np.zeros((w, hw), np.float32)          # broadcast along height
    for hh in range(h):
        for ww in range(w):
            p = hh * w + ww
            pool[p, hh] = 1.0 / w
            pool[p, h + ww] = 1.0 / h
            bh[hh, p] = 1.0
            bw[ww, p] = 1.0
    masks = np.zeros((9, 1, hw), np.float32)    # 3x3 tap validity masks
    t = 0
    for dh in (-1, 0, 1):
        for dw in (-1, 0, 1):
            for hh in range(h):
                for ww in range(w):
                    if 0 <= hh + dh < h and 0 <= ww + dw < w:
                        masks[t, 0, hh * w + ww] = 1.0
            t += 1
    return (jnp.asarray(pool), jnp.asarray(bh), jnp.asarray(bw), jnp.asarray(masks))


# ------------------------ parameters (pre-laid-out) ---------------------------

def init_params(key, feat_in, feat_out, num_classes, ksize, size):
    h, w = size
    keys = iter(jax.random.split(key, 32))

    def conv_w(shape):
        fan_in = int(np.prod(shape[1:]))
        return jax.random.normal(next(keys), shape, jnp.float32) / math.sqrt(fan_in)

    def bn(cch):  # folded inference-mode BatchNorm -> (scale, bias) as (C,1)
        wgt = 1.0 + 0.1 * jax.random.normal(next(keys), (cch,), jnp.float32)
        b = 0.1 * jax.random.normal(next(keys), (cch,), jnp.float32)
        mean = 0.1 * jax.random.normal(next(keys), (cch,), jnp.float32)
        var = 1.0 + 0.5 * jax.random.uniform(next(keys), (cch,), jnp.float32)
        scale = wgt / jnp.sqrt(var + 1e-5)
        return scale.reshape(cch, 1), (b - mean * scale).reshape(cch, 1)

    def bias(cch):
        return (0.1 * jax.random.normal(next(keys), (cch,), jnp.float32)).reshape(cch, 1)

    p = {"gamma": jnp.ones((1,), jnp.float32), "beta": jnp.ones((1,), jnp.float32)}

    # Conv1d weights stored pre-transposed to (K, Cout, Cin).
    p["hgt1_w"] = jnp.transpose(conv_w((feat_out, feat_in, 3)), (2, 0, 1))
    p["hgt1_s"], p["hgt1_b"] = bn(feat_out)
    p["hgt2_w"] = jnp.transpose(conv_w((feat_out, feat_in, 3)), (2, 0, 1))
    p["hgt2_s"], p["hgt2_b"] = bn(feat_out)
    p["pred1_w"] = jnp.transpose(conv_w((num_classes, feat_out, 3)), (2, 0, 1))
    p["pred1_b"] = bias(num_classes)
    p["pred2_w"] = jnp.transpose(conv_w((num_classes, feat_out, 3)), (2, 0, 1))
    p["pred2_b"] = bias(num_classes)
    p["up1_w"] = jnp.transpose(conv_w((feat_in, feat_out, ksize)), (2, 0, 1))
    p["up1_b"] = bias(feat_in)
    p["up2_w"] = jnp.transpose(conv_w((feat_in, feat_out, ksize)), (2, 0, 1))
    p["up2_b"] = bias(feat_in)

    # cmbFea Conv2d(3C -> C, 3x3, no bias): stored as (9 taps, Cout, 3C).
    w2 = conv_w((feat_in, feat_in * 3, 3, 3))
    p["cmb_w"] = jnp.transpose(w2, (2, 3, 0, 1)).reshape(9, feat_in, feat_in * 3)
    p["cmb_s"], p["cmb_b"] = bn(feat_in)

    p["poolmat"], p["Bh"], p["Bw"], p["masks"] = _make_constants(h, w)
    return p


# ------------------------------ forward pass ---------------------------------

def cdg_attention_forward(params, fea):
    n, c, h, w = fea.shape
    hw = h * w
    co = params["hgt1_w"].shape[1]
    nc = params["pred1_w"].shape[1]
    ks = params["up1_w"].shape[0]
    POFF, CPAD = 8, 128
    assert ks % 2 == 1 and ks // 2 <= POFF
    assert params["Bh"].shape == (h, hw)       # constants built for this size

    x_flat = fea.reshape(n, c, hw)             # free, contiguous reshape

    kern = functools.partial(_cdg_kernel, C=c, H=h, W=w, K=ks, POFF=POFF, CPAD=CPAD)

    def bcast(shape):
        return pl.BlockSpec(shape, lambda i: (0,) * len(shape))

    def smem():
        return pl.BlockSpec(memory_space=pltpu.MemorySpace.SMEM)

    out_flat, fea_hp, fea_wp = pl.pallas_call(
        kern,
        out_shape=(jax.ShapeDtypeStruct((n, c, hw), fea.dtype),
                   jax.ShapeDtypeStruct((n, nc, h), fea.dtype),
                   jax.ShapeDtypeStruct((n, nc, w), fea.dtype)),
        grid=(n,),
        in_specs=[
            pl.BlockSpec((1, c, hw), lambda i: (i, 0, 0)),
            bcast((hw, h + w)),
            bcast((3, co, c)), bcast((co, 1)), bcast((co, 1)),
            bcast((3, co, c)), bcast((co, 1)), bcast((co, 1)),
            bcast((3, nc, co)), bcast((nc, 1)),
            bcast((3, nc, co)), bcast((nc, 1)),
            bcast((ks, c, co)), bcast((c, 1)),
            bcast((ks, c, co)), bcast((c, 1)),
            bcast((h, hw)), bcast((w, hw)),
            smem(), smem(),
            bcast((9, c, 3 * c)), bcast((c, 1)), bcast((c, 1)),
            bcast((9, 1, hw)),
        ],
        out_specs=(pl.BlockSpec((1, c, hw), lambda i: (i, 0, 0)),
                   pl.BlockSpec((1, nc, h), lambda i: (i, 0, 0)),
                   pl.BlockSpec((1, nc, w), lambda i: (i, 0, 0))),
        scratch_shapes=[
            pltpu.VMEM((c, h + 2 * POFF), jnp.float32),
            pltpu.VMEM((c, w + 2 * POFF), jnp.float32),
            pltpu.VMEM((co, h + 2 * POFF), jnp.float32),
            pltpu.VMEM((co, w + 2 * POFF), jnp.float32),
            pltpu.VMEM((3 * c, hw + 2 * CPAD), jnp.float32),
        ],
        compiler_params=pltpu.CompilerParams(dimension_semantics=("parallel",)),
    )(x_flat, params["poolmat"],
      params["hgt1_w"], params["hgt1_s"], params["hgt1_b"],
      params["hgt2_w"], params["hgt2_s"], params["hgt2_b"],
      params["pred1_w"], params["pred1_b"],
      params["pred2_w"], params["pred2_b"],
      params["up1_w"], params["up1_b"],
      params["up2_w"], params["up2_b"],
      params["Bh"], params["Bw"],
      params["gamma"], params["beta"],
      params["cmb_w"], params["cmb_s"], params["cmb_b"],
      params["masks"])

    return out_flat.reshape(n, c, h, w), fea_hp, fea_wp


# --------------------------------- main --------------------------------------

if __name__ == "__main__":
    N, C, H, W = 2, 32, 16, 16               # feat_in = 32, H*W = 256 lanes
    FEAT_OUT, NUM_CLASSES, KSIZE = 16, 8, 7

    key = jax.random.PRNGKey(0)
    pkey, xkey = jax.random.split(key)
    params = init_params(pkey, C, FEAT_OUT, NUM_CLASSES, KSIZE, (H, W))
    x = jax.random.normal(xkey, (N, C, H, W), jnp.float32)

    fwd = jax.jit(cdg_attention_forward)
    out, fea_hp, fea_wp = fwd(params, x)
    jax.block_until_ready((out, fea_hp, fea_wp))

    assert out.shape == (N, C, H, W)
    assert fea_hp.shape == (N, NUM_CLASSES, H)
    assert fea_wp.shape == (N, NUM_CLASSES, W)
    assert out.dtype == jnp.float32

    print("KERNEL_OK")
</pallas_src>

<mosaic_0001>
module attributes {stable_mosaic.version = 11 : i64} {
  func.func @_cdg_kernel(%arg0: i32, %arg1: memref<1x32x256xf32, #tpu.memory_space<vmem>>, %arg2: memref<256x32xf32, #tpu.memory_space<vmem>>, %arg3: memref<3x16x32xf32, #tpu.memory_space<vmem>>, %arg4: memref<16x1xf32, #tpu.memory_space<vmem>>, %arg5: memref<16x1xf32, #tpu.memory_space<vmem>>, %arg6: memref<3x16x32xf32, #tpu.memory_space<vmem>>, %arg7: memref<16x1xf32, #tpu.memory_space<vmem>>, %arg8: memref<16x1xf32, #tpu.memory_space<vmem>>, %arg9: memref<3x8x16xf32, #tpu.memory_space<vmem>>, %arg10: memref<8x1xf32, #tpu.memory_space<vmem>>, %arg11: memref<3x8x16xf32, #tpu.memory_space<vmem>>, %arg12: memref<8x1xf32, #tpu.memory_space<vmem>>, %arg13: memref<7x32x16xf32, #tpu.memory_space<vmem>>, %arg14: memref<32x1xf32, #tpu.memory_space<vmem>>, %arg15: memref<7x32x16xf32, #tpu.memory_space<vmem>>, %arg16: memref<32x1xf32, #tpu.memory_space<vmem>>, %arg17: memref<16x256xf32, #tpu.memory_space<vmem>>, %arg18: memref<16x256xf32, #tpu.memory_space<vmem>>, %arg19: memref<1xf32, #tpu.memory_space<smem>>, %arg20: memref<1xf32, #tpu.memory_space<smem>>, %arg21: memref<9x32x96xf32, #tpu.memory_space<vmem>>, %arg22: memref<32x1xf32, #tpu.memory_space<vmem>>, %arg23: memref<32x1xf32, #tpu.memory_space<vmem>>, %arg24: memref<9x1x256xf32, #tpu.memory_space<vmem>>, %arg25: memref<1x32x256xf32, #tpu.memory_space<vmem>>, %arg26: memref<1x8x16xf32, #tpu.memory_space<vmem>>, %arg27: memref<1x8x16xf32, #tpu.memory_space<vmem>>, %arg28: memref<32x32xf32, #tpu.memory_space<vmem>>, %arg29: memref<32x32xf32, #tpu.memory_space<vmem>>, %arg30: memref<16x32xf32, #tpu.memory_space<vmem>>, %arg31: memref<16x32xf32, #tpu.memory_space<vmem>>, %arg32: memref<96x512xf32, #tpu.memory_space<vmem>>) attributes {dimension_semantics = [#tpu.dimension_semantics<parallel>], iteration_bounds = array<i64: 2>, scalar_prefetch = 0 : i64, scratch_operands = 5 : i64, tpu.core_type = #tpu.core_type<tc>, window_params = [{transform_indices = @transform_0, window_bounds = array<i64: 1, 32, 256>}, {pipeline_mode = #tpu.pipeline_mode<synchronous>, transform_indices = @transform_1, window_bounds = array<i64: 256, 32>}, {pipeline_mode = #tpu.pipeline_mode<synchronous>, transform_indices = @transform_2, window_bounds = array<i64: 3, 16, 32>}, {pipeline_mode = #tpu.pipeline_mode<synchronous>, transform_indices = @transform_3, window_bounds = array<i64: 16, 1>}, {pipeline_mode = #tpu.pipeline_mode<synchronous>, transform_indices = @transform_4, window_bounds = array<i64: 16, 1>}, {pipeline_mode = #tpu.pipeline_mode<synchronous>, transform_indices = @transform_5, window_bounds = array<i64: 3, 16, 32>}, {pipeline_mode = #tpu.pipeline_mode<synchronous>, transform_indices = @transform_6, window_bounds = array<i64: 16, 1>}, {pipeline_mode = #tpu.pipeline_mode<synchronous>, transform_indices = @transform_7, window_bounds = array<i64: 16, 1>}, {pipeline_mode = #tpu.pipeline_mode<synchronous>, transform_indices = @transform_8, window_bounds = array<i64: 3, 8, 16>}, {pipeline_mode = #tpu.pipeline_mode<synchronous>, transform_indices = @transform_9, window_bounds = array<i64: 8, 1>}, {pipeline_mode = #tpu.pipeline_mode<synchronous>, transform_indices = @transform_10, window_bounds = array<i64: 3, 8, 16>}, {pipeline_mode = #tpu.pipeline_mode<synchronous>, transform_indices = @transform_11, window_bounds = array<i64: 8, 1>}, {pipeline_mode = #tpu.pipeline_mode<synchronous>, transform_indices = @transform_12, window_bounds = array<i64: 7, 32, 16>}, {pipeline_mode = #tpu.pipeline_mode<synchronous>, transform_indices = @transform_13, window_bounds = array<i64: 32, 1>}, {pipeline_mode = #tpu.pipeline_mode<synchronous>, transform_indices = @transform_14, window_bounds = array<i64: 7, 32, 16>}, {pipeline_mode = #tpu.pipeline_mode<synchronous>, transform_indices = @transform_15, window_bounds = array<i64: 32, 1>}, {pipeline_mode = #tpu.pipeline_mode<synchronous>, transform_indices = @transform_16, window_bounds = array<i64: 16, 256>}, {pipeline_mode = #tpu.pipeline_mode<synchronous>, transform_indices = @transform_17, window_bounds = array<i64: 16, 256>}, {transform_indices = @transform_18, window_bounds = array<i64: 1>}, {transform_indices = @transform_19, window_bounds = array<i64: 1>}, {pipeline_mode = #tpu.pipeline_mode<synchronous>, transform_indices = @transform_20, window_bounds = array<i64: 9, 32, 96>}, {pipeline_mode = #tpu.pipeline_mode<synchronous>, transform_indices = @transform_21, window_bounds = array<i64: 32, 1>}, {pipeline_mode = #tpu.pipeline_mode<synchronous>, transform_indices = @transform_22, window_bounds = array<i64: 32, 1>}, {pipeline_mode = #tpu.pipeline_mode<synchronous>, transform_indices = @transform_23, window_bounds = array<i64: 9, 1, 256>}, {transform_indices = @transform_24, window_bounds = array<i64: 1, 32, 256>}, {transform_indices = @transform_25, window_bounds = array<i64: 1, 8, 16>}, {transform_indices = @transform_26, window_bounds = array<i64: 1, 8, 16>}]} {
    %c0 = arith.constant 0 : index
    %c0_0 = arith.constant 0 : index
    %c0_1 = arith.constant 0 : index
    %0 = vector.load %arg1[%c0, %c0_0, %c0_1] : memref<1x32x256xf32, #tpu.memory_space<vmem>>, vector<1x32x256xf32>
    %1 = vector.shape_cast %0 : vector<1x32x256xf32> to vector<32x256xf32>
    %c0_2 = arith.constant 0 : index
    %c0_3 = arith.constant 0 : index
    %2 = vector.load %arg2[%c0_2, %c0_3] : memref<256x32xf32, #tpu.memory_space<vmem>>, vector<256x16xf32>
    %cst = arith.constant dense<0.000000e+00> : vector<32x16xf32>
    %3 = tpu.matmul %1, %2, %cst {dimension_numbers = #tpu.dot_dimension_numbers<[1], [0], [0], [1], [0, 0, 1, 1], [], []>} : vector<32x256xf32>, vector<256x16xf32>, vector<32x16xf32> -> vector<32x16xf32>
    %c0_4 = arith.constant 0 : index
    %c16 = arith.constant 16 : index
    %4 = vector.load %arg2[%c0_4, %c16] : memref<256x32xf32, #tpu.memory_space<vmem>>, vector<256x16xf32>
    %cst_5 = arith.constant dense<0.000000e+00> : vector<32x16xf32>
    %5 = tpu.matmul %1, %4, %cst_5 {dimension_numbers = #tpu.dot_dimension_numbers<[1], [0], [0], [1], [0, 0, 1, 1], [], []>} : vector<32x256xf32>, vector<256x16xf32>, vector<32x16xf32> -> vector<32x16xf32>
    %cst_6 = arith.constant 0.000000e+00 : f32
    %6 = vector.broadcast %cst_6 : f32 to vector<32x32xf32>
    %c0_7 = arith.constant 0 : index
    %c0_8 = arith.constant 0 : index
    %7 = vector.load %arg28[%c0_7, %c0_8] : memref<32x32xf32, #tpu.memory_space<vmem>>, vector<32x32xf32>
    tpu.vector_store %arg28[%c0_7, %c0_8], %6 {strides = array<i32>} : memref<32x32xf32, #tpu.memory_space<vmem>>, vector<32x32xf32>,
    %cst_9 = arith.constant 0.000000e+00 : f32
    %8 = vector.broadcast %cst_9 : f32 to vector<32x32xf32>
    %c0_10 = arith.constant 0 : index
    %c0_11 = arith.constant 0 : index
    %9 = vector.load %arg29[%c0_10, %c0_11] : memref<32x32xf32, #tpu.memory_space<vmem>>, vector<32x32xf32>
    tpu.vector_store %arg29[%c0_10, %c0_11], %8 {strides = array<i32>} : memref<32x32xf32, #tpu.memory_space<vmem>>, vector<32x32xf32>,
    %c0_12 = arith.constant 0 : index
    %c8 = arith.constant 8 : index
    %10 = vector.load %arg28[%c0_12, %c8] : memref<32x32xf32, #tpu.memory_space<vmem>>, vector<32x16xf32>
    tpu.vector_store %arg28[%c0_12, %c8], %3 {strides = array<i32>} : memref<32x32xf32, #tpu.memory_space<vmem>>, vector<32x16xf32>,
    %c0_13 = arith.constant 0 : index
    %c8_14 = arith.constant 8 : index
    %11 = vector.load %arg29[%c0_13, %c8_14] : memref<32x32xf32, #tpu.memory_space<vmem>>, vector<32x16xf32>
    tpu.vector_store %arg29[%c0_13, %c8_14], %5 {strides = array<i32>} : memref<32x32xf32, #tpu.memory_space<vmem>>, vector<32x16xf32>,
    %c0_15 = arith.constant 0 : index
    %c0_16 = arith.constant 0 : index
    %12 = vector.load %arg4[%c0_15, %c0_16] : memref<16x1xf32, #tpu.memory_space<vmem>>, vector<16x1xf32>
    %c0_17 = arith.constant 0 : index
    %c0_18 = arith.constant 0 : index
    %13 = vector.load %arg5[%c0_17, %c0_18] : memref<16x1xf32, #tpu.memory_space<vmem>>, vector<16x1xf32>
    %cst_19 = arith.constant 0.000000e+00 : f32
    %14 = vector.broadcast %cst_19 : f32 to vector<16x16xf32>
    %c0_20 = arith.constant 0 : index
    %c0_21 = arith.constant 0 : index
    %c0_22 = arith.constant 0 : index
    %15 = vector.load %arg3[%c0_20, %c0_21, %c0_22] : memref<3x16x32xf32, #tpu.memory_space<vmem>>, vector<1x16x32xf32>
    %16 = vector.shape_cast %15 : vector<1x16x32xf32> to vector<16x32xf32>
    %c0_23 = arith.constant 0 : index
    %c7 = arith.constant 7 : index
    %17 = vector.load %arg28[%c0_23, %c7] : memref<32x32xf32, #tpu.memory_space<vmem>>, vector<32x16xf32>
    %cst_24 = arith.constant dense<0.000000e+00> : vector<16x16xf32>
    %18 = tpu.matmul %16, %17, %cst_24 {dimension_numbers = #tpu.dot_dimension_numbers<[1], [0], [0], [1], [0, 0, 1, 1], [], []>} : vector<16x32xf32>, vector<32x16xf32>, vector<16x16xf32> -> vector<16x16xf32>
    %19 = arith.addf %14, %18 : vector<16x16xf32>
    %c1 = arith.constant 1 : index
    %c0_25 = arith.constant 0 : index
    %c0_26 = arith.constant 0 : index
    %20 = vector.load %arg3[%c1, %c0_25, %c0_26] : memref<3x16x32xf32, #tpu.memory_space<vmem>>, vector<1x16x32xf32>
    %21 = vector.shape_cast %20 : vector<1x16x32xf32> to vector<16x32xf32>
    %c0_27 = arith.constant 0 : index
    %c8_28 = arith.constant 8 : index
    %22 = vector.load %arg28[%c0_27, %c8_28] : memref<32x32xf32, #tpu.memory_space<vmem>>, vector<32x16xf32>
    %cst_29 = arith.constant dense<0.000000e+00> : vector<16x16xf32>
    %23 = tpu.matmul %21, %22, %cst_29 {dimension_numbers = #tpu.dot_dimension_numbers<[1], [0], [0], [1], [0, 0, 1, 1], [], []>} : vector<16x32xf32>, vector<32x16xf32>, vector<16x16xf32> -> vector<16x16xf32>
    %24 = arith.addf %19, %23 : vector<16x16xf32>
    %c2 = arith.constant 2 : index
    %c0_30 = arith.constant 0 : index
    %c0_31 = arith.constant 0 : index
    %25 = vector.load %arg3[%c2, %c0_30, %c0_31] : memref<3x16x32xf32, #tpu.memory_space<vmem>>, vector<1x16x32xf32>
    %26 = vector.shape_cast %25 : vector<1x16x32xf32> to vector<16x32xf32>
    %c0_32 = arith.constant 0 : index
    %c9 = arith.constant 9 : index
    %27 = vector.load %arg28[%c0_32, %c9] : memref<32x32xf32, #tpu.memory_space<vmem>>, vector<32x16xf32>
    %cst_33 = arith.constant dense<0.000000e+00> : vector<16x16xf32>
    %28 = tpu.matmul %26, %27, %cst_33 {dimension_numbers = #tpu.dot_dimension_numbers<[1], [0], [0], [1], [0, 0, 1, 1], [], []>} : vector<16x32xf32>, vector<32x16xf32>, vector<16x16xf32> -> vector<16x16xf32>
    %29 = arith.addf %24, %28 : vector<16x16xf32>
    %30 = vector.broadcast %12 : vector<16x1xf32> to vector<16x16xf32>
    %31 = arith.mulf %29, %30 : vector<16x16xf32>
    %32 = vector.broadcast %13 : vector<16x1xf32> to vector<16x16xf32>
    %33 = arith.addf %31, %32 : vector<16x16xf32>
    %cst_34 = arith.constant 0.000000e+00 : f32
    %34 = vector.broadcast %cst_34 : f32 to vector<16x16xf32>
    %35 = arith.maximumf %33, %34 : vector<16x16xf32>
    %c0_35 = arith.constant 0 : index
    %c0_36 = arith.constant 0 : index
    %36 = vector.load %arg7[%c0_35, %c0_36] : memref<16x1xf32, #tpu.memory_space<vmem>>, vector<16x1xf32>
    %c0_37 = arith.constant 0 : index
    %c0_38 = arith.constant 0 : index
    %37 = vector.load %arg8[%c0_37, %c0_38] : memref<16x1xf32, #tpu.memory_space<vmem>>, vector<16x1xf32>
    %cst_39 = arith.constant 0.000000e+00 : f32
    %38 = vector.broadcast %cst_39 : f32 to vector<16x16xf32>
    %c0_40 = arith.constant 0 : index
    %c0_41 = arith.constant 0 : index
    %c0_42 = arith.constant 0 : index
    %39 = vector.load %arg6[%c0_40, %c0_41, %c0_42] : memref<3x16x32xf32, #tpu.memory_space<vmem>>, vector<1x16x32xf32>
    %40 = vector.shape_cast %39 : vector<1x16x32xf32> to vector<16x32xf32>
    %c0_43 = arith.constant 0 : index
    %c7_44 = arith.constant 7 : index
    %41 = vector.load %arg29[%c0_43, %c7_44] : memref<32x32xf32, #tpu.memory_space<vmem>>, vector<32x16xf32>
    %cst_45 = arith.constant dense<0.000000e+00> : vector<16x16xf32>
    %42 = tpu.matmul %40, %41, %cst_45 {dimension_numbers = #tpu.dot_dimension_numbers<[1], [0], [0], [1], [0, 0, 1, 1], [], []>} : vector<16x32xf32>, vector<32x16xf32>, vector<16x16xf32> -> vector<16x16xf32>
    %43 = arith.addf %38, %42 : vector<16x16xf32>
    %c1_46 = arith.constant 1 : index
    %c0_47 = arith.constant 0 : index
    %c0_48 = arith.constant 0 : index
    %44 = vector.load %arg6[%c1_46, %c0_47, %c0_48] : memref<3x16x32xf32, #tpu.memory_space<vmem>>, vector<1x16x32xf32>
    %45 = vector.shape_cast %44 : vector<1x16x32xf32> to vector<16x32xf32>
    %c0_49 = arith.constant 0 : index
    %c8_50 = arith.constant 8 : index
    %46 = vector.load %arg29[%c0_49, %c8_50] : memref<32x32xf32, #tpu.memory_space<vmem>>, vector<32x16xf32>
    %cst_51 = arith.constant dense<0.000000e+00> : vector<16x16xf32>
    %47 = tpu.matmul %45, %46, %cst_51 {dimension_numbers = #tpu.dot_dimension_numbers<[1], [0], [0], [1], [0, 0, 1, 1], [], []>} : vector<16x32xf32>, vector<32x16xf32>, vector<16x16xf32> -> vector<16x16xf32>
    %48 = arith.addf %43, %47 : vector<16x16xf32>
    %c2_52 = arith.constant 2 : index
    %c0_53 = arith.constant 0 : index
    %c0_54 = arith.constant 0 : index
    %49 = vector.load %arg6[%c2_52, %c0_53, %c0_54] : memref<3x16x32xf32, #tpu.memory_space<vmem>>, vector<1x16x32xf32>
    %50 = vector.shape_cast %49 : vector<1x16x32xf32> to vector<16x32xf32>
    %c0_55 = arith.constant 0 : index
    %c9_56 = arith.constant 9 : index
    %51 = vector.load %arg29[%c0_55, %c9_56] : memref<32x32xf32, #tpu.memory_space<vmem>>, vector<32x16xf32>
    %cst_57 = arith.constant dense<0.000000e+00> : vector<16x16xf32>
    %52 = tpu.matmul %50, %51, %cst_57 {dimension_numbers = #tpu.dot_dimension_numbers<[1], [0], [0], [1], [0, 0, 1, 1], [], []>} : vector<16x32xf32>, vector<32x16xf32>, vector<16x16xf32> -> vector<16x16xf32>
    %53 = arith.addf %48, %52 : vector<16x16xf32>
    %54 = vector.broadcast %36 : vector<16x1xf32> to vector<16x16xf32>
    %55 = arith.mulf %53, %54 : vector<16x16xf32>
    %56 = vector.broadcast %37 : vector<16x1xf32> to vector<16x16xf32>
    %57 = arith.addf %55, %56 : vector<16x16xf32>
    %cst_58 = arith.constant 0.000000e+00 : f32
    %58 = vector.broadcast %cst_58 : f32 to vector<16x16xf32>
    %59 = arith.maximumf %57, %58 : vector<16x16xf32>
    %cst_59 = arith.constant 0.000000e+00 : f32
    %60 = vector.broadcast %cst_59 : f32 to vector<16x32xf32>
    %c0_60 = arith.constant 0 : index
    %c0_61 = arith.constant 0 : index
    %61 = vector.load %arg30[%c0_60, %c0_61] : memref<16x32xf32, #tpu.memory_space<vmem>>, vector<16x32xf32>
    tpu.vector_store %arg30[%c0_60, %c0_61], %60 {strides = array<i32>} : memref<16x32xf32, #tpu.memory_space<vmem>>, vector<16x32xf32>,
    %cst_62 = arith.constant 0.000000e+00 : f32
    %62 = vector.broadcast %cst_62 : f32 to vector<16x32xf32>
    %c0_63 = arith.constant 0 : index
    %c0_64 = arith.constant 0 : index
    %63 = vector.load %arg31[%c0_63, %c0_64] : memref<16x32xf32, #tpu.memory_space<vmem>>, vector<16x32xf32>
    tpu.vector_store %arg31[%c0_63, %c0_64], %62 {strides = array<i32>} : memref<16x32xf32, #tpu.memory_space<vmem>>, vector<16x32xf32>,
    %c0_65 = arith.constant 0 : index
    %c8_66 = arith.constant 8 : index
    %64 = vector.load %arg30[%c0_65, %c8_66] : memref<16x32xf32, #tpu.memory_space<vmem>>, vector<16x16xf32>
    tpu.vector_store %arg30[%c0_65, %c8_66], %35 {strides = array<i32>} : memref<16x32xf32, #tpu.memory_space<vmem>>, vector<16x16xf32>,
    %c0_67 = arith.constant 0 : index
    %c8_68 = arith.constant 8 : index
    %65 = vector.load %arg31[%c0_67, %c8_68] : memref<16x32xf32, #tpu.memory_space<vmem>>, vector<16x16xf32>
    tpu.vector_store %arg31[%c0_67, %c8_68], %59 {strides = array<i32>} : memref<16x32xf32, #tpu.memory_space<vmem>>, vector<16x16xf32>,
    %c0_69 = arith.constant 0 : index
    %c0_70 = arith.constant 0 : index
    %66 = vector.load %arg10[%c0_69, %c0_70] : memref<8x1xf32, #tpu.memory_space<vmem>>, vector<8x1xf32>
    %cst_71 = arith.constant 0.000000e+00 : f32
    %67 = vector.broadcast %cst_71 : f32 to vector<8x16xf32>
    %c0_72 = arith.constant 0 : index
    %c0_73 = arith.constant 0 : index
    %c0_74 = arith.constant 0 : index
    %68 = vector.load %arg9[%c0_72, %c0_73, %c0_74] : memref<3x8x16xf32, #tpu.memory_space<vmem>>, vector<1x8x16xf32>
    %69 = vector.shape_cast %68 : vector<1x8x16xf32> to vector<8x16xf32>
    %c0_75 = arith.constant 0 : index
    %c7_76 = arith.constant 7 : index
    %70 = vector.load %arg30[%c0_75, %c7_76] : memref<16x32xf32, #tpu.memory_space<vmem>>, vector<16x16xf32>
    %cst_77 = arith.constant dense<0.000000e+00> : vector<8x16xf32>
    %71 = tpu.matmul %69, %70, %cst_77 {dimension_numbers = #tpu.dot_dimension_numbers<[1], [0], [0], [1], [0, 0, 1, 1], [], []>} : vector<8x16xf32>, vector<16x16xf32>, vector<8x16xf32> -> vector<8x16xf32>
    %72 = arith.addf %67, %71 : vector<8x16xf32>
    %c1_78 = arith.constant 1 : index
    %c0_79 = arith.constant 0 : index
    %c0_80 = arith.constant 0 : index
    %73 = vector.load %arg9[%c1_78, %c0_79, %c0_80] : memref<3x8x16xf32, #tpu.memory_space<vmem>>, vector<1x8x16xf32>
    %74 = vector.shape_cast %73 : vector<1x8x16xf32> to vector<8x16xf32>
    %c0_81 = arith.constant 0 : index
    %c8_82 = arith.constant 8 : index
    %75 = vector.load %arg30[%c0_81, %c8_82] : memref<16x32xf32, #tpu.memory_space<vmem>>, vector<16x16xf32>
    %cst_83 = arith.constant dense<0.000000e+00> : vector<8x16xf32>
    %76 = tpu.matmul %74, %75, %cst_83 {dimension_numbers = #tpu.dot_dimension_numbers<[1], [0], [0], [1], [0, 0, 1, 1], [], []>} : vector<8x16xf32>, vector<16x16xf32>, vector<8x16xf32> -> vector<8x16xf32>
    %77 = arith.addf %72, %76 : vector<8x16xf32>
    %c2_84 = arith.constant 2 : index
    %c0_85 = arith.constant 0 : index
    %c0_86 = arith.constant 0 : index
    %78 = vector.load %arg9[%c2_84, %c0_85, %c0_86] : memref<3x8x16xf32, #tpu.memory_space<vmem>>, vector<1x8x16xf32>
    %79 = vector.shape_cast %78 : vector<1x8x16xf32> to vector<8x16xf32>
    %c0_87 = arith.constant 0 : index
    %c9_88 = arith.constant 9 : index
    %80 = vector.load %arg30[%c0_87, %c9_88] : memref<16x32xf32, #tpu.memory_space<vmem>>, vector<16x16xf32>
    %cst_89 = arith.constant dense<0.000000e+00> : vector<8x16xf32>
    %81 = tpu.matmul %79, %80, %cst_89 {dimension_numbers = #tpu.dot_dimension_numbers<[1], [0], [0], [1], [0, 0, 1, 1], [], []>} : vector<8x16xf32>, vector<16x16xf32>, vector<8x16xf32> -> vector<8x16xf32>
    %82 = arith.addf %77, %81 : vector<8x16xf32>
    %cst_90 = arith.constant 1.000000e+00 : f32
    %83 = vector.broadcast %cst_90 : f32 to vector<8x16xf32>
    %84 = arith.mulf %82, %83 : vector<8x16xf32>
    %85 = vector.broadcast %66 : vector<8x1xf32> to vector<8x16xf32>
    %86 = arith.addf %84, %85 : vector<8x16xf32>
    %87 = arith.negf %86 : vector<8x16xf32>
    %88 = math.exp %87 : vector<8x16xf32>
    %cst_91 = arith.constant 1.000000e+00 : f32
    %89 = vector.broadcast %cst_91 : f32 to vector<8x16xf32>
    %90 = arith.addf %89, %88 : vector<8x16xf32>
    %91 = arith.divf %89, %90 : vector<8x16xf32>
    %c0_92 = arith.constant 0 : index
    %c0_93 = arith.constant 0 : index
    %92 = vector.load %arg12[%c0_92, %c0_93] : memref<8x1xf32, #tpu.memory_space<vmem>>, vector<8x1xf32>
    %cst_94 = arith.constant 0.000000e+00 : f32
    %93 = vector.broadcast %cst_94 : f32 to vector<8x16xf32>
    %c0_95 = arith.constant 0 : index
    %c0_96 = arith.constant 0 : index
    %c0_97 = arith.constant 0 : index
    %94 = vector.load %arg11[%c0_95, %c0_96, %c0_97] : memref<3x8x16xf32, #tpu.memory_space<vmem>>, vector<1x8x16xf32>
    %95 = vector.shape_cast %94 : vector<1x8x16xf32> to vector<8x16xf32>
    %c0_98 = arith.constant 0 : index
    %c7_99 = arith.constant 7 : index
    %96 = vector.load %arg31[%c0_98, %c7_99] : memref<16x32xf32, #tpu.memory_space<vmem>>, vector<16x16xf32>
    %cst_100 = arith.constant dense<0.000000e+00> : vector<8x16xf32>
    %97 = tpu.matmul %95, %96, %cst_100 {dimension_numbers = #tpu.dot_dimension_numbers<[1], [0], [0], [1], [0, 0, 1, 1], [], []>} : vector<8x16xf32>, vector<16x16xf32>, vector<8x16xf32> -> vector<8x16xf32>
    %98 = arith.addf %93, %97 : vector<8x16xf32>
    %c1_101 = arith.constant 1 : index
    %c0_102 = arith.constant 0 : index
    %c0_103 = arith.constant 0 : index
    %99 = vector.load %arg11[%c1_101, %c0_102, %c0_103] : memref<3x8x16xf32, #tpu.memory_space<vmem>>, vector<1x8x16xf32>
    %100 = vector.shape_cast %99 : vector<1x8x16xf32> to vector<8x16xf32>
    %c0_104 = arith.constant 0 : index
    %c8_105 = arith.constant 8 : index
    %101 = vector.load %arg31[%c0_104, %c8_105] : memref<16x32xf32, #tpu.memory_space<vmem>>, vector<16x16xf32>
    %cst_106 = arith.constant dense<0.000000e+00> : vector<8x16xf32>
    %102 = tpu.matmul %100, %101, %cst_106 {dimension_numbers = #tpu.dot_dimension_numbers<[1], [0], [0], [1], [0, 0, 1, 1], [], []>} : vector<8x16xf32>, vector<16x16xf32>, vector<8x16xf32> -> vector<8x16xf32>
    %103 = arith.addf %98, %102 : vector<8x16xf32>
    %c2_107 = arith.constant 2 : index
    %c0_108 = arith.constant 0 : index
    %c0_109 = arith.constant 0 : index
    %104 = vector.load %arg11[%c2_107, %c0_108, %c0_109] : memref<3x8x16xf32, #tpu.memory_space<vmem>>, vector<1x8x16xf32>
    %105 = vector.shape_cast %104 : vector<1x8x16xf32> to vector<8x16xf32>
    %c0_110 = arith.constant 0 : index
    %c9_111 = arith.constant 9 : index
    %106 = vector.load %arg31[%c0_110, %c9_111] : memref<16x32xf32, #tpu.memory_space<vmem>>, vector<16x16xf32>
    %cst_112 = arith.constant dense<0.000000e+00> : vector<8x16xf32>
    %107 = tpu.matmul %105, %106, %cst_112 {dimension_numbers = #tpu.dot_dimension_numbers<[1], [0], [0], [1], [0, 0, 1, 1], [], []>} : vector<8x16xf32>, vector<16x16xf32>, vector<8x16xf32> -> vector<8x16xf32>
    %108 = arith.addf %103, %107 : vector<8x16xf32>
    %cst_113 = arith.constant 1.000000e+00 : f32
    %109 = vector.broadcast %cst_113 : f32 to vector<8x16xf32>
    %110 = arith.mulf %108, %109 : vector<8x16xf32>
    %111 = vector.broadcast %92 : vector<8x1xf32> to vector<8x16xf32>
    %112 = arith.addf %110, %111 : vector<8x16xf32>
    %113 = arith.negf %112 : vector<8x16xf32>
    %114 = math.exp %113 : vector<8x16xf32>
    %cst_114 = arith.constant 1.000000e+00 : f32
    %115 = vector.broadcast %cst_114 : f32 to vector<8x16xf32>
    %116 = arith.addf %115, %114 : vector<8x16xf32>
    %117 = arith.divf %115, %116 : vector<8x16xf32>
    %c0_115 = arith.constant 0 : index
    %c0_116 = arith.constant 0 : index
    %c0_117 = arith.constant 0 : index
    %118 = vector.load %arg26[%c0_115, %c0_116, %c0_117] : memref<1x8x16xf32, #tpu.memory_space<vmem>>, vector<1x8x16xf32>
    %119 = vector.shape_cast %118 : vector<1x8x16xf32> to vector<8x16xf32>
    %120 = vector.shape_cast %91 : vector<8x16xf32> to vector<1x8x16xf32>
    tpu.vector_store %arg26[%c0_115, %c0_116, %c0_117], %120 {strides = array<i32>} : memref<1x8x16xf32, #tpu.memory_space<vmem>>, vector<1x8x16xf32>,
    %c0_118 = arith.constant 0 : index
    %c0_119 = arith.constant 0 : index
    %c0_120 = arith.constant 0 : index
    %121 = vector.load %arg27[%c0_118, %c0_119, %c0_120] : memref<1x8x16xf32, #tpu.memory_space<vmem>>, vector<1x8x16xf32>
    %122 = vector.shape_cast %121 : vector<1x8x16xf32> to vector<8x16xf32>
    %123 = vector.shape_cast %117 : vector<8x16xf32> to vector<1x8x16xf32>
    tpu.vector_store %arg27[%c0_118, %c0_119, %c0_120], %123 {strides = array<i32>} : memref<1x8x16xf32, #tpu.memory_space<vmem>>, vector<1x8x16xf32>,
    %c0_121 = arith.constant 0 : index
    %c0_122 = arith.constant 0 : index
    %124 = vector.load %arg14[%c0_121, %c0_122] : memref<32x1xf32, #tpu.memory_space<vmem>>, vector<32x1xf32>
    %cst_123 = arith.constant 0.000000e+00 : f32
    %125 = vector.broadcast %cst_123 : f32 to vector<32x16xf32>
    %c0_124 = arith.constant 0 : index
    %c0_125 = arith.constant 0 : index
    %c0_126 = arith.constant 0 : index
    %126 = vector.load %arg13[%c0_124, %c0_125, %c0_126] : memref<7x32x16xf32, #tpu.memory_space<vmem>>, vector<1x32x16xf32>
    %127 = vector.shape_cast %126 : vector<1x32x16xf32> to vector<32x16xf32>
    %c0_127 = arith.constant 0 : index
    %c5 = arith.constant 5 : index
    %128 = vector.load %arg30[%c0_127, %c5] : memref<16x32xf32, #tpu.memory_space<vmem>>, vector<16x16xf32>
    %cst_128 = arith.constant dense<0.000000e+00> : vector<32x16xf32>
    %129 = tpu.matmul %127, %128, %cst_128 {dimension_numbers = #tpu.dot_dimension_numbers<[1], [0], [0], [1], [0, 0, 1, 1], [], []>} : vector<32x16xf32>, vector<16x16xf32>, vector<32x16xf32> -> vector<32x16xf32>
    %130 = arith.addf %125, %129 : vector<32x16xf32>
    %c1_129 = arith.constant 1 : index
    %c0_130 = arith.constant 0 : index
    %c0_131 = arith.constant 0 : index
    %131 = vector.load %arg13[%c1_129, %c0_130, %c0_131] : memref<7x32x16xf32, #tpu.memory_space<vmem>>, vector<1x32x16xf32>
    %132 = vector.shape_cast %131 : vector<1x32x16xf32> to vector<32x16xf32>
    %c0_132 = arith.constant 0 : index
    %c6 = arith.constant 6 : index
    %133 = vector.load %arg30[%c0_132, %c6] : memref<16x32xf32, #tpu.memory_space<vmem>>, vector<16x16xf32>
    %cst_133 = arith.constant dense<0.000000e+00> : vector<32x16xf32>
    %134 = tpu.matmul %132, %133, %cst_133 {dimension_numbers = #tpu.dot_dimension_numbers<[1], [0], [0], [1], [0, 0, 1, 1], [], []>} : vector<32x16xf32>, vector<16x16xf32>, vector<32x16xf32> -> vector<32x16xf32>
    %135 = arith.addf %130, %134 : vector<32x16xf32>
    %c2_134 = arith.constant 2 : index
    %c0_135 = arith.constant 0 : index
    %c0_136 = arith.constant 0 : index
    %136 = vector.load %arg13[%c2_134, %c0_135, %c0_136] : memref<7x32x16xf32, #tpu.memory_space<vmem>>, vector<1x32x16xf32>
    %137 = vector.shape_cast %136 : vector<1x32x16xf32> to vector<32x16xf32>
    %c0_137 = arith.constant 0 : index
    %c7_138 = arith.constant 7 : index
    %138 = vector.load %arg30[%c0_137, %c7_138] : memref<16x32xf32, #tpu.memory_space<vmem>>, vector<16x16xf32>
    %cst_139 = arith.constant dense<0.000000e+00> : vector<32x16xf32>
    %139 = tpu.matmul %137, %138, %cst_139 {dimension_numbers = #tpu.dot_dimension_numbers<[1], [0], [0], [1], [0, 0, 1, 1], [], []>} : vector<32x16xf32>, vector<16x16xf32>, vector<32x16xf32> -> vector<32x16xf32>
    %140 = arith.addf %135, %139 : vector<32x16xf32>
    %c3 = arith.constant 3 : index
    %c0_140 = arith.constant 0 : index
    %c0_141 = arith.constant 0 : index
    %141 = vector.load %arg13[%c3, %c0_140, %c0_141] : memref<7x32x16xf32, #tpu.memory_space<vmem>>, vector<1x32x16xf32>
    %142 = vector.shape_cast %141 : vector<1x32x16xf32> to vector<32x16xf32>
    %c0_142 = arith.constant 0 : index
    %c8_143 = arith.constant 8 : index
    %143 = vector.load %arg30[%c0_142, %c8_143] : memref<16x32xf32, #tpu.memory_space<vmem>>, vector<16x16xf32>
    %cst_144 = arith.constant dense<0.000000e+00> : vector<32x16xf32>
    %144 = tpu.matmul %142, %143, %cst_144 {dimension_numbers = #tpu.dot_dimension_numbers<[1], [0], [0], [1], [0, 0, 1, 1], [], []>} : vector<32x16xf32>, vector<16x16xf32>, vector<32x16xf32> -> vector<32x16xf32>
    %145 = arith.addf %140, %144 : vector<32x16xf32>
    %c4 = arith.constant 4 : index
    %c0_145 = arith.constant 0 : index
    %c0_146 = arith.constant 0 : index
    %146 = vector.load %arg13[%c4, %c0_145, %c0_146] : memref<7x32x16xf32, #tpu.memory_space<vmem>>, vector<1x32x16xf32>
    %147 = vector.shape_cast %146 : vector<1x32x16xf32> to vector<32x16xf32>
    %c0_147 = arith.constant 0 : index
    %c9_148 = arith.constant 9 : index
    %148 = vector.load %arg30[%c0_147, %c9_148] : memref<16x32xf32, #tpu.memory_space<vmem>>, vector<16x16xf32>
    %cst_149 = arith.constant dense<0.000000e+00> : vector<32x16xf32>
    %149 = tpu.matmul %147, %148, %cst_149 {dimension_numbers = #tpu.dot_dimension_numbers<[1], [0], [0], [1], [0, 0, 1, 1], [], []>} : vector<32x16xf32>, vector<16x16xf32>, vector<32x16xf32> -> vector<32x16xf32>
    %150 = arith.addf %145, %149 : vector<32x16xf32>
    %c5_150 = arith.constant 5 : index
    %c0_151 = arith.constant 0 : index
    %c0_152 = arith.constant 0 : index
    %151 = vector.load %arg13[%c5_150, %c0_151, %c0_152] : memref<7x32x16xf32, #tpu.memory_space<vmem>>, vector<1x32x16xf32>
    %152 = vector.shape_cast %151 : vector<1x32x16xf32> to vector<32x16xf32>
    %c0_153 = arith.constant 0 : index
    %c10 = arith.constant 10 : index
    %153 = vector.load %arg30[%c0_153, %c10] : memref<16x32xf32, #tpu.memory_space<vmem>>, vector<16x16xf32>
    %cst_154 = arith.constant dense<0.000000e+00> : vector<32x16xf32>
    %154 = tpu.matmul %152, %153, %cst_154 {dimension_numbers = #tpu.dot_dimension_numbers<[1], [0], [0], [1], [0, 0, 1, 1], [], []>} : vector<32x16xf32>, vector<16x16xf32>, vector<32x16xf32> -> vector<32x16xf32>
    %155 = arith.addf %150, %154 : vector<32x16xf32>
    %c6_155 = arith.constant 6 : index
    %c0_156 = arith.constant 0 : index
    %c0_157 = arith.constant 0 : index
    %156 = vector.load %arg13[%c6_155, %c0_156, %c0_157] : memref<7x32x16xf32, #tpu.memory_space<vmem>>, vector<1x32x16xf32>
    %157 = vector.shape_cast %156 : vector<1x32x16xf32> to vector<32x16xf32>
    %c0_158 = arith.constant 0 : index
    %c11 = arith.constant 11 : index
    %158 = vector.load %arg30[%c0_158, %c11] : memref<16x32xf32, #tpu.memory_space<vmem>>, vector<16x16xf32>
    %cst_159 = arith.constant dense<0.000000e+00> : vector<32x16xf32>
    %159 = tpu.matmul %157, %158, %cst_159 {dimension_numbers = #tpu.dot_dimension_numbers<[1], [0], [0], [1], [0, 0, 1, 1], [], []>} : vector<32x16xf32>, vector<16x16xf32>, vector<32x16xf32> -> vector<32x16xf32>
    %160 = arith.addf %155, %159 : vector<32x16xf32>
    %cst_160 = arith.constant 1.000000e+00 : f32
    %161 = vector.broadcast %cst_160 : f32 to vector<32x16xf32>
    %162 = arith.mulf %160, %161 : vector<32x16xf32>
    %163 = vector.broadcast %124 : vector<32x1xf32> to vector<32x16xf32>
    %164 = arith.addf %162, %163 : vector<32x16xf32>
    %165 = arith.negf %164 : vector<32x16xf32>
    %166 = math.exp %165 : vector<32x16xf32>
    %cst_161 = arith.constant 1.000000e+00 : f32
    %167 = vector.broadcast %cst_161 : f32 to vector<32x16xf32>
    %168 = arith.addf %167, %166 : vector<32x16xf32>
    %169 = arith.divf %167, %168 : vector<32x16xf32>
    %c0_162 = arith.constant 0 : index
    %c0_163 = arith.constant 0 : index
    %170 = vector.load %arg16[%c0_162, %c0_163] : memref<32x1xf32, #tpu.memory_space<vmem>>, vector<32x1xf32>
    %cst_164 = arith.constant 0.000000e+00 : f32
    %171 = vector.broadcast %cst_164 : f32 to vector<32x16xf32>
    %c0_165 = arith.constant 0 : index
    %c0_166 = arith.constant 0 : index
    %c0_167 = arith.constant 0 : index
    %172 = vector.load %arg15[%c0_165, %c0_166, %c0_167] : memref<7x32x16xf32, #tpu.memory_space<vmem>>, vector<1x32x16xf32>
    %173 = vector.shape_cast %172 : vector<1x32x16xf32> to vector<32x16xf32>
    %c0_168 = arith.constant 0 : index
    %c5_169 = arith.constant 5 : index
    %174 = vector.load %arg31[%c0_168, %c5_169] : memref<16x32xf32, #tpu.memory_space<vmem>>, vector<16x16xf32>
    %cst_170 = arith.constant dense<0.000000e+00> : vector<32x16xf32>
    %175 = tpu.matmul %173, %174, %cst_170 {dimension_numbers = #tpu.dot_dimension_numbers<[1], [0], [0], [1], [0, 0, 1, 1], [], []>} : vector<32x16xf32>, vector<16x16xf32>, vector<32x16xf32> -> vector<32x16xf32>
    %176 = arith.addf %171, %175 : vector<32x16xf32>
    %c1_171 = arith.constant 1 : index
    %c0_172 = arith.constant 0 : index
    %c0_173 = arith.constant 0 : index
    %177 = vector.load %arg15[%c1_171, %c0_172, %c0_173] : memref<7x32x16xf32, #tpu.memory_space<vmem>>, vector<1x32x16xf32>
    %178 = vector.shape_cast %177 : vector<1x32x16xf32> to vector<32x16xf32>
    %c0_174 = arith.constant 0 : index
    %c6_175 = arith.constant 6 : index
    %179 = vector.load %arg31[%c0_174, %c6_175] : memref<16x32xf32, #tpu.memory_space<vmem>>, vector<16x16xf32>
    %cst_176 = arith.constant dense<0.000000e+00> : vector<32x16xf32>
    %180 = tpu.matmul %178, %179, %cst_176 {dimension_numbers = #tpu.dot_dimension_numbers<[1], [0], [0], [1], [0, 0, 1, 1], [], []>} : vector<32x16xf32>, vector<16x16xf32>, vector<32x16xf32> -> vector<32x16xf32>
    %181 = arith.addf %176, %180 : vector<32x16xf32>
    %c2_177 = arith.constant 2 : index
    %c0_178 = arith.constant 0 : index
    %c0_179 = arith.constant 0 : index
    %182 = vector.load %arg15[%c2_177, %c0_178, %c0_179] : memref<7x32x16xf32, #tpu.memory_space<vmem>>, vector<1x32x16xf32>
    %183 = vector.shape_cast %182 : vector<1x32x16xf32> to vector<32x16xf32>
    %c0_180 = arith.constant 0 : index
    %c7_181 = arith.constant 7 : index
    %184 = vector.load %arg31[%c0_180, %c7_181] : memref<16x32xf32, #tpu.memory_space<vmem>>, vector<16x16xf32>
    %cst_182 = arith.constant dense<0.000000e+00> : vector<32x16xf32>
    %185 = tpu.matmul %183, %184, %cst_182 {dimension_numbers = #tpu.dot_dimension_numbers<[1], [0], [0], [1], [0, 0, 1, 1], [], []>} : vector<32x16xf32>, vector<16x16xf32>, vector<32x16xf32> -> vector<32x16xf32>
    %186 = arith.addf %181, %185 : vector<32x16xf32>
    %c3_183 = arith.constant 3 : index
    %c0_184 = arith.constant 0 : index
    %c0_185 = arith.constant 0 : index
    %187 = vector.load %arg15[%c3_183, %c0_184, %c0_185] : memref<7x32x16xf32, #tpu.memory_space<vmem>>, vector<1x32x16xf32>
    %188 = vector.shape_cast %187 : vector<1x32x16xf32> to vector<32x16xf32>
    %c0_186 = arith.constant 0 : index
    %c8_187 = arith.constant 8 : index
    %189 = vector.load %arg31[%c0_186, %c8_187] : memref<16x32xf32, #tpu.memory_space<vmem>>, vector<16x16xf32>
    %cst_188 = arith.constant dense<0.000000e+00> : vector<32x16xf32>
    %190 = tpu.matmul %188, %189, %cst_188 {dimension_numbers = #tpu.dot_dimension_numbers<[1], [0], [0], [1], [0, 0, 1, 1], [], []>} : vector<32x16xf32>, vector<16x16xf32>, vector<32x16xf32> -> vector<32x16xf32>
    %191 = arith.addf %186, %190 : vector<32x16xf32>
    %c4_189 = arith.constant 4 : index
    %c0_190 = arith.constant 0 : index
    %c0_191 = arith.constant 0 : index
    %192 = vector.load %arg15[%c4_189, %c0_190, %c0_191] : memref<7x32x16xf32, #tpu.memory_space<vmem>>, vector<1x32x16xf32>
    %193 = vector.shape_cast %192 : vector<1x32x16xf32> to vector<32x16xf32>
    %c0_192 = arith.constant 0 : index
    %c9_193 = arith.constant 9 : index
    %194 = vector.load %arg31[%c0_192, %c9_193] : memref<16x32xf32, #tpu.memory_space<vmem>>, vector<16x16xf32>
    %cst_194 = arith.constant dense<0.000000e+00> : vector<32x16xf32>
    %195 = tpu.matmul %193, %194, %cst_194 {dimension_numbers = #tpu.dot_dimension_numbers<[1], [0], [0], [1], [0, 0, 1, 1], [], []>} : vector<32x16xf32>, vector<16x16xf32>, vector<32x16xf32> -> vector<32x16xf32>
    %196 = arith.addf %191, %195 : vector<32x16xf32>
    %c5_195 = arith.constant 5 : index
    %c0_196 = arith.constant 0 : index
    %c0_197 = arith.constant 0 : index
    %197 = vector.load %arg15[%c5_195, %c0_196, %c0_197] : memref<7x32x16xf32, #tpu.memory_space<vmem>>, vector<1x32x16xf32>
    %198 = vector.shape_cast %197 : vector<1x32x16xf32> to vector<32x16xf32>
    %c0_198 = arith.constant 0 : index
    %c10_199 = arith.constant 10 : index
    %199 = vector.load %arg31[%c0_198, %c10_199] : memref<16x32xf32, #tpu.memory_space<vmem>>, vector<16x16xf32>
    %cst_200 = arith.constant dense<0.000000e+00> : vector<32x16xf32>
    %200 = tpu.matmul %198, %199, %cst_200 {dimension_numbers = #tpu.dot_dimension_numbers<[1], [0], [0], [1], [0, 0, 1, 1], [], []>} : vector<32x16xf32>, vector<16x16xf32>, vector<32x16xf32> -> vector<32x16xf32>
    %201 = arith.addf %196, %200 : vector<32x16xf32>
    %c6_201 = arith.constant 6 : index
    %c0_202 = arith.constant 0 : index
    %c0_203 = arith.constant 0 : index
    %202 = vector.load %arg15[%c6_201, %c0_202, %c0_203] : memref<7x32x16xf32, #tpu.memory_space<vmem>>, vector<1x32x16xf32>
    %203 = vector.shape_cast %202 : vector<1x32x16xf32> to vector<32x16xf32>
    %c0_204 = arith.constant 0 : index
    %c11_205 = arith.constant 11 : index
    %204 = vector.load %arg31[%c0_204, %c11_205] : memref<16x32xf32, #tpu.memory_space<vmem>>, vector<16x16xf32>
    %cst_206 = arith.constant dense<0.000000e+00> : vector<32x16xf32>
    %205 = tpu.matmul %203, %204, %cst_206 {dimension_numbers = #tpu.dot_dimension_numbers<[1], [0], [0], [1], [0, 0, 1, 1], [], []>} : vector<32x16xf32>, vector<16x16xf32>, vector<32x16xf32> -> vector<32x16xf32>
    %206 = arith.addf %201, %205 : vector<32x16xf32>
    %cst_207 = arith.constant 1.000000e+00 : f32
    %207 = vector.broadcast %cst_207 : f32 to vector<32x16xf32>
    %208 = arith.mulf %206, %207 : vector<32x16xf32>
    %209 = vector.broadcast %170 : vector<32x1xf32> to vector<32x16xf32>
    %210 = arith.addf %208, %209 : vector<32x16xf32>
    %211 = arith.negf %210 : vector<32x16xf32>
    %212 = math.exp %211 : vector<32x16xf32>
    %cst_208 = arith.constant 1.000000e+00 : f32
    %213 = vector.broadcast %cst_208 : f32 to vector<32x16xf32>
    %214 = arith.addf %213, %212 : vector<32x16xf32>
    %215 = arith.divf %213, %214 : vector<32x16xf32>
    %c0_209 = arith.constant 0 : index
    %c0_210 = arith.constant 0 : index
    %216 = vector.load %arg17[%c0_209, %c0_210] : memref<16x256xf32, #tpu.memory_space<vmem>>, vector<16x256xf32>
    %cst_211 = arith.constant dense<0.000000e+00> : vector<32x256xf32>
    %217 = tpu.matmul %169, %216, %cst_211 {dimension_numbers = #tpu.dot_dimension_numbers<[1], [0], [0], [1], [0, 0, 1, 1], [], []>} : vector<32x16xf32>, vector<16x256xf32>, vector<32x256xf32> -> vector<32x256xf32>
    %c0_212 = arith.constant 0 : index
    %c0_213 = arith.constant 0 : index
    %218 = vector.load %arg18[%c0_212, %c0_213] : memref<16x256xf32, #tpu.memory_space<vmem>>, vector<16x256xf32>
    %cst_214 = arith.constant dense<0.000000e+00> : vector<32x256xf32>
    %219 = tpu.matmul %215, %218, %cst_214 {dimension_numbers = #tpu.dot_dimension_numbers<[1], [0], [0], [1], [0, 0, 1, 1], [], []>} : vector<32x16xf32>, vector<16x256xf32>, vector<32x256xf32> -> vector<32x256xf32>
    %c0_215 = arith.constant 0 : index
    %220 = memref.load %arg20[%c0_215] : memref<1xf32, #tpu.memory_space<smem>>
    %221 = vector.broadcast %220 : f32 to vector<32x256xf32>
    %222 = arith.mulf %221, %219 : vector<32x256xf32>
    %c0_216 = arith.constant 0 : index
    %223 = memref.load %arg19[%c0_216] : memref<1xf32, #tpu.memory_space<smem>>
    %224 = vector.broadcast %223 : f32 to vector<32x256xf32>
    %225 = arith.mulf %224, %217 : vector<32x256xf32>
    %226 = arith.addf %222, %225 : vector<32x256xf32>
    %227 = arith.mulf %1, %226 : vector<32x256xf32>
    %cst_217 = arith.constant 0.000000e+00 : f32
    %228 = vector.broadcast %cst_217 : f32 to vector<96x512xf32>
    %c0_218 = arith.constant 0 : index
    %c0_219 = arith.constant 0 : index
    %229 = vector.load %arg32[%c0_218, %c0_219] : memref<96x512xf32, #tpu.memory_space<vmem>>, vector<96x512xf32>
    tpu.vector_store %arg32[%c0_218, %c0_219], %228 {strides = array<i32>} : memref<96x512xf32, #tpu.memory_space<vmem>>, vector<96x512xf32>,
    %c0_220 = arith.constant 0 : index
    %c128 = arith.constant 128 : index
    %230 = vector.load %arg32[%c0_220, %c128] : memref<96x512xf32, #tpu.memory_space<vmem>>, vector<32x256xf32>
    tpu.vector_store %arg32[%c0_220, %c128], %1 {strides = array<i32>} : memref<96x512xf32, #tpu.memory_space<vmem>>, vector<32x256xf32>,
    %c32 = arith.constant 32 : index
    %c128_221 = arith.constant 128 : index
    %231 = vector.load %arg32[%c32, %c128_221] : memref<96x512xf32, #tpu.memory_space<vmem>>, vector<32x256xf32>
    tpu.vector_store %arg32[%c32, %c128_221], %227 {strides = array<i32>} : memref<96x512xf32, #tpu.memory_space<vmem>>, vector<32x256xf32>,
    %c64 = arith.constant 64 : index
    %c128_222 = arith.constant 128 : index
    %232 = vector.load %arg32[%c64, %c128_222] : memref<96x512xf32, #tpu.memory_space<vmem>>, vector<32x256xf32>
    tpu.vector_store %arg32[%c64, %c128_222], %226 {strides = array<i32>} : memref<96x512xf32, #tpu.memory_space<vmem>>, vector<32x256xf32>,
    %cst_223 = arith.constant 0.000000e+00 : f32
    %233 = vector.broadcast %cst_223 : f32 to vector<32x256xf32>
    %c0_224 = arith.constant 0 : index
    %c111 = arith.constant 111 : index
    %234 = vector.load %arg32[%c0_224, %c111] : memref<96x512xf32, #tpu.memory_space<vmem>>, vector<96x256xf32>
    %c0_225 = arith.constant 0 : index
    %c0_226 = arith.constant 0 : index
    %c0_227 = arith.constant 0 : index
    %235 = vector.load %arg24[%c0_225, %c0_226, %c0_227] : memref<9x1x256xf32, #tpu.memory_space<vmem>>, vector<1x1x256xf32>
    %236 = vector.shape_cast %235 : vector<1x1x256xf32> to vector<1x256xf32>
    %237 = vector.broadcast %236 : vector<1x256xf32> to vector<96x256xf32>
    %238 = arith.mulf %234, %237 : vector<96x256xf32>
    %c0_228 = arith.constant 0 : index
    %c0_229 = arith.constant 0 : index
    %c0_230 = arith.constant 0 : index
    %239 = vector.load %arg21[%c0_228, %c0_229, %c0_230] : memref<9x32x96xf32, #tpu.memory_space<vmem>>, vector<1x32x96xf32>
    %240 = vector.shape_cast %239 : vector<1x32x96xf32> to vector<32x96xf32>
    %cst_231 = arith.constant dense<0.000000e+00> : vector<32x256xf32>
    %241 = tpu.matmul %240, %238, %cst_231 {dimension_numbers = #tpu.dot_dimension_numbers<[1], [0], [0], [1], [0, 0, 1, 1], [], []>} : vector<32x96xf32>, vector<96x256xf32>, vector<32x256xf32> -> vector<32x256xf32>
    %242 = arith.addf %233, %241 : vector<32x256xf32>
    %c0_232 = arith.constant 0 : index
    %c112 = arith.constant 112 : index
    %243 = vector.load %arg32[%c0_232, %c112] : memref<96x512xf32, #tpu.memory_space<vmem>>, vector<96x256xf32>
    %c1_233 = arith.constant 1 : index
    %c0_234 = arith.constant 0 : index
    %c0_235 = arith.constant 0 : index
    %244 = vector.load %arg24[%c1_233, %c0_234, %c0_235] : memref<9x1x256xf32, #tpu.memory_space<vmem>>, vector<1x1x256xf32>
    %245 = vector.shape_cast %244 : vector<1x1x256xf32> to vector<1x256xf32>
    %246 = vector.broadcast %245 : vector<1x256xf32> to vector<96x256xf32>
    %247 = arith.mulf %243, %246 : vector<96x256xf32>
    %c1_236 = arith.constant 1 : index
    %c0_237 = arith.constant 0 : index
    %c0_238 = arith.constant 0 : index
    %248 = vector.load %arg21[%c1_236, %c0_237, %c0_238] : memref<9x32x96xf32, #tpu.memory_space<vmem>>, vector<1x32x96xf32>
    %249 = vector.shape_cast %248 : vector<1x32x96xf32> to vector<32x96xf32>
    %cst_239 = arith.constant dense<0.000000e+00> : vector<32x256xf32>
    %250 = tpu.matmul %249, %247, %cst_239 {dimension_numbers = #tpu.dot_dimension_numbers<[1], [0], [0], [1], [0, 0, 1, 1], [], []>} : vector<32x96xf32>, vector<96x256xf32>, vector<32x256xf32> -> vector<32x256xf32>
    %251 = arith.addf %242, %250 : vector<32x256xf32>
    %c0_240 = arith.constant 0 : index
    %c113 = arith.constant 113 : index
    %252 = vector.load %arg32[%c0_240, %c113] : memref<96x512xf32, #tpu.memory_space<vmem>>, vector<96x256xf32>
    %c2_241 = arith.constant 2 : index
    %c0_242 = arith.constant 0 : index
    %c0_243 = arith.constant 0 : index
    %253 = vector.load %arg24[%c2_241, %c0_242, %c0_243] : memref<9x1x256xf32, #tpu.memory_space<vmem>>, vector<1x1x256xf32>
    %254 = vector.shape_cast %253 : vector<1x1x256xf32> to vector<1x256xf32>
    %255 = vector.broadcast %254 : vector<1x256xf32> to vector<96x256xf32>
    %256 = arith.mulf %252, %255 : vector<96x256xf32>
    %c2_244 = arith.constant 2 : index
    %c0_245 = arith.constant 0 : index
    %c0_246 = arith.constant 0 : index
    %257 = vector.load %arg21[%c2_244, %c0_245, %c0_246] : memref<9x32x96xf32, #tpu.memory_space<vmem>>, vector<1x32x96xf32>
    %258 = vector.shape_cast %257 : vector<1x32x96xf32> to vector<32x96xf32>
    %cst_247 = arith.constant dense<0.000000e+00> : vector<32x256xf32>
    %259 = tpu.matmul %258, %256, %cst_247 {dimension_numbers = #tpu.dot_dimension_numbers<[1], [0], [0], [1], [0, 0, 1, 1], [], []>} : vector<32x96xf32>, vector<96x256xf32>, vector<32x256xf32> -> vector<32x256xf32>
    %260 = arith.addf %251, %259 : vector<32x256xf32>
    %c0_248 = arith.constant 0 : index
    %c127 = arith.constant 127 : index
    %261 = vector.load %arg32[%c0_248, %c127] : memref<96x512xf32, #tpu.memory_space<vmem>>, vector<96x256xf32>
    %c3_249 = arith.constant 3 : index
    %c0_250 = arith.constant 0 : index
    %c0_251 = arith.constant 0 : index
    %262 = vector.load %arg24[%c3_249, %c0_250, %c0_251] : memref<9x1x256xf32, #tpu.memory_space<vmem>>, vector<1x1x256xf32>
    %263 = vector.shape_cast %262 : vector<1x1x256xf32> to vector<1x256xf32>
    %264 = vector.broadcast %263 : vector<1x256xf32> to vector<96x256xf32>
    %265 = arith.mulf %261, %264 : vector<96x256xf32>
    %c3_252 = arith.constant 3 : index
    %c0_253 = arith.constant 0 : index
    %c0_254 = arith.constant 0 : index
    %266 = vector.load %arg21[%c3_252, %c0_253, %c0_254] : memref<9x32x96xf32, #tpu.memory_space<vmem>>, vector<1x32x96xf32>
    %267 = vector.shape_cast %266 : vector<1x32x96xf32> to vector<32x96xf32>
    %cst_255 = arith.constant dense<0.000000e+00> : vector<32x256xf32>
    %268 = tpu.matmul %267, %265, %cst_255 {dimension_numbers = #tpu.dot_dimension_numbers<[1], [0], [0], [1], [0, 0, 1, 1], [], []>} : vector<32x96xf32>, vector<96x256xf32>, vector<32x256xf32> -> vector<32x256xf32>
    %269 = arith.addf %260, %268 : vector<32x256xf32>
    %c0_256 = arith.constant 0 : index
    %c128_257 = arith.constant 128 : index
    %270 = vector.load %arg32[%c0_256, %c128_257] : memref<96x512xf32, #tpu.memory_space<vmem>>, vector<96x256xf32>
    %c4_258 = arith.constant 4 : index
    %c0_259 = arith.constant 0 : index
    %c0_260 = arith.constant 0 : index
    %271 = vector.load %arg24[%c4_258, %c0_259, %c0_260] : memref<9x1x256xf32, #tpu.memory_space<vmem>>, vector<1x1x256xf32>
    %272 = vector.shape_cast %271 : vector<1x1x256xf32> to vector<1x256xf32>
    %273 = vector.broadcast %272 : vector<1x256xf32> to vector<96x256xf32>
    %274 = arith.mulf %270, %273 : vector<96x256xf32>
    %c4_261 = arith.constant 4 : index
    %c0_262 = arith.constant 0 : index
    %c0_263 = arith.constant 0 : index
    %275 = vector.load %arg21[%c4_261, %c0_262, %c0_263] : memref<9x32x96xf32, #tpu.memory_space<vmem>>, vector<1x32x96xf32>
    %276 = vector.shape_cast %275 : vector<1x32x96xf32> to vector<32x96xf32>
    %cst_264 = arith.constant dense<0.000000e+00> : vector<32x256xf32>
    %277 = tpu.matmul %276, %274, %cst_264 {dimension_numbers = #tpu.dot_dimension_numbers<[1], [0], [0], [1], [0, 0, 1, 1], [], []>} : vector<32x96xf32>, vector<96x256xf32>, vector<32x256xf32> -> vector<32x256xf32>
    %278 = arith.addf %269, %277 : vector<32x256xf32>
    %c0_265 = arith.constant 0 : index
    %c129 = arith.constant 129 : index
    %279 = vector.load %arg32[%c0_265, %c129] : memref<96x512xf32, #tpu.memory_space<vmem>>, vector<96x256xf32>
    %c5_266 = arith.constant 5 : index
    %c0_267 = arith.constant 0 : index
    %c0_268 = arith.constant 0 : index
    %280 = vector.load %arg24[%c5_266, %c0_267, %c0_268] : memref<9x1x256xf32, #tpu.memory_space<vmem>>, vector<1x1x256xf32>
    %281 = vector.shape_cast %280 : vector<1x1x256xf32> to vector<1x256xf32>
    %282 = vector.broadcast %281 : vector<1x256xf32> to vector<96x256xf32>
    %283 = arith.mulf %279, %282 : vector<96x256xf32>
    %c5_269 = arith.constant 5 : index
    %c0_270 = arith.constant 0 : index
    %c0_271 = arith.constant 0 : index
    %284 = vector.load %arg21[%c5_269, %c0_270, %c0_271] : memref<9x32x96xf32, #tpu.memory_space<vmem>>, vector<1x32x96xf32>
    %285 = vector.shape_cast %284 : vector<1x32x96xf32> to vector<32x96xf32>
    %cst_272 = arith.constant dense<0.000000e+00> : vector<32x256xf32>
    %286 = tpu.matmul %285, %283, %cst_272 {dimension_numbers = #tpu.dot_dimension_numbers<[1], [0], [0], [1], [0, 0, 1, 1], [], []>} : vector<32x96xf32>, vector<96x256xf32>, vector<32x256xf32> -> vector<32x256xf32>
    %287 = arith.addf %278, %286 : vector<32x256xf32>
    %c0_273 = arith.constant 0 : index
    %c143 = arith.constant 143 : index
    %288 = vector.load %arg32[%c0_273, %c143] : memref<96x512xf32, #tpu.memory_space<vmem>>, vector<96x256xf32>
    %c6_274 = arith.constant 6 : index
    %c0_275 = arith.constant 0 : index
    %c0_276 = arith.constant 0 : index
    %289 = vector.load %arg24[%c6_274, %c0_275, %c0_276] : memref<9x1x256xf32, #tpu.memory_space<vmem>>, vector<1x1x256xf32>
    %290 = vector.shape_cast %289 : vector<1x1x256xf32> to vector<1x256xf32>
    %291 = vector.broadcast %290 : vector<1x256xf32> to vector<96x256xf32>
    %292 = arith.mulf %288, %291 : vector<96x256xf32>
    %c6_277 = arith.constant 6 : index
    %c0_278 = arith.constant 0 : index
    %c0_279 = arith.constant 0 : index
    %293 = vector.load %arg21[%c6_277, %c0_278, %c0_279] : memref<9x32x96xf32, #tpu.memory_space<vmem>>, vector<1x32x96xf32>
    %294 = vector.shape_cast %293 : vector<1x32x96xf32> to vector<32x96xf32>
    %cst_280 = arith.constant dense<0.000000e+00> : vector<32x256xf32>
    %295 = tpu.matmul %294, %292, %cst_280 {dimension_numbers = #tpu.dot_dimension_numbers<[1], [0], [0], [1], [0, 0, 1, 1], [], []>} : vector<32x96xf32>, vector<96x256xf32>, vector<32x256xf32> -> vector<32x256xf32>
    %296 = arith.addf %287, %295 : vector<32x256xf32>
    %c0_281 = arith.constant 0 : index
    %c144 = arith.constant 144 : index
    %297 = vector.load %arg32[%c0_281, %c144] : memref<96x512xf32, #tpu.memory_space<vmem>>, vector<96x256xf32>
    %c7_282 = arith.constant 7 : index
    %c0_283 = arith.constant 0 : index
    %c0_284 = arith.constant 0 : index
    %298 = vector.load %arg24[%c7_282, %c0_283, %c0_284] : memref<9x1x256xf32, #tpu.memory_space<vmem>>, vector<1x1x256xf32>
    %299 = vector.shape_cast %298 : vector<1x1x256xf32> to vector<1x256xf32>
    %300 = vector.broadcast %299 : vector<1x256xf32> to vector<96x256xf32>
    %301 = arith.mulf %297, %300 : vector<96x256xf32>
    %c7_285 = arith.constant 7 : index
    %c0_286 = arith.constant 0 : index
    %c0_287 = arith.constant 0 : index
    %302 = vector.load %arg21[%c7_285, %c0_286, %c0_287] : memref<9x32x96xf32, #tpu.memory_space<vmem>>, vector<1x32x96xf32>
    %303 = vector.shape_cast %302 : vector<1x32x96xf32> to vector<32x96xf32>
    %cst_288 = arith.constant dense<0.000000e+00> : vector<32x256xf32>
    %304 = tpu.matmul %303, %301, %cst_288 {dimension_numbers = #tpu.dot_dimension_numbers<[1], [0], [0], [1], [0, 0, 1, 1], [], []>} : vector<32x96xf32>, vector<96x256xf32>, vector<32x256xf32> -> vector<32x256xf32>
    %305 = arith.addf %296, %304 : vector<32x256xf32>
    %c0_289 = arith.constant 0 : index
    %c145 = arith.constant 145 : index
    %306 = vector.load %arg32[%c0_289, %c145] : memref<96x512xf32, #tpu.memory_space<vmem>>, vector<96x256xf32>
    %c8_290 = arith.constant 8 : index
    %c0_291 = arith.constant 0 : index
    %c0_292 = arith.constant 0 : index
    %307 = vector.load %arg24[%c8_290, %c0_291, %c0_292] : memref<9x1x256xf32, #tpu.memory_space<vmem>>, vector<1x1x256xf32>
    %308 = vector.shape_cast %307 : vector<1x1x256xf32> to vector<1x256xf32>
    %309 = vector.broadcast %308 : vector<1x256xf32> to vector<96x256xf32>
    %310 = arith.mulf %306, %309 : vector<96x256xf32>
    %c8_293 = arith.constant 8 : index
    %c0_294 = arith.constant 0 : index
    %c0_295 = arith.constant 0 : index
    %311 = vector.load %arg21[%c8_293, %c0_294, %c0_295] : memref<9x32x96xf32, #tpu.memory_space<vmem>>, vector<1x32x96xf32>
    %312 = vector.shape_cast %311 : vector<1x32x96xf32> to vector<32x96xf32>
    %cst_296 = arith.constant dense<0.000000e+00> : vector<32x256xf32>
    %313 = tpu.matmul %312, %310, %cst_296 {dimension_numbers = #tpu.dot_dimension_numbers<[1], [0], [0], [1], [0, 0, 1, 1], [], []>} : vector<32x96xf32>, vector<96x256xf32>, vector<32x256xf32> -> vector<32x256xf32>
    %314 = arith.addf %305, %313 : vector<32x256xf32>
    %c0_297 = arith.constant 0 : index
    %c0_298 = arith.constant 0 : index
    %315 = vector.load %arg22[%c0_297, %c0_298] : memref<32x1xf32, #tpu.memory_space<vmem>>, vector<32x1xf32>
    %316 = vector.broadcast %315 : vector<32x1xf32> to vector<32x256xf32>
    %317 = arith.mulf %314, %316 : vector<32x256xf32>
    %c0_299 = arith.constant 0 : index
    %c0_300 = arith.constant 0 : index
    %318 = vector.load %arg23[%c0_299, %c0_300] : memref<32x1xf32, #tpu.memory_space<vmem>>, vector<32x1xf32>
    %319 = vector.broadcast %318 : vector<32x1xf32> to vector<32x256xf32>
    %320 = arith.addf %317, %319 : vector<32x256xf32>
    %cst_301 = arith.constant 0.000000e+00 : f32
    %321 = vector.broadcast %cst_301 : f32 to vector<32x256xf32>
    %322 = arith.maximumf %320, %321 : vector<32x256xf32>
    %c0_302 = arith.constant 0 : index
    %c0_303 = arith.constant 0 : index
    %c0_304 = arith.constant 0 : index
    %323 = vector.load %arg25[%c0_302, %c0_303, %c0_304] : memref<1x32x256xf32, #tpu.memory_space<vmem>>, vector<1x32x256xf32>
    %324 = vector.shape_cast %323 : vector<1x32x256xf32> to vector<32x256xf32>
    %325 = vector.shape_cast %322 : vector<32x256xf32> to vector<1x32x256xf32>
    tpu.vector_store %arg25[%c0_302, %c0_303, %c0_304], %325 {strides = array<i32>} : memref<1x32x256xf32, #tpu.memory_space<vmem>>, vector<1x32x256xf32>,
    return
  }
  func.func @transform_0(%arg0: i32) -> (i32, i32, i32) {
    %c0_i32 = arith.constant 0 : i32
    %c0_i32_0 = arith.constant 0 : i32
    %c0_i32_1 = arith.constant 0 : i32
    return %arg0, %c0_i32, %c0_i32_0 : i32, i32, i32
  }
  func.func @transform_1(%arg0: i32) -> (i32, i32) {
    %c0_i32 = arith.constant 0 : i32
    %c0_i32_0 = arith.constant 0 : i32
    %c0_i32_1 = arith.constant 0 : i32
    return %c0_i32, %c0_i32_0 : i32, i32
  }
  func.func @transform_2(%arg0: i32) -> (i32, i32, i32) {
    %c0_i32 = arith.constant 0 : i32
    %c0_i32_0 = arith.constant 0 : i32
    %c0_i32_1 = arith.constant 0 : i32
    %c0_i32_2 = arith.constant 0 : i32
    return %c0_i32, %c0_i32_0, %c0_i32_1 : i32, i32, i32
  }
  func.func @transform_3(%arg0: i32) -> (i32, i32) {
    %c0_i32 = arith.constant 0 : i32
    %c0_i32_0 = arith.constant 0 : i32
    %c0_i32_1 = arith.constant 0 : i32
    return %c0_i32, %c0_i32_0 : i32, i32
  }
  func.func @transform_4(%arg0: i32) -> (i32, i32) {
    %c0_i32 = arith.constant 0 : i32
    %c0_i32_0 = arith.constant 0 : i32
    %c0_i32_1 = arith.constant 0 : i32
    return %c0_i32, %c0_i32_0 : i32, i32
  }
  func.func @transform_5(%arg0: i32) -> (i32, i32, i32) {
    %c0_i32 = arith.constant 0 : i32
    %c0_i32_0 = arith.constant 0 : i32
    %c0_i32_1 = arith.constant 0 : i32
    %c0_i32_2 = arith.constant 0 : i32
    return %c0_i32, %c0_i32_0, %c0_i32_1 : i32, i32, i32
  }
  func.func @transform_6(%arg0: i32) -> (i32, i32) {
    %c0_i32 = arith.constant 0 : i32
    %c0_i32_0 = arith.constant 0 : i32
    %c0_i32_1 = arith.constant 0 : i32
    return %c0_i32, %c0_i32_0 : i32, i32
  }
  func.func @transform_7(%arg0: i32) -> (i32, i32) {
    %c0_i32 = arith.constant 0 : i32
    %c0_i32_0 = arith.constant 0 : i32
    %c0_i32_1 = arith.constant 0 : i32
    return %c0_i32, %c0_i32_0 : i32, i32
  }
  func.func @transform_8(%arg0: i32) -> (i32, i32, i32) {
    %c0_i32 = arith.constant 0 : i32
    %c0_i32_0 = arith.constant 0 : i32
    %c0_i32_1 = arith.constant 0 : i32
    %c0_i32_2 = arith.constant 0 : i32
    return %c0_i32, %c0_i32_0, %c0_i32_1 : i32, i32, i32
  }
  func.func @transform_9(%arg0: i32) -> (i32, i32) {
    %c0_i32 = arith.constant 0 : i32
    %c0_i32_0 = arith.constant 0 : i32
    %c0_i32_1 = arith.constant 0 : i32
    return %c0_i32, %c0_i32_0 : i32, i32
  }
  func.func @transform_10(%arg0: i32) -> (i32, i32, i32) {
    %c0_i32 = arith.constant 0 : i32
    %c0_i32_0 = arith.constant 0 : i32
    %c0_i32_1 = arith.constant 0 : i32
    %c0_i32_2 = arith.constant 0 : i32
    return %c0_i32, %c0_i32_0, %c0_i32_1 : i32, i32, i32
  }
  func.func @transform_11(%arg0: i32) -> (i32, i32) {
    %c0_i32 = arith.constant 0 : i32
    %c0_i32_0 = arith.constant 0 : i32
    %c0_i32_1 = arith.constant 0 : i32
    return %c0_i32, %c0_i32_0 : i32, i32
  }
  func.func @transform_12(%arg0: i32) -> (i32, i32, i32) {
    %c0_i32 = arith.constant 0 : i32
    %c0_i32_0 = arith.constant 0 : i32
    %c0_i32_1 = arith.constant 0 : i32
    %c0_i32_2 = arith.constant 0 : i32
    return %c0_i32, %c0_i32_0, %c0_i32_1 : i32, i32, i32
  }
  func.func @transform_13(%arg0: i32) -> (i32, i32) {
    %c0_i32 = arith.constant 0 : i32
    %c0_i32_0 = arith.constant 0 : i32
    %c0_i32_1 = arith.constant 0 : i32
    return %c0_i32, %c0_i32_0 : i32, i32
  }
  func.func @transform_14(%arg0: i32) -> (i32, i32, i32) {
    %c0_i32 = arith.constant 0 : i32
    %c0_i32_0 = arith.constant 0 : i32
    %c0_i32_1 = arith.constant 0 : i32
    %c0_i32_2 = arith.constant 0 : i32
    return %c0_i32, %c0_i32_0, %c0_i32_1 : i32, i32, i32
  }
  func.func @transform_15(%arg0: i32) -> (i32, i32) {
    %c0_i32 = arith.constant 0 : i32
    %c0_i32_0 = arith.constant 0 : i32
    %c0_i32_1 = arith.constant 0 : i32
    return %c0_i32, %c0_i32_0 : i32, i32
  }
  func.func @transform_16(%arg0: i32) -> (i32, i32) {
    %c0_i32 = arith.constant 0 : i32
    %c0_i32_0 = arith.constant 0 : i32
    %c0_i32_1 = arith.constant 0 : i32
    return %c0_i32, %c0_i32_0 : i32, i32
  }
  func.func @transform_17(%arg0: i32) -> (i32, i32) {
    %c0_i32 = arith.constant 0 : i32
    %c0_i32_0 = arith.constant 0 : i32
    %c0_i32_1 = arith.constant 0 : i32
    return %c0_i32, %c0_i32_0 : i32, i32
  }
  func.func @transform_18(%arg0: i32) -> i32 {
    %c0_i32 = arith.constant 0 : i32
    %c0_i32_0 = arith.constant 0 : i32
    return %c0_i32 : i32
  }
  func.func @transform_19(%arg0: i32) -> i32 {
    %c0_i32 = arith.constant 0 : i32
    %c0_i32_0 = arith.constant 0 : i32
    return %c0_i32 : i32
  }
  func.func @transform_20(%arg0: i32) -> (i32, i32, i32) {
    %c0_i32 = arith.constant 0 : i32
    %c0_i32_0 = arith.constant 0 : i32
    %c0_i32_1 = arith.constant 0 : i32
    %c0_i32_2 = arith.constant 0 : i32
    return %c0_i32, %c0_i32_0, %c0_i32_1 : i32, i32, i32
  }
  func.func @transform_21(%arg0: i32) -> (i32, i32) {
    %c0_i32 = arith.constant 0 : i32
    %c0_i32_0 = arith.constant 0 : i32
    %c0_i32_1 = arith.constant 0 : i32
    return %c0_i32, %c0_i32_0 : i32, i32
  }
  func.func @transform_22(%arg0: i32) -> (i32, i32) {
    %c0_i32 = arith.constant 0 : i32
    %c0_i32_0 = arith.constant 0 : i32
    %c0_i32_1 = arith.constant 0 : i32
    return %c0_i32, %c0_i32_0 : i32, i32
  }
  func.func @transform_23(%arg0: i32) -> (i32, i32, i32) {
    %c0_i32 = arith.constant 0 : i32
    %c0_i32_0 = arith.constant 0 : i32
    %c0_i32_1 = arith.constant 0 : i32
    %c0_i32_2 = arith.constant 0 : i32
    return %c0_i32, %c0_i32_0, %c0_i32_1 : i32, i32, i32
  }
  func.func @transform_24(%arg0: i32) -> (i32, i32, i32) {
    %c0_i32 = arith.constant 0 : i32
    %c0_i32_0 = arith.constant 0 : i32
    %c0_i32_1 = arith.constant 0 : i32
    return %arg0, %c0_i32, %c0_i32_0 : i32, i32, i32
  }
  func.func @transform_25(%arg0: i32) -> (i32, i32, i32) {
    %c0_i32 = arith.constant 0 : i32
    %c0_i32_0 = arith.constant 0 : i32
    %c0_i32_1 = arith.constant 0 : i32
    return %arg0, %c0_i32, %c0_i32_0 : i32, i32, i32
  }
  func.func @transform_26(%arg0: i32) -> (i32, i32, i32) {
    %c0_i32 = arith.constant 0 : i32
    %c0_i32_0 = arith.constant 0 : i32
    %c0_i32_1 = arith.constant 0 : i32
    return %arg0, %c0_i32, %c0_i32_0 : i32, i32, i32
  }
}

</mosaic_0001>

<llo_original>
// kernel: cdg_attention_forward.1
$region0: #{cdg_attention_forward.1}
  #allocation0 [shape = 'u32[]', space=smem, size = 0x4, offset = 0x4, fixed_abs, tag = 'smem constant byte address 0x4 - core index']
  #allocation1 [shape = 'u32[144,128]{1,0:T(1,128)}', space=vmem, size = 0x12000, scoped, tag = 'internal scratch']
  #allocation2 [shape = 'f32[32,32]{1,0:T(8,128)}', space=vmem, size = 0x4000, scoped, tag = 'scratch operand']
  #allocation3 [shape = 'f32[32,32]{1,0:T(8,128)}', space=vmem, size = 0x4000, scoped, tag = 'scratch operand']
  #allocation4 [shape = 'f32[16,32]{1,0:T(8,128)}', space=vmem, size = 0x2000, scoped, tag = 'scratch operand']
  #allocation5 [shape = 'f32[16,32]{1,0:T(8,128)}', space=vmem, size = 0x2000, scoped, tag = 'scratch operand']
  #allocation6 [shape = 'f32[96,512]{1,0:T(8,128)}', space=vmem, size = 0x30000, scoped, tag = 'scratch operand']
  #allocation7 [shape = 'f32[1]{0:T(128)S(6)}', space=smem, size = 0x200, scoped, tag = 'scoped memory for cdg_attention_forward.1']
  #allocation8 [shape = 'f32[1]{0:T(128)S(6)}', space=smem, size = 0x200, scoped, tag = 'scoped memory for cdg_attention_forward.1']
  %s0 = inlined_call_operand.vmem [shape: f32[2,32,256], index: 0, kind: input, shape index: {}]
  %s1 = inlined_call_operand.vmem [shape: f32[256,32], index: 1, kind: input, shape index: {}]
  %s2 = inlined_call_operand.vmem [shape: f32[3,16,32], index: 2, kind: input, shape index: {}]
  %s3 = inlined_call_operand.vmem [shape: f32[16,1], index: 3, kind: input, shape index: {}]
  %s4 = inlined_call_operand.vmem [shape: f32[16,1], index: 4, kind: input, shape index: {}]
  %s5 = inlined_call_operand.vmem [shape: f32[3,16,32], index: 5, kind: input, shape index: {}]
  %s6 = inlined_call_operand.vmem [shape: f32[16,1], index: 6, kind: input, shape index: {}]
  %s7 = inlined_call_operand.vmem [shape: f32[16,1], index: 7, kind: input, shape index: {}]
  %s8 = inlined_call_operand.vmem [shape: f32[3,8,16], index: 8, kind: input, shape index: {}]
  %s9 = inlined_call_operand.vmem [shape: f32[8,1], index: 9, kind: input, shape index: {}]
  %s10 = inlined_call_operand.vmem [shape: f32[3,8,16], index: 10, kind: input, shape index: {}]
  %s11 = inlined_call_operand.vmem [shape: f32[8,1], index: 11, kind: input, shape index: {}]
  %s12 = inlined_call_operand.vmem [shape: f32[7,32,16], index: 12, kind: input, shape index: {}]
  %s13 = inlined_call_operand.vmem [shape: f32[32,1], index: 13, kind: input, shape index: {}]
  %s14 = inlined_call_operand.vmem [shape: f32[7,32,16], index: 14, kind: input, shape index: {}]
  %s15 = inlined_call_operand.vmem [shape: f32[32,1], index: 15, kind: input, shape index: {}]
  %s16 = inlined_call_operand.vmem [shape: f32[16,256], index: 16, kind: input, shape index: {}]
  %s17 = inlined_call_operand.vmem [shape: f32[16,256], index: 17, kind: input, shape index: {}]
  %s18 = inlined_call_operand.<no memory space> [shape: f32[1], index: 18, kind: input, shape index: {}]
  %s19 = inlined_call_operand.<no memory space> [shape: f32[1], index: 19, kind: input, shape index: {}]
  %s20 = inlined_call_operand.vmem [shape: f32[9,32,96], index: 20, kind: input, shape index: {}]
  %s21 = inlined_call_operand.vmem [shape: f32[32,1], index: 21, kind: input, shape index: {}]
  %s22 = inlined_call_operand.vmem [shape: f32[32,1], index: 22, kind: input, shape index: {}]
  %s23 = inlined_call_operand.vmem [shape: f32[9,1,256], index: 23, kind: input, shape index: {}]
  %s24 = inlined_call_operand.vmem [shape: f32[2,32,256], index: 24, kind: output, shape index: {0}]
  %s25 = inlined_call_operand.hbm [shape: f32[2,8,16], index: 25, kind: output, shape index: {1}]
  %s26 = inlined_call_operand.hbm [shape: f32[2,8,16], index: 26, kind: output, shape index: {2}]
  %27 = xla_tuple %s24, %s25, %s26
  %s28 = sld [smem:[#allocation0]]
  $region145: #{cdg_attention_forward.1} parent=0
    _
  %s30 = ssub.s32 1, %s28
  %s31 = scalar_select 0, %s30, %s28
  %32 = sst [smem:[#allocation7]] %s18
  %33 = sst [smem:[#allocation8]] %s19
  $region1: #{cdg_attention_forward.1} parent=0
    #allocation9 [shape = 'u8[8192]{0}', space=vmem, size = 0x2000, scoped, tag = 'output window, operand 1']
    #allocation10 [shape = 's32[2]{0}', space=sflag, size = 0x8, scoped, tag = 'scoped memory for cdg_attention_forward.1']
    #allocation11 [shape = 'u8[8192]{0}', space=vmem, size = 0x2000, scoped, tag = 'output window, operand 2']
    #allocation12 [shape = 's32[2]{0}', space=sflag, size = 0x8, scoped, tag = 'scoped memory for cdg_attention_forward.1']
    %34 = vsyncpa [#allocation10], 0
    %s35 = scalar_lea.sflag [#allocation10], 1
    %36 = vsyncpa %s35, 0
    %37 = vsyncpa [#allocation12], 0
    %s38 = scalar_lea.sflag [#allocation12], 1
    %39 = vsyncpa %s38, 0
    loop: start=0, step=1, limit=4
    $region2: #{cdg_attention_forward.1} parent=1 // loop_pre_header
      _
    $region3: #{cdg_attention_forward.1} parent=1 // loop_header
      %s41 = sphi 0, %s45
      %p42 = scmp.ge.s32.totalorder %s41, 4
      %s51 = sphi 0, %s53
      %s54 = sphi 0, %s51
      %s55 = sphi 0, %s54
      %s71 = sphi 0, %s55
      %s75 = sphi 0, %s75
      %s77 = sphi 0, %s75
      %s78 = sphi 0, %s77
      %s92 = sphi 0, %s78
      %s96 = sphi 0, %s96
      %s98 = sphi 0, %s96
      %s99 = sphi 0, %s98
      %s113 = sphi 0, %s99
      %s117 = sphi 0, %s117
      %s119 = sphi 0, %s117
      %s120 = sphi 0, %s119
      %s134 = sphi 0, %s120
      %s138 = sphi 0, %s138
      %s140 = sphi 0, %s138
      %s141 = sphi 0, %s140
      %s155 = sphi 0, %s141
      %s159 = sphi 0, %s159
      %s161 = sphi 0, %s159
      %s162 = sphi 0, %s161
      %s176 = sphi 0, %s162
      %s180 = sphi 0, %s180
      %s182 = sphi 0, %s180
      %s183 = sphi 0, %s182
      %s197 = sphi 0, %s183
      %s201 = sphi 0, %s201
      %s203 = sphi 0, %s201
      %s204 = sphi 0, %s203
      %s218 = sphi 0, %s204
      %s222 = sphi 0, %s222
      %s224 = sphi 0, %s222
      %s225 = sphi 0, %s224
      %s239 = sphi 0, %s225
      %s243 = sphi 0, %s243
      %s245 = sphi 0, %s243
      %s246 = sphi 0, %s245
      %s260 = sphi 0, %s246
      %s264 = sphi 0, %s264
      %s266 = sphi 0, %s264
      %s267 = sphi 0, %s266
      %s281 = sphi 0, %s267
      %s285 = sphi 0, %s285
      %s287 = sphi 0, %s285
      %s288 = sphi 0, %s287
      %s302 = sphi 0, %s288
      %s306 = sphi 0, %s306
      %s308 = sphi 0, %s306
      %s309 = sphi 0, %s308
      %s323 = sphi 0, %s309
      %s327 = sphi 0, %s327
      %s329 = sphi 0, %s327
      %s330 = sphi 0, %s329
      %s344 = sphi 0, %s330
      %s348 = sphi 0, %s348
      %s350 = sphi 0, %s348
      %s351 = sphi 0, %s350
      %s365 = sphi 0, %s351
      %s369 = sphi 0, %s369
      %s371 = sphi 0, %s369
      %s372 = sphi 0, %s371
      %s386 = sphi 0, %s372
      %s390 = sphi 0, %s390
      %s392 = sphi 0, %s390
      %s393 = sphi 0, %s392
      %s407 = sphi 0, %s393
      %s411 = sphi 0, %s411
      %s413 = sphi 0, %s411
      %s414 = sphi 0, %s413
      %s428 = sphi 0, %s414
      %s432 = sphi 0, %s432
      %s434 = sphi 0, %s432
      %s435 = sphi 0, %s434
      %s449 = sphi 0, %s435
      %s453 = sphi 0, %s453
      %s455 = sphi 0, %s453
      %s456 = sphi 0, %s455
      %s470 = sphi 0, %s456
      %s474 = sphi 0, %s474
      %s476 = sphi 0, %s474
      %s477 = sphi 0, %s476
      %s491 = sphi 0, %s477
      %s495 = sphi 0, %s495
      %s497 = sphi 0, %s495
      %s498 = sphi 0, %s497
      %s512 = sphi 0, %s498
      %s516 = sphi 0, %s516
      %s518 = sphi 0, %s516
      %s519 = sphi 0, %s518
      %s533 = sphi 0, %s519
      %s537 = sphi 0, %s537
      %s539 = sphi 0, %s537
      %s540 = sphi 0, %s539
      %s554 = sphi 0, %s540
      %s560 = sphi 0, %s562
      %s563 = sphi 0, %s560
      %s564 = sphi 0, %s563
      %s580 = sphi 0, %s564
      %s586 = sphi 0, %s588
      %s589 = sphi 0, %s586
      %s590 = sphi 0, %s589
      %s606 = sphi 0, %s590
      %s612 = sphi 0, %s614
      %s615 = sphi 0, %s612
      %s616 = sphi 0, %s615
      %s632 = sphi 0, %s616
    $region4: #{cdg_attention_forward.1} parent=1 // loop_header_branch
      %44 = sbr.rel (%p42) target = $region8
    $region5: #{cdg_attention_forward.1} parent=1 // loop_body
      %s46 = ssub.s32 %s41, 1
      %s47 = ssub.s32 %s41, 2
      %s48 = sadd.s32 %s41, 1
      %s49 = ssub.s32 %s41, %s48
      %p50 = scmp.eq.s32.totalorder %s49, 0
      %s52 = sadd.s32 %s51, 1
      %s53 = scalar_select %p50, %s51, %s52
      %p56 = pneg %p50
      %p57 = scmp.eq.s32.totalorder %s41, 1
      %p58 = por %p56, %p57
      %p59 = scmp.ne.s32.totalorder %s51, %s54
      %p60 = scmp.eq.s32.totalorder %s41, 0
      %p61 = por %p59, %p60
      %p62 = scmp.ne.s32.totalorder %s51, %s54
      %p63 = scmp.eq.s32.totalorder %s46, 1
      %p64 = por %p62, %p63
      %p65 = scmp.ne.s32.totalorder %s54, %s55
      %p66 = scmp.eq.s32.totalorder %s46, 0
      %p67 = por %p65, %p66
      %p68 = scmp.ne.s32.totalorder %s54, %s55
      %p69 = scmp.eq.s32.totalorder %s47, 1
      %p70 = por %p68, %p69
      %p72 = scmp.ne.s32.totalorder %s55, %s71
      %p73 = scmp.eq.s32.totalorder %s47, 0
      %p74 = por %p72, %p73
      %s76 = sadd.s32 %s75, 1
      %p79 = scmp.eq.s32.totalorder %s41, 1
      %p80 = scmp.ne.s32.totalorder %s75, %s77
      %p81 = scmp.eq.s32.totalorder %s41, 0
      %p82 = por %p80, %p81
      %p83 = scmp.ne.s32.totalorder %s75, %s77
      %p84 = scmp.eq.s32.totalorder %s46, 1
      %p85 = por %p83, %p84
      %p86 = scmp.ne.s32.totalorder %s77, %s78
      %p87 = scmp.eq.s32.totalorder %s46, 0
      %p88 = por %p86, %p87
      %p89 = scmp.ne.s32.totalorder %s77, %s78
      %p90 = scmp.eq.s32.totalorder %s47, 1
      %p91 = por %p89, %p90
      %p93 = scmp.ne.s32.totalorder %s78, %s92
      %p94 = scmp.eq.s32.totalorder %s47, 0
      %p95 = por %p93, %p94
      %s97 = sadd.s32 %s96, 1
      %p100 = scmp.eq.s32.totalorder %s41, 1
      %p101 = scmp.ne.s32.totalorder %s96, %s98
      %p102 = scmp.eq.s32.totalorder %s41, 0
      %p103 = por %p101, %p102
      %p104 = scmp.ne.s32.totalorder %s96, %s98
      %p105 = scmp.eq.s32.totalorder %s46, 1
      %p106 = por %p104, %p105
      %p107 = scmp.ne.s32.totalorder %s98, %s99
      %p108 = scmp.eq.s32.totalorder %s46, 0
      %p109 = por %p107, %p108
      %p110 = scmp.ne.s32.totalorder %s98, %s99
      %p111 = scmp.eq.s32.totalorder %s47, 1
      %p112 = por %p110, %p111
      %p114 = scmp.ne.s32.totalorder %s99, %s113
      %p115 = scmp.eq.s32.totalorder %s47, 0
      %p116 = por %p114, %p115
      %s118 = sadd.s32 %s117, 1
      %p121 = scmp.eq.s32.totalorder %s41, 1
      %p122 = scmp.ne.s32.totalorder %s117, %s119
      %p123 = scmp.eq.s32.totalorder %s41, 0
      %p124 = por %p122, %p123
      %p125 = scmp.ne.s32.totalorder %s117, %s119
      %p126 = scmp.eq.s32.totalorder %s46, 1
      %p127 = por %p125, %p126
      %p128 = scmp.ne.s32.totalorder %s119, %s120
      %p129 = scmp.eq.s32.totalorder %s46, 0
      %p130 = por %p128, %p129
      %p131 = scmp.ne.s32.totalorder %s119, %s120
      %p132 = scmp.eq.s32.totalorder %s47, 1
      %p133 = por %p131, %p132
      %p135 = scmp.ne.s32.totalorder %s120, %s134
      %p136 = scmp.eq.s32.totalorder %s47, 0
      %p137 = por %p135, %p136
      %s139 = sadd.s32 %s138, 1
      %p142 = scmp.eq.s32.totalorder %s41, 1
      %p143 = scmp.ne.s32.totalorder %s138, %s140
      %p144 = scmp.eq.s32.totalorder %s41, 0
      %p145 = por %p143, %p144
      %p146 = scmp.ne.s32.totalorder %s138, %s140
      %p147 = scmp.eq.s32.totalorder %s46, 1
      %p148 = por %p146, %p147
      %p149 = scmp.ne.s32.totalorder %s140, %s141
      %p150 = scmp.eq.s32.totalorder %s46, 0
      %p151 = por %p149, %p150
      %p152 = scmp.ne.s32.totalorder %s140, %s141
      %p153 = scmp.eq.s32.totalorder %s47, 1
      %p154 = por %p152, %p153
      %p156 = scmp.ne.s32.totalorder %s141, %s155
      %p157 = scmp.eq.s32.totalorder %s47, 0
      %p158 = por %p156, %p157
      %s160 = sadd.s32 %s159, 1
      %p163 = scmp.eq.s32.totalorder %s41, 1
      %p164 = scmp.ne.s32.totalorder %s159, %s161
      %p165 = scmp.eq.s32.totalorder %s41, 0
      %p166 = por %p164, %p165
      %p167 = scmp.ne.s32.totalorder %s159, %s161
      %p168 = scmp.eq.s32.totalorder %s46, 1
      %p169 = por %p167, %p168
      %p170 = scmp.ne.s32.totalorder %s161, %s162
      %p171 = scmp.eq.s32.totalorder %s46, 0
      %p172 = por %p170, %p171
      %p173 = scmp.ne.s32.totalorder %s161, %s162
      %p174 = scmp.eq.s32.totalorder %s47, 1
      %p175 = por %p173, %p174
      %p177 = scmp.ne.s32.totalorder %s162, %s176
      %p178 = scmp.eq.s32.totalorder %s47, 0
      %p179 = por %p177, %p178
      %s181 = sadd.s32 %s180, 1
      %p184 = scmp.eq.s32.totalorder %s41, 1
      %p185 = scmp.ne.s32.totalorder %s180, %s182
      %p186 = scmp.eq.s32.totalorder %s41, 0
      %p187 = por %p185, %p186
      %p188 = scmp.ne.s32.totalorder %s180, %s182
      %p189 = scmp.eq.s32.totalorder %s46, 1
      %p190 = por %p188, %p189
      %p191 = scmp.ne.s32.totalorder %s182, %s183
      %p192 = scmp.eq.s32.totalorder %s46, 0
      %p193 = por %p191, %p192
      %p194 = scmp.ne.s32.totalorder %s182, %s183
      %p195 = scmp.eq.s32.totalorder %s47, 1
      %p196 = por %p194, %p195
      %p198 = scmp.ne.s32.totalorder %s183, %s197
      %p199 = scmp.eq.s32.totalorder %s47, 0
      %p200 = por %p198, %p199
      %s202 = sadd.s32 %s201, 1
      %p205 = scmp.eq.s32.totalorder %s41, 1
      %p206 = scmp.ne.s32.totalorder %s201, %s203
      %p207 = scmp.eq.s32.totalorder %s41, 0
      %p208 = por %p206, %p207
      %p209 = scmp.ne.s32.totalorder %s201, %s203
      %p210 = scmp.eq.s32.totalorder %s46, 1
      %p211 = por %p209, %p210
      %p212 = scmp.ne.s32.totalorder %s203, %s204
      %p213 = scmp.eq.s32.totalorder %s46, 0
      %p214 = por %p212, %p213
      %p215 = scmp.ne.s32.totalorder %s203, %s204
      %p216 = scmp.eq.s32.totalorder %s47, 1
      %p217 = por %p215, %p216
      %p219 = scmp.ne.s32.totalorder %s204, %s218
      %p220 = scmp.eq.s32.totalorder %s47, 0
      %p221 = por %p219, %p220
      %s223 = sadd.s32 %s222, 1
      %p226 = scmp.eq.s32.totalorder %s41, 1
      %p227 = scmp.ne.s32.totalorder %s222, %s224
      %p228 = scmp.eq.s32.totalorder %s41, 0
      %p229 = por %p227, %p228
      %p230 = scmp.ne.s32.totalorder %s222, %s224
      %p231 = scmp.eq.s32.totalorder %s46, 1
      %p232 = por %p230, %p231
      %p233 = scmp.ne.s32.totalorder %s224, %s225
      %p234 = scmp.eq.s32.totalorder %s46, 0
      %p235 = por %p233, %p234
      %p236 = scmp.ne.s32.totalorder %s224, %s225
      %p237 = scmp.eq.s32.totalorder %s47, 1
      %p238 = por %p236, %p237
      %p240 = scmp.ne.s32.totalorder %s225, %s239
      %p241 = scmp.eq.s32.totalorder %s47, 0
      %p242 = por %p240, %p241
      %s244 = sadd.s32 %s243, 1
      %p247 = scmp.eq.s32.totalorder %s41, 1
      %p248 = scmp.ne.s32.totalorder %s243, %s245
      %p249 = scmp.eq.s32.totalorder %s41, 0
      %p250 = por %p248, %p249
      %p251 = scmp.ne.s32.totalorder %s243, %s245
      %p252 = scmp.eq.s32.totalorder %s46, 1
      %p253 = por %p251, %p252
      %p254 = scmp.ne.s32.totalorder %s245, %s246
      %p255 = scmp.eq.s32.totalorder %s46, 0
      %p256 = por %p254, %p255
      %p257 = scmp.ne.s32.totalorder %s245, %s246
      %p258 = scmp.eq.s32.totalorder %s47, 1
      %p259 = por %p257, %p258
      %p261 = scmp.ne.s32.totalorder %s246, %s260
      %p262 = scmp.eq.s32.totalorder %s47, 0
      %p263 = por %p261, %p262
      %s265 = sadd.s32 %s264, 1
      %p268 = scmp.eq.s32.totalorder %s41, 1
      %p269 = scmp.ne.s32.totalorder %s264, %s266
      %p270 = scmp.eq.s32.totalorder %s41, 0
      %p271 = por %p269, %p270
      %p272 = scmp.ne.s32.totalorder %s264, %s266
      %p273 = scmp.eq.s32.totalorder %s46, 1
      %p274 = por %p272, %p273
      %p275 = scmp.ne.s32.totalorder %s266, %s267
      %p276 = scmp.eq.s32.totalorder %s46, 0
      %p277 = por %p275, %p276
      %p278 = scmp.ne.s32.totalorder %s266, %s267
      %p279 = scmp.eq.s32.totalorder %s47, 1
      %p280 = por %p278, %p279
      %p282 = scmp.ne.s32.totalorder %s267, %s281
      %p283 = scmp.eq.s32.totalorder %s47, 0
      %p284 = por %p282, %p283
      %s286 = sadd.s32 %s285, 1
      %p289 = scmp.eq.s32.totalorder %s41, 1
      %p290 = scmp.ne.s32.totalorder %s285, %s287
      %p291 = scmp.eq.s32.totalorder %s41, 0
      %p292 = por %p290, %p291
      %p293 = scmp.ne.s32.totalorder %s285, %s287
      %p294 = scmp.eq.s32.totalorder %s46, 1
      %p295 = por %p293, %p294
      %p296 = scmp.ne.s32.totalorder %s287, %s288
      %p297 = scmp.eq.s32.totalorder %s46, 0
      %p298 = por %p296, %p297
      %p299 = scmp.ne.s32.totalorder %s287, %s288
      %p300 = scmp.eq.s32.totalorder %s47, 1
      %p301 = por %p299, %p300
      %p303 = scmp.ne.s32.totalorder %s288, %s302
      %p304 = scmp.eq.s32.totalorder %s47, 0
      %p305 = por %p303, %p304
      %s307 = sadd.s32 %s306, 1
      %p310 = scmp.eq.s32.totalorder %s41, 1
      %p311 = scmp.ne.s32.totalorder %s306, %s308
      %p312 = scmp.eq.s32.totalorder %s41, 0
      %p313 = por %p311, %p312
      %p314 = scmp.ne.s32.totalorder %s306, %s308
      %p315 = scmp.eq.s32.totalorder %s46, 1
      %p316 = por %p314, %p315
      %p317 = scmp.ne.s32.totalorder %s308, %s309
      %p318 = scmp.eq.s32.totalorder %s46, 0
      %p319 = por %p317, %p318
      %p320 = scmp.ne.s32.totalorder %s308, %s309
      %p321 = scmp.eq.s32.totalorder %s47, 1
      %p322 = por %p320, %p321
      %p324 = scmp.ne.s32.totalorder %s309, %s323
      %p325 = scmp.eq.s32.totalorder %s47, 0
      %p326 = por %p324, %p325
      %s328 = sadd.s32 %s327, 1
      %p331 = scmp.eq.s32.totalorder %s41, 1
      %p332 = scmp.ne.s32.totalorder %s327, %s329
      %p333 = scmp.eq.s32.totalorder %s41, 0
      %p334 = por %p332, %p333
      %p335 = scmp.ne.s32.totalorder %s327, %s329
      %p336 = scmp.eq.s32.totalorder %s46, 1
      %p337 = por %p335, %p336
      %p338 = scmp.ne.s32.totalorder %s329, %s330
      %p339 = scmp.eq.s32.totalorder %s46, 0
      %p340 = por %p338, %p339
      %p341 = scmp.ne.s32.totalorder %s329, %s330
      %p342 = scmp.eq.s32.totalorder %s47, 1
      %p343 = por %p341, %p342
      %p345 = scmp.ne.s32.totalorder %s330, %s344
      %p346 = scmp.eq.s32.totalorder %s47, 0
      %p347 = por %p345, %p346
      %s349 = sadd.s32 %s348, 1
      %p352 = scmp.eq.s32.totalorder %s41, 1
      %p353 = scmp.ne.s32.totalorder %s348, %s350
      %p354 = scmp.eq.s32.totalorder %s41, 0
      %p355 = por %p353, %p354
      %p356 = scmp.ne.s32.totalorder %s348, %s350
      %p357 = scmp.eq.s32.totalorder %s46, 1
      %p358 = por %p356, %p357
      %p359 = scmp.ne.s32.totalorder %s350, %s351
      %p360 = scmp.eq.s32.totalorder %s46, 0
      %p361 = por %p359, %p360
      %p362 = scmp.ne.s32.totalorder %s350, %s351
      %p363 = scmp.eq.s32.totalorder %s47, 1
      %p364 = por %p362, %p363
      %p366 = scmp.ne.s32.totalorder %s351, %s365
      %p367 = scmp.eq.s32.totalorder %s47, 0
      %p368 = por %p366, %p367
      %s370 = sadd.s32 %s369, 1
      %p373 = scmp.eq.s32.totalorder %s41, 1
      %p374 = scmp.ne.s32.totalorder %s369, %s371
      %p375 = scmp.eq.s32.totalorder %s41, 0
      %p376 = por %p374, %p375
      %p377 = scmp.ne.s32.totalorder %s369, %s371
      %p378 = scmp.eq.s32.totalorder %s46, 1
      %p379 = por %p377, %p378
      %p380 = scmp.ne.s32.totalorder %s371, %s372
      %p381 = scmp.eq.s32.totalorder %s46, 0
      %p382 = por %p380, %p381
      %p383 = scmp.ne.s32.totalorder %s371, %s372
      %p384 = scmp.eq.s32.totalorder %s47, 1
      %p385 = por %p383, %p384
      %p387 = scmp.ne.s32.totalorder %s372, %s386
      %p388 = scmp.eq.s32.totalorder %s47, 0
      %p389 = por %p387, %p388
      %s391 = sadd.s32 %s390, 1
      %p394 = scmp.eq.s32.totalorder %s41, 1
      %p395 = scmp.ne.s32.totalorder %s390, %s392
      %p396 = scmp.eq.s32.totalorder %s41, 0
      %p397 = por %p395, %p396
      %p398 = scmp.ne.s32.totalorder %s390, %s392
      %p399 = scmp.eq.s32.totalorder %s46, 1
      %p400 = por %p398, %p399
      %p401 = scmp.ne.s32.totalorder %s392, %s393
      %p402 = scmp.eq.s32.totalorder %s46, 0
      %p403 = por %p401, %p402
      %p404 = scmp.ne.s32.totalorder %s392, %s393
      %p405 = scmp.eq.s32.totalorder %s47, 1
      %p406 = por %p404, %p405
      %p408 = scmp.ne.s32.totalorder %s393, %s407
      %p409 = scmp.eq.s32.totalorder %s47, 0
      %p410 = por %p408, %p409
      %s412 = sadd.s32 %s411, 1
      %p415 = scmp.eq.s32.totalorder %s41, 1
      %p416 = scmp.ne.s32.totalorder %s411, %s413
      %p417 = scmp.eq.s32.totalorder %s41, 0
      %p418 = por %p416, %p417
      %p419 = scmp.ne.s32.totalorder %s411, %s413
      %p420 = scmp.eq.s32.totalorder %s46, 1
      %p421 = por %p419, %p420
      %p422 = scmp.ne.s32.totalorder %s413, %s414
      %p423 = scmp.eq.s32.totalorder %s46, 0
      %p424 = por %p422, %p423
      %p425 = scmp.ne.s32.totalorder %s413, %s414
      %p426 = scmp.eq.s32.totalorder %s47, 1
      %p427 = por %p425, %p426
      %p429 = scmp.ne.s32.totalorder %s414, %s428
      %p430 = scmp.eq.s32.totalorder %s47, 0
      %p431 = por %p429, %p430
      %s433 = sadd.s32 %s432, 1
      %p436 = scmp.eq.s32.totalorder %s41, 1
      %p437 = scmp.ne.s32.totalorder %s432, %s434
      %p438 = scmp.eq.s32.totalorder %s41, 0
      %p439 = por %p437, %p438
      %p440 = scmp.ne.s32.totalorder %s432, %s434
      %p441 = scmp.eq.s32.totalorder %s46, 1
      %p442 = por %p440, %p441
      %p443 = scmp.ne.s32.totalorder %s434, %s435
      %p444 = scmp.eq.s32.totalorder %s46, 0
      %p445 = por %p443, %p444
      %p446 = scmp.ne.s32.totalorder %s434, %s435
      %p447 = scmp.eq.s32.totalorder %s47, 1
      %p448 = por %p446, %p447
      %p450 = scmp.ne.s32.totalorder %s435, %s449
      %p451 = scmp.eq.s32.totalorder %s47, 0
      %p452 = por %p450, %p451
      %s454 = sadd.s32 %s453, 1
      %p457 = scmp.eq.s32.totalorder %s41, 1
      %p458 = scmp.ne.s32.totalorder %s453, %s455
      %p459 = scmp.eq.s32.totalorder %s41, 0
      %p460 = por %p458, %p459
      %p461 = scmp.ne.s32.totalorder %s453, %s455
      %p462 = scmp.eq.s32.totalorder %s46, 1
      %p463 = por %p461, %p462
      %p464 = scmp.ne.s32.totalorder %s455, %s456
      %p465 = scmp.eq.s32.totalorder %s46, 0
      %p466 = por %p464, %p465
      %p467 = scmp.ne.s32.totalorder %s455, %s456
      %p468 = scmp.eq.s32.totalorder %s47, 1
      %p469 = por %p467, %p468
      %p471 = scmp.ne.s32.totalorder %s456, %s470
      %p472 = scmp.eq.s32.totalorder %s47, 0
      %p473 = por %p471, %p472
      %s475 = sadd.s32 %s474, 1
      %p478 = scmp.eq.s32.totalorder %s41, 1
      %p479 = scmp.ne.s32.totalorder %s474, %s476
      %p480 = scmp.eq.s32.totalorder %s41, 0
      %p481 = por %p479, %p480
      %p482 = scmp.ne.s32.totalorder %s474, %s476
      %p483 = scmp.eq.s32.totalorder %s46, 1
      %p484 = por %p482, %p483
      %p485 = scmp.ne.s32.totalorder %s476, %s477
      %p486 = scmp.eq.s32.totalorder %s46, 0
      %p487 = por %p485, %p486
      %p488 = scmp.ne.s32.totalorder %s476, %s477
      %p489 = scmp.eq.s32.totalorder %s47, 1
      %p490 = por %p488, %p489
      %p492 = scmp.ne.s32.totalorder %s477, %s491
      %p493 = scmp.eq.s32.totalorder %s47, 0
      %p494 = por %p492, %p493
      %s496 = sadd.s32 %s495, 1
      %p499 = scmp.eq.s32.totalorder %s41, 1
      %p500 = scmp.ne.s32.totalorder %s495, %s497
      %p501 = scmp.eq.s32.totalorder %s41, 0
      %p502 = por %p500, %p501
      %p503 = scmp.ne.s32.totalorder %s495, %s497
      %p504 = scmp.eq.s32.totalorder %s46, 1
      %p505 = por %p503, %p504
      %p506 = scmp.ne.s32.totalorder %s497, %s498
      %p507 = scmp.eq.s32.totalorder %s46, 0
      %p508 = por %p506, %p507
      %p509 = scmp.ne.s32.totalorder %s497, %s498
      %p510 = scmp.eq.s32.totalorder %s47, 1
      %p511 = por %p509, %p510
      %p513 = scmp.ne.s32.totalorder %s498, %s512
      %p514 = scmp.eq.s32.totalorder %s47, 0
      %p515 = por %p513, %p514
      %s517 = sadd.s32 %s516, 1
      %p520 = scmp.eq.s32.totalorder %s41, 1
      %p521 = scmp.ne.s32.totalorder %s516, %s518
      %p522 = scmp.eq.s32.totalorder %s41, 0
      %p523 = por %p521, %p522
      %p524 = scmp.ne.s32.totalorder %s516, %s518
      %p525 = scmp.eq.s32.totalorder %s46, 1
      %p526 = por %p524, %p525
      %p527 = scmp.ne.s32.totalorder %s518, %s519
      %p528 = scmp.eq.s32.totalorder %s46, 0
      %p529 = por %p527, %p528
      %p530 = scmp.ne.s32.totalorder %s518, %s519
      %p531 = scmp.eq.s32.totalorder %s47, 1
      %p532 = por %p530, %p531
      %p534 = scmp.ne.s32.totalorder %s519, %s533
      %p535 = scmp.eq.s32.totalorder %s47, 0
      %p536 = por %p534, %p535
      %s538 = sadd.s32 %s537, 1
      %p541 = scmp.eq.s32.totalorder %s41, 1
      %p542 = scmp.ne.s32.totalorder %s537, %s539
      %p543 = scmp.eq.s32.totalorder %s41, 0
      %p544 = por %p542, %p543
      %p545 = scmp.ne.s32.totalorder %s537, %s539
      %p546 = scmp.eq.s32.totalorder %s46, 1
      %p547 = por %p545, %p546
      %p548 = scmp.ne.s32.totalorder %s539, %s540
      %p549 = scmp.eq.s32.totalorder %s46, 0
      %p550 = por %p548, %p549
      %p551 = scmp.ne.s32.totalorder %s539, %s540
      %p552 = scmp.eq.s32.totalorder %s47, 1
      %p553 = por %p551, %p552
      %p555 = scmp.ne.s32.totalorder %s540, %s554
      %p556 = scmp.eq.s32.totalorder %s47, 0
      %p557 = por %p555, %p556
      %s558 = ssub.s32 %s41, %s48
      %p559 = scmp.eq.s32.totalorder %s558, 0
      %s561 = sadd.s32 %s560, 1
      %s562 = scalar_select %p559, %s560, %s561
      %p565 = pneg %p559
      %p566 = scmp.eq.s32.totalorder %s41, 1
      %p567 = por %p565, %p566
      %p568 = scmp.ne.s32.totalorder %s560, %s563
      %p569 = scmp.eq.s32.totalorder %s41, 0
      %p570 = por %p568, %p569
      %p571 = scmp.ne.s32.totalorder %s560, %s563
      %p572 = scmp.eq.s32.totalorder %s46, 1
      %p573 = por %p571, %p572
      %p574 = scmp.ne.s32.totalorder %s563, %s564
      %p575 = scmp.eq.s32.totalorder %s46, 0
      %p576 = por %p574, %p575
      %p577 = scmp.ne.s32.totalorder %s563, %s564
      %p578 = scmp.eq.s32.totalorder %s47, 1
      %p579 = por %p577, %p578
      %p581 = scmp.ne.s32.totalorder %s564, %s580
      %p582 = scmp.eq.s32.totalorder %s47, 0
      %p583 = por %p581, %p582
      %s584 = ssub.s32 %s41, %s48
      %p585 = scmp.eq.s32.totalorder %s584, 0
      %s587 = sadd.s32 %s586, 1
      %s588 = scalar_select %p585, %s586, %s587
      %p591 = pneg %p585
      %p592 = scmp.eq.s32.totalorder %s41, 1
      %p593 = por %p591, %p592
      %p594 = scmp.ne.s32.totalorder %s586, %s589
      %p595 = scmp.eq.s32.totalorder %s41, 0
      %p596 = por %p594, %p595
      %p597 = scmp.ne.s32.totalorder %s586, %s589
      %p598 = scmp.eq.s32.totalorder %s46, 1
      %p599 = por %p597, %p598
      %p600 = scmp.ne.s32.totalorder %s589, %s590
      %p601 = scmp.eq.s32.totalorder %s46, 0
      %p602 = por %p600, %p601
      %p603 = scmp.ne.s32.totalorder %s589, %s590
      %p604 = scmp.eq.s32.totalorder %s47, 1
      %p605 = por %p603, %p604
      %p607 = scmp.ne.s32.totalorder %s590, %s606
      %p608 = scmp.eq.s32.totalorder %s47, 0
      %p609 = por %p607, %p608
      %s610 = ssub.s32 %s41, %s48
      %p611 = scmp.eq.s32.totalorder %s610, 0
      %s613 = sadd.s32 %s612, 1
      %s614 = scalar_select %p611, %s612, %s613
      %p617 = pneg %p611
      %p618 = scmp.eq.s32.totalorder %s41, 1
      %p619 = por %p617, %p618
      %p620 = scmp.ne.s32.totalorder %s612, %s615
      %p621 = scmp.eq.s32.totalorder %s41, 0
      %p622 = por %p620, %p621
      %p623 = scmp.ne.s32.totalorder %s612, %s615
      %p624 = scmp.eq.s32.totalorder %s46, 1
      %p625 = por %p623, %p624
      %p626 = scmp.ne.s32.totalorder %s615, %s616
      %p627 = scmp.eq.s32.totalorder %s46, 0
      %p628 = por %p626, %p627
      %p629 = scmp.ne.s32.totalorder %s615, %s616
      %p630 = scmp.eq.s32.totalorder %s47, 1
      %p631 = por %p629, %p630
      %p633 = scmp.ne.s32.totalorder %s616, %s632
      %p634 = scmp.eq.s32.totalorder %s47, 0
      %p635 = por %p633, %p634
      %p636 = scmp.le.s32.totalorder 1, %s41
      %p637 = scmp.lt.s32.totalorder %s41, 3
      %p638 = pnand %p636, %p637
      %p639 = pneg %p638
      // Predicated region
      $region9: #{cdg_attention_forward.1} parent=5 // pred_check
        _
      $region10: #{cdg_attention_forward.1} parent=5 // pred_check_branch
        %641 = sbr.rel (%p638) target = $region12
      $region11: #{cdg_attention_forward.1} parent=5 // pred_region
        %s642 = ssub.s32 %s41, 1
        // Predicated region
        $region13: #{cdg_attention_forward.1} parent=11 // pred_check
          %p643 = pneg %p88
        $region14: #{cdg_attention_forward.1} parent=11 // pred_check_branch
          %645 = sbr.rel (%p643) target = $region16
        $region15: #{cdg_attention_forward.1} parent=11 // pred_region
          _
        $region16: #{cdg_attention_forward.1} parent=11 // pred_fallthru
          _
        // Predicated region
        $region17: #{cdg_attention_forward.1} parent=11 // pred_check
          %p646 = pneg %p109
        $region18: #{cdg_attention_forward.1} parent=11 // pred_check_branch
          %648 = sbr.rel (%p646) target = $region20
        $region19: #{cdg_attention_forward.1} parent=11 // pred_region
          _
        $region20: #{cdg_attention_forward.1} parent=11 // pred_fallthru
          _
        // Predicated region
        $region21: #{cdg_attention_forward.1} parent=11 // pred_check
          %p649 = pneg %p130
        $region22: #{cdg_attention_forward.1} parent=11 // pred_check_branch
          %651 = sbr.rel (%p649) target = $region24
        $region23: #{cdg_attention_forward.1} parent=11 // pred_region
          _
        $region24: #{cdg_attention_forward.1} parent=11 // pred_fallthru
          _
        // Predicated region
        $region25: #{cdg_attention_forward.1} parent=11 // pred_check
          %p652 = pneg %p151
        $region26: #{cdg_attention_forward.1} parent=11 // pred_check_branch
          %654 = sbr.rel (%p652) target = $region28
        $region27: #{cdg_attention_forward.1} parent=11 // pred_region
          _
        $region28: #{cdg_attention_forward.1} parent=11 // pred_fallthru
          _
        // Predicated region
        $region29: #{cdg_attention_forward.1} parent=11 // pred_check
          %p655 = pneg %p172
        $region30: #{cdg_attention_forward.1} parent=11 // pred_check_branch
          %657 = sbr.rel (%p655) target = $region32
        $region31: #{cdg_attention_forward.1} parent=11 // pred_region
          _
        $region32: #{cdg_attention_forward.1} parent=11 // pred_fallthru
          _
        // Predicated region
        $region33: #{cdg_attention_forward.1} parent=11 // pred_check
          %p658 = pneg %p193
        $region34: #{cdg_attention_forward.1} parent=11 // pred_check_branch
          %660 = sbr.rel (%p658) target = $region36
        $region35: #{cdg_attention_forward.1} parent=11 // pred_region
          _
        $region36: #{cdg_attention_forward.1} parent=11 // pred_fallthru
          _
        // Predicated region
        $region37: #{cdg_attention_forward.1} parent=11 // pred_check
          %p661 = pneg %p214
        $region38: #{cdg_attention_forward.1} parent=11 // pred_check_branch
          %663 = sbr.rel (%p661) target = $region40
        $region39: #{cdg_attention_forward.1} parent=11 // pred_region
          _
        $region40: #{cdg_attention_forward.1} parent=11 // pred_fallthru
          _
        // Predicated region
        $region41: #{cdg_attention_forward.1} parent=11 // pred_check
          %p664 = pneg %p235
        $region42: #{cdg_attention_forward.1} parent=11 // pred_check_branch
          %666 = sbr.rel (%p664) target = $region44
        $region43: #{cdg_attention_forward.1} parent=11 // pred_region
          _
        $region44: #{cdg_attention_forward.1} parent=11 // pred_fallthru
          _
        // Predicated region
        $region45: #{cdg_attention_forward.1} parent=11 // pred_check
          %p667 = pneg %p256
        $region46: #{cdg_attention_forward.1} parent=11 // pred_check_branch
          %669 = sbr.rel (%p667) target = $region48
        $region47: #{cdg_attention_forward.1} parent=11 // pred_region
          _
        $region48: #{cdg_attention_forward.1} parent=11 // pred_fallthru
          _
        // Predicated region
        $region49: #{cdg_attention_forward.1} parent=11 // pred_check
          %p670 = pneg %p277
        $region50: #{cdg_attention_forward.1} parent=11 // pred_check_branch
          %672 = sbr.rel (%p670) target = $region52
        $region51: #{cdg_attention_forward.1} parent=11 // pred_region
          _
        $region52: #{cdg_attention_forward.1} parent=11 // pred_fallthru
          _
        // Predicated region
        $region53: #{cdg_attention_forward.1} parent=11 // pred_check
          %p673 = pneg %p298
        $region54: #{cdg_attention_forward.1} parent=11 // pred_check_branch
          %675 = sbr.rel (%p673) target = $region56
        $region55: #{cdg_attention_forward.1} parent=11 // pred_region
          _
        $region56: #{cdg_attention_forward.1} parent=11 // pred_fallthru
          _
        // Predicated region
        $region57: #{cdg_attention_forward.1} parent=11 // pred_check
          %p676 = pneg %p319
        $region58: #{cdg_attention_forward.1} parent=11 // pred_check_branch
          %678 = sbr.rel (%p676) target = $region60
        $region59: #{cdg_attention_forward.1} parent=11 // pred_region
          _
        $region60: #{cdg_attention_forward.1} parent=11 // pred_fallthru
          _
        // Predicated region
        $region61: #{cdg_attention_forward.1} parent=11 // pred_check
          %p679 = pneg %p340
        $region62: #{cdg_attention_forward.1} parent=11 // pred_check_branch
          %681 = sbr.rel (%p679) target = $region64
        $region63: #{cdg_attention_forward.1} parent=11 // pred_region
          _
        $region64: #{cdg_attention_forward.1} parent=11 // pred_fallthru
          _
        // Predicated region
        $region65: #{cdg_attention_forward.1} parent=11 // pred_check
          %p682 = pneg %p361
        $region66: #{cdg_attention_forward.1} parent=11 // pred_check_branch
          %684 = sbr.rel (%p682) target = $region68
        $region67: #{cdg_attention_forward.1} parent=11 // pred_region
          _
        $region68: #{cdg_attention_forward.1} parent=11 // pred_fallthru
          _
        // Predicated region
        $region69: #{cdg_attention_forward.1} parent=11 // pred_check
          %p685 = pneg %p382
        $region70: #{cdg_attention_forward.1} parent=11 // pred_check_branch
          %687 = sbr.rel (%p685) target = $region72
        $region71: #{cdg_attention_forward.1} parent=11 // pred_region
          _
        $region72: #{cdg_attention_forward.1} parent=11 // pred_fallthru
          _
        // Predicated region
        $region73: #{cdg_attention_forward.1} parent=11 // pred_check
          %p688 = pneg %p403
        $region74: #{cdg_attention_forward.1} parent=11 // pred_check_branch
          %690 = sbr.rel (%p688) target = $region76
        $region75: #{cdg_attention_forward.1} parent=11 // pred_region
          _
        $region76: #{cdg_attention_forward.1} parent=11 // pred_fallthru
          _
        // Predicated region
        $region77: #{cdg_attention_forward.1} parent=11 // pred_check
          %p691 = pneg %p424
        $region78: #{cdg_attention_forward.1} parent=11 // pred_check_branch
          %693 = sbr.rel (%p691) target = $region80
        $region79: #{cdg_attention_forward.1} parent=11 // pred_region
          _
        $region80: #{cdg_attention_forward.1} parent=11 // pred_fallthru
          _
        // Predicated region
        $region81: #{cdg_attention_forward.1} parent=11 // pred_check
          %p694 = pneg %p445
        $region82: #{cdg_attention_forward.1} parent=11 // pred_check_branch
          %696 = sbr.rel (%p694) target = $region84
        $region83: #{cdg_attention_forward.1} parent=11 // pred_region
          _
        $region84: #{cdg_attention_forward.1} parent=11 // pred_fallthru
          _
        // Predicated region
        $region85: #{cdg_attention_forward.1} parent=11 // pred_check
          %p697 = pneg %p466
        $region86: #{cdg_attention_forward.1} parent=11 // pred_check_branch
          %699 = sbr.rel (%p697) target = $region88
        $region87: #{cdg_attention_forward.1} parent=11 // pred_region
          _
        $region88: #{cdg_attention_forward.1} parent=11 // pred_fallthru
          _
        // Predicated region
        $region89: #{cdg_attention_forward.1} parent=11 // pred_check
          %p700 = pneg %p487
        $region90: #{cdg_attention_forward.1} parent=11 // pred_check_branch
          %702 = sbr.rel (%p700) target = $region92
        $region91: #{cdg_attention_forward.1} parent=11 // pred_region
          _
        $region92: #{cdg_attention_forward.1} parent=11 // pred_fallthru
          _
        // Predicated region
        $region93: #{cdg_attention_forward.1} parent=11 // pred_check
          %p703 = pneg %p508
        $region94: #{cdg_attention_forward.1} parent=11 // pred_check_branch
          %705 = sbr.rel (%p703) target = $region96
        $region95: #{cdg_attention_forward.1} parent=11 // pred_region
          _
        $region96: #{cdg_attention_forward.1} parent=11 // pred_fallthru
          _
        // Predicated region
        $region97: #{cdg_attention_forward.1} parent=11 // pred_check
          %p706 = pneg %p529
        $region98: #{cdg_attention_forward.1} parent=11 // pred_check_branch
          %708 = sbr.rel (%p706) target = $region100
        $region99: #{cdg_attention_forward.1} parent=11 // pred_region
          _
        $region100: #{cdg_attention_forward.1} parent=11 // pred_fallthru
          _
        // Predicated region
        $region101: #{cdg_attention_forward.1} parent=11 // pred_check
          %p709 = pneg %p550
        $region102: #{cdg_attention_forward.1} parent=11 // pred_check_branch
          %711 = sbr.rel (%p709) target = $region104
        $region103: #{cdg_attention_forward.1} parent=11 // pred_region
          _
        $region104: #{cdg_attention_forward.1} parent=11 // pred_fallthru
          _
      $region12: #{cdg_attention_forward.1} parent=5 // pred_fallthru
        _
      %p712 = scmp.lt.s32.totalorder %s41, 2
      // Predicated region
      $region105: #{cdg_attention_forward.1} parent=5 // pred_check
        %p713 = pneg %p712
      $region106: #{cdg_attention_forward.1} parent=5 // pred_check_branch
        %715 = sbr.rel (%p713) target = $region108
      $region107: #{cdg_attention_forward.1} parent=5 // pred_region
        // Predicated region
        $region109: #{cdg_attention_forward.1} parent=107 // pred_check
          %p716 = pneg %p61
        $region110: #{cdg_attention_forward.1} parent=107 // pred_check_branch
          %718 = sbr.rel (%p716) target = $region112
        $region111: #{cdg_attention_forward.1} parent=107 // pred_region
          %p719 = scmp.lt.s32.totalorder %s41, 1
          %s720 = scalar_select %p719, %s41, 1
          %s721 = smul.addr %s720, 8
          %s722 = smul.addr %s721, 8
          %s723 = scalar_lea.vmem %s0, %s722
        $region112: #{cdg_attention_forward.1} parent=107 // pred_fallthru
          _
      $region108: #{cdg_attention_forward.1} parent=5 // pred_fallthru
        _
      %p724 = scmp.le.s32.totalorder 1, %s41
      %p725 = scmp.lt.s32.totalorder %s41, 3
      %p726 = pnand %p724, %p725
      %p727 = pneg %p726
      // Predicated region
      $region113: #{cdg_attention_forward.1} parent=5 // pred_check
        _
      $region114: #{cdg_attention_forward.1} parent=5 // pred_check_branch
        %729 = sbr.rel (%p726) target = $region116
      $region115: #{cdg_attention_forward.1} parent=5 // pred_region
        %s730 = ssub.s32 %s41, 1
        %p731 = scmp.lt.s32.totalorder %s46, 1
        %s732 = scalar_select %p731, %s46, 1
        %s733 = smul.addr %s732, 8
        %s734 = smul.addr %s733, 8
        %s735 = scalar_lea.vmem %s0, %s734
        %p736 = pneg %p67
        %p737 = pneg %p64
        %p738 = pneg %p88
        %p739 = pneg %p85
        %p740 = pneg %p109
        %p741 = pneg %p106
        %p742 = pneg %p130
        %p743 = pneg %p127
        %p744 = pneg %p151
        %p745 = pneg %p148
        %p746 = pneg %p172
        %p747 = pneg %p169
        %p748 = pneg %p193
        %p749 = pneg %p190
        %p750 = pneg %p214
        %p751 = pneg %p211
        %p752 = pneg %p235
        %p753 = pneg %p232
        %p754 = pneg %p256
        %p755 = pneg %p253
        %p756 = pneg %p277
        %p757 = pneg %p274
        %p758 = pneg %p298
        %p759 = pneg %p295
        %p760 = pneg %p319
        %p761 = pneg %p316
        %p762 = pneg %p340
        %p763 = pneg %p337
        %p764 = pneg %p361
        %p765 = pneg %p358
        %p766 = pneg %p382
        %p767 = pneg %p379
        %p768 = pneg %p403
        %p769 = pneg %p400
        %p770 = pneg %p424
        %p771 = pneg %p421
        %p772 = pneg %p445
        %p773 = pneg %p442
        %p774 = pneg %p466
        %p775 = pneg %p463
        %p776 = pneg %p487
        %p777 = pneg %p484
        %p778 = pneg %p508
        %p779 = pneg %p505
        %p780 = pneg %p529
        %p781 = pneg %p526
        %p782 = pneg %p550
        %p783 = pneg %p547
        %p784 = pneg %p576
        %p785 = pneg %p573
        %p786 = scmp.lt.s32.totalorder %s46, 1
        %s787 = scalar_select %p786, %s46, 1
        %s788 = smul.addr %s787, 8
        %s789 = smul.addr %s788, 8
        %s790 = scalar_lea.vmem %s24, %s789
        %p791 = pneg %p602
        %p792 = pneg %p599
        %s793 = sand.u32 %s589, 1
        %s794 = scalar_lea.sflag [#allocation10], %s793
        %s795 = sand.u32 %s589, 1
        %s796 = smul.addr %s795, 8
        %s797 = scalar_lea.vmem [#allocation9], %s796
        %p798 = pneg %p628
        %p799 = pneg %p625
        %s800 = sand.u32 %s615, 1
        %s801 = scalar_lea.sflag [#allocation12], %s800
        %s802 = sand.u32 %s615, 1
        %s803 = smul.addr %s802, 8
        %s804 = scalar_lea.vmem [#allocation11], %s803
        %p805 = scmp.lt.s32.totalorder %s46, 1
        %s806 = scalar_select %p805, %s46, 1
        %s807 = smul.addr %s806, 8
        %s808 = smul.addr %s807, 8
        %s809 = scalar_lea.vmem %s0, %s808
        %p810 = scmp.lt.s32.totalorder %s46, 1
        %s811 = scalar_select %p810, %s46, 1
        %s812 = smul.addr %s811, 8
        %s813 = smul.addr %s812, 8
        %s814 = scalar_lea.vmem %s24, %s813
        %v815 = vld [vmem:[%s809] sm:$0xff]
        %v816 = vld [vmem:[%s809 + $0x8] sm:$0xff]
        %v817 = vld [vmem:[%s809 + $0x10] sm:$0xff]
        %v818 = vld [vmem:[%s809 + $0x18] sm:$0xff]
        %v819 = vld [vmem:[%s809 + $0x20] sm:$0xff]
        %v820 = vld [vmem:[%s809 + $0x28] sm:$0xff]
        %v821 = vld [vmem:[%s809 + $0x30] sm:$0xff]
        %v822 = vld [vmem:[%s809 + $0x38] sm:$0xff]
        %v823 = vld [vmem:[%s1] sm:$0xff]
        %v824 = vld [vmem:[%s1 + $0x8] sm:$0xff]
        %v825 = vld [vmem:[%s1 + $0x10] sm:$0xff]
        %v826 = vld [vmem:[%s1 + $0x18] sm:$0xff]
        %v827 = vld [vmem:[%s1 + $0x20] sm:$0xff]
        %v828 = vld [vmem:[%s1 + $0x28] sm:$0xff]
        %v829 = vld [vmem:[%s1 + $0x30] sm:$0xff]
        %v830 = vld [vmem:[%s1 + $0x38] sm:$0xff]
        %v831 = vld [vmem:[%s1 + $0x40] sm:$0xff]
        %v832 = vld [vmem:[%s1 + $0x48] sm:$0xff]
        %v833 = vld [vmem:[%s1 + $0x50] sm:$0xff]
        %v834 = vld [vmem:[%s1 + $0x58] sm:$0xff]
        %v835 = vld [vmem:[%s1 + $0x60] sm:$0xff]
        %v836 = vld [vmem:[%s1 + $0x68] sm:$0xff]
        %v837 = vld [vmem:[%s1 + $0x70] sm:$0xff]
        %v838 = vld [vmem:[%s1 + $0x78] sm:$0xff]
        %v839 = vld [vmem:[%s1 + $0x80] sm:$0xff]
        %v840 = vld [vmem:[%s1 + $0x88] sm:$0xff]
        %v841 = vld [vmem:[%s1 + $0x90] sm:$0xff]
        %v842 = vld [vmem:[%s1 + $0x98] sm:$0xff]
        %v843 = vld [vmem:[%s1 + $0xa0] sm:$0xff]
        %v844 = vld [vmem:[%s1 + $0xa8] sm:$0xff]
        %v845 = vld [vmem:[%s1 + $0xb0] sm:$0xff]
        %v846 = vld [vmem:[%s1 + $0xb8] sm:$0xff]
        %v847 = vld [vmem:[%s1 + $0xc0] sm:$0xff]
        %v848 = vld [vmem:[%s1 + $0xc8] sm:$0xff]
        %v849 = vld [vmem:[%s1 + $0xd0] sm:$0xff]
        %v850 = vld [vmem:[%s1 + $0xd8] sm:$0xff]
        %v851 = vld [vmem:[%s1 + $0xe0] sm:$0xff]
        %v852 = vld [vmem:[%s1 + $0xe8] sm:$0xff]
        %v853 = vld [vmem:[%s1 + $0xf0] sm:$0xff]
        %v854 = vld [vmem:[%s1 + $0xf8] sm:$0xff]
        %855 = vmatprep.subr.mxu0 0.0
        %856 = vmatpush1.msra.mxu0 %v823
        %857 = vmatprep.subr.mxu0 0.0
        %858 = vmatpush1.msra.mxu0 %v824
        %859 = vmatprep.subr.mxu0 0.0
        %860 = vmatpush1.msra.mxu0 %v825
        %861 = vmatprep.subr.mxu0 0.0
        %862 = vmatpush1.msra.mxu0 %v826
        %863 = vmatprep.subr.mxu0 0.0
        %864 = vmatpush1.msra.mxu0 %v827
        %865 = vmatprep.subr.mxu0 0.0
        %866 = vmatpush1.msra.mxu0 %v828
        %867 = vmatprep.subr.mxu0 0.0
        %868 = vmatpush1.msra.mxu0 %v829
        %869 = vmatprep.subr.mxu0 0.0
        %870 = vmatpush1.msra.mxu0 %v830
        %871 = vmatprep.subr.mxu0 0.0
        %872 = vmatpush1.msra.mxu0 %v831
        %873 = vmatprep.subr.mxu0 0.0
        %874 = vmatpush1.msra.mxu0 %v832
        %875 = vmatprep.subr.mxu0 0.0
        %876 = vmatpush1.msra.mxu0 %v833
        %877 = vmatprep.subr.mxu0 0.0
        %878 = vmatpush1.msra.mxu0 %v834
        %879 = vmatprep.subr.mxu0 0.0
        %880 = vmatpush1.msra.mxu0 %v835
        %881 = vmatprep.subr.mxu0 0.0
        %882 = vmatpush1.msra.mxu0 %v836
        %883 = vmatprep.subr.mxu0 0.0
        %884 = vmatpush1.msra.mxu0 %v837
        %885 = vmatprep.subr.mxu0 0.0
        %886 = vmatpush1.msra.mxu0 %v838
        %887 = vmatprep.subr.mxu0 0.0
        %888 = vmatpush1.msra.mxu0 %v839
        %889 = vmatprep.subr.mxu0 0.0
        %890 = vmatpush1.msra.mxu0 %v840
        %891 = vmatprep.subr.mxu0 0.0
        %892 = vmatpush1.msra.mxu0 %v841
        %893 = vmatprep.subr.mxu0 0.0
        %894 = vmatpush1.msra.mxu0 %v842
        %895 = vmatprep.subr.mxu0 0.0
        %896 = vmatpush1.msra.mxu0 %v843
        %897 = vmatprep.subr.mxu0 0.0
        %898 = vmatpush1.msra.mxu0 %v844
        %899 = vmatprep.subr.mxu0 0.0
        %900 = vmatpush1.msra.mxu0 %v845
        %901 = vmatprep.subr.mxu0 0.0
        %902 = vmatpush1.msra.mxu0 %v846
        %903 = vmatprep.subr.mxu0 0.0
        %904 = vmatpush1.msra.mxu0 %v847
        %905 = vmatprep.subr.mxu0 0.0
        %906 = vmatpush1.msra.mxu0 %v848
        %907 = vmatprep.subr.mxu0 0.0
        %908 = vmatpush1.msra.mxu0 %v849
        %909 = vmatprep.subr.mxu0 0.0
        %910 = vmatpush1.msra.mxu0 %v850
        %911 = vmatprep.subr.mxu0 0.0
        %912 = vmatpush1.msra.mxu0 %v851
        %913 = vmatprep.subr.mxu0 0.0
        %914 = vmatpush1.msra.mxu0 %v852
        %915 = vmatprep.subr.mxu0 0.0
        %916 = vmatpush1.msra.mxu0 %v853
        %917 = vmatprep.subr.mxu0 0.0
        %918 = vmatpush1.msra.mxu0 %v854
        %919 = vmatprep.mubr.f32.mxu0 %v816
        %920 = vmatmul.mubr.f32.gmra.mrb[0].mxu0 %v815
        %v921 = vpop.f32.mrb[0].mxu0
        %v922 = vadd.f32 0.0, %v921
        %v923 = vpop.f32.mrb[0].mxu0
        %924 = vmatprep.mubr.f32.mxu0 %v818
        %925 = vmatmul.mubr.f32.gmra.mrb[0].mxu0 %v817
        %v926 = vpop.f32.mrb[0].mxu0
        %v927 = vadd.f32 0.0, %v926
        %v928 = vpop.f32.mrb[0].mxu0
        %929 = vmatprep.mubr.f32.mxu0 %v820
        %930 = vmatmul.mubr.f32.gmra.mrb[0].mxu0 %v819
        %v931 = vpop.f32.mrb[0].mxu0
        %v932 = vadd.f32 0.0, %v931
        %v933 = vpop.f32.mrb[0].mxu0
        %934 = vmatprep.mubr.f32.mxu0 %v822
        %935 = vmatmul.mubr.f32.gmra.mrb[0].mxu0 %v821
        %v936 = vpop.f32.mrb[0].mxu0
        %v937 = vadd.f32 0.0, %v936
        %v938 = vpop.f32.mrb[0].mxu0
        %939 = vdwg.mxu0
        %972 = vrot.lane.b32.xlu0 %v823, 112
        %v973 = vpop.permute.xlu0 %972
        %974 = vrot.lane.b32.xlu0 %v824, 112
        %v975 = vpop.permute.xlu0 %974
        %976 = vrot.lane.b32.xlu0 %v825, 112
        %v977 = vpop.permute.xlu0 %976
        %978 = vrot.lane.b32.xlu0 %v826, 112
        %v979 = vpop.permute.xlu0 %978
        %980 = vrot.lane.b32.xlu0 %v827, 112
        %v981 = vpop.permute.xlu0 %980
        %982 = vrot.lane.b32.xlu0 %v828, 112
        %v983 = vpop.permute.xlu0 %982
        %984 = vrot.lane.b32.xlu0 %v829, 112
        %v985 = vpop.permute.xlu0 %984
        %986 = vrot.lane.b32.xlu0 %v830, 112
        %v987 = vpop.permute.xlu0 %986
        %988 = vrot.lane.b32.xlu0 %v831, 112
        %v989 = vpop.permute.xlu0 %988
        %990 = vrot.lane.b32.xlu0 %v832, 112
        %v991 = vpop.permute.xlu0 %990
        %992 = vrot.lane.b32.xlu0 %v833, 112
        %v993 = vpop.permute.xlu0 %992
        %994 = vrot.lane.b32.xlu0 %v834, 112
        %v995 = vpop.permute.xlu0 %994
        %996 = vrot.lane.b32.xlu0 %v835, 112
        %v997 = vpop.permute.xlu0 %996
        %998 = vrot.lane.b32.xlu0 %v836, 112
        %v999 = vpop.permute.xlu0 %998
        %1000 = vrot.lane.b32.xlu0 %v837, 112
        %v1001 = vpop.permute.xlu0 %1000
        %1002 = vrot.lane.b32.xlu0 %v838, 112
        %v1003 = vpop.permute.xlu0 %1002
        %1004 = vrot.lane.b32.xlu0 %v839, 112
        %v1005 = vpop.permute.xlu0 %1004
        %1006 = vrot.lane.b32.xlu0 %v840, 112
        %v1007 = vpop.permute.xlu0 %1006
        %1008 = vrot.lane.b32.xlu0 %v841, 112
        %v1009 = vpop.permute.xlu0 %1008
        %1010 = vrot.lane.b32.xlu0 %v842, 112
        %v1011 = vpop.permute.xlu0 %1010
        %1012 = vrot.lane.b32.xlu0 %v843, 112
        %v1013 = vpop.permute.xlu0 %1012
        %1014 = vrot.lane.b32.xlu0 %v844, 112
        %v1015 = vpop.permute.xlu0 %1014
        %1016 = vrot.lane.b32.xlu0 %v845, 112
        %v1017 = vpop.permute.xlu0 %1016
        %1018 = vrot.lane.b32.xlu0 %v846, 112
        %v1019 = vpop.permute.xlu0 %1018
        %1020 = vrot.lane.b32.xlu0 %v847, 112
        %v1021 = vpop.permute.xlu0 %1020
        %1022 = vrot.lane.b32.xlu0 %v848, 112
        %v1023 = vpop.permute.xlu0 %1022
        %1024 = vrot.lane.b32.xlu0 %v849, 112
        %v1025 = vpop.permute.xlu0 %1024
        %1026 = vrot.lane.b32.xlu0 %v850, 112
        %v1027 = vpop.permute.xlu0 %1026
        %1028 = vrot.lane.b32.xlu0 %v851, 112
        %v1029 = vpop.permute.xlu0 %1028
        %1030 = vrot.lane.b32.xlu0 %v852, 112
        %v1031 = vpop.permute.xlu0 %1030
        %1032 = vrot.lane.b32.xlu0 %v853, 112
        %v1033 = vpop.permute.xlu0 %1032
        %1034 = vrot.lane.b32.xlu0 %v854, 112
        %v1035 = vpop.permute.xlu0 %1034
        %1068 = vmatprep.subr.mxu0 0.0
        %1069 = vmatpush1.msra.mxu0 %v973
        %1070 = vmatprep.subr.mxu0 0.0
        %1071 = vmatpush1.msra.mxu0 %v975
        %1072 = vmatprep.subr.mxu0 0.0
        %1073 = vmatpush1.msra.mxu0 %v977
        %1074 = vmatprep.subr.mxu0 0.0
        %1075 = vmatpush1.msra.mxu0 %v979
        %1076 = vmatprep.subr.mxu0 0.0
        %1077 = vmatpush1.msra.mxu0 %v981
        %1078 = vmatprep.subr.mxu0 0.0
        %1079 = vmatpush1.msra.mxu0 %v983
        %1080 = vmatprep.subr.mxu0 0.0
        %1081 = vmatpush1.msra.mxu0 %v985
        %1082 = vmatprep.subr.mxu0 0.0
        %1083 = vmatpush1.msra.mxu0 %v987
        %1084 = vmatprep.subr.mxu0 0.0
        %1085 = vmatpush1.msra.mxu0 %v989
        %1086 = vmatprep.subr.mxu0 0.0
        %1087 = vmatpush1.msra.mxu0 %v991
        %1088 = vmatprep.subr.mxu0 0.0
        %1089 = vmatpush1.msra.mxu0 %v993
        %1090 = vmatprep.subr.mxu0 0.0
        %1091 = vmatpush1.msra.mxu0 %v995
        %1092 = vmatprep.subr.mxu0 0.0
        %1093 = vmatpush1.msra.mxu0 %v997
        %1094 = vmatprep.subr.mxu0 0.0
        %1095 = vmatpush1.msra.mxu0 %v999
        %1096 = vmatprep.subr.mxu0 0.0
        %1097 = vmatpush1.msra.mxu0 %v1001
        %1098 = vmatprep.subr.mxu0 0.0
        %1099 = vmatpush1.msra.mxu0 %v1003
        %1100 = vmatprep.subr.mxu0 0.0
        %1101 = vmatpush1.msra.mxu0 %v1005
        %1102 = vmatprep.subr.mxu0 0.0
        %1103 = vmatpush1.msra.mxu0 %v1007
        %1104 = vmatprep.subr.mxu0 0.0
        %1105 = vmatpush1.msra.mxu0 %v1009
        %1106 = vmatprep.subr.mxu0 0.0
        %1107 = vmatpush1.msra.mxu0 %v1011
        %1108 = vmatprep.subr.mxu0 0.0
        %1109 = vmatpush1.msra.mxu0 %v1013
        %1110 = vmatprep.subr.mxu0 0.0
        %1111 = vmatpush1.msra.mxu0 %v1015
        %1112 = vmatprep.subr.mxu0 0.0
        %1113 = vmatpush1.msra.mxu0 %v1017
        %1114 = vmatprep.subr.mxu0 0.0
        %1115 = vmatpush1.msra.mxu0 %v1019
        %1116 = vmatprep.subr.mxu0 0.0
        %1117 = vmatpush1.msra.mxu0 %v1021
        %1118 = vmatprep.subr.mxu0 0.0
        %1119 = vmatpush1.msra.mxu0 %v1023
        %1120 = vmatprep.subr.mxu0 0.0
        %1121 = vmatpush1.msra.mxu0 %v1025
        %1122 = vmatprep.subr.mxu0 0.0
        %1123 = vmatpush1.msra.mxu0 %v1027
        %1124 = vmatprep.subr.mxu0 0.0
        %1125 = vmatpush1.msra.mxu0 %v1029
        %1126 = vmatprep.subr.mxu0 0.0
        %1127 = vmatpush1.msra.mxu0 %v1031
        %1128 = vmatprep.subr.mxu0 0.0
        %1129 = vmatpush1.msra.mxu0 %v1033
        %1130 = vmatprep.subr.mxu0 0.0
        %1131 = vmatpush1.msra.mxu0 %v1035
        %1132 = vmatprep.mubr.f32.mxu0 %v816
        %1133 = vmatmul.mubr.f32.gmra.mrb[0].mxu0 %v815
        %v1134 = vpop.f32.mrb[0].mxu0
        %v1135 = vadd.f32 0.0, %v1134
        %v1136 = vpop.f32.mrb[0].mxu0
        %1137 = vmatprep.mubr.f32.mxu0 %v818
        %1138 = vmatmul.mubr.f32.gmra.mrb[0].mxu0 %v817
        %v1139 = vpop.f32.mrb[0].mxu0
        %v1140 = vadd.f32 0.0, %v1139
        %v1141 = vpop.f32.mrb[0].mxu0
        %1142 = vmatprep.mubr.f32.mxu0 %v820
        %1143 = vmatmul.mubr.f32.gmra.mrb[0].mxu0 %v819
        %v1144 = vpop.f32.mrb[0].mxu0
        %v1145 = vadd.f32 0.0, %v1144
        %v1146 = vpop.f32.mrb[0].mxu0
        %1147 = vmatprep.mubr.f32.mxu0 %v822
        %1148 = vmatmul.mubr.f32.gmra.mrb[0].mxu0 %v821
        %v1149 = vpop.f32.mrb[0].mxu0
        %v1150 = vadd.f32 0.0, %v1149
        %v1151 = vpop.f32.mrb[0].mxu0
        %1152 = vdwg.mxu0
        %vm1153 = vcmask 261120
        %1154 = vst.msk [vmem:[#allocation2] sm:$0xff] %vm1153, 0.0
        %1155 = vst.msk [vmem:[#allocation2 + $0x8] sm:$0xff] %vm1153, 0.0
        %1156 = vst.msk [vmem:[#allocation2 + $0x10] sm:$0xff] %vm1153, 0.0
        %1157 = vst.msk [vmem:[#allocation2 + $0x18] sm:$0xff] %vm1153, 0.0
        %1158 = vst.msk [vmem:[#allocation3] sm:$0xff] %vm1153, 0.0
        %1159 = vst.msk [vmem:[#allocation3 + $0x8] sm:$0xff] %vm1153, 0.0
        %1160 = vst.msk [vmem:[#allocation3 + $0x10] sm:$0xff] %vm1153, 0.0
        %1161 = vst.msk [vmem:[#allocation3 + $0x18] sm:$0xff] %vm1153, 0.0
        %1166 = vrot.lane.b32.xlu0 %v922, 8
        %v1167 = vpop.permute.xlu0 %1166
        %1168 = vrot.lane.b32.xlu0 %v927, 8
        %v1169 = vpop.permute.xlu0 %1168
        %1170 = vrot.lane.b32.xlu0 %v932, 8
        %v1171 = vpop.permute.xlu0 %1170
        %1172 = vrot.lane.b32.xlu0 %v937, 8
        %v1173 = vpop.permute.xlu0 %1172
        %vm1178 = vcmask 195648
        %1179 = vst.msk [vmem:[#allocation2] sm:$0xff] %vm1178, %v1167
        %1180 = vst.msk [vmem:[#allocation2 + $0x8] sm:$0xff] %vm1178, %v1169
        %1181 = vst.msk [vmem:[#allocation2 + $0x10] sm:$0xff] %vm1178, %v1171
        %1182 = vst.msk [vmem:[#allocation2 + $0x18] sm:$0xff] %vm1178, %v1173
        %1187 = vrot.lane.b32.xlu0 %v1135, 8
        %v1188 = vpop.permute.xlu0 %1187
        %1189 = vrot.lane.b32.xlu0 %v1140, 8
        %v1190 = vpop.permute.xlu0 %1189
        %1191 = vrot.lane.b32.xlu0 %v1145, 8
        %v1192 = vpop.permute.xlu0 %1191
        %1193 = vrot.lane.b32.xlu0 %v1150, 8
        %v1194 = vpop.permute.xlu0 %1193
        %1199 = vst.msk [vmem:[#allocation3] sm:$0xff] %vm1178, %v1188
        %1200 = vst.msk [vmem:[#allocation3 + $0x8] sm:$0xff] %vm1178, %v1190
        %1201 = vst.msk [vmem:[#allocation3 + $0x10] sm:$0xff] %vm1178, %v1192
        %1202 = vst.msk [vmem:[#allocation3 + $0x18] sm:$0xff] %vm1178, %v1194
        %v1203 = vld [vmem:[%s3] sm:$0xff]
        %v1204 = vld [vmem:[%s3 + $0x8] sm:$0xff]
        %v1205 = vld [vmem:[%s4] sm:$0xff]
        %v1206 = vld [vmem:[%s4 + $0x8] sm:$0xff]
        %v1207 = vld [vmem:[%s2] sm:$0xff]
        %v1208 = vld [vmem:[%s2 + $0x8] sm:$0xff]
        %v1209 = vld [vmem:[#allocation2] sm:$0xff]
        %v1210 = vld [vmem:[#allocation2 + $0x8] sm:$0xff]
        %v1211 = vld [vmem:[#allocation2 + $0x10] sm:$0xff]
        %v1212 = vld [vmem:[#allocation2 + $0x18] sm:$0xff]
        %s1213 = scalar_lea.vmem %s2, 16
        %v1214 = vld [vmem:[%s1213] sm:$0xff]
        %v1215 = vld [vmem:[%s1213 + $0x8] sm:$0xff]
        %1220 = vrot.lane.b32.xlu0 %v1209, 120
        %v1221 = vpop.permute.xlu0 %1220
        %1222 = vrot.lane.b32.xlu0 %v1210, 120
        %v1223 = vpop.permute.xlu0 %1222
        %1224 = vrot.lane.b32.xlu0 %v1211, 120
        %v1225 = vpop.permute.xlu0 %1224
        %1226 = vrot.lane.b32.xlu0 %v1212, 120
        %v1227 = vpop.permute.xlu0 %1226
        %v1233 = vsel %vm1153, %v1214, 0
        %v1236 = vsel %vm1153, %v1215, 0
        %1238 = vmatprep.subr.mxu0 0.0
        %1239 = vmatpush1.msra.mxu0 %v1221
        %1240 = vmatprep.subr.mxu0 0.0
        %1241 = vmatpush1.msra.mxu0 %v1223
        %1242 = vmatprep.subr.mxu0 0.0
        %1243 = vmatpush1.msra.mxu0 %v1225
        %1244 = vmatprep.subr.mxu0 0.0
        %1245 = vmatpush1.msra.mxu0 %v1227
        %1246 = vmatprep.subr.mxu0 0.0
        %1247 = vmatpush1.msra.mxu0 0.0
        %1248 = vmatprep.subr.mxu0 0.0
        %1249 = vmatpush1.msra.mxu0 0.0
        %1250 = vmatprep.subr.mxu0 0.0
        %1251 = vmatpush1.msra.mxu0 0.0
        %1252 = vmatprep.subr.mxu0 0.0
        %1253 = vmatpush1.msra.mxu0 0.0
        %1254 = vmatprep.subr.mxu0 0.0
        %1255 = vmatpush1.msra.mxu0 0.0
        %1256 = vmatprep.subr.mxu0 0.0
        %1257 = vmatpush1.msra.mxu0 0.0
        %1258 = vmatprep.subr.mxu0 0.0
        %1259 = vmatpush1.msra.mxu0 0.0
        %1260 = vmatprep.subr.mxu0 0.0
        %1261 = vmatpush1.msra.mxu0 0.0
        %1262 = vmatprep.subr.mxu0 0.0
        %1263 = vmatpush1.msra.mxu0 0.0
        %1264 = vmatprep.subr.mxu0 0.0
        %1265 = vmatpush1.msra.mxu0 0.0
        %1266 = vmatprep.subr.mxu0 0.0
        %1267 = vmatpush1.msra.mxu0 0.0
        %1268 = vmatprep.subr.mxu0 0.0
        %1269 = vmatpush1.msra.mxu0 0.0
        %1270 = vmatprep.subr.mxu0 0.0
        %1271 = vmatpush1.msra.mxu0 0.0
        %1272 = vmatprep.subr.mxu0 0.0
        %1273 = vmatpush1.msra.mxu0 0.0
        %1274 = vmatprep.subr.mxu0 0.0
        %1275 = vmatpush1.msra.mxu0 0.0
        %1276 = vmatprep.subr.mxu0 0.0
        %1277 = vmatpush1.msra.mxu0 0.0
        %1278 = vmatprep.subr.mxu0 0.0
        %1279 = vmatpush1.msra.mxu0 0.0
        %1280 = vmatprep.subr.mxu0 0.0
        %1281 = vmatpush1.msra.mxu0 0.0
        %1282 = vmatprep.subr.mxu0 0.0
        %1283 = vmatpush1.msra.mxu0 0.0
        %1284 = vmatprep.subr.mxu0 0.0
        %1285 = vmatpush1.msra.mxu0 0.0
        %1286 = vmatprep.subr.mxu0 0.0
        %1287 = vmatpush1.msra.mxu0 0.0
        %1288 = vmatprep.subr.mxu0 0.0
        %1289 = vmatpush1.msra.mxu0 0.0
        %1290 = vmatprep.subr.mxu0 0.0
        %1291 = vmatpush1.msra.mxu0 0.0
        %1292 = vmatprep.subr.mxu0 0.0
        %1293 = vmatpush1.msra.mxu0 0.0
        %1294 = vmatprep.subr.mxu0 0.0
        %1295 = vmatpush1.msra.mxu0 0.0
        %1296 = vmatprep.subr.mxu0 0.0
        %1297 = vmatpush1.msra.mxu0 0.0
        %1298 = vmatprep.subr.mxu0 0.0
        %1299 = vmatpush1.msra.mxu0 0.0
        %1300 = vmatprep.subr.mxu0 0.0
        %1301 = vmatpush1.msra.mxu0 0.0
        %1302 = vmatprep.mubr.f32.mxu0 0.0
        %1303 = vmatmul.mubr.f32.gmra.mrb[0].mxu0 %v1233
        %v1304 = vpop.f32.mrb[0].mxu0
        %v1305 = vadd.f32 0.0, %v1304
        %v1306 = vpop.f32.mrb[0].mxu0
        %1307 = vmatprep.mubr.f32.mxu0 0.0
        %1308 = vmatmul.mubr.f32.gmra.mrb[0].mxu0 %v1236
        %v1309 = vpop.f32.mrb[0].mxu0
        %v1310 = vadd.f32 0.0, %v1309
        %v1311 = vpop.f32.mrb[0].mxu0
        %1312 = vdwg.mxu0
        %1313 = vrot.lane.b32.xlu0 %v1209, 121
        %v1314 = vpop.permute.xlu0 %1313
        %1315 = vrot.lane.b32.xlu0 %v1210, 121
        %v1316 = vpop.permute.xlu0 %1315
        %1317 = vrot.lane.b32.xlu0 %v1211, 121
        %v1318 = vpop.permute.xlu0 %1317
        %1319 = vrot.lane.b32.xlu0 %v1212, 121
        %v1320 = vpop.permute.xlu0 %1319
        %v1326 = vsel %vm1153, %v1207, 0
        %v1329 = vsel %vm1153, %v1208, 0
        %1331 = vmatprep.subr.mxu0 0.0
        %1332 = vmatpush1.msra.mxu0 %v1314
        %1333 = vmatprep.subr.mxu0 0.0
        %1334 = vmatpush1.msra.mxu0 %v1316
        %1335 = vmatprep.subr.mxu0 0.0
        %1336 = vmatpush1.msra.mxu0 %v1318
        %1337 = vmatprep.subr.mxu0 0.0
        %1338 = vmatpush1.msra.mxu0 %v1320
        %1339 = vmatprep.subr.mxu0 0.0
        %1340 = vmatpush1.msra.mxu0 0.0
        %1341 = vmatprep.subr.mxu0 0.0
        %1342 = vmatpush1.msra.mxu0 0.0
        %1343 = vmatprep.subr.mxu0 0.0
        %1344 = vmatpush1.msra.mxu0 0.0
        %1345 = vmatprep.subr.mxu0 0.0
        %1346 = vmatpush1.msra.mxu0 0.0
        %1347 = vmatprep.subr.mxu0 0.0
        %1348 = vmatpush1.msra.mxu0 0.0
        %1349 = vmatprep.subr.mxu0 0.0
        %1350 = vmatpush1.msra.mxu0 0.0
        %1351 = vmatprep.subr.mxu0 0.0
        %1352 = vmatpush1.msra.mxu0 0.0
        %1353 = vmatprep.subr.mxu0 0.0
        %1354 = vmatpush1.msra.mxu0 0.0
        %1355 = vmatprep.subr.mxu0 0.0
        %1356 = vmatpush1.msra.mxu0 0.0
        %1357 = vmatprep.subr.mxu0 0.0
        %1358 = vmatpush1.msra.mxu0 0.0
        %1359 = vmatprep.subr.mxu0 0.0
        %1360 = vmatpush1.msra.mxu0 0.0
        %1361 = vmatprep.subr.mxu0 0.0
        %1362 = vmatpush1.msra.mxu0 0.0
        %1363 = vmatprep.subr.mxu0 0.0
        %1364 = vmatpush1.msra.mxu0 0.0
        %1365 = vmatprep.subr.mxu0 0.0
        %1366 = vmatpush1.msra.mxu0 0.0
        %1367 = vmatprep.subr.mxu0 0.0
        %1368 = vmatpush1.msra.mxu0 0.0
        %1369 = vmatprep.subr.mxu0 0.0
        %1370 = vmatpush1.msra.mxu0 0.0
        %1371 = vmatprep.subr.mxu0 0.0
        %1372 = vmatpush1.msra.mxu0 0.0
        %1373 = vmatprep.subr.mxu0 0.0
        %1374 = vmatpush1.msra.mxu0 0.0
        %1375 = vmatprep.subr.mxu0 0.0
        %1376 = vmatpush1.msra.mxu0 0.0
        %1377 = vmatprep.subr.mxu0 0.0
        %1378 = vmatpush1.msra.mxu0 0.0
        %1379 = vmatprep.subr.mxu0 0.0
        %1380 = vmatpush1.msra.mxu0 0.0
        %1381 = vmatprep.subr.mxu0 0.0
        %1382 = vmatpush1.msra.mxu0 0.0
        %1383 = vmatprep.subr.mxu0 0.0
        %1384 = vmatpush1.msra.mxu0 0.0
        %1385 = vmatprep.subr.mxu0 0.0
        %1386 = vmatpush1.msra.mxu0 0.0
        %1387 = vmatprep.subr.mxu0 0.0
        %1388 = vmatpush1.msra.mxu0 0.0
        %1389 = vmatprep.subr.mxu0 0.0
        %1390 = vmatpush1.msra.mxu0 0.0
        %1391 = vmatprep.subr.mxu0 0.0
        %1392 = vmatpush1.msra.mxu0 0.0
        %1393 = vmatprep.subr.mxu0 0.0
        %1394 = vmatpush1.msra.mxu0 0.0
        %1395 = vmatprep.mubr.f32.mxu0 0.0
        %1396 = vmatmul.mubr.f32.gmra.mrb[0].mxu0 %v1326
        %v1397 = vpop.f32.mrb[0].mxu0
        %v1398 = vadd.f32 %v1305, %v1397
        %v1399 = vpop.f32.mrb[0].mxu0
        %1400 = vmatprep.mubr.f32.mxu0 0.0
        %1401 = vmatmul.mubr.f32.gmra.mrb[0].mxu0 %v1329
        %v1402 = vpop.f32.mrb[0].mxu0
        %v1403 = vadd.f32 %v1310, %v1402
        %v1404 = vpop.f32.mrb[0].mxu0
        %1405 = vdwg.mxu0
        %s1406 = scalar_lea.vmem %s2, 32
        %v1407 = vld [vmem:[%s1406] sm:$0xff]
        %v1408 = vld [vmem:[%s1406 + $0x8] sm:$0xff]
        %1409 = vrot.lane.b32.xlu0 %v1209, 119
        %v1410 = vpop.permute.xlu0 %1409
        %1411 = vrot.lane.b32.xlu0 %v1210, 119
        %v1412 = vpop.permute.xlu0 %1411
        %1413 = vrot.lane.b32.xlu0 %v1211, 119
        %v1414 = vpop.permute.xlu0 %1413
        %1415 = vrot.lane.b32.xlu0 %v1212, 119
        %v1416 = vpop.permute.xlu0 %1415
        %v1422 = vsel %vm1153, %v1407, 0
        %v1425 = vsel %vm1153, %v1408, 0
        %1427 = vmatprep.subr.mxu0 0.0
        %1428 = vmatpush1.msra.mxu0 %v1410
        %1429 = vmatprep.subr.mxu0 0.0
        %1430 = vmatpush1.msra.mxu0 %v1412
        %1431 = vmatprep.subr.mxu0 0.0
        %1432 = vmatpush1.msra.mxu0 %v1414
        %1433 = vmatprep.subr.mxu0 0.0
        %1434 = vmatpush1.msra.mxu0 %v1416
        %1435 = vmatprep.subr.mxu0 0.0
        %1436 = vmatpush1.msra.mxu0 0.0
        %1437 = vmatprep.subr.mxu0 0.0
        %1438 = vmatpush1.msra.mxu0 0.0
        %1439 = vmatprep.subr.mxu0 0.0
        %1440 = vmatpush1.msra.mxu0 0.0
        %1441 = vmatprep.subr.mxu0 0.0
        %1442 = vmatpush1.msra.mxu0 0.0
        %1443 = vmatprep.subr.mxu0 0.0
        %1444 = vmatpush1.msra.mxu0 0.0
        %1445 = vmatprep.subr.mxu0 0.0
        %1446 = vmatpush1.msra.mxu0 0.0
        %1447 = vmatprep.subr.mxu0 0.0
        %1448 = vmatpush1.msra.mxu0 0.0
        %1449 = vmatprep.subr.mxu0 0.0
        %1450 = vmatpush1.msra.mxu0 0.0
        %1451 = vmatprep.subr.mxu0 0.0
        %1452 = vmatpush1.msra.mxu0 0.0
        %1453 = vmatprep.subr.mxu0 0.0
        %1454 = vmatpush1.msra.mxu0 0.0
        %1455 = vmatprep.subr.mxu0 0.0
        %1456 = vmatpush1.msra.mxu0 0.0
        %1457 = vmatprep.subr.mxu0 0.0
        %1458 = vmatpush1.msra.mxu0 0.0
        %1459 = vmatprep.subr.mxu0 0.0
        %1460 = vmatpush1.msra.mxu0 0.0
        %1461 = vmatprep.subr.mxu0 0.0
        %1462 = vmatpush1.msra.mxu0 0.0
        %1463 = vmatprep.subr.mxu0 0.0
        %1464 = vmatpush1.msra.mxu0 0.0
        %1465 = vmatprep.subr.mxu0 0.0
        %1466 = vmatpush1.msra.mxu0 0.0
        %1467 = vmatprep.subr.mxu0 0.0
        %1468 = vmatpush1.msra.mxu0 0.0
        %1469 = vmatprep.subr.mxu0 0.0
        %1470 = vmatpush1.msra.mxu0 0.0
        %1471 = vmatprep.subr.mxu0 0.0
        %1472 = vmatpush1.msra.mxu0 0.0
        %1473 = vmatprep.subr.mxu0 0.0
        %1474 = vmatpush1.msra.mxu0 0.0
        %1475 = vmatprep.subr.mxu0 0.0
        %1476 = vmatpush1.msra.mxu0 0.0
        %1477 = vmatprep.subr.mxu0 0.0
        %1478 = vmatpush1.msra.mxu0 0.0
        %1479 = vmatprep.subr.mxu0 0.0
        %1480 = vmatpush1.msra.mxu0 0.0
        %1481 = vmatprep.subr.mxu0 0.0
        %1482 = vmatpush1.msra.mxu0 0.0
        %1483 = vmatprep.subr.mxu0 0.0
        %1484 = vmatpush1.msra.mxu0 0.0
        %1485 = vmatprep.subr.mxu0 0.0
        %1486 = vmatpush1.msra.mxu0 0.0
        %1487 = vmatprep.subr.mxu0 0.0
        %1488 = vmatpush1.msra.mxu0 0.0
        %1489 = vmatprep.subr.mxu0 0.0
        %1490 = vmatpush1.msra.mxu0 0.0
        %1491 = vmatprep.mubr.f32.mxu0 0.0
        %1492 = vmatmul.mubr.f32.gmra.mrb[0].mxu0 %v1422
        %v1493 = vpop.f32.mrb[0].mxu0
        %v1494 = vadd.f32 0.0, %v1493
        %v1495 = vpop.f32.mrb[0].mxu0
        %1496 = vmatprep.mubr.f32.mxu0 0.0
        %1497 = vmatmul.mubr.f32.gmra.mrb[0].mxu0 %v1425
        %v1498 = vpop.f32.mrb[0].mxu0
        %v1499 = vadd.f32 0.0, %v1498
        %v1500 = vpop.f32.mrb[0].mxu0
        %1501 = vdwg.mxu0
        %v1502 = vadd.f32 %v1398, %v1494
        %v1503 = vadd.f32 %v1403, %v1499
        %1505 = vset.pattern.permute.xlu0 0
        %1506 = vperm.xlu0 %1505, %v1203
        %v1507 = vpop.permute.xlu0 %1506
        %1510 = vset.pattern.permute.xlu0 0
        %1511 = vperm.xlu0 %1510, %v1204
        %v1512 = vpop.permute.xlu0 %1511
        %v1514 = vmul.f32 %v1502, %v1507
        %v1515 = vmul.f32 %v1503, %v1512
        %1517 = vset.pattern.permute.xlu0 0
        %1518 = vperm.xlu0 %1517, %v1205
        %v1519 = vpop.permute.xlu0 %1518
        %1522 = vset.pattern.permute.xlu0 0
        %1523 = vperm.xlu0 %1522, %v1206
        %v1524 = vpop.permute.xlu0 %1523
        %v1526 = vadd.f32 %v1514, %v1519
        %v1527 = vadd.f32 %v1515, %v1524
        %v1528 = vmax.f32 %v1526, 0.0
        %v1529 = vmax.f32 %v1527, 0.0
        %v1530 = vld [vmem:[%s6] sm:$0xff]
        %v1531 = vld [vmem:[%s6 + $0x8] sm:$0xff]
        %v1532 = vld [vmem:[%s7] sm:$0xff]
        %v1533 = vld [vmem:[%s7 + $0x8] sm:$0xff]
        %v1534 = vld [vmem:[%s5] sm:$0xff]
        %v1535 = vld [vmem:[%s5 + $0x8] sm:$0xff]
        %v1536 = vld [vmem:[#allocation3] sm:$0xff]
        %v1537 = vld [vmem:[#allocation3 + $0x8] sm:$0xff]
        %v1538 = vld [vmem:[#allocation3 + $0x10] sm:$0xff]
        %v1539 = vld [vmem:[#allocation3 + $0x18] sm:$0xff]
        %s1540 = scalar_lea.vmem %s5, 16
        %v1541 = vld [vmem:[%s1540] sm:$0xff]
        %v1542 = vld [vmem:[%s1540 + $0x8] sm:$0xff]
        %1547 = vrot.lane.b32.xlu0 %v1536, 120
        %v1548 = vpop.permute.xlu0 %1547
        %1549 = vrot.lane.b32.xlu0 %v1537, 120
        %v1550 = vpop.permute.xlu0 %1549
        %1551 = vrot.lane.b32.xlu0 %v1538, 120
        %v1552 = vpop.permute.xlu0 %1551
        %1553 = vrot.lane.b32.xlu0 %v1539, 120
        %v1554 = vpop.permute.xlu0 %1553
        %v1560 = vsel %vm1153, %v1541, 0
        %v1563 = vsel %vm1153, %v1542, 0
        %1565 = vmatprep.subr.mxu0 0.0
        %1566 = vmatpush1.msra.mxu0 %v1548
        %1567 = vmatprep.subr.mxu0 0.0
        %1568 = vmatpush1.msra.mxu0 %v1550
        %1569 = vmatprep.subr.mxu0 0.0
        %1570 = vmatpush1.msra.mxu0 %v1552
        %1571 = vmatprep.subr.mxu0 0.0
        %1572 = vmatpush1.msra.mxu0 %v1554
        %1573 = vmatprep.subr.mxu0 0.0
        %1574 = vmatpush1.msra.mxu0 0.0
        %1575 = vmatprep.subr.mxu0 0.0
        %1576 = vmatpush1.msra.mxu0 0.0
        %1577 = vmatprep.subr.mxu0 0.0
        %1578 = vmatpush1.msra.mxu0 0.0
        %1579 = vmatprep.subr.mxu0 0.0
        %1580 = vmatpush1.msra.mxu0 0.0
        %1581 = vmatprep.subr.mxu0 0.0
        %1582 = vmatpush1.msra.mxu0 0.0
        %1583 = vmatprep.subr.mxu0 0.0
        %1584 = vmatpush1.msra.mxu0 0.0
        %1585 = vmatprep.subr.mxu0 0.0
        %1586 = vmatpush1.msra.mxu0 0.0
        %1587 = vmatprep.subr.mxu0 0.0
        %1588 = vmatpush1.msra.mxu0 0.0
        %1589 = vmatprep.subr.mxu0 0.0
        %1590 = vmatpush1.msra.mxu0 0.0
        %1591 = vmatprep.subr.mxu0 0.0
        %1592 = vmatpush1.msra.mxu0 0.0
        %1593 = vmatprep.subr.mxu0 0.0
        %1594 = vmatpush1.msra.mxu0 0.0
        %1595 = vmatprep.subr.mxu0 0.0
        %1596 = vmatpush1.msra.mxu0 0.0
        %1597 = vmatprep.subr.mxu0 0.0
        %1598 = vmatpush1.msra.mxu0 0.0
        %1599 = vmatprep.subr.mxu0 0.0
        %1600 = vmatpush1.msra.mxu0 0.0
        %1601 = vmatprep.subr.mxu0 0.0
        %1602 = vmatpush1.msra.mxu0 0.0
        %1603 = vmatprep.subr.mxu0 0.0
        %1604 = vmatpush1.msra.mxu0 0.0
        %1605 = vmatprep.subr.mxu0 0.0
        %1606 = vmatpush1.msra.mxu0 0.0
        %1607 = vmatprep.subr.mxu0 0.0
        %1608 = vmatpush1.msra.mxu0 0.0
        %1609 = vmatprep.subr.mxu0 0.0
        %1610 = vmatpush1.msra.mxu0 0.0
        %1611 = vmatprep.subr.mxu0 0.0
        %1612 = vmatpush1.msra.mxu0 0.0
        %1613 = vmatprep.subr.mxu0 0.0
        %1614 = vmatpush1.msra.mxu0 0.0
        %1615 = vmatprep.subr.mxu0 0.0
        %1616 = vmatpush1.msra.mxu0 0.0
        %1617 = vmatprep.subr.mxu0 0.0
        %1618 = vmatpush1.msra.mxu0 0.0
        %1619 = vmatprep.subr.mxu0 0.0
        %1620 = vmatpush1.msra.mxu0 0.0
        %1621 = vmatprep.subr.mxu0 0.0
        %1622 = vmatpush1.msra.mxu0 0.0
        %1623 = vmatprep.subr.mxu0 0.0
        %1624 = vmatpush1.msra.mxu0 0.0
        %1625 = vmatprep.subr.mxu0 0.0
        %1626 = vmatpush1.msra.mxu0 0.0
        %1627 = vmatprep.subr.mxu0 0.0
        %1628 = vmatpush1.msra.mxu0 0.0
        %1629 = vmatprep.mubr.f32.mxu0 0.0
        %1630 = vmatmul.mubr.f32.gmra.mrb[0].mxu0 %v1560
        %v1631 = vpop.f32.mrb[0].mxu0
        %v1632 = vadd.f32 0.0, %v1631
        %v1633 = vpop.f32.mrb[0].mxu0
        %1634 = vmatprep.mubr.f32.mxu0 0.0
        %1635 = vmatmul.mubr.f32.gmra.mrb[0].mxu0 %v1563
        %v1636 = vpop.f32.mrb[0].mxu0
        %v1637 = vadd.f32 0.0, %v1636
        %v1638 = vpop.f32.mrb[0].mxu0
        %1639 = vdwg.mxu0
        %1640 = vrot.lane.b32.xlu0 %v1536, 121
        %v1641 = vpop.permute.xlu0 %1640
        %1642 = vrot.lane.b32.xlu0 %v1537, 121
        %v1643 = vpop.permute.xlu0 %1642
        %1644 = vrot.lane.b32.xlu0 %v1538, 121
        %v1645 = vpop.permute.xlu0 %1644
        %1646 = vrot.lane.b32.xlu0 %v1539, 121
        %v1647 = vpop.permute.xlu0 %1646
        %v1653 = vsel %vm1153, %v1534, 0
        %v1656 = vsel %vm1153, %v1535, 0
        %1658 = vmatprep.subr.mxu0 0.0
        %1659 = vmatpush1.msra.mxu0 %v1641
        %1660 = vmatprep.subr.mxu0 0.0
        %1661 = vmatpush1.msra.mxu0 %v1643
        %1662 = vmatprep.subr.mxu0 0.0
        %1663 = vmatpush1.msra.mxu0 %v1645
        %1664 = vmatprep.subr.mxu0 0.0
        %1665 = vmatpush1.msra.mxu0 %v1647
        %1666 = vmatprep.subr.mxu0 0.0
        %1667 = vmatpush1.msra.mxu0 0.0
        %1668 = vmatprep.subr.mxu0 0.0
        %1669 = vmatpush1.msra.mxu0 0.0
        %1670 = vmatprep.subr.mxu0 0.0
        %1671 = vmatpush1.msra.mxu0 0.0
        %1672 = vmatprep.subr.mxu0 0.0
        %1673 = vmatpush1.msra.mxu0 0.0
        %1674 = vmatprep.subr.mxu0 0.0
        %1675 = vmatpush1.msra.mxu0 0.0
        %1676 = vmatprep.subr.mxu0 0.0
        %1677 = vmatpush1.msra.mxu0 0.0
        %1678 = vmatprep.subr.mxu0 0.0
        %1679 = vmatpush1.msra.mxu0 0.0
        %1680 = vmatprep.subr.mxu0 0.0
        %1681 = vmatpush1.msra.mxu0 0.0
        %1682 = vmatprep.subr.mxu0 0.0
        %1683 = vmatpush1.msra.mxu0 0.0
        %1684 = vmatprep.subr.mxu0 0.0
        %1685 = vmatpush1.msra.mxu0 0.0
        %1686 = vmatprep.subr.mxu0 0.0
        %1687 = vmatpush1.msra.mxu0 0.0
        %1688 = vmatprep.subr.mxu0 0.0
        %1689 = vmatpush1.msra.mxu0 0.0
        %1690 = vmatprep.subr.mxu0 0.0
        %1691 = vmatpush1.msra.mxu0 0.0
        %1692 = vmatprep.subr.mxu0 0.0
        %1693 = vmatpush1.msra.mxu0 0.0
        %1694 = vmatprep.subr.mxu0 0.0
        %1695 = vmatpush1.msra.mxu0 0.0
        %1696 = vmatprep.subr.mxu0 0.0
        %1697 = vmatpush1.msra.mxu0 0.0
        %1698 = vmatprep.subr.mxu0 0.0
        %1699 = vmatpush1.msra.mxu0 0.0
        %1700 = vmatprep.subr.mxu0 0.0
        %1701 = vmatpush1.msra.mxu0 0.0
        %1702 = vmatprep.subr.mxu0 0.0
        %1703 = vmatpush1.msra.mxu0 0.0
        %1704 = vmatprep.subr.mxu0 0.0
        %1705 = vmatpush1.msra.mxu0 0.0
        %1706 = vmatprep.subr.mxu0 0.0
        %1707 = vmatpush1.msra.mxu0 0.0
        %1708 = vmatprep.subr.mxu0 0.0
        %1709 = vmatpush1.msra.mxu0 0.0
        %1710 = vmatprep.subr.mxu0 0.0
        %1711 = vmatpush1.msra.mxu0 0.0
        %1712 = vmatprep.subr.mxu0 0.0
        %1713 = vmatpush1.msra.mxu0 0.0
        %1714 = vmatprep.subr.mxu0 0.0
        %1715 = vmatpush1.msra.mxu0 0.0
        %1716 = vmatprep.subr.mxu0 0.0
        %1717 = vmatpush1.msra.mxu0 0.0
        %1718 = vmatprep.subr.mxu0 0.0
        %1719 = vmatpush1.msra.mxu0 0.0
        %1720 = vmatprep.subr.mxu0 0.0
        %1721 = vmatpush1.msra.mxu0 0.0
        %1722 = vmatprep.mubr.f32.mxu0 0.0
        %1723 = vmatmul.mubr.f32.gmra.mrb[0].mxu0 %v1653
        %v1724 = vpop.f32.mrb[0].mxu0
        %v1725 = vadd.f32 %v1632, %v1724
        %v1726 = vpop.f32.mrb[0].mxu0
        %1727 = vmatprep.mubr.f32.mxu0 0.0
        %1728 = vmatmul.mubr.f32.gmra.mrb[0].mxu0 %v1656
        %v1729 = vpop.f32.mrb[0].mxu0
        %v1730 = vadd.f32 %v1637, %v1729
        %v1731 = vpop.f32.mrb[0].mxu0
        %1732 = vdwg.mxu0
        %s1733 = scalar_lea.vmem %s5, 32
        %v1734 = vld [vmem:[%s1733] sm:$0xff]
        %v1735 = vld [vmem:[%s1733 + $0x8] sm:$0xff]
        %1736 = vrot.lane.b32.xlu0 %v1536, 119
        %v1737 = vpop.permute.xlu0 %1736
        %1738 = vrot.lane.b32.xlu0 %v1537, 119
        %v1739 = vpop.permute.xlu0 %1738
        %1740 = vrot.lane.b32.xlu0 %v1538, 119
        %v1741 = vpop.permute.xlu0 %1740
        %1742 = vrot.lane.b32.xlu0 %v1539, 119
        %v1743 = vpop.permute.xlu0 %1742
        %v1749 = vsel %vm1153, %v1734, 0
        %v1752 = vsel %vm1153, %v1735, 0
        %1754 = vmatprep.subr.mxu0 0.0
        %1755 = vmatpush1.msra.mxu0 %v1737
        %1756 = vmatprep.subr.mxu0 0.0
        %1757 = vmatpush1.msra.mxu0 %v1739
        %1758 = vmatprep.subr.mxu0 0.0
        %1759 = vmatpush1.msra.mxu0 %v1741
        %1760 = vmatprep.subr.mxu0 0.0
        %1761 = vmatpush1.msra.mxu0 %v1743
        %1762 = vmatprep.subr.mxu0 0.0
        %1763 = vmatpush1.msra.mxu0 0.0
        %1764 = vmatprep.subr.mxu0 0.0
        %1765 = vmatpush1.msra.mxu0 0.0
        %1766 = vmatprep.subr.mxu0 0.0
        %1767 = vmatpush1.msra.mxu0 0.0
        %1768 = vmatprep.subr.mxu0 0.0
        %1769 = vmatpush1.msra.mxu0 0.0
        %1770 = vmatprep.subr.mxu0 0.0
        %1771 = vmatpush1.msra.mxu0 0.0
        %1772 = vmatprep.subr.mxu0 0.0
        %1773 = vmatpush1.msra.mxu0 0.0
        %1774 = vmatprep.subr.mxu0 0.0
        %1775 = vmatpush1.msra.mxu0 0.0
        %1776 = vmatprep.subr.mxu0 0.0
        %1777 = vmatpush1.msra.mxu0 0.0
        %1778 = vmatprep.subr.mxu0 0.0
        %1779 = vmatpush1.msra.mxu0 0.0
        %1780 = vmatprep.subr.mxu0 0.0
        %1781 = vmatpush1.msra.mxu0 0.0
        %1782 = vmatprep.subr.mxu0 0.0
        %1783 = vmatpush1.msra.mxu0 0.0
        %1784 = vmatprep.subr.mxu0 0.0
        %1785 = vmatpush1.msra.mxu0 0.0
        %1786 = vmatprep.subr.mxu0 0.0
        %1787 = vmatpush1.msra.mxu0 0.0
        %1788 = vmatprep.subr.mxu0 0.0
        %1789 = vmatpush1.msra.mxu0 0.0
        %1790 = vmatprep.subr.mxu0 0.0
        %1791 = vmatpush1.msra.mxu0 0.0
        %1792 = vmatprep.subr.mxu0 0.0
        %1793 = vmatpush1.msra.mxu0 0.0
        %1794 = vmatprep.subr.mxu0 0.0
        %1795 = vmatpush1.msra.mxu0 0.0
        %1796 = vmatprep.subr.mxu0 0.0
        %1797 = vmatpush1.msra.mxu0 0.0
        %1798 = vmatprep.subr.mxu0 0.0
        %1799 = vmatpush1.msra.mxu0 0.0
        %1800 = vmatprep.subr.mxu0 0.0
        %1801 = vmatpush1.msra.mxu0 0.0
        %1802 = vmatprep.subr.mxu0 0.0
        %1803 = vmatpush1.msra.mxu0 0.0
        %1804 = vmatprep.subr.mxu0 0.0
        %1805 = vmatpush1.msra.mxu0 0.0
        %1806 = vmatprep.subr.mxu0 0.0
        %1807 = vmatpush1.msra.mxu0 0.0
        %1808 = vmatprep.subr.mxu0 0.0
        %1809 = vmatpush1.msra.mxu0 0.0
        %1810 = vmatprep.subr.mxu0 0.0
        %1811 = vmatpush1.msra.mxu0 0.0
        %1812 = vmatprep.subr.mxu0 0.0
        %1813 = vmatpush1.msra.mxu0 0.0
        %1814 = vmatprep.subr.mxu0 0.0
        %1815 = vmatpush1.msra.mxu0 0.0
        %1816 = vmatprep.subr.mxu0 0.0
        %1817 = vmatpush1.msra.mxu0 0.0
        %1818 = vmatprep.mubr.f32.mxu0 0.0
        %1819 = vmatmul.mubr.f32.gmra.mrb[0].mxu0 %v1749
        %v1820 = vpop.f32.mrb[0].mxu0
        %v1821 = vadd.f32 0.0, %v1820
        %v1822 = vpop.f32.mrb[0].mxu0
        %1823 = vmatprep.mubr.f32.mxu0 0.0
        %1824 = vmatmul.mubr.f32.gmra.mrb[0].mxu0 %v1752
        %v1825 = vpop.f32.mrb[0].mxu0
        %v1826 = vadd.f32 0.0, %v1825
        %v1827 = vpop.f32.mrb[0].mxu0
        %1828 = vdwg.mxu0
        %v1829 = vadd.f32 %v1725, %v1821
        %v1830 = vadd.f32 %v1730, %v1826
        %1832 = vset.pattern.permute.xlu0 0
        %1833 = vperm.xlu0 %1832, %v1530
        %v1834 = vpop.permute.xlu0 %1833
        %1837 = vset.pattern.permute.xlu0 0
        %1838 = vperm.xlu0 %1837, %v1531
        %v1839 = vpop.permute.xlu0 %1838
        %v1841 = vmul.f32 %v1829, %v1834
        %v1842 = vmul.f32 %v1830, %v1839
        %1844 = vset.pattern.permute.xlu0 0
        %1845 = vperm.xlu0 %1844, %v1532
        %v1846 = vpop.permute.xlu0 %1845
        %1849 = vset.pattern.permute.xlu0 0
        %1850 = vperm.xlu0 %1849, %v1533
        %v1851 = vpop.permute.xlu0 %1850
        %v1853 = vadd.f32 %v1841, %v1846
        %v1854 = vadd.f32 %v1842, %v1851
        %v1855 = vmax.f32 %v1853, 0.0
        %v1856 = vmax.f32 %v1854, 0.0
        %1857 = vst.msk [vmem:[#allocation4] sm:$0xff] %vm1153, 0.0
        %1858 = vst.msk [vmem:[#allocation4 + $0x8] sm:$0xff] %vm1153, 0.0
        %1859 = vst.msk [vmem:[#allocation5] sm:$0xff] %vm1153, 0.0
        %1860 = vst.msk [vmem:[#allocation5 + $0x8] sm:$0xff] %vm1153, 0.0
        %1863 = vrot.lane.b32.xlu0 %v1528, 8
        %v1864 = vpop.permute.xlu0 %1863
        %1865 = vrot.lane.b32.xlu0 %v1529, 8
        %v1866 = vpop.permute.xlu0 %1865
        %1869 = vst.msk [vmem:[#allocation4] sm:$0xff] %vm1178, %v1864
        %1870 = vst.msk [vmem:[#allocation4 + $0x8] sm:$0xff] %vm1178, %v1866
        %1873 = vrot.lane.b32.xlu0 %v1855, 8
        %v1874 = vpop.permute.xlu0 %1873
        %1875 = vrot.lane.b32.xlu0 %v1856, 8
        %v1876 = vpop.permute.xlu0 %1875
        %1879 = vst.msk [vmem:[#allocation5] sm:$0xff] %vm1178, %v1874
        %1880 = vst.msk [vmem:[#allocation5 + $0x8] sm:$0xff] %vm1178, %v1876
        %v1881 = vld [vmem:[%s9] sm:$0xff]
        %v1882 = vld [vmem:[%s8] sm:$0xff]
        %v1883 = vld [vmem:[#allocation4] sm:$0xff]
        %v1884 = vld [vmem:[#allocation4 + $0x8] sm:$0xff]
        %s1885 = scalar_lea.vmem %s8, 8
        %v1886 = vld [vmem:[%s1885] sm:$0xff]
        %1889 = vrot.lane.b32.xlu0 %v1883, 120
        %v1890 = vpop.permute.xlu0 %1889
        %1891 = vrot.lane.b32.xlu0 %v1884, 120
        %v1892 = vpop.permute.xlu0 %1891
        %vm1895 = vcmask 130048
        %v1897 = vsel %vm1895, %v1886, 0
        %1899 = vmatprep.subr.mxu0 0.0
        %1900 = vmatpush1.msra.mxu0 %v1890
        %1901 = vmatprep.subr.mxu0 0.0
        %1902 = vmatpush1.msra.mxu0 %v1892
        %1903 = vmatprep.subr.mxu0 0.0
        %1904 = vmatpush1.msra.mxu0 0.0
        %1905 = vmatprep.subr.mxu0 0.0
        %1906 = vmatpush1.msra.mxu0 0.0
        %1907 = vmatprep.subr.mxu0 0.0
        %1908 = vmatpush1.msra.mxu0 0.0
        %1909 = vmatprep.subr.mxu0 0.0
        %1910 = vmatpush1.msra.mxu0 0.0
        %1911 = vmatprep.subr.mxu0 0.0
        %1912 = vmatpush1.msra.mxu0 0.0
        %1913 = vmatprep.subr.mxu0 0.0
        %1914 = vmatpush1.msra.mxu0 0.0
        %1915 = vmatprep.subr.mxu0 0.0
        %1916 = vmatpush1.msra.mxu0 0.0
        %1917 = vmatprep.subr.mxu0 0.0
        %1918 = vmatpush1.msra.mxu0 0.0
        %1919 = vmatprep.subr.mxu0 0.0
        %1920 = vmatpush1.msra.mxu0 0.0
        %1921 = vmatprep.subr.mxu0 0.0
        %1922 = vmatpush1.msra.mxu0 0.0
        %1923 = vmatprep.subr.mxu0 0.0
        %1924 = vmatpush1.msra.mxu0 0.0
        %1925 = vmatprep.subr.mxu0 0.0
        %1926 = vmatpush1.msra.mxu0 0.0
        %1927 = vmatprep.subr.mxu0 0.0
        %1928 = vmatpush1.msra.mxu0 0.0
        %1929 = vmatprep.subr.mxu0 0.0
        %1930 = vmatpush1.msra.mxu0 0.0
        %1931 = vmatprep.subr.mxu0 0.0
        %1932 = vmatpush1.msra.mxu0 0.0
        %1933 = vmatprep.subr.mxu0 0.0
        %1934 = vmatpush1.msra.mxu0 0.0
        %1935 = vmatprep.subr.mxu0 0.0
        %1936 = vmatpush1.msra.mxu0 0.0
        %1937 = vmatprep.subr.mxu0 0.0
        %1938 = vmatpush1.msra.mxu0 0.0
        %1939 = vmatprep.subr.mxu0 0.0
        %1940 = vmatpush1.msra.mxu0 0.0
        %1941 = vmatprep.subr.mxu0 0.0
        %1942 = vmatpush1.msra.mxu0 0.0
        %1943 = vmatprep.subr.mxu0 0.0
        %1944 = vmatpush1.msra.mxu0 0.0
        %1945 = vmatprep.subr.mxu0 0.0
        %1946 = vmatpush1.msra.mxu0 0.0
        %1947 = vmatprep.subr.mxu0 0.0
        %1948 = vmatpush1.msra.mxu0 0.0
        %1949 = vmatprep.subr.mxu0 0.0
        %1950 = vmatpush1.msra.mxu0 0.0
        %1951 = vmatprep.subr.mxu0 0.0
        %1952 = vmatpush1.msra.mxu0 0.0
        %1953 = vmatprep.subr.mxu0 0.0
        %1954 = vmatpush1.msra.mxu0 0.0
        %1955 = vmatprep.subr.mxu0 0.0
        %1956 = vmatpush1.msra.mxu0 0.0
        %1957 = vmatprep.subr.mxu0 0.0
        %1958 = vmatpush1.msra.mxu0 0.0
        %1959 = vmatprep.subr.mxu0 0.0
        %1960 = vmatpush1.msra.mxu0 0.0
        %1961 = vmatprep.subr.mxu0 0.0
        %1962 = vmatpush1.msra.mxu0 0.0
        %1963 = vmatprep.mubr.f32.mxu0 0.0
        %1964 = vmatmul.mubr.f32.gmra.mrb[0].mxu0 %v1897
        %v1965 = vpop.f32.mrb[0].mxu0
        %v1966 = vadd.f32 0.0, %v1965
        %v1967 = vpop.f32.mrb[0].mxu0
        %1968 = vdwg.mxu0
        %1969 = vrot.lane.b32.xlu0 %v1883, 121
        %v1970 = vpop.permute.xlu0 %1969
        %1971 = vrot.lane.b32.xlu0 %v1884, 121
        %v1972 = vpop.permute.xlu0 %1971
        %v1976 = vsel %vm1895, %v1882, 0
        %1978 = vmatprep.subr.mxu0 0.0
        %1979 = vmatpush1.msra.mxu0 %v1970
        %1980 = vmatprep.subr.mxu0 0.0
        %1981 = vmatpush1.msra.mxu0 %v1972
        %1982 = vmatprep.subr.mxu0 0.0
        %1983 = vmatpush1.msra.mxu0 0.0
        %1984 = vmatprep.subr.mxu0 0.0
        %1985 = vmatpush1.msra.mxu0 0.0
        %1986 = vmatprep.subr.mxu0 0.0
        %1987 = vmatpush1.msra.mxu0 0.0
        %1988 = vmatprep.subr.mxu0 0.0
        %1989 = vmatpush1.msra.mxu0 0.0
        %1990 = vmatprep.subr.mxu0 0.0
        %1991 = vmatpush1.msra.mxu0 0.0
        %1992 = vmatprep.subr.mxu0 0.0
        %1993 = vmatpush1.msra.mxu0 0.0
        %1994 = vmatprep.subr.mxu0 0.0
        %1995 = vmatpush1.msra.mxu0 0.0
        %1996 = vmatprep.subr.mxu0 0.0
        %1997 = vmatpush1.msra.mxu0 0.0
        %1998 = vmatprep.subr.mxu0 0.0
        %1999 = vmatpush1.msra.mxu0 0.0
        %2000 = vmatprep.subr.mxu0 0.0
        %2001 = vmatpush1.msra.mxu0 0.0
        %2002 = vmatprep.subr.mxu0 0.0
        %2003 = vmatpush1.msra.mxu0 0.0
        %2004 = vmatprep.subr.mxu0 0.0
        %2005 = vmatpush1.msra.mxu0 0.0
        %2006 = vmatprep.subr.mxu0 0.0
        %2007 = vmatpush1.msra.mxu0 0.0
        %2008 = vmatprep.subr.mxu0 0.0
        %2009 = vmatpush1.msra.mxu0 0.0
        %2010 = vmatprep.subr.mxu0 0.0
        %2011 = vmatpush1.msra.mxu0 0.0
        %2012 = vmatprep.subr.mxu0 0.0
        %2013 = vmatpush1.msra.mxu0 0.0
        %2014 = vmatprep.subr.mxu0 0.0
        %2015 = vmatpush1.msra.mxu0 0.0
        %2016 = vmatprep.subr.mxu0 0.0
        %2017 = vmatpush1.msra.mxu0 0.0
        %2018 = vmatprep.subr.mxu0 0.0
        %2019 = vmatpush1.msra.mxu0 0.0
        %2020 = vmatprep.subr.mxu0 0.0
        %2021 = vmatpush1.msra.mxu0 0.0
        %2022 = vmatprep.subr.mxu0 0.0
        %2023 = vmatpush1.msra.mxu0 0.0
        %2024 = vmatprep.subr.mxu0 0.0
        %2025 = vmatpush1.msra.mxu0 0.0
        %2026 = vmatprep.subr.mxu0 0.0
        %2027 = vmatpush1.msra.mxu0 0.0
        %2028 = vmatprep.subr.mxu0 0.0
        %2029 = vmatpush1.msra.mxu0 0.0
        %2030 = vmatprep.subr.mxu0 0.0
        %2031 = vmatpush1.msra.mxu0 0.0
        %2032 = vmatprep.subr.mxu0 0.0
        %2033 = vmatpush1.msra.mxu0 0.0
        %2034 = vmatprep.subr.mxu0 0.0
        %2035 = vmatpush1.msra.mxu0 0.0
        %2036 = vmatprep.subr.mxu0 0.0
        %2037 = vmatpush1.msra.mxu0 0.0
        %2038 = vmatprep.subr.mxu0 0.0
        %2039 = vmatpush1.msra.mxu0 0.0
        %2040 = vmatprep.subr.mxu0 0.0
        %2041 = vmatpush1.msra.mxu0 0.0
        %2042 = vmatprep.mubr.f32.mxu0 0.0
        %2043 = vmatmul.mubr.f32.gmra.mrb[0].mxu0 %v1976
        %v2044 = vpop.f32.mrb[0].mxu0
        %v2045 = vadd.f32 %v1966, %v2044
        %v2046 = vpop.f32.mrb[0].mxu0
        %2047 = vdwg.mxu0
        %s2048 = scalar_lea.vmem %s8, 16
        %v2049 = vld [vmem:[%s2048] sm:$0xff]
        %2050 = vrot.lane.b32.xlu0 %v1883, 119
        %v2051 = vpop.permute.xlu0 %2050
        %2052 = vrot.lane.b32.xlu0 %v1884, 119
        %v2053 = vpop.permute.xlu0 %2052
        %v2057 = vsel %vm1895, %v2049, 0
        %2059 = vmatprep.subr.mxu0 0.0
        %2060 = vmatpush1.msra.mxu0 %v2051
        %2061 = vmatprep.subr.mxu0 0.0
        %2062 = vmatpush1.msra.mxu0 %v2053
        %2063 = vmatprep.subr.mxu0 0.0
        %2064 = vmatpush1.msra.mxu0 0.0
        %2065 = vmatprep.subr.mxu0 0.0
        %2066 = vmatpush1.msra.mxu0 0.0
        %2067 = vmatprep.subr.mxu0 0.0
        %2068 = vmatpush1.msra.mxu0 0.0
        %2069 = vmatprep.subr.mxu0 0.0
        %2070 = vmatpush1.msra.mxu0 0.0
        %2071 = vmatprep.subr.mxu0 0.0
        %2072 = vmatpush1.msra.mxu0 0.0
        %2073 = vmatprep.subr.mxu0 0.0
        %2074 = vmatpush1.msra.mxu0 0.0
        %2075 = vmatprep.subr.mxu0 0.0
        %2076 = vmatpush1.msra.mxu0 0.0
        %2077 = vmatprep.subr.mxu0 0.0
        %2078 = vmatpush1.msra.mxu0 0.0
        %2079 = vmatprep.subr.mxu0 0.0
        %2080 = vmatpush1.msra.mxu0 0.0
        %2081 = vmatprep.subr.mxu0 0.0
        %2082 = vmatpush1.msra.mxu0 0.0
        %2083 = vmatprep.subr.mxu0 0.0
        %2084 = vmatpush1.msra.mxu0 0.0
        %2085 = vmatprep.subr.mxu0 0.0
        %2086 = vmatpush1.msra.mxu0 0.0
        %2087 = vmatprep.subr.mxu0 0.0
        %2088 = vmatpush1.msra.mxu0 0.0
        %2089 = vmatprep.subr.mxu0 0.0
        %2090 = vmatpush1.msra.mxu0 0.0
        %2091 = vmatprep.subr.mxu0 0.0
        %2092 = vmatpush1.msra.mxu0 0.0
        %2093 = vmatprep.subr.mxu0 0.0
        %2094 = vmatpush1.msra.mxu0 0.0
        %2095 = vmatprep.subr.mxu0 0.0
        %2096 = vmatpush1.msra.mxu0 0.0
        %2097 = vmatprep.subr.mxu0 0.0
        %2098 = vmatpush1.msra.mxu0 0.0
        %2099 = vmatprep.subr.mxu0 0.0
        %2100 = vmatpush1.msra.mxu0 0.0
        %2101 = vmatprep.subr.mxu0 0.0
        %2102 = vmatpush1.msra.mxu0 0.0
        %2103 = vmatprep.subr.mxu0 0.0
        %2104 = vmatpush1.msra.mxu0 0.0
        %2105 = vmatprep.subr.mxu0 0.0
        %2106 = vmatpush1.msra.mxu0 0.0
        %2107 = vmatprep.subr.mxu0 0.0
        %2108 = vmatpush1.msra.mxu0 0.0
        %2109 = vmatprep.subr.mxu0 0.0
        %2110 = vmatpush1.msra.mxu0 0.0
        %2111 = vmatprep.subr.mxu0 0.0
        %2112 = vmatpush1.msra.mxu0 0.0
        %2113 = vmatprep.subr.mxu0 0.0
        %2114 = vmatpush1.msra.mxu0 0.0
        %2115 = vmatprep.subr.mxu0 0.0
        %2116 = vmatpush1.msra.mxu0 0.0
        %2117 = vmatprep.subr.mxu0 0.0
        %2118 = vmatpush1.msra.mxu0 0.0
        %2119 = vmatprep.subr.mxu0 0.0
        %2120 = vmatpush1.msra.mxu0 0.0
        %2121 = vmatprep.subr.mxu0 0.0
        %2122 = vmatpush1.msra.mxu0 0.0
        %2123 = vmatprep.mubr.f32.mxu0 0.0
        %2124 = vmatmul.mubr.f32.gmra.mrb[0].mxu0 %v2057
        %v2125 = vpop.f32.mrb[0].mxu0
        %v2126 = vadd.f32 0.0, %v2125
        %v2127 = vpop.f32.mrb[0].mxu0
        %2128 = vdwg.mxu0
        %v2129 = vadd.f32 %v2045, %v2126
        %2131 = vset.pattern.permute.xlu0 0
        %2132 = vperm.xlu0 %2131, %v1881
        %v2133 = vpop.permute.xlu0 %2132
        %v2135 = vadd.f32 %v2129, %v2133
        %v2136 = vxor.u32 %v2135, 2147483648
        %v2137 = vmul.f32 %v2136, 1.442695
        %v2138 = vpow.pop %v2137
        %v2139 = vadd.f32 %v2138, 1.0
        %v2140 = vrcp.pop %v2139
        %v2141 = vmul.f32 1.0, %v2140
        %v2142 = vld [vmem:[%s11] sm:$0xff]
        %v2143 = vld [vmem:[%s10] sm:$0xff]
        %v2144 = vld [vmem:[#allocation5] sm:$0xff]
        %v2145 = vld [vmem:[#allocation5 + $0x8] sm:$0xff]
        %s2146 = scalar_lea.vmem %s10, 8
        %v2147 = vld [vmem:[%s2146] sm:$0xff]
        %2150 = vrot.lane.b32.xlu0 %v2144, 120
        %v2151 = vpop.permute.xlu0 %2150
        %2152 = vrot.lane.b32.xlu0 %v2145, 120
        %v2153 = vpop.permute.xlu0 %2152
        %v2157 = vsel %vm1895, %v2147, 0
        %2159 = vmatprep.subr.mxu0 0.0
        %2160 = vmatpush1.msra.mxu0 %v2151
        %2161 = vmatprep.subr.mxu0 0.0
        %2162 = vmatpush1.msra.mxu0 %v2153
        %2163 = vmatprep.subr.mxu0 0.0
        %2164 = vmatpush1.msra.mxu0 0.0
        %2165 = vmatprep.subr.mxu0 0.0
        %2166 = vmatpush1.msra.mxu0 0.0
        %2167 = vmatprep.subr.mxu0 0.0
        %2168 = vmatpush1.msra.mxu0 0.0
        %2169 = vmatprep.subr.mxu0 0.0
        %2170 = vmatpush1.msra.mxu0 0.0
        %2171 = vmatprep.subr.mxu0 0.0
        %2172 = vmatpush1.msra.mxu0 0.0
        %2173 = vmatprep.subr.mxu0 0.0
        %2174 = vmatpush1.msra.mxu0 0.0
        %2175 = vmatprep.subr.mxu0 0.0
        %2176 = vmatpush1.msra.mxu0 0.0
        %2177 = vmatprep.subr.mxu0 0.0
        %2178 = vmatpush1.msra.mxu0 0.0
        %2179 = vmatprep.subr.mxu0 0.0
        %2180 = vmatpush1.msra.mxu0 0.0
        %2181 = vmatprep.subr.mxu0 0.0
        %2182 = vmatpush1.msra.mxu0 0.0
        %2183 = vmatprep.subr.mxu0 0.0
        %2184 = vmatpush1.msra.mxu0 0.0
        %2185 = vmatprep.subr.mxu0 0.0
        %2186 = vmatpush1.msra.mxu0 0.0
        %2187 = vmatprep.subr.mxu0 0.0
        %2188 = vmatpush1.msra.mxu0 0.0
        %2189 = vmatprep.subr.mxu0 0.0
        %2190 = vmatpush1.msra.mxu0 0.0
        %2191 = vmatprep.subr.mxu0 0.0
        %2192 = vmatpush1.msra.mxu0 0.0
        %2193 = vmatprep.subr.mxu0 0.0
        %2194 = vmatpush1.msra.mxu0 0.0
        %2195 = vmatprep.subr.mxu0 0.0
        %2196 = vmatpush1.msra.mxu0 0.0
        %2197 = vmatprep.subr.mxu0 0.0
        %2198 = vmatpush1.msra.mxu0 0.0
        %2199 = vmatprep.subr.mxu0 0.0
        %2200 = vmatpush1.msra.mxu0 0.0
        %2201 = vmatprep.subr.mxu0 0.0
        %2202 = vmatpush1.msra.mxu0 0.0
        %2203 = vmatprep.subr.mxu0 0.0
        %2204 = vmatpush1.msra.mxu0 0.0
        %2205 = vmatprep.subr.mxu0 0.0
        %2206 = vmatpush1.msra.mxu0 0.0
        %2207 = vmatprep.subr.mxu0 0.0
        %2208 = vmatpush1.msra.mxu0 0.0
        %2209 = vmatprep.subr.mxu0 0.0
        %2210 = vmatpush1.msra.mxu0 0.0
        %2211 = vmatprep.subr.mxu0 0.0
        %2212 = vmatpush1.msra.mxu0 0.0
        %2213 = vmatprep.subr.mxu0 0.0
        %2214 = vmatpush1.msra.mxu0 0.0
        %2215 = vmatprep.subr.mxu0 0.0
        %2216 = vmatpush1.msra.mxu0 0.0
        %2217 = vmatprep.subr.mxu0 0.0
        %2218 = vmatpush1.msra.mxu0 0.0
        %2219 = vmatprep.subr.mxu0 0.0
        %2220 = vmatpush1.msra.mxu0 0.0
        %2221 = vmatprep.subr.mxu0 0.0
        %2222 = vmatpush1.msra.mxu0 0.0
        %2223 = vmatprep.mubr.f32.mxu0 0.0
        %2224 = vmatmul.mubr.f32.gmra.mrb[0].mxu0 %v2157
        %v2225 = vpop.f32.mrb[0].mxu0
        %v2226 = vadd.f32 0.0, %v2225
        %v2227 = vpop.f32.mrb[0].mxu0
        %2228 = vdwg.mxu0
        %2229 = vrot.lane.b32.xlu0 %v2144, 121
        %v2230 = vpop.permute.xlu0 %2229
        %2231 = vrot.lane.b32.xlu0 %v2145, 121
        %v2232 = vpop.permute.xlu0 %2231
        %v2236 = vsel %vm1895, %v2143, 0
        %2238 = vmatprep.subr.mxu0 0.0
        %2239 = vmatpush1.msra.mxu0 %v2230
        %2240 = vmatprep.subr.mxu0 0.0
        %2241 = vmatpush1.msra.mxu0 %v2232
        %2242 = vmatprep.subr.mxu0 0.0
        %2243 = vmatpush1.msra.mxu0 0.0
        %2244 = vmatprep.subr.mxu0 0.0
        %2245 = vmatpush1.msra.mxu0 0.0
        %2246 = vmatprep.subr.mxu0 0.0
        %2247 = vmatpush1.msra.mxu0 0.0
        %2248 = vmatprep.subr.mxu0 0.0
        %2249 = vmatpush1.msra.mxu0 0.0
        %2250 = vmatprep.subr.mxu0 0.0
        %2251 = vmatpush1.msra.mxu0 0.0
        %2252 = vmatprep.subr.mxu0 0.0
        %2253 = vmatpush1.msra.mxu0 0.0
        %2254 = vmatprep.subr.mxu0 0.0
        %2255 = vmatpush1.msra.mxu0 0.0
        %2256 = vmatprep.subr.mxu0 0.0
        %2257 = vmatpush1.msra.mxu0 0.0
        %2258 = vmatprep.subr.mxu0 0.0
        %2259 = vmatpush1.msra.mxu0 0.0
        %2260 = vmatprep.subr.mxu0 0.0
        %2261 = vmatpush1.msra.mxu0 0.0
        %2262 = vmatprep.subr.mxu0 0.0
        %2263 = vmatpush1.msra.mxu0 0.0
        %2264 = vmatprep.subr.mxu0 0.0
        %2265 = vmatpush1.msra.mxu0 0.0
        %2266 = vmatprep.subr.mxu0 0.0
        %2267 = vmatpush1.msra.mxu0 0.0
        %2268 = vmatprep.subr.mxu0 0.0
        %2269 = vmatpush1.msra.mxu0 0.0
        %2270 = vmatprep.subr.mxu0 0.0
        %2271 = vmatpush1.msra.mxu0 0.0
        %2272 = vmatprep.subr.mxu0 0.0
        %2273 = vmatpush1.msra.mxu0 0.0
        %2274 = vmatprep.subr.mxu0 0.0
        %2275 = vmatpush1.msra.mxu0 0.0
        %2276 = vmatprep.subr.mxu0 0.0
        %2277 = vmatpush1.msra.mxu0 0.0
        %2278 = vmatprep.subr.mxu0 0.0
        %2279 = vmatpush1.msra.mxu0 0.0
        %2280 = vmatprep.subr.mxu0 0.0
        %2281 = vmatpush1.msra.mxu0 0.0
        %2282 = vmatprep.subr.mxu0 0.0
        %2283 = vmatpush1.msra.mxu0 0.0
        %2284 = vmatprep.subr.mxu0 0.0
        %2285 = vmatpush1.msra.mxu0 0.0
        %2286 = vmatprep.subr.mxu0 0.0
        %2287 = vmatpush1.msra.mxu0 0.0
        %2288 = vmatprep.subr.mxu0 0.0
        %2289 = vmatpush1.msra.mxu0 0.0
        %2290 = vmatprep.subr.mxu0 0.0
        %2291 = vmatpush1.msra.mxu0 0.0
        %2292 = vmatprep.subr.mxu0 0.0
        %2293 = vmatpush1.msra.mxu0 0.0
        %2294 = vmatprep.subr.mxu0 0.0
        %2295 = vmatpush1.msra.mxu0 0.0
        %2296 = vmatprep.subr.mxu0 0.0
        %2297 = vmatpush1.msra.mxu0 0.0
        %2298 = vmatprep.subr.mxu0 0.0
        %2299 = vmatpush1.msra.mxu0 0.0
        %2300 = vmatprep.subr.mxu0 0.0
        %2301 = vmatpush1.msra.mxu0 0.0
        %2302 = vmatprep.mubr.f32.mxu0 0.0
        %2303 = vmatmul.mubr.f32.gmra.mrb[0].mxu0 %v2236
        %v2304 = vpop.f32.mrb[0].mxu0
        %v2305 = vadd.f32 %v2226, %v2304
        %v2306 = vpop.f32.mrb[0].mxu0
        %2307 = vdwg.mxu0
        %s2308 = scalar_lea.vmem %s10, 16
        %v2309 = vld [vmem:[%s2308] sm:$0xff]
        %2310 = vrot.lane.b32.xlu0 %v2144, 119
        %v2311 = vpop.permute.xlu0 %2310
        %2312 = vrot.lane.b32.xlu0 %v2145, 119
        %v2313 = vpop.permute.xlu0 %2312
        %v2317 = vsel %vm1895, %v2309, 0
        %2319 = vmatprep.subr.mxu0 0.0
        %2320 = vmatpush1.msra.mxu0 %v2311
        %2321 = vmatprep.subr.mxu0 0.0
        %2322 = vmatpush1.msra.mxu0 %v2313
        %2323 = vmatprep.subr.mxu0 0.0
        %2324 = vmatpush1.msra.mxu0 0.0
        %2325 = vmatprep.subr.mxu0 0.0
        %2326 = vmatpush1.msra.mxu0 0.0
        %2327 = vmatprep.subr.mxu0 0.0
        %2328 = vmatpush1.msra.mxu0 0.0
        %2329 = vmatprep.subr.mxu0 0.0
        %2330 = vmatpush1.msra.mxu0 0.0
        %2331 = vmatprep.subr.mxu0 0.0
        %2332 = vmatpush1.msra.mxu0 0.0
        %2333 = vmatprep.subr.mxu0 0.0
        %2334 = vmatpush1.msra.mxu0 0.0
        %2335 = vmatprep.subr.mxu0 0.0
        %2336 = vmatpush1.msra.mxu0 0.0
        %2337 = vmatprep.subr.mxu0 0.0
        %2338 = vmatpush1.msra.mxu0 0.0
        %2339 = vmatprep.subr.mxu0 0.0
        %2340 = vmatpush1.msra.mxu0 0.0
        %2341 = vmatprep.subr.mxu0 0.0
        %2342 = vmatpush1.msra.mxu0 0.0
        %2343 = vmatprep.subr.mxu0 0.0
        %2344 = vmatpush1.msra.mxu0 0.0
        %2345 = vmatprep.subr.mxu0 0.0
        %2346 = vmatpush1.msra.mxu0 0.0
        %2347 = vmatprep.subr.mxu0 0.0
        %2348 = vmatpush1.msra.mxu0 0.0
        %2349 = vmatprep.subr.mxu0 0.0
        %2350 = vmatpush1.msra.mxu0 0.0
        %2351 = vmatprep.subr.mxu0 0.0
        %2352 = vmatpush1.msra.mxu0 0.0
        %2353 = vmatprep.subr.mxu0 0.0
        %2354 = vmatpush1.msra.mxu0 0.0
        %2355 = vmatprep.subr.mxu0 0.0
        %2356 = vmatpush1.msra.mxu0 0.0
        %2357 = vmatprep.subr.mxu0 0.0
        %2358 = vmatpush1.msra.mxu0 0.0
        %2359 = vmatprep.subr.mxu0 0.0
        %2360 = vmatpush1.msra.mxu0 0.0
        %2361 = vmatprep.subr.mxu0 0.0
        %2362 = vmatpush1.msra.mxu0 0.0
        %2363 = vmatprep.subr.mxu0 0.0
        %2364 = vmatpush1.msra.mxu0 0.0
        %2365 = vmatprep.subr.mxu0 0.0
        %2366 = vmatpush1.msra.mxu0 0.0
        %2367 = vmatprep.subr.mxu0 0.0
        %2368 = vmatpush1.msra.mxu0 0.0
        %2369 = vmatprep.subr.mxu0 0.0
        %2370 = vmatpush1.msra.mxu0 0.0
        %2371 = vmatprep.subr.mxu0 0.0
        %2372 = vmatpush1.msra.mxu0 0.0
        %2373 = vmatprep.subr.mxu0 0.0
        %2374 = vmatpush1.msra.mxu0 0.0
        %2375 = vmatprep.subr.mxu0 0.0
        %2376 = vmatpush1.msra.mxu0 0.0
        %2377 = vmatprep.subr.mxu0 0.0
        %2378 = vmatpush1.msra.mxu0 0.0
        %2379 = vmatprep.subr.mxu0 0.0
        %2380 = vmatpush1.msra.mxu0 0.0
        %2381 = vmatprep.subr.mxu0 0.0
        %2382 = vmatpush1.msra.mxu0 0.0
        %2383 = vmatprep.mubr.f32.mxu0 0.0
        %2384 = vmatmul.mubr.f32.gmra.mrb[0].mxu0 %v2317
        %v2385 = vpop.f32.mrb[0].mxu0
        %v2386 = vadd.f32 0.0, %v2385
        %v2387 = vpop.f32.mrb[0].mxu0
        %2388 = vdwg.mxu0
        %v2389 = vadd.f32 %v2305, %v2386
        %2391 = vset.pattern.permute.xlu0 0
        %2392 = vperm.xlu0 %2391, %v2142
        %v2393 = vpop.permute.xlu0 %2392
        %v2395 = vadd.f32 %v2389, %v2393
        %v2396 = vxor.u32 %v2395, 2147483648
        %v2397 = vmul.f32 %v2396, 1.442695
        %v2398 = vpow.pop %v2397
        %v2399 = vadd.f32 %v2398, 1.0
        %v2400 = vrcp.pop %v2399
        %v2401 = vmul.f32 1.0, %v2400
        %2402 = vst.msk [vmem:[%s797] sm:$0xff] %vm1895, %v2141
        %2403 = vst.msk [vmem:[%s804] sm:$0xff] %vm1895, %v2401
        %v2404 = vld [vmem:[%s13] sm:$0xff]
        %v2405 = vld [vmem:[%s13 + $0x8] sm:$0xff]
        %v2406 = vld [vmem:[%s13 + $0x10] sm:$0xff]
        %v2407 = vld [vmem:[%s13 + $0x18] sm:$0xff]
        %v2408 = vld [vmem:[%s12] sm:$0xff]
        %v2409 = vld [vmem:[%s12 + $0x8] sm:$0xff]
        %v2410 = vld [vmem:[%s12 + $0x10] sm:$0xff]
        %v2411 = vld [vmem:[%s12 + $0x18] sm:$0xff]
        %v2412 = vld [vmem:[#allocation4] sm:$0xff]
        %v2413 = vld [vmem:[#allocation4 + $0x8] sm:$0xff]
        %s2414 = scalar_lea.vmem %s12, 32
        %v2415 = vld [vmem:[%s2414] sm:$0xff]
        %v2416 = vld [vmem:[%s2414 + $0x8] sm:$0xff]
        %v2417 = vld [vmem:[%s2414 + $0x10] sm:$0xff]
        %v2418 = vld [vmem:[%s2414 + $0x18] sm:$0xff]
        %2421 = vrot.lane.b32.xlu0 %v2412, 122
        %v2422 = vpop.permute.xlu0 %2421
        %2423 = vrot.lane.b32.xlu0 %v2413, 122
        %v2424 = vpop.permute.xlu0 %2423
        %v2428 = vsel %vm1895, %v2415, 0
        %v2431 = vsel %vm1895, %v2416, 0
        %v2434 = vsel %vm1895, %v2417, 0
        %v2437 = vsel %vm1895, %v2418, 0
        %2439 = vmatprep.subr.mxu0 0.0
        %2440 = vmatpush1.msra.mxu0 %v2422
        %2441 = vmatprep.subr.mxu0 0.0
        %2442 = vmatpush1.msra.mxu0 %v2424
        %2443 = vmatprep.subr.mxu0 0.0
        %2444 = vmatpush1.msra.mxu0 0.0
        %2445 = vmatprep.subr.mxu0 0.0
        %2446 = vmatpush1.msra.mxu0 0.0
        %2447 = vmatprep.subr.mxu0 0.0
        %2448 = vmatpush1.msra.mxu0 0.0
        %2449 = vmatprep.subr.mxu0 0.0
        %2450 = vmatpush1.msra.mxu0 0.0
        %2451 = vmatprep.subr.mxu0 0.0
        %2452 = vmatpush1.msra.mxu0 0.0
        %2453 = vmatprep.subr.mxu0 0.0
        %2454 = vmatpush1.msra.mxu0 0.0
        %2455 = vmatprep.subr.mxu0 0.0
        %2456 = vmatpush1.msra.mxu0 0.0
        %2457 = vmatprep.subr.mxu0 0.0
        %2458 = vmatpush1.msra.mxu0 0.0
        %2459 = vmatprep.subr.mxu0 0.0
        %2460 = vmatpush1.msra.mxu0 0.0
        %2461 = vmatprep.subr.mxu0 0.0
        %2462 = vmatpush1.msra.mxu0 0.0
        %2463 = vmatprep.subr.mxu0 0.0
        %2464 = vmatpush1.msra.mxu0 0.0
        %2465 = vmatprep.subr.mxu0 0.0
        %2466 = vmatpush1.msra.mxu0 0.0
        %2467 = vmatprep.subr.mxu0 0.0
        %2468 = vmatpush1.msra.mxu0 0.0
        %2469 = vmatprep.subr.mxu0 0.0
        %2470 = vmatpush1.msra.mxu0 0.0
        %2471 = vmatprep.subr.mxu0 0.0
        %2472 = vmatpush1.msra.mxu0 0.0
        %2473 = vmatprep.subr.mxu0 0.0
        %2474 = vmatpush1.msra.mxu0 0.0
        %2475 = vmatprep.subr.mxu0 0.0
        %2476 = vmatpush1.msra.mxu0 0.0
        %2477 = vmatprep.subr.mxu0 0.0
        %2478 = vmatpush1.msra.mxu0 0.0
        %2479 = vmatprep.subr.mxu0 0.0
        %2480 = vmatpush1.msra.mxu0 0.0
        %2481 = vmatprep.subr.mxu0 0.0
        %2482 = vmatpush1.msra.mxu0 0.0
        %2483 = vmatprep.subr.mxu0 0.0
        %2484 = vmatpush1.msra.mxu0 0.0
        %2485 = vmatprep.subr.mxu0 0.0
        %2486 = vmatpush1.msra.mxu0 0.0
        %2487 = vmatprep.subr.mxu0 0.0
        %2488 = vmatpush1.msra.mxu0 0.0
        %2489 = vmatprep.subr.mxu0 0.0
        %2490 = vmatpush1.msra.mxu0 0.0
        %2491 = vmatprep.subr.mxu0 0.0
        %2492 = vmatpush1.msra.mxu0 0.0
        %2493 = vmatprep.subr.mxu0 0.0
        %2494 = vmatpush1.msra.mxu0 0.0
        %2495 = vmatprep.subr.mxu0 0.0
        %2496 = vmatpush1.msra.mxu0 0.0
        %2497 = vmatprep.subr.mxu0 0.0
        %2498 = vmatpush1.msra.mxu0 0.0
        %2499 = vmatprep.subr.mxu0 0.0
        %2500 = vmatpush1.msra.mxu0 0.0
        %2501 = vmatprep.subr.mxu0 0.0
        %2502 = vmatpush1.msra.mxu0 0.0
        %2503 = vmatprep.mubr.f32.mxu0 0.0
        %2504 = vmatmul.mubr.f32.gmra.mrb[0].mxu0 %v2428
        %v2505 = vpop.f32.mrb[0].mxu0
        %v2506 = vadd.f32 0.0, %v2505
        %v2507 = vpop.f32.mrb[0].mxu0
        %2508 = vmatprep.mubr.f32.mxu0 0.0
        %2509 = vmatmul.mubr.f32.gmra.mrb[0].mxu0 %v2431
        %v2510 = vpop.f32.mrb[0].mxu0
        %v2511 = vadd.f32 0.0, %v2510
        %v2512 = vpop.f32.mrb[0].mxu0
        %2513 = vmatprep.mubr.f32.mxu0 0.0
        %2514 = vmatmul.mubr.f32.gmra.mrb[0].mxu0 %v2434
        %v2515 = vpop.f32.mrb[0].mxu0
        %v2516 = vadd.f32 0.0, %v2515
        %v2517 = vpop.f32.mrb[0].mxu0
        %2518 = vmatprep.mubr.f32.mxu0 0.0
        %2519 = vmatmul.mubr.f32.gmra.mrb[0].mxu0 %v2437
        %v2520 = vpop.f32.mrb[0].mxu0
        %v2521 = vadd.f32 0.0, %v2520
        %v2522 = vpop.f32.mrb[0].mxu0
        %2523 = vdwg.mxu0
        %2524 = vrot.lane.b32.xlu0 %v2412, 123
        %v2525 = vpop.permute.xlu0 %2524
        %2526 = vrot.lane.b32.xlu0 %v2413, 123
        %v2527 = vpop.permute.xlu0 %2526
        %v2531 = vsel %vm1895, %v2408, 0
        %v2534 = vsel %vm1895, %v2409, 0
        %v2537 = vsel %vm1895, %v2410, 0
        %v2540 = vsel %vm1895, %v2411, 0
        %2542 = vmatprep.subr.mxu0 0.0
        %2543 = vmatpush1.msra.mxu0 %v2525
        %2544 = vmatprep.subr.mxu0 0.0
        %2545 = vmatpush1.msra.mxu0 %v2527
        %2546 = vmatprep.subr.mxu0 0.0
        %2547 = vmatpush1.msra.mxu0 0.0
        %2548 = vmatprep.subr.mxu0 0.0
        %2549 = vmatpush1.msra.mxu0 0.0
        %2550 = vmatprep.subr.mxu0 0.0
        %2551 = vmatpush1.msra.mxu0 0.0
        %2552 = vmatprep.subr.mxu0 0.0
        %2553 = vmatpush1.msra.mxu0 0.0
        %2554 = vmatprep.subr.mxu0 0.0
        %2555 = vmatpush1.msra.mxu0 0.0
        %2556 = vmatprep.subr.mxu0 0.0
        %2557 = vmatpush1.msra.mxu0 0.0
        %2558 = vmatprep.subr.mxu0 0.0
        %2559 = vmatpush1.msra.mxu0 0.0
        %2560 = vmatprep.subr.mxu0 0.0
        %2561 = vmatpush1.msra.mxu0 0.0
        %2562 = vmatprep.subr.mxu0 0.0
        %2563 = vmatpush1.msra.mxu0 0.0
        %2564 = vmatprep.subr.mxu0 0.0
        %2565 = vmatpush1.msra.mxu0 0.0
        %2566 = vmatprep.subr.mxu0 0.0
        %2567 = vmatpush1.msra.mxu0 0.0
        %2568 = vmatprep.subr.mxu0 0.0
        %2569 = vmatpush1.msra.mxu0 0.0
        %2570 = vmatprep.subr.mxu0 0.0
        %2571 = vmatpush1.msra.mxu0 0.0
        %2572 = vmatprep.subr.mxu0 0.0
        %2573 = vmatpush1.msra.mxu0 0.0
        %2574 = vmatprep.subr.mxu0 0.0
        %2575 = vmatpush1.msra.mxu0 0.0
        %2576 = vmatprep.subr.mxu0 0.0
        %2577 = vmatpush1.msra.mxu0 0.0
        %2578 = vmatprep.subr.mxu0 0.0
        %2579 = vmatpush1.msra.mxu0 0.0
        %2580 = vmatprep.subr.mxu0 0.0
        %2581 = vmatpush1.msra.mxu0 0.0
        %2582 = vmatprep.subr.mxu0 0.0
        %2583 = vmatpush1.msra.mxu0 0.0
        %2584 = vmatprep.subr.mxu0 0.0
        %2585 = vmatpush1.msra.mxu0 0.0
        %2586 = vmatprep.subr.mxu0 0.0
        %2587 = vmatpush1.msra.mxu0 0.0
        %2588 = vmatprep.subr.mxu0 0.0
        %2589 = vmatpush1.msra.mxu0 0.0
        %2590 = vmatprep.subr.mxu0 0.0
        %2591 = vmatpush1.msra.mxu0 0.0
        %2592 = vmatprep.subr.mxu0 0.0
        %2593 = vmatpush1.msra.mxu0 0.0
        %2594 = vmatprep.subr.mxu0 0.0
        %2595 = vmatpush1.msra.mxu0 0.0
        %2596 = vmatprep.subr.mxu0 0.0
        %2597 = vmatpush1.msra.mxu0 0.0
        %2598 = vmatprep.subr.mxu0 0.0
        %2599 = vmatpush1.msra.mxu0 0.0
        %2600 = vmatprep.subr.mxu0 0.0
        %2601 = vmatpush1.msra.mxu0 0.0
        %2602 = vmatprep.subr.mxu0 0.0
        %2603 = vmatpush1.msra.mxu0 0.0
        %2604 = vmatprep.subr.mxu0 0.0
        %2605 = vmatpush1.msra.mxu0 0.0
        %2606 = vmatprep.mubr.f32.mxu0 0.0
        %2607 = vmatmul.mubr.f32.gmra.mrb[0].mxu0 %v2531
        %v2608 = vpop.f32.mrb[0].mxu0
        %v2609 = vadd.f32 %v2506, %v2608
        %v2610 = vpop.f32.mrb[0].mxu0
        %2611 = vmatprep.mubr.f32.mxu0 0.0
        %2612 = vmatmul.mubr.f32.gmra.mrb[0].mxu0 %v2534
        %v2613 = vpop.f32.mrb[0].mxu0
        %v2614 = vadd.f32 %v2511, %v2613
        %v2615 = vpop.f32.mrb[0].mxu0
        %2616 = vmatprep.mubr.f32.mxu0 0.0
        %2617 = vmatmul.mubr.f32.gmra.mrb[0].mxu0 %v2537
        %v2618 = vpop.f32.mrb[0].mxu0
        %v2619 = vadd.f32 %v2516, %v2618
        %v2620 = vpop.f32.mrb[0].mxu0
        %2621 = vmatprep.mubr.f32.mxu0 0.0
        %2622 = vmatmul.mubr.f32.gmra.mrb[0].mxu0 %v2540
        %v2623 = vpop.f32.mrb[0].mxu0
        %v2624 = vadd.f32 %v2521, %v2623
        %v2625 = vpop.f32.mrb[0].mxu0
        %2626 = vdwg.mxu0
        %s2627 = scalar_lea.vmem %s12, 64
        %v2628 = vld [vmem:[%s2627] sm:$0xff]
        %v2629 = vld [vmem:[%s2627 + $0x8] sm:$0xff]
        %v2630 = vld [vmem:[%s2627 + $0x10] sm:$0xff]
        %v2631 = vld [vmem:[%s2627 + $0x18] sm:$0xff]
        %2632 = vrot.lane.b32.xlu0 %v2412, 121
        %v2633 = vpop.permute.xlu0 %2632
        %2634 = vrot.lane.b32.xlu0 %v2413, 121
        %v2635 = vpop.permute.xlu0 %2634
        %v2639 = vsel %vm1895, %v2628, 0
        %v2642 = vsel %vm1895, %v2629, 0
        %v2645 = vsel %vm1895, %v2630, 0
        %v2648 = vsel %vm1895, %v2631, 0
        %2650 = vmatprep.subr.mxu0 0.0
        %2651 = vmatpush1.msra.mxu0 %v2633
        %2652 = vmatprep.subr.mxu0 0.0
        %2653 = vmatpush1.msra.mxu0 %v2635
        %2654 = vmatprep.subr.mxu0 0.0
        %2655 = vmatpush1.msra.mxu0 0.0
        %2656 = vmatprep.subr.mxu0 0.0
        %2657 = vmatpush1.msra.mxu0 0.0
        %2658 = vmatprep.subr.mxu0 0.0
        %2659 = vmatpush1.msra.mxu0 0.0
        %2660 = vmatprep.subr.mxu0 0.0
        %2661 = vmatpush1.msra.mxu0 0.0
        %2662 = vmatprep.subr.mxu0 0.0
        %2663 = vmatpush1.msra.mxu0 0.0
        %2664 = vmatprep.subr.mxu0 0.0
        %2665 = vmatpush1.msra.mxu0 0.0
        %2666 = vmatprep.subr.mxu0 0.0
        %2667 = vmatpush1.msra.mxu0 0.0
        %2668 = vmatprep.subr.mxu0 0.0
        %2669 = vmatpush1.msra.mxu0 0.0
        %2670 = vmatprep.subr.mxu0 0.0
        %2671 = vmatpush1.msra.mxu0 0.0
        %2672 = vmatprep.subr.mxu0 0.0
        %2673 = vmatpush1.msra.mxu0 0.0
        %2674 = vmatprep.subr.mxu0 0.0
        %2675 = vmatpush1.msra.mxu0 0.0
        %2676 = vmatprep.subr.mxu0 0.0
        %2677 = vmatpush1.msra.mxu0 0.0
        %2678 = vmatprep.subr.mxu0 0.0
        %2679 = vmatpush1.msra.mxu0 0.0
        %2680 = vmatprep.subr.mxu0 0.0
        %2681 = vmatpush1.msra.mxu0 0.0
        %2682 = vmatprep.subr.mxu0 0.0
        %2683 = vmatpush1.msra.mxu0 0.0
        %2684 = vmatprep.subr.mxu0 0.0
        %2685 = vmatpush1.msra.mxu0 0.0
        %2686 = vmatprep.subr.mxu0 0.0
        %2687 = vmatpush1.msra.mxu0 0.0
        %2688 = vmatprep.subr.mxu0 0.0
        %2689 = vmatpush1.msra.mxu0 0.0
        %2690 = vmatprep.subr.mxu0 0.0
        %2691 = vmatpush1.msra.mxu0 0.0
        %2692 = vmatprep.subr.mxu0 0.0
        %2693 = vmatpush1.msra.mxu0 0.0
        %2694 = vmatprep.subr.mxu0 0.0
        %2695 = vmatpush1.msra.mxu0 0.0
        %2696 = vmatprep.subr.mxu0 0.0
        %2697 = vmatpush1.msra.mxu0 0.0
        %2698 = vmatprep.subr.mxu0 0.0
        %2699 = vmatpush1.msra.mxu0 0.0
        %2700 = vmatprep.subr.mxu0 0.0
        %2701 = vmatpush1.msra.mxu0 0.0
        %2702 = vmatprep.subr.mxu0 0.0
        %2703 = vmatpush1.msra.mxu0 0.0
        %2704 = vmatprep.subr.mxu0 0.0
        %2705 = vmatpush1.msra.mxu0 0.0
        %2706 = vmatprep.subr.mxu0 0.0
        %2707 = vmatpush1.msra.mxu0 0.0
        %2708 = vmatprep.subr.mxu0 0.0
        %2709 = vmatpush1.msra.mxu0 0.0
        %2710 = vmatprep.subr.mxu0 0.0
        %2711 = vmatpush1.msra.mxu0 0.0
        %2712 = vmatprep.subr.mxu0 0.0
        %2713 = vmatpush1.msra.mxu0 0.0
        %2714 = vmatprep.mubr.f32.mxu0 0.0
        %2715 = vmatmul.mubr.f32.gmra.mrb[0].mxu0 %v2639
        %v2716 = vpop.f32.mrb[0].mxu0
        %v2717 = vadd.f32 0.0, %v2716
        %v2718 = vpop.f32.mrb[0].mxu0
        %2719 = vmatprep.mubr.f32.mxu0 0.0
        %2720 = vmatmul.mubr.f32.gmra.mrb[0].mxu0 %v2642
        %v2721 = vpop.f32.mrb[0].mxu0
        %v2722 = vadd.f32 0.0, %v2721
        %v2723 = vpop.f32.mrb[0].mxu0
        %2724 = vmatprep.mubr.f32.mxu0 0.0
        %2725 = vmatmul.mubr.f32.gmra.mrb[0].mxu0 %v2645
        %v2726 = vpop.f32.mrb[0].mxu0
        %v2727 = vadd.f32 0.0, %v2726
        %v2728 = vpop.f32.mrb[0].mxu0
        %2729 = vmatprep.mubr.f32.mxu0 0.0
        %2730 = vmatmul.mubr.f32.gmra.mrb[0].mxu0 %v2648
        %v2731 = vpop.f32.mrb[0].mxu0
        %v2732 = vadd.f32 0.0, %v2731
        %v2733 = vpop.f32.mrb[0].mxu0
        %2734 = vdwg.mxu0
        %v2735 = vadd.f32 %v2609, %v2717
        %v2736 = vadd.f32 %v2614, %v2722
        %v2737 = vadd.f32 %v2619, %v2727
        %v2738 = vadd.f32 %v2624, %v2732
        %s2739 = scalar_lea.vmem %s12, 96
        %v2740 = vld [vmem:[%s2739] sm:$0xff]
        %v2741 = vld [vmem:[%s2739 + $0x8] sm:$0xff]
        %v2742 = vld [vmem:[%s2739 + $0x10] sm:$0xff]
        %v2743 = vld [vmem:[%s2739 + $0x18] sm:$0xff]
        %2744 = vrot.lane.b32.xlu0 %v2412, 120
        %v2745 = vpop.permute.xlu0 %2744
        %2746 = vrot.lane.b32.xlu0 %v2413, 120
        %v2747 = vpop.permute.xlu0 %2746
        %v2751 = vsel %vm1895, %v2740, 0
        %v2754 = vsel %vm1895, %v2741, 0
        %v2757 = vsel %vm1895, %v2742, 0
        %v2760 = vsel %vm1895, %v2743, 0
        %2762 = vmatprep.subr.mxu0 0.0
        %2763 = vmatpush1.msra.mxu0 %v2745
        %2764 = vmatprep.subr.mxu0 0.0
        %2765 = vmatpush1.msra.mxu0 %v2747
        %2766 = vmatprep.subr.mxu0 0.0
        %2767 = vmatpush1.msra.mxu0 0.0
        %2768 = vmatprep.subr.mxu0 0.0
        %2769 = vmatpush1.msra.mxu0 0.0
        %2770 = vmatprep.subr.mxu0 0.0
        %2771 = vmatpush1.msra.mxu0 0.0
        %2772 = vmatprep.subr.mxu0 0.0
        %2773 = vmatpush1.msra.mxu0 0.0
        %2774 = vmatprep.subr.mxu0 0.0
        %2775 = vmatpush1.msra.mxu0 0.0
        %2776 = vmatprep.subr.mxu0 0.0
        %2777 = vmatpush1.msra.mxu0 0.0
        %2778 = vmatprep.subr.mxu0 0.0
        %2779 = vmatpush1.msra.mxu0 0.0
        %2780 = vmatprep.subr.mxu0 0.0
        %2781 = vmatpush1.msra.mxu0 0.0
        %2782 = vmatprep.subr.mxu0 0.0
        %2783 = vmatpush1.msra.mxu0 0.0
        %2784 = vmatprep.subr.mxu0 0.0
        %2785 = vmatpush1.msra.mxu0 0.0
        %2786 = vmatprep.subr.mxu0 0.0
        %2787 = vmatpush1.msra.mxu0 0.0
        %2788 = vmatprep.subr.mxu0 0.0
        %2789 = vmatpush1.msra.mxu0 0.0
        %2790 = vmatprep.subr.mxu0 0.0
        %2791 = vmatpush1.msra.mxu0 0.0
        %2792 = vmatprep.subr.mxu0 0.0
        %2793 = vmatpush1.msra.mxu0 0.0
        %2794 = vmatprep.subr.mxu0 0.0
        %2795 = vmatpush1.msra.mxu0 0.0
        %2796 = vmatprep.subr.mxu0 0.0
        %2797 = vmatpush1.msra.mxu0 0.0
        %2798 = vmatprep.subr.mxu0 0.0
        %2799 = vmatpush1.msra.mxu0 0.0
        %2800 = vmatprep.subr.mxu0 0.0
        %2801 = vmatpush1.msra.mxu0 0.0
        %2802 = vmatprep.subr.mxu0 0.0
        %2803 = vmatpush1.msra.mxu0 0.0
        %2804 = vmatprep.subr.mxu0 0.0
        %2805 = vmatpush1.msra.mxu0 0.0
        %2806 = vmatprep.subr.mxu0 0.0
        %2807 = vmatpush1.msra.mxu0 0.0
        %2808 = vmatprep.subr.mxu0 0.0
        %2809 = vmatpush1.msra.mxu0 0.0
        %2810 = vmatprep.subr.mxu0 0.0
        %2811 = vmatpush1.msra.mxu0 0.0
        %2812 = vmatprep.subr.mxu0 0.0
        %2813 = vmatpush1.msra.mxu0 0.0
        %2814 = vmatprep.subr.mxu0 0.0
        %2815 = vmatpush1.msra.mxu0 0.0
        %2816 = vmatprep.subr.mxu0 0.0
        %2817 = vmatpush1.msra.mxu0 0.0
        %2818 = vmatprep.subr.mxu0 0.0
        %2819 = vmatpush1.msra.mxu0 0.0
        %2820 = vmatprep.subr.mxu0 0.0
        %2821 = vmatpush1.msra.mxu0 0.0
        %2822 = vmatprep.subr.mxu0 0.0
        %2823 = vmatpush1.msra.mxu0 0.0
        %2824 = vmatprep.subr.mxu0 0.0
        %2825 = vmatpush1.msra.mxu0 0.0
        %2826 = vmatprep.mubr.f32.mxu0 0.0
        %2827 = vmatmul.mubr.f32.gmra.mrb[0].mxu0 %v2751
        %v2828 = vpop.f32.mrb[0].mxu0
        %v2829 = vadd.f32 0.0, %v2828
        %v2830 = vpop.f32.mrb[0].mxu0
        %2831 = vmatprep.mubr.f32.mxu0 0.0
        %2832 = vmatmul.mubr.f32.gmra.mrb[0].mxu0 %v2754
        %v2833 = vpop.f32.mrb[0].mxu0
        %v2834 = vadd.f32 0.0, %v2833
        %v2835 = vpop.f32.mrb[0].mxu0
        %2836 = vmatprep.mubr.f32.mxu0 0.0
        %2837 = vmatmul.mubr.f32.gmra.mrb[0].mxu0 %v2757
        %v2838 = vpop.f32.mrb[0].mxu0
        %v2839 = vadd.f32 0.0, %v2838
        %v2840 = vpop.f32.mrb[0].mxu0
        %2841 = vmatprep.mubr.f32.mxu0 0.0
        %2842 = vmatmul.mubr.f32.gmra.mrb[0].mxu0 %v2760
        %v2843 = vpop.f32.mrb[0].mxu0
        %v2844 = vadd.f32 0.0, %v2843
        %v2845 = vpop.f32.mrb[0].mxu0
        %2846 = vdwg.mxu0
        %v2847 = vadd.f32 %v2735, %v2829
        %v2848 = vadd.f32 %v2736, %v2834
        %v2849 = vadd.f32 %v2737, %v2839
        %v2850 = vadd.f32 %v2738, %v2844
        %s2851 = scalar_lea.vmem %s12, 128
        %v2852 = vld [vmem:[%s2851] sm:$0xff]
        %v2853 = vld [vmem:[%s2851 + $0x8] sm:$0xff]
        %v2854 = vld [vmem:[%s2851 + $0x10] sm:$0xff]
        %v2855 = vld [vmem:[%s2851 + $0x18] sm:$0xff]
        %2856 = vrot.lane.b32.xlu0 %v2412, 119
        %v2857 = vpop.permute.xlu0 %2856
        %2858 = vrot.lane.b32.xlu0 %v2413, 119
        %v2859 = vpop.permute.xlu0 %2858
        %v2863 = vsel %vm1895, %v2852, 0
        %v2866 = vsel %vm1895, %v2853, 0
        %v2869 = vsel %vm1895, %v2854, 0
        %v2872 = vsel %vm1895, %v2855, 0
        %2874 = vmatprep.subr.mxu0 0.0
        %2875 = vmatpush1.msra.mxu0 %v2857
        %2876 = vmatprep.subr.mxu0 0.0
        %2877 = vmatpush1.msra.mxu0 %v2859
        %2878 = vmatprep.subr.mxu0 0.0
        %2879 = vmatpush1.msra.mxu0 0.0
        %2880 = vmatprep.subr.mxu0 0.0
        %2881 = vmatpush1.msra.mxu0 0.0
        %2882 = vmatprep.subr.mxu0 0.0
        %2883 = vmatpush1.msra.mxu0 0.0
        %2884 = vmatprep.subr.mxu0 0.0
        %2885 = vmatpush1.msra.mxu0 0.0
        %2886 = vmatprep.subr.mxu0 0.0
        %2887 = vmatpush1.msra.mxu0 0.0
        %2888 = vmatprep.subr.mxu0 0.0
        %2889 = vmatpush1.msra.mxu0 0.0
        %2890 = vmatprep.subr.mxu0 0.0
        %2891 = vmatpush1.msra.mxu0 0.0
        %2892 = vmatprep.subr.mxu0 0.0
        %2893 = vmatpush1.msra.mxu0 0.0
        %2894 = vmatprep.subr.mxu0 0.0
        %2895 = vmatpush1.msra.mxu0 0.0
        %2896 = vmatprep.subr.mxu0 0.0
        %2897 = vmatpush1.msra.mxu0 0.0
        %2898 = vmatprep.subr.mxu0 0.0
        %2899 = vmatpush1.msra.mxu0 0.0
        %2900 = vmatprep.subr.mxu0 0.0
        %2901 = vmatpush1.msra.mxu0 0.0
        %2902 = vmatprep.subr.mxu0 0.0
        %2903 = vmatpush1.msra.mxu0 0.0
        %2904 = vmatprep.subr.mxu0 0.0
        %2905 = vmatpush1.msra.mxu0 0.0
        %2906 = vmatprep.subr.mxu0 0.0
        %2907 = vmatpush1.msra.mxu0 0.0
        %2908 = vmatprep.subr.mxu0 0.0
        %2909 = vmatpush1.msra.mxu0 0.0
        %2910 = vmatprep.subr.mxu0 0.0
        %2911 = vmatpush1.msra.mxu0 0.0
        %2912 = vmatprep.subr.mxu0 0.0
        %2913 = vmatpush1.msra.mxu0 0.0
        %2914 = vmatprep.subr.mxu0 0.0
        %2915 = vmatpush1.msra.mxu0 0.0
        %2916 = vmatprep.subr.mxu0 0.0
        %2917 = vmatpush1.msra.mxu0 0.0
        %2918 = vmatprep.subr.mxu0 0.0
        %2919 = vmatpush1.msra.mxu0 0.0
        %2920 = vmatprep.subr.mxu0 0.0
        %2921 = vmatpush1.msra.mxu0 0.0
        %2922 = vmatprep.subr.mxu0 0.0
        %2923 = vmatpush1.msra.mxu0 0.0
        %2924 = vmatprep.subr.mxu0 0.0
        %2925 = vmatpush1.msra.mxu0 0.0
        %2926 = vmatprep.subr.mxu0 0.0
        %2927 = vmatpush1.msra.mxu0 0.0
        %2928 = vmatprep.subr.mxu0 0.0
        %2929 = vmatpush1.msra.mxu0 0.0
        %2930 = vmatprep.subr.mxu0 0.0
        %2931 = vmatpush1.msra.mxu0 0.0
        %2932 = vmatprep.subr.mxu0 0.0
        %2933 = vmatpush1.msra.mxu0 0.0
        %2934 = vmatprep.subr.mxu0 0.0
        %2935 = vmatpush1.msra.mxu0 0.0
        %2936 = vmatprep.subr.mxu0 0.0
        %2937 = vmatpush1.msra.mxu0 0.0
        %2938 = vmatprep.mubr.f32.mxu0 0.0
        %2939 = vmatmul.mubr.f32.gmra.mrb[0].mxu0 %v2863
        %v2940 = vpop.f32.mrb[0].mxu0
        %v2941 = vadd.f32 0.0, %v2940
        %v2942 = vpop.f32.mrb[0].mxu0
        %2943 = vmatprep.mubr.f32.mxu0 0.0
        %2944 = vmatmul.mubr.f32.gmra.mrb[0].mxu0 %v2866
        %v2945 = vpop.f32.mrb[0].mxu0
        %v2946 = vadd.f32 0.0, %v2945
        %v2947 = vpop.f32.mrb[0].mxu0
        %2948 = vmatprep.mubr.f32.mxu0 0.0
        %2949 = vmatmul.mubr.f32.gmra.mrb[0].mxu0 %v2869
        %v2950 = vpop.f32.mrb[0].mxu0
        %v2951 = vadd.f32 0.0, %v2950
        %v2952 = vpop.f32.mrb[0].mxu0
        %2953 = vmatprep.mubr.f32.mxu0 0.0
        %2954 = vmatmul.mubr.f32.gmra.mrb[0].mxu0 %v2872
        %v2955 = vpop.f32.mrb[0].mxu0
        %v2956 = vadd.f32 0.0, %v2955
        %v2957 = vpop.f32.mrb[0].mxu0
        %2958 = vdwg.mxu0
        %v2959 = vadd.f32 %v2847, %v2941
        %v2960 = vadd.f32 %v2848, %v2946
        %v2961 = vadd.f32 %v2849, %v2951
        %v2962 = vadd.f32 %v2850, %v2956
        %s2963 = scalar_lea.vmem %s12, 160
        %v2964 = vld [vmem:[%s2963] sm:$0xff]
        %v2965 = vld [vmem:[%s2963 + $0x8] sm:$0xff]
        %v2966 = vld [vmem:[%s2963 + $0x10] sm:$0xff]
        %v2967 = vld [vmem:[%s2963 + $0x18] sm:$0xff]
        %2968 = vrot.lane.b32.xlu0 %v2412, 118
        %v2969 = vpop.permute.xlu0 %2968
        %2970 = vrot.lane.b32.xlu0 %v2413, 118
        %v2971 = vpop.permute.xlu0 %2970
        %v2975 = vsel %vm1895, %v2964, 0
        %v2978 = vsel %vm1895, %v2965, 0
        %v2981 = vsel %vm1895, %v2966, 0
        %v2984 = vsel %vm1895, %v2967, 0
        %2986 = vmatprep.subr.mxu0 0.0
        %2987 = vmatpush1.msra.mxu0 %v2969
        %2988 = vmatprep.subr.mxu0 0.0
        %2989 = vmatpush1.msra.mxu0 %v2971
        %2990 = vmatprep.subr.mxu0 0.0
        %2991 = vmatpush1.msra.mxu0 0.0
        %2992 = vmatprep.subr.mxu0 0.0
        %2993 = vmatpush1.msra.mxu0 0.0
        %2994 = vmatprep.subr.mxu0 0.0
        %2995 = vmatpush1.msra.mxu0 0.0
        %2996 = vmatprep.subr.mxu0 0.0
        %2997 = vmatpush1.msra.mxu0 0.0
        %2998 = vmatprep.subr.mxu0 0.0
        %2999 = vmatpush1.msra.mxu0 0.0
        %3000 = vmatprep.subr.mxu0 0.0
        %3001 = vmatpush1.msra.mxu0 0.0
        %3002 = vmatprep.subr.mxu0 0.0
        %3003 = vmatpush1.msra.mxu0 0.0
        %3004 = vmatprep.subr.mxu0 0.0
        %3005 = vmatpush1.msra.mxu0 0.0
        %3006 = vmatprep.subr.mxu0 0.0
        %3007 = vmatpush1.msra.mxu0 0.0
        %3008 = vmatprep.subr.mxu0 0.0
        %3009 = vmatpush1.msra.mxu0 0.0
        %3010 = vmatprep.subr.mxu0 0.0
        %3011 = vmatpush1.msra.mxu0 0.0
        %3012 = vmatprep.subr.mxu0 0.0
        %3013 = vmatpush1.msra.mxu0 0.0
        %3014 = vmatprep.subr.mxu0 0.0
        %3015 = vmatpush1.msra.mxu0 0.0
        %3016 = vmatprep.subr.mxu0 0.0
        %3017 = vmatpush1.msra.mxu0 0.0
        %3018 = vmatprep.subr.mxu0 0.0
        %3019 = vmatpush1.msra.mxu0 0.0
        %3020 = vmatprep.subr.mxu0 0.0
        %3021 = vmatpush1.msra.mxu0 0.0
        %3022 = vmatprep.subr.mxu0 0.0
        %3023 = vmatpush1.msra.mxu0 0.0
        %3024 = vmatprep.subr.mxu0 0.0
        %3025 = vmatpush1.msra.mxu0 0.0
        %3026 = vmatprep.subr.mxu0 0.0
        %3027 = vmatpush1.msra.mxu0 0.0
        %3028 = vmatprep.subr.mxu0 0.0
        %3029 = vmatpush1.msra.mxu0 0.0
        %3030 = vmatprep.subr.mxu0 0.0
        %3031 = vmatpush1.msra.mxu0 0.0
        %3032 = vmatprep.subr.mxu0 0.0
        %3033 = vmatpush1.msra.mxu0 0.0
        %3034 = vmatprep.subr.mxu0 0.0
        %3035 = vmatpush1.msra.mxu0 0.0
        %3036 = vmatprep.subr.mxu0 0.0
        %3037 = vmatpush1.msra.mxu0 0.0
        %3038 = vmatprep.subr.mxu0 0.0
        %3039 = vmatpush1.msra.mxu0 0.0
        %3040 = vmatprep.subr.mxu0 0.0
        %3041 = vmatpush1.msra.mxu0 0.0
        %3042 = vmatprep.subr.mxu0 0.0
        %3043 = vmatpush1.msra.mxu0 0.0
        %3044 = vmatprep.subr.mxu0 0.0
        %3045 = vmatpush1.msra.mxu0 0.0
        %3046 = vmatprep.subr.mxu0 0.0
        %3047 = vmatpush1.msra.mxu0 0.0
        %3048 = vmatprep.subr.mxu0 0.0
        %3049 = vmatpush1.msra.mxu0 0.0
        %3050 = vmatprep.mubr.f32.mxu0 0.0
        %3051 = vmatmul.mubr.f32.gmra.mrb[0].mxu0 %v2975
        %v3052 = vpop.f32.mrb[0].mxu0
        %v3053 = vadd.f32 0.0, %v3052
        %v3054 = vpop.f32.mrb[0].mxu0
        %3055 = vmatprep.mubr.f32.mxu0 0.0
        %3056 = vmatmul.mubr.f32.gmra.mrb[0].mxu0 %v2978
        %v3057 = vpop.f32.mrb[0].mxu0
        %v3058 = vadd.f32 0.0, %v3057
        %v3059 = vpop.f32.mrb[0].mxu0
        %3060 = vmatprep.mubr.f32.mxu0 0.0
        %3061 = vmatmul.mubr.f32.gmra.mrb[0].mxu0 %v2981
        %v3062 = vpop.f32.mrb[0].mxu0
        %v3063 = vadd.f32 0.0, %v3062
        %v3064 = vpop.f32.mrb[0].mxu0
        %3065 = vmatprep.mubr.f32.mxu0 0.0
        %3066 = vmatmul.mubr.f32.gmra.mrb[0].mxu0 %v2984
        %v3067 = vpop.f32.mrb[0].mxu0
        %v3068 = vadd.f32 0.0, %v3067
        %v3069 = vpop.f32.mrb[0].mxu0
        %3070 = vdwg.mxu0
        %v3071 = vadd.f32 %v2959, %v3053
        %v3072 = vadd.f32 %v2960, %v3058
        %v3073 = vadd.f32 %v2961, %v3063
        %v3074 = vadd.f32 %v2962, %v3068
        %s3075 = scalar_lea.vmem %s12, 192
        %v3076 = vld [vmem:[%s3075] sm:$0xff]
        %v3077 = vld [vmem:[%s3075 + $0x8] sm:$0xff]
        %v3078 = vld [vmem:[%s3075 + $0x10] sm:$0xff]
        %v3079 = vld [vmem:[%s3075 + $0x18] sm:$0xff]
        %3080 = vrot.lane.b32.xlu0 %v2412, 117
        %v3081 = vpop.permute.xlu0 %3080
        %3082 = vrot.lane.b32.xlu0 %v2413, 117
        %v3083 = vpop.permute.xlu0 %3082
        %v3087 = vsel %vm1895, %v3076, 0
        %v3090 = vsel %vm1895, %v3077, 0
        %v3093 = vsel %vm1895, %v3078, 0
        %v3096 = vsel %vm1895, %v3079, 0
        %3098 = vmatprep.subr.mxu0 0.0
        %3099 = vmatpush1.msra.mxu0 %v3081
        %3100 = vmatprep.subr.mxu0 0.0
        %3101 = vmatpush1.msra.mxu0 %v3083
        %3102 = vmatprep.subr.mxu0 0.0
        %3103 = vmatpush1.msra.mxu0 0.0
        %3104 = vmatprep.subr.mxu0 0.0
        %3105 = vmatpush1.msra.mxu0 0.0
        %3106 = vmatprep.subr.mxu0 0.0
        %3107 = vmatpush1.msra.mxu0 0.0
        %3108 = vmatprep.subr.mxu0 0.0
        %3109 = vmatpush1.msra.mxu0 0.0
        %3110 = vmatprep.subr.mxu0 0.0
        %3111 = vmatpush1.msra.mxu0 0.0
        %3112 = vmatprep.subr.mxu0 0.0
        %3113 = vmatpush1.msra.mxu0 0.0
        %3114 = vmatprep.subr.mxu0 0.0
        %3115 = vmatpush1.msra.mxu0 0.0
        %3116 = vmatprep.subr.mxu0 0.0
        %3117 = vmatpush1.msra.mxu0 0.0
        %3118 = vmatprep.subr.mxu0 0.0
        %3119 = vmatpush1.msra.mxu0 0.0
        %3120 = vmatprep.subr.mxu0 0.0
        %3121 = vmatpush1.msra.mxu0 0.0
        %3122 = vmatprep.subr.mxu0 0.0
        %3123 = vmatpush1.msra.mxu0 0.0
        %3124 = vmatprep.subr.mxu0 0.0
        %3125 = vmatpush1.msra.mxu0 0.0
        %3126 = vmatprep.subr.mxu0 0.0
        %3127 = vmatpush1.msra.mxu0 0.0
        %3128 = vmatprep.subr.mxu0 0.0
        %3129 = vmatpush1.msra.mxu0 0.0
        %3130 = vmatprep.subr.mxu0 0.0
        %3131 = vmatpush1.msra.mxu0 0.0
        %3132 = vmatprep.subr.mxu0 0.0
        %3133 = vmatpush1.msra.mxu0 0.0
        %3134 = vmatprep.subr.mxu0 0.0
        %3135 = vmatpush1.msra.mxu0 0.0
        %3136 = vmatprep.subr.mxu0 0.0
        %3137 = vmatpush1.msra.mxu0 0.0
        %3138 = vmatprep.subr.mxu0 0.0
        %3139 = vmatpush1.msra.mxu0 0.0
        %3140 = vmatprep.subr.mxu0 0.0
        %3141 = vmatpush1.msra.mxu0 0.0
        %3142 = vmatprep.subr.mxu0 0.0
        %3143 = vmatpush1.msra.mxu0 0.0
        %3144 = vmatprep.subr.mxu0 0.0
        %3145 = vmatpush1.msra.mxu0 0.0
        %3146 = vmatprep.subr.mxu0 0.0
        %3147 = vmatpush1.msra.mxu0 0.0
        %3148 = vmatprep.subr.mxu0 0.0
        %3149 = vmatpush1.msra.mxu0 0.0
        %3150 = vmatprep.subr.mxu0 0.0
        %3151 = vmatpush1.msra.mxu0 0.0
        %3152 = vmatprep.subr.mxu0 0.0
        %3153 = vmatpush1.msra.mxu0 0.0
        %3154 = vmatprep.subr.mxu0 0.0
        %3155 = vmatpush1.msra.mxu0 0.0
        %3156 = vmatprep.subr.mxu0 0.0
        %3157 = vmatpush1.msra.mxu0 0.0
        %3158 = vmatprep.subr.mxu0 0.0
        %3159 = vmatpush1.msra.mxu0 0.0
        %3160 = vmatprep.subr.mxu0 0.0
        %3161 = vmatpush1.msra.mxu0 0.0
        %3162 = vmatprep.mubr.f32.mxu0 0.0
        %3163 = vmatmul.mubr.f32.gmra.mrb[0].mxu0 %v3087
        %v3164 = vpop.f32.mrb[0].mxu0
        %v3165 = vadd.f32 0.0, %v3164
        %v3166 = vpop.f32.mrb[0].mxu0
        %3167 = vmatprep.mubr.f32.mxu0 0.0
        %3168 = vmatmul.mubr.f32.gmra.mrb[0].mxu0 %v3090
        %v3169 = vpop.f32.mrb[0].mxu0
        %v3170 = vadd.f32 0.0, %v3169
        %v3171 = vpop.f32.mrb[0].mxu0
        %3172 = vmatprep.mubr.f32.mxu0 0.0
        %3173 = vmatmul.mubr.f32.gmra.mrb[0].mxu0 %v3093
        %v3174 = vpop.f32.mrb[0].mxu0
        %v3175 = vadd.f32 0.0, %v3174
        %v3176 = vpop.f32.mrb[0].mxu0
        %3177 = vmatprep.mubr.f32.mxu0 0.0
        %3178 = vmatmul.mubr.f32.gmra.mrb[0].mxu0 %v3096
        %v3179 = vpop.f32.mrb[0].mxu0
        %v3180 = vadd.f32 0.0, %v3179
        %v3181 = vpop.f32.mrb[0].mxu0
        %3182 = vdwg.mxu0
        %v3183 = vadd.f32 %v3071, %v3165
        %v3184 = vadd.f32 %v3072, %v3170
        %v3185 = vadd.f32 %v3073, %v3175
        %v3186 = vadd.f32 %v3074, %v3180
        %3188 = vset.pattern.permute.xlu0 0
        %3189 = vperm.xlu0 %3188, %v2404
        %v3190 = vpop.permute.xlu0 %3189
        %3193 = vset.pattern.permute.xlu0 0
        %3194 = vperm.xlu0 %3193, %v2405
        %v3195 = vpop.permute.xlu0 %3194
        %3198 = vset.pattern.permute.xlu0 0
        %3199 = vperm.xlu0 %3198, %v2406
        %v3200 = vpop.permute.xlu0 %3199
        %3203 = vset.pattern.permute.xlu0 0
        %3204 = vperm.xlu0 %3203, %v2407
        %v3205 = vpop.permute.xlu0 %3204
        %v3207 = vadd.f32 %v3183, %v3190
        %v3208 = vadd.f32 %v3184, %v3195
        %v3209 = vadd.f32 %v3185, %v3200
        %v3210 = vadd.f32 %v3186, %v3205
        %v3211 = vxor.u32 %v3207, 2147483648
        %v3212 = vxor.u32 %v3208, 2147483648
        %v3213 = vxor.u32 %v3209, 2147483648
        %v3214 = vxor.u32 %v3210, 2147483648
        %v3215 = vmul.f32 %v3211, 1.442695
        %v3216 = vpow.pop %v3215
        %v3217 = vmul.f32 %v3212, 1.442695
        %v3218 = vpow.pop %v3217
        %v3219 = vmul.f32 %v3213, 1.442695
        %v3220 = vpow.pop %v3219
        %v3221 = vmul.f32 %v3214, 1.442695
        %v3222 = vpow.pop %v3221
        %v3223 = vadd.f32 %v3216, 1.0
        %v3224 = vadd.f32 %v3218, 1.0
        %v3225 = vadd.f32 %v3220, 1.0
        %v3226 = vadd.f32 %v3222, 1.0
        %v3227 = vrcp.pop %v3223
        %v3228 = vmul.f32 1.0, %v3227
        %v3229 = vrcp.pop %v3224
        %v3230 = vmul.f32 1.0, %v3229
        %v3231 = vrcp.pop %v3225
        %v3232 = vmul.f32 1.0, %v3231
        %v3233 = vrcp.pop %v3226
        %v3234 = vmul.f32 1.0, %v3233
        %v3235 = vld [vmem:[%s15] sm:$0xff]
        %v3236 = vld [vmem:[%s15 + $0x8] sm:$0xff]
        %v3237 = vld [vmem:[%s15 + $0x10] sm:$0xff]
        %v3238 = vld [vmem:[%s15 + $0x18] sm:$0xff]
        %v3239 = vld [vmem:[%s14] sm:$0xff]
        %v3240 = vld [vmem:[%s14 + $0x8] sm:$0xff]
        %v3241 = vld [vmem:[%s14 + $0x10] sm:$0xff]
        %v3242 = vld [vmem:[%s14 + $0x18] sm:$0xff]
        %v3243 = vld [vmem:[#allocation5] sm:$0xff]
        %v3244 = vld [vmem:[#allocation5 + $0x8] sm:$0xff]
        %s3245 = scalar_lea.vmem %s14, 32
        %v3246 = vld [vmem:[%s3245] sm:$0xff]
        %v3247 = vld [vmem:[%s3245 + $0x8] sm:$0xff]
        %v3248 = vld [vmem:[%s3245 + $0x10] sm:$0xff]
        %v3249 = vld [vmem:[%s3245 + $0x18] sm:$0xff]
        %3252 = vrot.lane.b32.xlu0 %v3243, 122
        %v3253 = vpop.permute.xlu0 %3252
        %3254 = vrot.lane.b32.xlu0 %v3244, 122
        %v3255 = vpop.permute.xlu0 %3254
        %v3259 = vsel %vm1895, %v3246, 0
        %v3262 = vsel %vm1895, %v3247, 0
        %v3265 = vsel %vm1895, %v3248, 0
        %v3268 = vsel %vm1895, %v3249, 0
        %3270 = vmatprep.subr.mxu0 0.0
        %3271 = vmatpush1.msra.mxu0 %v3253
        %3272 = vmatprep.subr.mxu0 0.0
        %3273 = vmatpush1.msra.mxu0 %v3255
        %3274 = vmatprep.subr.mxu0 0.0
        %3275 = vmatpush1.msra.mxu0 0.0
        %3276 = vmatprep.subr.mxu0 0.0
        %3277 = vmatpush1.msra.mxu0 0.0
        %3278 = vmatprep.subr.mxu0 0.0
        %3279 = vmatpush1.msra.mxu0 0.0
        %3280 = vmatprep.subr.mxu0 0.0
        %3281 = vmatpush1.msra.mxu0 0.0
        %3282 = vmatprep.subr.mxu0 0.0
        %3283 = vmatpush1.msra.mxu0 0.0
        %3284 = vmatprep.subr.mxu0 0.0
        %3285 = vmatpush1.msra.mxu0 0.0
        %3286 = vmatprep.subr.mxu0 0.0
        %3287 = vmatpush1.msra.mxu0 0.0
        %3288 = vmatprep.subr.mxu0 0.0
        %3289 = vmatpush1.msra.mxu0 0.0
        %3290 = vmatprep.subr.mxu0 0.0
        %3291 = vmatpush1.msra.mxu0 0.0
        %3292 = vmatprep.subr.mxu0 0.0
        %3293 = vmatpush1.msra.mxu0 0.0
        %3294 = vmatprep.subr.mxu0 0.0
        %3295 = vmatpush1.msra.mxu0 0.0
        %3296 = vmatprep.subr.mxu0 0.0
        %3297 = vmatpush1.msra.mxu0 0.0
        %3298 = vmatprep.subr.mxu0 0.0
        %3299 = vmatpush1.msra.mxu0 0.0
        %3300 = vmatprep.subr.mxu0 0.0
        %3301 = vmatpush1.msra.mxu0 0.0
        %3302 = vmatprep.subr.mxu0 0.0
        %3303 = vmatpush1.msra.mxu0 0.0
        %3304 = vmatprep.subr.mxu0 0.0
        %3305 = vmatpush1.msra.mxu0 0.0
        %3306 = vmatprep.subr.mxu0 0.0
        %3307 = vmatpush1.msra.mxu0 0.0
        %3308 = vmatprep.subr.mxu0 0.0
        %3309 = vmatpush1.msra.mxu0 0.0
        %3310 = vmatprep.subr.mxu0 0.0
        %3311 = vmatpush1.msra.mxu0 0.0
        %3312 = vmatprep.subr.mxu0 0.0
        %3313 = vmatpush1.msra.mxu0 0.0
        %3314 = vmatprep.subr.mxu0 0.0
        %3315 = vmatpush1.msra.mxu0 0.0
        %3316 = vmatprep.subr.mxu0 0.0
        %3317 = vmatpush1.msra.mxu0 0.0
        %3318 = vmatprep.subr.mxu0 0.0
        %3319 = vmatpush1.msra.mxu0 0.0
        %3320 = vmatprep.subr.mxu0 0.0
        %3321 = vmatpush1.msra.mxu0 0.0
        %3322 = vmatprep.subr.mxu0 0.0
        %3323 = vmatpush1.msra.mxu0 0.0
        %3324 = vmatprep.subr.mxu0 0.0
        %3325 = vmatpush1.msra.mxu0 0.0
        %3326 = vmatprep.subr.mxu0 0.0
        %3327 = vmatpush1.msra.mxu0 0.0
        %3328 = vmatprep.subr.mxu0 0.0
        %3329 = vmatpush1.msra.mxu0 0.0
        %3330 = vmatprep.subr.mxu0 0.0
        %3331 = vmatpush1.msra.mxu0 0.0
        %3332 = vmatprep.subr.mxu0 0.0
        %3333 = vmatpush1.msra.mxu0 0.0
        %3334 = vmatprep.mubr.f32.mxu0 0.0
        %3335 = vmatmul.mubr.f32.gmra.mrb[0].mxu0 %v3259
        %v3336 = vpop.f32.mrb[0].mxu0
        %v3337 = vadd.f32 0.0, %v3336
        %v3338 = vpop.f32.mrb[0].mxu0
        %3339 = vmatprep.mubr.f32.mxu0 0.0
        %3340 = vmatmul.mubr.f32.gmra.mrb[0].mxu0 %v3262
        %v3341 = vpop.f32.mrb[0].mxu0
        %v3342 = vadd.f32 0.0, %v3341
        %v3343 = vpop.f32.mrb[0].mxu0
        %3344 = vmatprep.mubr.f32.mxu0 0.0
        %3345 = vmatmul.mubr.f32.gmra.mrb[0].mxu0 %v3265
        %v3346 = vpop.f32.mrb[0].mxu0
        %v3347 = vadd.f32 0.0, %v3346
        %v3348 = vpop.f32.mrb[0].mxu0
        %3349 = vmatprep.mubr.f32.mxu0 0.0
        %3350 = vmatmul.mubr.f32.gmra.mrb[0].mxu0 %v3268
        %v3351 = vpop.f32.mrb[0].mxu0
        %v3352 = vadd.f32 0.0, %v3351
        %v3353 = vpop.f32.mrb[0].mxu0
        %3354 = vdwg.mxu0
        %3355 = vrot.lane.b32.xlu0 %v3243, 123
        %v3356 = vpop.permute.xlu0 %3355
        %3357 = vrot.lane.b32.xlu0 %v3244, 123
        %v3358 = vpop.permute.xlu0 %3357
        %v3362 = vsel %vm1895, %v3239, 0
        %v3365 = vsel %vm1895, %v3240, 0
        %v3368 = vsel %vm1895, %v3241, 0
        %v3371 = vsel %vm1895, %v3242, 0
        %3373 = vmatprep.subr.mxu0 0.0
        %3374 = vmatpush1.msra.mxu0 %v3356
        %3375 = vmatprep.subr.mxu0 0.0
        %3376 = vmatpush1.msra.mxu0 %v3358
        %3377 = vmatprep.subr.mxu0 0.0
        %3378 = vmatpush1.msra.mxu0 0.0
        %3379 = vmatprep.subr.mxu0 0.0
        %3380 = vmatpush1.msra.mxu0 0.0
        %3381 = vmatprep.subr.mxu0 0.0
        %3382 = vmatpush1.msra.mxu0 0.0
        %3383 = vmatprep.subr.mxu0 0.0
        %3384 = vmatpush1.msra.mxu0 0.0
        %3385 = vmatprep.subr.mxu0 0.0
        %3386 = vmatpush1.msra.mxu0 0.0
        %3387 = vmatprep.subr.mxu0 0.0
        %3388 = vmatpush1.msra.mxu0 0.0
        %3389 = vmatprep.subr.mxu0 0.0
        %3390 = vmatpush1.msra.mxu0 0.0
        %3391 = vmatprep.subr.mxu0 0.0
        %3392 = vmatpush1.msra.mxu0 0.0
        %3393 = vmatprep.subr.mxu0 0.0
        %3394 = vmatpush1.msra.mxu0 0.0
        %3395 = vmatprep.subr.mxu0 0.0
        %3396 = vmatpush1.msra.mxu0 0.0
        %3397 = vmatprep.subr.mxu0 0.0
        %3398 = vmatpush1.msra.mxu0 0.0
        %3399 = vmatprep.subr.mxu0 0.0
        %3400 = vmatpush1.msra.mxu0 0.0
        %3401 = vmatprep.subr.mxu0 0.0
        %3402 = vmatpush1.msra.mxu0 0.0
        %3403 = vmatprep.subr.mxu0 0.0
        %3404 = vmatpush1.msra.mxu0 0.0
        %3405 = vmatprep.subr.mxu0 0.0
        %3406 = vmatpush1.msra.mxu0 0.0
        %3407 = vmatprep.subr.mxu0 0.0
        %3408 = vmatpush1.msra.mxu0 0.0
        %3409 = vmatprep.subr.mxu0 0.0
        %3410 = vmatpush1.msra.mxu0 0.0
        %3411 = vmatprep.subr.mxu0 0.0
        %3412 = vmatpush1.msra.mxu0 0.0
        %3413 = vmatprep.subr.mxu0 0.0
        %3414 = vmatpush1.msra.mxu0 0.0
        %3415 = vmatprep.subr.mxu0 0.0
        %3416 = vmatpush1.msra.mxu0 0.0
        %3417 = vmatprep.subr.mxu0 0.0
        %3418 = vmatpush1.msra.mxu0 0.0
        %3419 = vmatprep.subr.mxu0 0.0
        %3420 = vmatpush1.msra.mxu0 0.0
        %3421 = vmatprep.subr.mxu0 0.0
        %3422 = vmatpush1.msra.mxu0 0.0
        %3423 = vmatprep.subr.mxu0 0.0
        %3424 = vmatpush1.msra.mxu0 0.0
        %3425 = vmatprep.subr.mxu0 0.0
        %3426 = vmatpush1.msra.mxu0 0.0
        %3427 = vmatprep.subr.mxu0 0.0
        %3428 = vmatpush1.msra.mxu0 0.0
        %3429 = vmatprep.subr.mxu0 0.0
        %3430 = vmatpush1.msra.mxu0 0.0
        %3431 = vmatprep.subr.mxu0 0.0
        %3432 = vmatpush1.msra.mxu0 0.0
        %3433 = vmatprep.subr.mxu0 0.0
        %3434 = vmatpush1.msra.mxu0 0.0
        %3435 = vmatprep.subr.mxu0 0.0
        %3436 = vmatpush1.msra.mxu0 0.0
        %3437 = vmatprep.mubr.f32.mxu0 0.0
        %3438 = vmatmul.mubr.f32.gmra.mrb[0].mxu0 %v3362
        %v3439 = vpop.f32.mrb[0].mxu0
        %v3440 = vadd.f32 %v3337, %v3439
        %v3441 = vpop.f32.mrb[0].mxu0
        %3442 = vmatprep.mubr.f32.mxu0 0.0
        %3443 = vmatmul.mubr.f32.gmra.mrb[0].mxu0 %v3365
        %v3444 = vpop.f32.mrb[0].mxu0
        %v3445 = vadd.f32 %v3342, %v3444
        %v3446 = vpop.f32.mrb[0].mxu0
        %3447 = vmatprep.mubr.f32.mxu0 0.0
        %3448 = vmatmul.mubr.f32.gmra.mrb[0].mxu0 %v3368
        %v3449 = vpop.f32.mrb[0].mxu0
        %v3450 = vadd.f32 %v3347, %v3449
        %v3451 = vpop.f32.mrb[0].mxu0
        %3452 = vmatprep.mubr.f32.mxu0 0.0
        %3453 = vmatmul.mubr.f32.gmra.mrb[0].mxu0 %v3371
        %v3454 = vpop.f32.mrb[0].mxu0
        %v3455 = vadd.f32 %v3352, %v3454
        %v3456 = vpop.f32.mrb[0].mxu0
        %3457 = vdwg.mxu0
        %s3458 = scalar_lea.vmem %s14, 64
        %v3459 = vld [vmem:[%s3458] sm:$0xff]
        %v3460 = vld [vmem:[%s3458 + $0x8] sm:$0xff]
        %v3461 = vld [vmem:[%s3458 + $0x10] sm:$0xff]
        %v3462 = vld [vmem:[%s3458 + $0x18] sm:$0xff]
        %3463 = vrot.lane.b32.xlu0 %v3243, 121
        %v3464 = vpop.permute.xlu0 %3463
        %3465 = vrot.lane.b32.xlu0 %v3244, 121
        %v3466 = vpop.permute.xlu0 %3465
        %v3470 = vsel %vm1895, %v3459, 0
        %v3473 = vsel %vm1895, %v3460, 0
        %v3476 = vsel %vm1895, %v3461, 0
        %v3479 = vsel %vm1895, %v3462, 0
        %3481 = vmatprep.subr.mxu0 0.0
        %3482 = vmatpush1.msra.mxu0 %v3464
        %3483 = vmatprep.subr.mxu0 0.0
        %3484 = vmatpush1.msra.mxu0 %v3466
        %3485 = vmatprep.subr.mxu0 0.0
        %3486 = vmatpush1.msra.mxu0 0.0
        %3487 = vmatprep.subr.mxu0 0.0
        %3488 = vmatpush1.msra.mxu0 0.0
        %3489 = vmatprep.subr.mxu0 0.0
        %3490 = vmatpush1.msra.mxu0 0.0
        %3491 = vmatprep.subr.mxu0 0.0
        %3492 = vmatpush1.msra.mxu0 0.0
        %3493 = vmatprep.subr.mxu0 0.0
        %3494 = vmatpush1.msra.mxu0 0.0
        %3495 = vmatprep.subr.mxu0 0.0
        %3496 = vmatpush1.msra.mxu0 0.0
        %3497 = vmatprep.subr.mxu0 0.0
        %3498 = vmatpush1.msra.mxu0 0.0
        %3499 = vmatprep.subr.mxu0 0.0
        %3500 = vmatpush1.msra.mxu0 0.0
        %3501 = vmatprep.subr.mxu0 0.0
        %3502 = vmatpush1.msra.mxu0 0.0
        %3503 = vmatprep.subr.mxu0 0.0
        %3504 = vmatpush1.msra.mxu0 0.0
        %3505 = vmatprep.subr.mxu0 0.0
        %3506 = vmatpush1.msra.mxu0 0.0
        %3507 = vmatprep.subr.mxu0 0.0
        %3508 = vmatpush1.msra.mxu0 0.0
        %3509 = vmatprep.subr.mxu0 0.0
        %3510 = vmatpush1.msra.mxu0 0.0
        %3511 = vmatprep.subr.mxu0 0.0
        %3512 = vmatpush1.msra.mxu0 0.0
        %3513 = vmatprep.subr.mxu0 0.0
        %3514 = vmatpush1.msra.mxu0 0.0
        %3515 = vmatprep.subr.mxu0 0.0
        %3516 = vmatpush1.msra.mxu0 0.0
        %3517 = vmatprep.subr.mxu0 0.0
        %3518 = vmatpush1.msra.mxu0 0.0
        %3519 = vmatprep.subr.mxu0 0.0
        %3520 = vmatpush1.msra.mxu0 0.0
        %3521 = vmatprep.subr.mxu0 0.0
        %3522 = vmatpush1.msra.mxu0 0.0
        %3523 = vmatprep.subr.mxu0 0.0
        %3524 = vmatpush1.msra.mxu0 0.0
        %3525 = vmatprep.subr.mxu0 0.0
        %3526 = vmatpush1.msra.mxu0 0.0
        %3527 = vmatprep.subr.mxu0 0.0
        %3528 = vmatpush1.msra.mxu0 0.0
        %3529 = vmatprep.subr.mxu0 0.0
        %3530 = vmatpush1.msra.mxu0 0.0
        %3531 = vmatprep.subr.mxu0 0.0
        %3532 = vmatpush1.msra.mxu0 0.0
        %3533 = vmatprep.subr.mxu0 0.0
        %3534 = vmatpush1.msra.mxu0 0.0
        %3535 = vmatprep.subr.mxu0 0.0
        %3536 = vmatpush1.msra.mxu0 0.0
        %3537 = vmatprep.subr.mxu0 0.0
        %3538 = vmatpush1.msra.mxu0 0.0
        %3539 = vmatprep.subr.mxu0 0.0
        %3540 = vmatpush1.msra.mxu0 0.0
        %3541 = vmatprep.subr.mxu0 0.0
        %3542 = vmatpush1.msra.mxu0 0.0
        %3543 = vmatprep.subr.mxu0 0.0
        %3544 = vmatpush1.msra.mxu0 0.0
        %3545 = vmatprep.mubr.f32.mxu0 0.0
        %3546 = vmatmul.mubr.f32.gmra.mrb[0].mxu0 %v3470
        %v3547 = vpop.f32.mrb[0].mxu0
        %v3548 = vadd.f32 0.0, %v3547
        %v3549 = vpop.f32.mrb[0].mxu0
        %3550 = vmatprep.mubr.f32.mxu0 0.0
        %3551 = vmatmul.mubr.f32.gmra.mrb[0].mxu0 %v3473
        %v3552 = vpop.f32.mrb[0].mxu0
        %v3553 = vadd.f32 0.0, %v3552
        %v3554 = vpop.f32.mrb[0].mxu0
        %3555 = vmatprep.mubr.f32.mxu0 0.0
        %3556 = vmatmul.mubr.f32.gmra.mrb[0].mxu0 %v3476
        %v3557 = vpop.f32.mrb[0].mxu0
        %v3558 = vadd.f32 0.0, %v3557
        %v3559 = vpop.f32.mrb[0].mxu0
        %3560 = vmatprep.mubr.f32.mxu0 0.0
        %3561 = vmatmul.mubr.f32.gmra.mrb[0].mxu0 %v3479
        %v3562 = vpop.f32.mrb[0].mxu0
        %v3563 = vadd.f32 0.0, %v3562
        %v3564 = vpop.f32.mrb[0].mxu0
        %3565 = vdwg.mxu0
        %v3566 = vadd.f32 %v3440, %v3548
        %v3567 = vadd.f32 %v3445, %v3553
        %v3568 = vadd.f32 %v3450, %v3558
        %v3569 = vadd.f32 %v3455, %v3563
        %s3570 = scalar_lea.vmem %s14, 96
        %v3571 = vld [vmem:[%s3570] sm:$0xff]
        %v3572 = vld [vmem:[%s3570 + $0x8] sm:$0xff]
        %v3573 = vld [vmem:[%s3570 + $0x10] sm:$0xff]
        %v3574 = vld [vmem:[%s3570 + $0x18] sm:$0xff]
        %3575 = vrot.lane.b32.xlu0 %v3243, 120
        %v3576 = vpop.permute.xlu0 %3575
        %3577 = vrot.lane.b32.xlu0 %v3244, 120
        %v3578 = vpop.permute.xlu0 %3577
        %v3582 = vsel %vm1895, %v3571, 0
        %v3585 = vsel %vm1895, %v3572, 0
        %v3588 = vsel %vm1895, %v3573, 0
        %v3591 = vsel %vm1895, %v3574, 0
        %3593 = vmatprep.subr.mxu0 0.0
        %3594 = vmatpush1.msra.mxu0 %v3576
        %3595 = vmatprep.subr.mxu0 0.0
        %3596 = vmatpush1.msra.mxu0 %v3578
        %3597 = vmatprep.subr.mxu0 0.0
        %3598 = vmatpush1.msra.mxu0 0.0
        %3599 = vmatprep.subr.mxu0 0.0
        %3600 = vmatpush1.msra.mxu0 0.0
        %3601 = vmatprep.subr.mxu0 0.0
        %3602 = vmatpush1.msra.mxu0 0.0
        %3603 = vmatprep.subr.mxu0 0.0
        %3604 = vmatpush1.msra.mxu0 0.0
        %3605 = vmatprep.subr.mxu0 0.0
        %3606 = vmatpush1.msra.mxu0 0.0
        %3607 = vmatprep.subr.mxu0 0.0
        %3608 = vmatpush1.msra.mxu0 0.0
        %3609 = vmatprep.subr.mxu0 0.0
        %3610 = vmatpush1.msra.mxu0 0.0
        %3611 = vmatprep.subr.mxu0 0.0
        %3612 = vmatpush1.msra.mxu0 0.0
        %3613 = vmatprep.subr.mxu0 0.0
        %3614 = vmatpush1.msra.mxu0 0.0
        %3615 = vmatprep.subr.mxu0 0.0
        %3616 = vmatpush1.msra.mxu0 0.0
        %3617 = vmatprep.subr.mxu0 0.0
        %3618 = vmatpush1.msra.mxu0 0.0
        %3619 = vmatprep.subr.mxu0 0.0
        %3620 = vmatpush1.msra.mxu0 0.0
        %3621 = vmatprep.subr.mxu0 0.0
        %3622 = vmatpush1.msra.mxu0 0.0
        %3623 = vmatprep.subr.mxu0 0.0
        %3624 = vmatpush1.msra.mxu0 0.0
        %3625 = vmatprep.subr.mxu0 0.0
        %3626 = vmatpush1.msra.mxu0 0.0
        %3627 = vmatprep.subr.mxu0 0.0
        %3628 = vmatpush1.msra.mxu0 0.0
        %3629 = vmatprep.subr.mxu0 0.0
        %3630 = vmatpush1.msra.mxu0 0.0
        %3631 = vmatprep.subr.mxu0 0.0
        %3632 = vmatpush1.msra.mxu0 0.0
        %3633 = vmatprep.subr.mxu0 0.0
        %3634 = vmatpush1.msra.mxu0 0.0
        %3635 = vmatprep.subr.mxu0 0.0
        %3636 = vmatpush1.msra.mxu0 0.0
        %3637 = vmatprep.subr.mxu0 0.0
        %3638 = vmatpush1.msra.mxu0 0.0
        %3639 = vmatprep.subr.mxu0 0.0
        %3640 = vmatpush1.msra.mxu0 0.0
        %3641 = vmatprep.subr.mxu0 0.0
        %3642 = vmatpush1.msra.mxu0 0.0
        %3643 = vmatprep.subr.mxu0 0.0
        %3644 = vmatpush1.msra.mxu0 0.0
        %3645 = vmatprep.subr.mxu0 0.0
        %3646 = vmatpush1.msra.mxu0 0.0
        %3647 = vmatprep.subr.mxu0 0.0
        %3648 = vmatpush1.msra.mxu0 0.0
        %3649 = vmatprep.subr.mxu0 0.0
        %3650 = vmatpush1.msra.mxu0 0.0
        %3651 = vmatprep.subr.mxu0 0.0
        %3652 = vmatpush1.msra.mxu0 0.0
        %3653 = vmatprep.subr.mxu0 0.0
        %3654 = vmatpush1.msra.mxu0 0.0
        %3655 = vmatprep.subr.mxu0 0.0
        %3656 = vmatpush1.msra.mxu0 0.0
        %3657 = vmatprep.mubr.f32.mxu0 0.0
        %3658 = vmatmul.mubr.f32.gmra.mrb[0].mxu0 %v3582
        %v3659 = vpop.f32.mrb[0].mxu0
        %v3660 = vadd.f32 0.0, %v3659
        %v3661 = vpop.f32.mrb[0].mxu0
        %3662 = vmatprep.mubr.f32.mxu0 0.0
        %3663 = vmatmul.mubr.f32.gmra.mrb[0].mxu0 %v3585
        %v3664 = vpop.f32.mrb[0].mxu0
        %v3665 = vadd.f32 0.0, %v3664
        %v3666 = vpop.f32.mrb[0].mxu0
        %3667 = vmatprep.mubr.f32.mxu0 0.0
        %3668 = vmatmul.mubr.f32.gmra.mrb[0].mxu0 %v3588
        %v3669 = vpop.f32.mrb[0].mxu0
        %v3670 = vadd.f32 0.0, %v3669
        %v3671 = vpop.f32.mrb[0].mxu0
        %3672 = vmatprep.mubr.f32.mxu0 0.0
        %3673 = vmatmul.mubr.f32.gmra.mrb[0].mxu0 %v3591
        %v3674 = vpop.f32.mrb[0].mxu0
        %v3675 = vadd.f32 0.0, %v3674
        %v3676 = vpop.f32.mrb[0].mxu0
        %3677 = vdwg.mxu0
        %v3678 = vadd.f32 %v3566, %v3660
        %v3679 = vadd.f32 %v3567, %v3665
        %v3680 = vadd.f32 %v3568, %v3670
        %v3681 = vadd.f32 %v3569, %v3675
        %s3682 = scalar_lea.vmem %s14, 128
        %v3683 = vld [vmem:[%s3682] sm:$0xff]
        %v3684 = vld [vmem:[%s3682 + $0x8] sm:$0xff]
        %v3685 = vld [vmem:[%s3682 + $0x10] sm:$0xff]
        %v3686 = vld [vmem:[%s3682 + $0x18] sm:$0xff]
        %3687 = vrot.lane.b32.xlu0 %v3243, 119
        %v3688 = vpop.permute.xlu0 %3687
        %3689 = vrot.lane.b32.xlu0 %v3244, 119
        %v3690 = vpop.permute.xlu0 %3689
        %v3694 = vsel %vm1895, %v3683, 0
        %v3697 = vsel %vm1895, %v3684, 0
        %v3700 = vsel %vm1895, %v3685, 0
        %v3703 = vsel %vm1895, %v3686, 0
        %3705 = vmatprep.subr.mxu0 0.0
        %3706 = vmatpush1.msra.mxu0 %v3688
        %3707 = vmatprep.subr.mxu0 0.0
        %3708 = vmatpush1.msra.mxu0 %v3690
        %3709 = vmatprep.subr.mxu0 0.0
        %3710 = vmatpush1.msra.mxu0 0.0
        %3711 = vmatprep.subr.mxu0 0.0
        %3712 = vmatpush1.msra.mxu0 0.0
        %3713 = vmatprep.subr.mxu0 0.0
        %3714 = vmatpush1.msra.mxu0 0.0
        %3715 = vmatprep.subr.mxu0 0.0
        %3716 = vmatpush1.msra.mxu0 0.0
        %3717 = vmatprep.subr.mxu0 0.0
        %3718 = vmatpush1.msra.mxu0 0.0
        %3719 = vmatprep.subr.mxu0 0.0
        %3720 = vmatpush1.msra.mxu0 0.0
        %3721 = vmatprep.subr.mxu0 0.0
        %3722 = vmatpush1.msra.mxu0 0.0
        %3723 = vmatprep.subr.mxu0 0.0
        %3724 = vmatpush1.msra.mxu0 0.0
        %3725 = vmatprep.subr.mxu0 0.0
        %3726 = vmatpush1.msra.mxu0 0.0
        %3727 = vmatprep.subr.mxu0 0.0
        %3728 = vmatpush1.msra.mxu0 0.0
        %3729 = vmatprep.subr.mxu0 0.0
        %3730 = vmatpush1.msra.mxu0 0.0
        %3731 = vmatprep.subr.mxu0 0.0
        %3732 = vmatpush1.msra.mxu0 0.0
        %3733 = vmatprep.subr.mxu0 0.0
        %3734 = vmatpush1.msra.mxu0 0.0
        %3735 = vmatprep.subr.mxu0 0.0
        %3736 = vmatpush1.msra.mxu0 0.0
        %3737 = vmatprep.subr.mxu0 0.0
        %3738 = vmatpush1.msra.mxu0 0.0
        %3739 = vmatprep.subr.mxu0 0.0
        %3740 = vmatpush1.msra.mxu0 0.0
        %3741 = vmatprep.subr.mxu0 0.0
        %3742 = vmatpush1.msra.mxu0 0.0
        %3743 = vmatprep.subr.mxu0 0.0
        %3744 = vmatpush1.msra.mxu0 0.0
        %3745 = vmatprep.subr.mxu0 0.0
        %3746 = vmatpush1.msra.mxu0 0.0
        %3747 = vmatprep.subr.mxu0 0.0
        %3748 = vmatpush1.msra.mxu0 0.0
        %3749 = vmatprep.subr.mxu0 0.0
        %3750 = vmatpush1.msra.mxu0 0.0
        %3751 = vmatprep.subr.mxu0 0.0
        %3752 = vmatpush1.msra.mxu0 0.0
        %3753 = vmatprep.subr.mxu0 0.0
        %3754 = vmatpush1.msra.mxu0 0.0
        %3755 = vmatprep.subr.mxu0 0.0
        %3756 = vmatpush1.msra.mxu0 0.0
        %3757 = vmatprep.subr.mxu0 0.0
        %3758 = vmatpush1.msra.mxu0 0.0
        %3759 = vmatprep.subr.mxu0 0.0
        %3760 = vmatpush1.msra.mxu0 0.0
        %3761 = vmatprep.subr.mxu0 0.0
        %3762 = vmatpush1.msra.mxu0 0.0
        %3763 = vmatprep.subr.mxu0 0.0
        %3764 = vmatpush1.msra.mxu0 0.0
        %3765 = vmatprep.subr.mxu0 0.0
        %3766 = vmatpush1.msra.mxu0 0.0
        %3767 = vmatprep.subr.mxu0 0.0
        %3768 = vmatpush1.msra.mxu0 0.0
        %3769 = vmatprep.mubr.f32.mxu0 0.0
        %3770 = vmatmul.mubr.f32.gmra.mrb[0].mxu0 %v3694
        %v3771 = vpop.f32.mrb[0].mxu0
        %v3772 = vadd.f32 0.0, %v3771
        %v3773 = vpop.f32.mrb[0].mxu0
        %3774 = vmatprep.mubr.f32.mxu0 0.0
        %3775 = vmatmul.mubr.f32.gmra.mrb[0].mxu0 %v3697
        %v3776 = vpop.f32.mrb[0].mxu0
        %v3777 = vadd.f32 0.0, %v3776
        %v3778 = vpop.f32.mrb[0].mxu0
        %3779 = vmatprep.mubr.f32.mxu0 0.0
        %3780 = vmatmul.mubr.f32.gmra.mrb[0].mxu0 %v3700
        %v3781 = vpop.f32.mrb[0].mxu0
        %v3782 = vadd.f32 0.0, %v3781
        %v3783 = vpop.f32.mrb[0].mxu0
        %3784 = vmatprep.mubr.f32.mxu0 0.0
        %3785 = vmatmul.mubr.f32.gmra.mrb[0].mxu0 %v3703
        %v3786 = vpop.f32.mrb[0].mxu0
        %v3787 = vadd.f32 0.0, %v3786
        %v3788 = vpop.f32.mrb[0].mxu0
        %3789 = vdwg.mxu0
        %v3790 = vadd.f32 %v3678, %v3772
        %v3791 = vadd.f32 %v3679, %v3777
        %v3792 = vadd.f32 %v3680, %v3782
        %v3793 = vadd.f32 %v3681, %v3787
        %s3794 = scalar_lea.vmem %s14, 160
        %v3795 = vld [vmem:[%s3794] sm:$0xff]
        %v3796 = vld [vmem:[%s3794 + $0x8] sm:$0xff]
        %v3797 = vld [vmem:[%s3794 + $0x10] sm:$0xff]
        %v3798 = vld [vmem:[%s3794 + $0x18] sm:$0xff]
        %3799 = vrot.lane.b32.xlu0 %v3243, 118
        %v3800 = vpop.permute.xlu0 %3799
        %3801 = vrot.lane.b32.xlu0 %v3244, 118
        %v3802 = vpop.permute.xlu0 %3801
        %v3806 = vsel %vm1895, %v3795, 0
        %v3809 = vsel %vm1895, %v3796, 0
        %v3812 = vsel %vm1895, %v3797, 0
        %v3815 = vsel %vm1895, %v3798, 0
        %3817 = vmatprep.subr.mxu0 0.0
        %3818 = vmatpush1.msra.mxu0 %v3800
        %3819 = vmatprep.subr.mxu0 0.0
        %3820 = vmatpush1.msra.mxu0 %v3802
        %3821 = vmatprep.subr.mxu0 0.0
        %3822 = vmatpush1.msra.mxu0 0.0
        %3823 = vmatprep.subr.mxu0 0.0
        %3824 = vmatpush1.msra.mxu0 0.0
        %3825 = vmatprep.subr.mxu0 0.0
        %3826 = vmatpush1.msra.mxu0 0.0
        %3827 = vmatprep.subr.mxu0 0.0
        %3828 = vmatpush1.msra.mxu0 0.0
        %3829 = vmatprep.subr.mxu0 0.0
        %3830 = vmatpush1.msra.mxu0 0.0
        %3831 = vmatprep.subr.mxu0 0.0
        %3832 = vmatpush1.msra.mxu0 0.0
        %3833 = vmatprep.subr.mxu0 0.0
        %3834 = vmatpush1.msra.mxu0 0.0
        %3835 = vmatprep.subr.mxu0 0.0
        %3836 = vmatpush1.msra.mxu0 0.0
        %3837 = vmatprep.subr.mxu0 0.0
        %3838 = vmatpush1.msra.mxu0 0.0
        %3839 = vmatprep.subr.mxu0 0.0
        %3840 = vmatpush1.msra.mxu0 0.0
        %3841 = vmatprep.subr.mxu0 0.0
        %3842 = vmatpush1.msra.mxu0 0.0
        %3843 = vmatprep.subr.mxu0 0.0
        %3844 = vmatpush1.msra.mxu0 0.0
        %3845 = vmatprep.subr.mxu0 0.0
        %3846 = vmatpush1.msra.mxu0 0.0
        %3847 = vmatprep.subr.mxu0 0.0
        %3848 = vmatpush1.msra.mxu0 0.0
        %3849 = vmatprep.subr.mxu0 0.0
        %3850 = vmatpush1.msra.mxu0 0.0
        %3851 = vmatprep.subr.mxu0 0.0
        %3852 = vmatpush1.msra.mxu0 0.0
        %3853 = vmatprep.subr.mxu0 0.0
        %3854 = vmatpush1.msra.mxu0 0.0
        %3855 = vmatprep.subr.mxu0 0.0
        %3856 = vmatpush1.msra.mxu0 0.0
        %3857 = vmatprep.subr.mxu0 0.0
        %3858 = vmatpush1.msra.mxu0 0.0
        %3859 = vmatprep.subr.mxu0 0.0
        %3860 = vmatpush1.msra.mxu0 0.0
        %3861 = vmatprep.subr.mxu0 0.0
        %3862 = vmatpush1.msra.mxu0 0.0
        %3863 = vmatprep.subr.mxu0 0.0
        %3864 = vmatpush1.msra.mxu0 0.0
        %3865 = vmatprep.subr.mxu0 0.0
        %3866 = vmatpush1.msra.mxu0 0.0
        %3867 = vmatprep.subr.mxu0 0.0
        %3868 = vmatpush1.msra.mxu0 0.0
        %3869 = vmatprep.subr.mxu0 0.0
        %3870 = vmatpush1.msra.mxu0 0.0
        %3871 = vmatprep.subr.mxu0 0.0
        %3872 = vmatpush1.msra.mxu0 0.0
        %3873 = vmatprep.subr.mxu0 0.0
        %3874 = vmatpush1.msra.mxu0 0.0
        %3875 = vmatprep.subr.mxu0 0.0
        %3876 = vmatpush1.msra.mxu0 0.0
        %3877 = vmatprep.subr.mxu0 0.0
        %3878 = vmatpush1.msra.mxu0 0.0
        %3879 = vmatprep.subr.mxu0 0.0
        %3880 = vmatpush1.msra.mxu0 0.0
        %3881 = vmatprep.mubr.f32.mxu0 0.0
        %3882 = vmatmul.mubr.f32.gmra.mrb[0].mxu0 %v3806
        %v3883 = vpop.f32.mrb[0].mxu0
        %v3884 = vadd.f32 0.0, %v3883
        %v3885 = vpop.f32.mrb[0].mxu0
        %3886 = vmatprep.mubr.f32.mxu0 0.0
        %3887 = vmatmul.mubr.f32.gmra.mrb[0].mxu0 %v3809
        %v3888 = vpop.f32.mrb[0].mxu0
        %v3889 = vadd.f32 0.0, %v3888
        %v3890 = vpop.f32.mrb[0].mxu0
        %3891 = vmatprep.mubr.f32.mxu0 0.0
        %3892 = vmatmul.mubr.f32.gmra.mrb[0].mxu0 %v3812
        %v3893 = vpop.f32.mrb[0].mxu0
        %v3894 = vadd.f32 0.0, %v3893
        %v3895 = vpop.f32.mrb[0].mxu0
        %3896 = vmatprep.mubr.f32.mxu0 0.0
        %3897 = vmatmul.mubr.f32.gmra.mrb[0].mxu0 %v3815
        %v3898 = vpop.f32.mrb[0].mxu0
        %v3899 = vadd.f32 0.0, %v3898
        %v3900 = vpop.f32.mrb[0].mxu0
        %3901 = vdwg.mxu0
        %v3902 = vadd.f32 %v3790, %v3884
        %v3903 = vadd.f32 %v3791, %v3889
        %v3904 = vadd.f32 %v3792, %v3894
        %v3905 = vadd.f32 %v3793, %v3899
        %s3906 = scalar_lea.vmem %s14, 192
        %v3907 = vld [vmem:[%s3906] sm:$0xff]
        %v3908 = vld [vmem:[%s3906 + $0x8] sm:$0xff]
        %v3909 = vld [vmem:[%s3906 + $0x10] sm:$0xff]
        %v3910 = vld [vmem:[%s3906 + $0x18] sm:$0xff]
        %3911 = vrot.lane.b32.xlu0 %v3243, 117
        %v3912 = vpop.permute.xlu0 %3911
        %3913 = vrot.lane.b32.xlu0 %v3244, 117
        %v3914 = vpop.permute.xlu0 %3913
        %v3918 = vsel %vm1895, %v3907, 0
        %v3921 = vsel %vm1895, %v3908, 0
        %v3924 = vsel %vm1895, %v3909, 0
        %v3927 = vsel %vm1895, %v3910, 0
        %3929 = vmatprep.subr.mxu0 0.0
        %3930 = vmatpush1.msra.mxu0 %v3912
        %3931 = vmatprep.subr.mxu0 0.0
        %3932 = vmatpush1.msra.mxu0 %v3914
        %3933 = vmatprep.subr.mxu0 0.0
        %3934 = vmatpush1.msra.mxu0 0.0
        %3935 = vmatprep.subr.mxu0 0.0
        %3936 = vmatpush1.msra.mxu0 0.0
        %3937 = vmatprep.subr.mxu0 0.0
        %3938 = vmatpush1.msra.mxu0 0.0
        %3939 = vmatprep.subr.mxu0 0.0
        %3940 = vmatpush1.msra.mxu0 0.0
        %3941 = vmatprep.subr.mxu0 0.0
        %3942 = vmatpush1.msra.mxu0 0.0
        %3943 = vmatprep.subr.mxu0 0.0
        %3944 = vmatpush1.msra.mxu0 0.0
        %3945 = vmatprep.subr.mxu0 0.0
        %3946 = vmatpush1.msra.mxu0 0.0
        %3947 = vmatprep.subr.mxu0 0.0
        %3948 = vmatpush1.msra.mxu0 0.0
        %3949 = vmatprep.subr.mxu0 0.0
        %3950 = vmatpush1.msra.mxu0 0.0
        %3951 = vmatprep.subr.mxu0 0.0
        %3952 = vmatpush1.msra.mxu0 0.0
        %3953 = vmatprep.subr.mxu0 0.0
        %3954 = vmatpush1.msra.mxu0 0.0
        %3955 = vmatprep.subr.mxu0 0.0
        %3956 = vmatpush1.msra.mxu0 0.0
        %3957 = vmatprep.subr.mxu0 0.0
        %3958 = vmatpush1.msra.mxu0 0.0
        %3959 = vmatprep.subr.mxu0 0.0
        %3960 = vmatpush1.msra.mxu0 0.0
        %3961 = vmatprep.subr.mxu0 0.0
        %3962 = vmatpush1.msra.mxu0 0.0
        %3963 = vmatprep.subr.mxu0 0.0
        %3964 = vmatpush1.msra.mxu0 0.0
        %3965 = vmatprep.subr.mxu0 0.0
        %3966 = vmatpush1.msra.mxu0 0.0
        %3967 = vmatprep.subr.mxu0 0.0
        %3968 = vmatpush1.msra.mxu0 0.0
        %3969 = vmatprep.subr.mxu0 0.0
        %3970 = vmatpush1.msra.mxu0 0.0
        %3971 = vmatprep.subr.mxu0 0.0
        %3972 = vmatpush1.msra.mxu0 0.0
        %3973 = vmatprep.subr.mxu0 0.0
        %3974 = vmatpush1.msra.mxu0 0.0
        %3975 = vmatprep.subr.mxu0 0.0
        %3976 = vmatpush1.msra.mxu0 0.0
        %3977 = vmatprep.subr.mxu0 0.0
        %3978 = vmatpush1.msra.mxu0 0.0
        %3979 = vmatprep.subr.mxu0 0.0
        %3980 = vmatpush1.msra.mxu0 0.0
        %3981 = vmatprep.subr.mxu0 0.0
        %3982 = vmatpush1.msra.mxu0 0.0
        %3983 = vmatprep.subr.mxu0 0.0
        %3984 = vmatpush1.msra.mxu0 0.0
        %3985 = vmatprep.subr.mxu0 0.0
        %3986 = vmatpush1.msra.mxu0 0.0
        %3987 = vmatprep.subr.mxu0 0.0
        %3988 = vmatpush1.msra.mxu0 0.0
        %3989 = vmatprep.subr.mxu0 0.0
        %3990 = vmatpush1.msra.mxu0 0.0
        %3991 = vmatprep.subr.mxu0 0.0
        %3992 = vmatpush1.msra.mxu0 0.0
        %3993 = vmatprep.mubr.f32.mxu0 0.0
        %3994 = vmatmul.mubr.f32.gmra.mrb[0].mxu0 %v3918
        %v3995 = vpop.f32.mrb[0].mxu0
        %v3996 = vadd.f32 0.0, %v3995
        %v3997 = vpop.f32.mrb[0].mxu0
        %3998 = vmatprep.mubr.f32.mxu0 0.0
        %3999 = vmatmul.mubr.f32.gmra.mrb[0].mxu0 %v3921
        %v4000 = vpop.f32.mrb[0].mxu0
        %v4001 = vadd.f32 0.0, %v4000
        %v4002 = vpop.f32.mrb[0].mxu0
        %4003 = vmatprep.mubr.f32.mxu0 0.0
        %4004 = vmatmul.mubr.f32.gmra.mrb[0].mxu0 %v3924
        %v4005 = vpop.f32.mrb[0].mxu0
        %v4006 = vadd.f32 0.0, %v4005
        %v4007 = vpop.f32.mrb[0].mxu0
        %4008 = vmatprep.mubr.f32.mxu0 0.0
        %4009 = vmatmul.mubr.f32.gmra.mrb[0].mxu0 %v3927
        %v4010 = vpop.f32.mrb[0].mxu0
        %v4011 = vadd.f32 0.0, %v4010
        %v4012 = vpop.f32.mrb[0].mxu0
        %4013 = vdwg.mxu0
        %v4014 = vadd.f32 %v3902, %v3996
        %v4015 = vadd.f32 %v3903, %v4001
        %v4016 = vadd.f32 %v3904, %v4006
        %v4017 = vadd.f32 %v3905, %v4011
        %4019 = vset.pattern.permute.xlu0 0
        %4020 = vperm.xlu0 %4019, %v3235
        %v4021 = vpop.permute.xlu0 %4020
        %4024 = vset.pattern.permute.xlu0 0
        %4025 = vperm.xlu0 %4024, %v3236
        %v4026 = vpop.permute.xlu0 %4025
        %4029 = vset.pattern.permute.xlu0 0
        %4030 = vperm.xlu0 %4029, %v3237
        %v4031 = vpop.permute.xlu0 %4030
        %4034 = vset.pattern.permute.xlu0 0
        %4035 = vperm.xlu0 %4034, %v3238
        %v4036 = vpop.permute.xlu0 %4035
        %v4038 = vadd.f32 %v4014, %v4021
        %v4039 = vadd.f32 %v4015, %v4026
        %v4040 = vadd.f32 %v4016, %v4031
        %v4041 = vadd.f32 %v4017, %v4036
        %v4042 = vxor.u32 %v4038, 2147483648
        %v4043 = vxor.u32 %v4039, 2147483648
        %v4044 = vxor.u32 %v4040, 2147483648
        %v4045 = vxor.u32 %v4041, 2147483648
        %v4046 = vmul.f32 %v4042, 1.442695
        %v4047 = vpow.pop %v4046
        %v4048 = vmul.f32 %v4043, 1.442695
        %v4049 = vpow.pop %v4048
        %v4050 = vmul.f32 %v4044, 1.442695
        %v4051 = vpow.pop %v4050
        %v4052 = vmul.f32 %v4045, 1.442695
        %v4053 = vpow.pop %v4052
        %v4054 = vadd.f32 %v4047, 1.0
        %v4055 = vadd.f32 %v4049, 1.0
        %v4056 = vadd.f32 %v4051, 1.0
        %v4057 = vadd.f32 %v4053, 1.0
        %v4058 = vrcp.pop %v4054
        %v4059 = vmul.f32 1.0, %v4058
        %v4060 = vrcp.pop %v4055
        %v4061 = vmul.f32 1.0, %v4060
        %v4062 = vrcp.pop %v4056
        %v4063 = vmul.f32 1.0, %v4062
        %v4064 = vrcp.pop %v4057
        %v4065 = vmul.f32 1.0, %v4064
        %v4066 = vld [vmem:[%s16] sm:$0xff]
        %v4067 = vld [vmem:[%s16 + $0x8] sm:$0xff]
        %v4068 = vld [vmem:[%s16 + $0x10] sm:$0xff]
        %v4069 = vld [vmem:[%s16 + $0x18] sm:$0xff]
        %v4071 = vsel %vm1895, %v3228, 0
        %v4074 = vsel %vm1895, %v3230, 0
        %v4077 = vsel %vm1895, %v3232, 0
        %v4080 = vsel %vm1895, %v3234, 0
        %4082 = vmatprep.subr.mxu0 %v4067
        %4083 = vmatpush1.msra.mxu0 %v4066
        %4084 = vmatprep.subr.mxu0 %v4069
        %4085 = vmatpush1.msra.mxu0 %v4068
        %4086 = vmatprep.subr.mxu0 0.0
        %4087 = vmatpush1.msra.mxu0 0.0
        %4088 = vmatprep.subr.mxu0 0.0
        %4089 = vmatpush1.msra.mxu0 0.0
        %4090 = vmatprep.subr.mxu0 0.0
        %4091 = vmatpush1.msra.mxu0 0.0
        %4092 = vmatprep.subr.mxu0 0.0
        %4093 = vmatpush1.msra.mxu0 0.0
        %4094 = vmatprep.subr.mxu0 0.0
        %4095 = vmatpush1.msra.mxu0 0.0
        %4096 = vmatprep.subr.mxu0 0.0
        %4097 = vmatpush1.msra.mxu0 0.0
        %4098 = vmatprep.subr.mxu0 0.0
        %4099 = vmatpush1.msra.mxu0 0.0
        %4100 = vmatprep.subr.mxu0 0.0
        %4101 = vmatpush1.msra.mxu0 0.0
        %4102 = vmatprep.subr.mxu0 0.0
        %4103 = vmatpush1.msra.mxu0 0.0
        %4104 = vmatprep.subr.mxu0 0.0
        %4105 = vmatpush1.msra.mxu0 0.0
        %4106 = vmatprep.subr.mxu0 0.0
        %4107 = vmatpush1.msra.mxu0 0.0
        %4108 = vmatprep.subr.mxu0 0.0
        %4109 = vmatpush1.msra.mxu0 0.0
        %4110 = vmatprep.subr.mxu0 0.0
        %4111 = vmatpush1.msra.mxu0 0.0
        %4112 = vmatprep.subr.mxu0 0.0
        %4113 = vmatpush1.msra.mxu0 0.0
        %4114 = vmatprep.subr.mxu0 0.0
        %4115 = vmatpush1.msra.mxu0 0.0
        %4116 = vmatprep.subr.mxu0 0.0
        %4117 = vmatpush1.msra.mxu0 0.0
        %4118 = vmatprep.subr.mxu0 0.0
        %4119 = vmatpush1.msra.mxu0 0.0
        %4120 = vmatprep.subr.mxu0 0.0
        %4121 = vmatpush1.msra.mxu0 0.0
        %4122 = vmatprep.subr.mxu0 0.0
        %4123 = vmatpush1.msra.mxu0 0.0
        %4124 = vmatprep.subr.mxu0 0.0
        %4125 = vmatpush1.msra.mxu0 0.0
        %4126 = vmatprep.subr.mxu0 0.0
        %4127 = vmatpush1.msra.mxu0 0.0
        %4128 = vmatprep.subr.mxu0 0.0
        %4129 = vmatpush1.msra.mxu0 0.0
        %4130 = vmatprep.subr.mxu0 0.0
        %4131 = vmatpush1.msra.mxu0 0.0
        %4132 = vmatprep.subr.mxu0 0.0
        %4133 = vmatpush1.msra.mxu0 0.0
        %4134 = vmatprep.subr.mxu0 0.0
        %4135 = vmatpush1.msra.mxu0 0.0
        %4136 = vmatprep.subr.mxu0 0.0
        %4137 = vmatpush1.msra.mxu0 0.0
        %4138 = vmatprep.subr.mxu0 0.0
        %4139 = vmatpush1.msra.mxu0 0.0
        %4140 = vmatprep.subr.mxu0 0.0
        %4141 = vmatpush1.msra.mxu0 0.0
        %4142 = vmatprep.subr.mxu0 0.0
        %4143 = vmatpush1.msra.mxu0 0.0
        %4144 = vmatprep.subr.mxu0 0.0
        %4145 = vmatpush1.msra.mxu0 0.0
        %4146 = vmatprep.mubr.f32.mxu0 0.0
        %4147 = vmatmul.mubr.f32.gmra.mrb[0].mxu0 %v4071
        %v4148 = vpop.f32.mrb[0].mxu0
        %v4149 = vadd.f32 0.0, %v4148
        %v4150 = vpop.f32.mrb[0].mxu0
        %v4151 = vadd.f32 0.0, %v4150
        %4152 = vmatprep.mubr.f32.mxu0 0.0
        %4153 = vmatmul.mubr.f32.gmra.mrb[0].mxu0 %v4074
        %v4154 = vpop.f32.mrb[0].mxu0
        %v4155 = vadd.f32 0.0, %v4154
        %v4156 = vpop.f32.mrb[0].mxu0
        %v4157 = vadd.f32 0.0, %v4156
        %4158 = vmatprep.mubr.f32.mxu0 0.0
        %4159 = vmatmul.mubr.f32.gmra.mrb[0].mxu0 %v4077
        %v4160 = vpop.f32.mrb[0].mxu0
        %v4161 = vadd.f32 0.0, %v4160
        %v4162 = vpop.f32.mrb[0].mxu0
        %v4163 = vadd.f32 0.0, %v4162
        %4164 = vmatprep.mubr.f32.mxu0 0.0
        %4165 = vmatmul.mubr.f32.gmra.mrb[0].mxu0 %v4080
        %v4166 = vpop.f32.mrb[0].mxu0
        %v4167 = vadd.f32 0.0, %v4166
        %v4168 = vpop.f32.mrb[0].mxu0
        %v4169 = vadd.f32 0.0, %v4168
        %4170 = vdwg.mxu0
        %v4171 = vld [vmem:[%s17] sm:$0xff]
        %v4172 = vld [vmem:[%s17 + $0x8] sm:$0xff]
        %v4173 = vld [vmem:[%s17 + $0x10] sm:$0xff]
        %v4174 = vld [vmem:[%s17 + $0x18] sm:$0xff]
        %v4176 = vsel %vm1895, %v4059, 0
        %v4179 = vsel %vm1895, %v4061, 0
        %v4182 = vsel %vm1895, %v4063, 0
        %v4185 = vsel %vm1895, %v4065, 0
        %4187 = vmatprep.subr.mxu0 %v4172
        %4188 = vmatpush1.msra.mxu0 %v4171
        %4189 = vmatprep.subr.mxu0 %v4174
        %4190 = vmatpush1.msra.mxu0 %v4173
        %4191 = vmatprep.subr.mxu0 0.0
        %4192 = vmatpush1.msra.mxu0 0.0
        %4193 = vmatprep.subr.mxu0 0.0
        %4194 = vmatpush1.msra.mxu0 0.0
        %4195 = vmatprep.subr.mxu0 0.0
        %4196 = vmatpush1.msra.mxu0 0.0
        %4197 = vmatprep.subr.mxu0 0.0
        %4198 = vmatpush1.msra.mxu0 0.0
        %4199 = vmatprep.subr.mxu0 0.0
        %4200 = vmatpush1.msra.mxu0 0.0
        %4201 = vmatprep.subr.mxu0 0.0
        %4202 = vmatpush1.msra.mxu0 0.0
        %4203 = vmatprep.subr.mxu0 0.0
        %4204 = vmatpush1.msra.mxu0 0.0
        %4205 = vmatprep.subr.mxu0 0.0
        %4206 = vmatpush1.msra.mxu0 0.0
        %4207 = vmatprep.subr.mxu0 0.0
        %4208 = vmatpush1.msra.mxu0 0.0
        %4209 = vmatprep.subr.mxu0 0.0
        %4210 = vmatpush1.msra.mxu0 0.0
        %4211 = vmatprep.subr.mxu0 0.0
        %4212 = vmatpush1.msra.mxu0 0.0
        %4213 = vmatprep.subr.mxu0 0.0
        %4214 = vmatpush1.msra.mxu0 0.0
        %4215 = vmatprep.subr.mxu0 0.0
        %4216 = vmatpush1.msra.mxu0 0.0
        %4217 = vmatprep.subr.mxu0 0.0
        %4218 = vmatpush1.msra.mxu0 0.0
        %4219 = vmatprep.subr.mxu0 0.0
        %4220 = vmatpush1.msra.mxu0 0.0
        %4221 = vmatprep.subr.mxu0 0.0
        %4222 = vmatpush1.msra.mxu0 0.0
        %4223 = vmatprep.subr.mxu0 0.0
        %4224 = vmatpush1.msra.mxu0 0.0
        %4225 = vmatprep.subr.mxu0 0.0
        %4226 = vmatpush1.msra.mxu0 0.0
        %4227 = vmatprep.subr.mxu0 0.0
        %4228 = vmatpush1.msra.mxu0 0.0
        %4229 = vmatprep.subr.mxu0 0.0
        %4230 = vmatpush1.msra.mxu0 0.0
        %4231 = vmatprep.subr.mxu0 0.0
        %4232 = vmatpush1.msra.mxu0 0.0
        %4233 = vmatprep.subr.mxu0 0.0
        %4234 = vmatpush1.msra.mxu0 0.0
        %4235 = vmatprep.subr.mxu0 0.0
        %4236 = vmatpush1.msra.mxu0 0.0
        %4237 = vmatprep.subr.mxu0 0.0
        %4238 = vmatpush1.msra.mxu0 0.0
        %4239 = vmatprep.subr.mxu0 0.0
        %4240 = vmatpush1.msra.mxu0 0.0
        %4241 = vmatprep.subr.mxu0 0.0
        %4242 = vmatpush1.msra.mxu0 0.0
        %4243 = vmatprep.subr.mxu0 0.0
        %4244 = vmatpush1.msra.mxu0 0.0
        %4245 = vmatprep.subr.mxu0 0.0
        %4246 = vmatpush1.msra.mxu0 0.0
        %4247 = vmatprep.subr.mxu0 0.0
        %4248 = vmatpush1.msra.mxu0 0.0
        %4249 = vmatprep.subr.mxu0 0.0
        %4250 = vmatpush1.msra.mxu0 0.0
        %4251 = vmatprep.mubr.f32.mxu0 0.0
        %4252 = vmatmul.mubr.f32.gmra.mrb[0].mxu0 %v4176
        %v4253 = vpop.f32.mrb[0].mxu0
        %v4254 = vadd.f32 0.0, %v4253
        %v4255 = vpop.f32.mrb[0].mxu0
        %v4256 = vadd.f32 0.0, %v4255
        %4257 = vmatprep.mubr.f32.mxu0 0.0
        %4258 = vmatmul.mubr.f32.gmra.mrb[0].mxu0 %v4179
        %v4259 = vpop.f32.mrb[0].mxu0
        %v4260 = vadd.f32 0.0, %v4259
        %v4261 = vpop.f32.mrb[0].mxu0
        %v4262 = vadd.f32 0.0, %v4261
        %4263 = vmatprep.mubr.f32.mxu0 0.0
        %4264 = vmatmul.mubr.f32.gmra.mrb[0].mxu0 %v4182
        %v4265 = vpop.f32.mrb[0].mxu0
        %v4266 = vadd.f32 0.0, %v4265
        %v4267 = vpop.f32.mrb[0].mxu0
        %v4268 = vadd.f32 0.0, %v4267
        %4269 = vmatprep.mubr.f32.mxu0 0.0
        %4270 = vmatmul.mubr.f32.gmra.mrb[0].mxu0 %v4185
        %v4271 = vpop.f32.mrb[0].mxu0
        %v4272 = vadd.f32 0.0, %v4271
        %v4273 = vpop.f32.mrb[0].mxu0
        %v4274 = vadd.f32 0.0, %v4273
        %4275 = vdwg.mxu0
        %s4276 = sld [smem:[#allocation8]]
        %v4277 = vstv %s4276
        %v4278 = vmul.f32 %v4277, %v4254
        %v4279 = vmul.f32 %v4277, %v4256
        %v4280 = vmul.f32 %v4277, %v4260
        %v4281 = vmul.f32 %v4277, %v4262
        %v4282 = vmul.f32 %v4277, %v4266
        %v4283 = vmul.f32 %v4277, %v4268
        %v4284 = vmul.f32 %v4277, %v4272
        %v4285 = vmul.f32 %v4277, %v4274
        %s4286 = sld [smem:[#allocation7]]
        %v4287 = vstv %s4286
        %v4288 = vmul.f32 %v4287, %v4149
        %v4289 = vmul.f32 %v4287, %v4151
        %v4290 = vmul.f32 %v4287, %v4155
        %v4291 = vmul.f32 %v4287, %v4157
        %v4292 = vmul.f32 %v4287, %v4161
        %v4293 = vmul.f32 %v4287, %v4163
        %v4294 = vmul.f32 %v4287, %v4167
        %v4295 = vmul.f32 %v4287, %v4169
        %v4296 = vadd.f32 %v4278, %v4288
        %v4297 = vadd.f32 %v4279, %v4289
        %v4298 = vadd.f32 %v4280, %v4290
        %v4299 = vadd.f32 %v4281, %v4291
        %v4300 = vadd.f32 %v4282, %v4292
        %v4301 = vadd.f32 %v4283, %v4293
        %v4302 = vadd.f32 %v4284, %v4294
        %v4303 = vadd.f32 %v4285, %v4295
        %v4304 = vmul.f32 %v815, %v4296
        %v4305 = vmul.f32 %v816, %v4297
        %v4306 = vmul.f32 %v817, %v4298
        %v4307 = vmul.f32 %v818, %v4299
        %v4308 = vmul.f32 %v819, %v4300
        %v4309 = vmul.f32 %v820, %v4301
        %v4310 = vmul.f32 %v821, %v4302
        %v4311 = vmul.f32 %v822, %v4303
        %4312 = vst [vmem:[#allocation6] sm:$0xff] 0.0
        %4313 = vst [vmem:[#allocation6 + $0x8] sm:$0xff] 0.0
        %4314 = vst [vmem:[#allocation6 + $0x10] sm:$0xff] 0.0
        %4315 = vst [vmem:[#allocation6 + $0x18] sm:$0xff] 0.0
        %4316 = vst [vmem:[#allocation6 + $0x20] sm:$0xff] 0.0
        %4317 = vst [vmem:[#allocation6 + $0x28] sm:$0xff] 0.0
        %4318 = vst [vmem:[#allocation6 + $0x30] sm:$0xff] 0.0
        %4319 = vst [vmem:[#allocation6 + $0x38] sm:$0xff] 0.0
        %4320 = vst [vmem:[#allocation6 + $0x40] sm:$0xff] 0.0
        %4321 = vst [vmem:[#allocation6 + $0x48] sm:$0xff] 0.0
        %4322 = vst [vmem:[#allocation6 + $0x50] sm:$0xff] 0.0
        %4323 = vst [vmem:[#allocation6 + $0x58] sm:$0xff] 0.0
        %4324 = vst [vmem:[#allocation6 + $0x60] sm:$0xff] 0.0
        %4325 = vst [vmem:[#allocation6 + $0x68] sm:$0xff] 0.0
        %4326 = vst [vmem:[#allocation6 + $0x70] sm:$0xff] 0.0
        %4327 = vst [vmem:[#allocation6 + $0x78] sm:$0xff] 0.0
        %4328 = vst [vmem:[#allocation6 + $0x80] sm:$0xff] 0.0
        %4329 = vst [vmem:[#allocation6 + $0x88] sm:$0xff] 0.0
        %4330 = vst [vmem:[#allocation6 + $0x90] sm:$0xff] 0.0
        %4331 = vst [vmem:[#allocation6 + $0x98] sm:$0xff] 0.0
        %4332 = vst [vmem:[#allocation6 + $0xa0] sm:$0xff] 0.0
        %4333 = vst [vmem:[#allocation6 + $0xa8] sm:$0xff] 0.0
        %4334 = vst [vmem:[#allocation6 + $0xb0] sm:$0xff] 0.0
        %4335 = vst [vmem:[#allocation6 + $0xb8] sm:$0xff] 0.0
        %4336 = vst [vmem:[#allocation6 + $0xc0] sm:$0xff] 0.0
        %4337 = vst [vmem:[#allocation6 + $0xc8] sm:$0xff] 0.0
        %4338 = vst [vmem:[#allocation6 + $0xd0] sm:$0xff] 0.0
        %4339 = vst [vmem:[#allocation6 + $0xd8] sm:$0xff] 0.0
        %4340 = vst [vmem:[#allocation6 + $0xe0] sm:$0xff] 0.0
        %4341 = vst [vmem:[#allocation6 + $0xe8] sm:$0xff] 0.0
        %4342 = vst [vmem:[#allocation6 + $0xf0] sm:$0xff] 0.0
        %4343 = vst [vmem:[#allocation6 + $0xf8] sm:$0xff] 0.0
        %4344 = vst [vmem:[#allocation6 + $0x100] sm:$0xff] 0.0
        %4345 = vst [vmem:[#allocation6 + $0x108] sm:$0xff] 0.0
        %4346 = vst [vmem:[#allocation6 + $0x110] sm:$0xff] 0.0
        %4347 = vst [vmem:[#allocation6 + $0x118] sm:$0xff] 0.0
        %4348 = vst [vmem:[#allocation6 + $0x120] sm:$0xff] 0.0
        %4349 = vst [vmem:[#allocation6 + $0x128] sm:$0xff] 0.0
        %4350 = vst [vmem:[#allocation6 + $0x130] sm:$0xff] 0.0
        %4351 = vst [vmem:[#allocation6 + $0x138] sm:$0xff] 0.0
        %4352 = vst [vmem:[#allocation6 + $0x140] sm:$0xff] 0.0
        %4353 = vst [vmem:[#allocation6 + $0x148] sm:$0xff] 0.0
        %4354 = vst [vmem:[#allocation6 + $0x150] sm:$0xff] 0.0
        %4355 = vst [vmem:[#allocation6 + $0x158] sm:$0xff] 0.0
        %4356 = vst [vmem:[#allocation6 + $0x160] sm:$0xff] 0.0
        %4357 = vst [vmem:[#allocation6 + $0x168] sm:$0xff] 0.0
        %4358 = vst [vmem:[#allocation6 + $0x170] sm:$0xff] 0.0
        %4359 = vst [vmem:[#allocation6 + $0x178] sm:$0xff] 0.0
        %4360 = vst [vmem:[#allocation6 + $0x8] sm:$0xff] %v815
        %4361 = vst [vmem:[#allocation6 + $0x10] sm:$0xff] %v816
        %4362 = vst [vmem:[#allocation6 + $0x28] sm:$0xff] %v817
        %4363 = vst [vmem:[#allocation6 + $0x30] sm:$0xff] %v818
        %4364 = vst [vmem:[#allocation6 + $0x48] sm:$0xff] %v819
        %4365 = vst [vmem:[#allocation6 + $0x50] sm:$0xff] %v820
        %4366 = vst [vmem:[#allocation6 + $0x68] sm:$0xff] %v821
        %4367 = vst [vmem:[#allocation6 + $0x70] sm:$0xff] %v822
        %4368 = vst [vmem:[#allocation6 + $0x88] sm:$0xff] %v4304
        %4369 = vst [vmem:[#allocation6 + $0x90] sm:$0xff] %v4305
        %4370 = vst [vmem:[#allocation6 + $0xa8] sm:$0xff] %v4306
        %4371 = vst [vmem:[#allocation6 + $0xb0] sm:$0xff] %v4307
        %4372 = vst [vmem:[#allocation6 + $0xc8] sm:$0xff] %v4308
        %4373 = vst [vmem:[#allocation6 + $0xd0] sm:$0xff] %v4309
        %4374 = vst [vmem:[#allocation6 + $0xe8] sm:$0xff] %v4310
        %4375 = vst [vmem:[#allocation6 + $0xf0] sm:$0xff] %v4311
        %4376 = vst [vmem:[#allocation6 + $0x108] sm:$0xff] %v4296
        %4377 = vst [vmem:[#allocation6 + $0x110] sm:$0xff] %v4297
        %4378 = vst [vmem:[#allocation6 + $0x128] sm:$0xff] %v4298
        %4379 = vst [vmem:[#allocation6 + $0x130] sm:$0xff] %v4299
        %4380 = vst [vmem:[#allocation6 + $0x148] sm:$0xff] %v4300
        %4381 = vst [vmem:[#allocation6 + $0x150] sm:$0xff] %v4301
        %4382 = vst [vmem:[#allocation6 + $0x168] sm:$0xff] %v4302
        %4383 = vst [vmem:[#allocation6 + $0x170] sm:$0xff] %v4303
        %v4384 = vld [vmem:[#allocation6] sm:$0xff]
        %v4385 = vld [vmem:[#allocation6 + $0x8] sm:$0xff]
        %v4386 = vld [vmem:[#allocation6 + $0x10] sm:$0xff]
        %v4387 = vld [vmem:[#allocation6 + $0x20] sm:$0xff]
        %v4388 = vld [vmem:[#allocation6 + $0x28] sm:$0xff]
        %v4389 = vld [vmem:[#allocation6 + $0x30] sm:$0xff]
        %v4390 = vld [vmem:[#allocation6 + $0x40] sm:$0xff]
        %v4391 = vld [vmem:[#allocation6 + $0x48] sm:$0xff]
        %v4392 = vld [vmem:[#allocation6 + $0x50] sm:$0xff]
        %v4393 = vld [vmem:[#allocation6 + $0x60] sm:$0xff]
        %v4394 = vld [vmem:[#allocation6 + $0x68] sm:$0xff]
        %v4395 = vld [vmem:[#allocation6 + $0x70] sm:$0xff]
        %v4396 = vld [vmem:[#allocation6 + $0x80] sm:$0xff]
        %v4397 = vld [vmem:[#allocation6 + $0x88] sm:$0xff]
        %v4398 = vld [vmem:[#allocation6 + $0x90] sm:$0xff]
        %v4399 = vld [vmem:[#allocation6 + $0xa0] sm:$0xff]
        %v4400 = vld [vmem:[#allocation6 + $0xa8] sm:$0xff]
        %v4401 = vld [vmem:[#allocation6 + $0xb0] sm:$0xff]
        %v4402 = vld [vmem:[#allocation6 + $0xc0] sm:$0xff]
        %v4403 = vld [vmem:[#allocation6 + $0xc8] sm:$0xff]
        %v4404 = vld [vmem:[#allocation6 + $0xd0] sm:$0xff]
        %v4405 = vld [vmem:[#allocation6 + $0xe0] sm:$0xff]
        %v4406 = vld [vmem:[#allocation6 + $0xe8] sm:$0xff]
        %v4407 = vld [vmem:[#allocation6 + $0xf0] sm:$0xff]
        %v4408 = vld [vmem:[#allocation6 + $0x100] sm:$0xff]
        %v4409 = vld [vmem:[#allocation6 + $0x108] sm:$0xff]
        %v4410 = vld [vmem:[#allocation6 + $0x110] sm:$0xff]
        %v4411 = vld [vmem:[#allocation6 + $0x120] sm:$0xff]
        %v4412 = vld [vmem:[#allocation6 + $0x128] sm:$0xff]
        %v4413 = vld [vmem:[#allocation6 + $0x130] sm:$0xff]
        %v4414 = vld [vmem:[#allocation6 + $0x140] sm:$0xff]
        %v4415 = vld [vmem:[#allocation6 + $0x148] sm:$0xff]
        %v4416 = vld [vmem:[#allocation6 + $0x150] sm:$0xff]
        %v4417 = vld [vmem:[#allocation6 + $0x160] sm:$0xff]
        %v4418 = vld [vmem:[#allocation6 + $0x168] sm:$0xff]
        %v4419 = vld [vmem:[#allocation6 + $0x170] sm:$0xff]
        %v4420 = vld [vmem:[%s23] sm:$0x3]
        %v4422 = vlaneseq
        %v4423 = vshrl.u32 %v4422, 7
        %v4424 = vsub.s32 0, %v4423
        %v4425 = vrot.slane %v4420, %v4424
        %v4426 = vlaneseq
        %v4427 = vshrl.u32 %v4426, 7
        %v4428 = vsub.s32 1, %v4427
        %v4429 = vrot.slane %v4420, %v4428
        %4430 = vrot.lane.b32.xlu0 %v4425, 111
        %v4431 = vpop.permute.xlu0 %4430
        %4432 = vrot.lane.b32.xlu0 %v4429, 111
        %v4433 = vpop.permute.xlu0 %4432
        %vm4434 = vcmask 908288
        %v4435 = vsel %vm4434, %v4431, %v4433
        %v4439 = vmul.f32 %v4384, %v4431
        %v4440 = vmul.f32 %v4385, %v4435
        %v4441 = vmul.f32 %v4386, %v4433
        %v4442 = vmul.f32 %v4387, %v4431
        %v4443 = vmul.f32 %v4388, %v4435
        %v4444 = vmul.f32 %v4389, %v4433
        %v4445 = vmul.f32 %v4390, %v4431
        %v4446 = vmul.f32 %v4391, %v4435
        %v4447 = vmul.f32 %v4392, %v4433
        %v4448 = vmul.f32 %v4393, %v4431
        %v4449 = vmul.f32 %v4394, %v4435
        %v4450 = vmul.f32 %v4395, %v4433
        %v4451 = vmul.f32 %v4396, %v4431
        %v4452 = vmul.f32 %v4397, %v4435
        %v4453 = vmul.f32 %v4398, %v4433
        %v4454 = vmul.f32 %v4399, %v4431
        %v4455 = vmul.f32 %v4400, %v4435
        %v4456 = vmul.f32 %v4401, %v4433
        %v4457 = vmul.f32 %v4402, %v4431
        %v4458 = vmul.f32 %v4403, %v4435
        %v4459 = vmul.f32 %v4404, %v4433
        %v4460 = vmul.f32 %v4405, %v4431
        %v4461 = vmul.f32 %v4406, %v4435
        %v4462 = vmul.f32 %v4407, %v4433
        %v4463 = vmul.f32 %v4408, %v4431
        %v4464 = vmul.f32 %v4409, %v4435
        %v4465 = vmul.f32 %v4410, %v4433
        %v4466 = vmul.f32 %v4411, %v4431
        %v4467 = vmul.f32 %v4412, %v4435
        %v4468 = vmul.f32 %v4413, %v4433
        %v4469 = vmul.f32 %v4414, %v4431
        %v4470 = vmul.f32 %v4415, %v4435
        %v4471 = vmul.f32 %v4416, %v4433
        %v4472 = vmul.f32 %v4417, %v4431
        %v4473 = vmul.f32 %v4418, %v4435
        %v4474 = vmul.f32 %v4419, %v4433
        %v4475 = vld [vmem:[%s20] sm:$0xff]
        %v4476 = vld [vmem:[%s20 + $0x8] sm:$0xff]
        %v4477 = vld [vmem:[%s20 + $0x10] sm:$0xff]
        %v4478 = vld [vmem:[%s20 + $0x18] sm:$0xff]
        %s4479 = scalar_lea.vmem %s23, 2
        %v4480 = vld [vmem:[%s4479] sm:$0x3]
        %v4482 = vlaneseq
        %v4483 = vshrl.u32 %v4482, 7
        %v4484 = vsub.s32 0, %v4483
        %v4485 = vrot.slane %v4480, %v4484
        %v4486 = vlaneseq
        %v4487 = vshrl.u32 %v4486, 7
        %v4488 = vsub.s32 1, %v4487
        %v4489 = vrot.slane %v4480, %v4488
        %4490 = vrot.lane.b32.xlu0 %v4485, 112
        %v4491 = vpop.permute.xlu0 %4490
        %4492 = vrot.lane.b32.xlu0 %v4489, 112
        %v4493 = vpop.permute.xlu0 %4492
        %vm4494 = vcmask 916480
        %v4495 = vsel %vm4494, %v4491, %v4493
        %v4499 = vmul.f32 %v4384, %v4491
        %v4500 = vmul.f32 %v4385, %v4495
        %v4501 = vmul.f32 %v4386, %v4493
        %v4502 = vmul.f32 %v4387, %v4491
        %v4503 = vmul.f32 %v4388, %v4495
        %v4504 = vmul.f32 %v4389, %v4493
        %v4505 = vmul.f32 %v4390, %v4491
        %v4506 = vmul.f32 %v4391, %v4495
        %v4507 = vmul.f32 %v4392, %v4493
        %v4508 = vmul.f32 %v4393, %v4491
        %v4509 = vmul.f32 %v4394, %v4495
        %v4510 = vmul.f32 %v4395, %v4493
        %v4511 = vmul.f32 %v4396, %v4491
        %v4512 = vmul.f32 %v4397, %v4495
        %v4513 = vmul.f32 %v4398, %v4493
        %v4514 = vmul.f32 %v4399, %v4491
        %v4515 = vmul.f32 %v4400, %v4495
        %v4516 = vmul.f32 %v4401, %v4493
        %v4517 = vmul.f32 %v4402, %v4491
        %v4518 = vmul.f32 %v4403, %v4495
        %v4519 = vmul.f32 %v4404, %v4493
        %v4520 = vmul.f32 %v4405, %v4491
        %v4521 = vmul.f32 %v4406, %v4495
        %v4522 = vmul.f32 %v4407, %v4493
        %v4523 = vmul.f32 %v4408, %v4491
        %v4524 = vmul.f32 %v4409, %v4495
        %v4525 = vmul.f32 %v4410, %v4493
        %v4526 = vmul.f32 %v4411, %v4491
        %v4527 = vmul.f32 %v4412, %v4495
        %v4528 = vmul.f32 %v4413, %v4493
        %v4529 = vmul.f32 %v4414, %v4491
        %v4530 = vmul.f32 %v4415, %v4495
        %v4531 = vmul.f32 %v4416, %v4493
        %v4532 = vmul.f32 %v4417, %v4491
        %v4533 = vmul.f32 %v4418, %v4495
        %v4534 = vmul.f32 %v4419, %v4493
        %s4535 = scalar_lea.vmem %s20, 32
        %v4536 = vld [vmem:[%s4535] sm:$0xff]
        %v4537 = vld [vmem:[%s4535 + $0x8] sm:$0xff]
        %v4538 = vld [vmem:[%s4535 + $0x10] sm:$0xff]
        %v4539 = vld [vmem:[%s4535 + $0x18] sm:$0xff]
        %4576 = vrot.lane.b32.xlu0 %v4499, 16
        %v4577 = vpop.permute.xlu0 %4576
        %4578 = vrot.lane.b32.xlu0 %v4500, 16
        %v4579 = vpop.permute.xlu0 %4578
        %4580 = vrot.lane.b32.xlu0 %v4501, 16
        %v4581 = vpop.permute.xlu0 %4580
        %4582 = vrot.lane.b32.xlu0 %v4502, 16
        %v4583 = vpop.permute.xlu0 %4582
        %4584 = vrot.lane.b32.xlu0 %v4503, 16
        %v4585 = vpop.permute.xlu0 %4584
        %4586 = vrot.lane.b32.xlu0 %v4504, 16
        %v4587 = vpop.permute.xlu0 %4586
        %4588 = vrot.lane.b32.xlu0 %v4505, 16
        %v4589 = vpop.permute.xlu0 %4588
        %4590 = vrot.lane.b32.xlu0 %v4506, 16
        %v4591 = vpop.permute.xlu0 %4590
        %4592 = vrot.lane.b32.xlu0 %v4507, 16
        %v4593 = vpop.permute.xlu0 %4592
        %4594 = vrot.lane.b32.xlu0 %v4508, 16
        %v4595 = vpop.permute.xlu0 %4594
        %4596 = vrot.lane.b32.xlu0 %v4509, 16
        %v4597 = vpop.permute.xlu0 %4596
        %4598 = vrot.lane.b32.xlu0 %v4510, 16
        %v4599 = vpop.permute.xlu0 %4598
        %4600 = vrot.lane.b32.xlu0 %v4511, 16
        %v4601 = vpop.permute.xlu0 %4600
        %4602 = vrot.lane.b32.xlu0 %v4512, 16
        %v4603 = vpop.permute.xlu0 %4602
        %4604 = vrot.lane.b32.xlu0 %v4513, 16
        %v4605 = vpop.permute.xlu0 %4604
        %4606 = vrot.lane.b32.xlu0 %v4514, 16
        %v4607 = vpop.permute.xlu0 %4606
        %4608 = vrot.lane.b32.xlu0 %v4515, 16
        %v4609 = vpop.permute.xlu0 %4608
        %4610 = vrot.lane.b32.xlu0 %v4516, 16
        %v4611 = vpop.permute.xlu0 %4610
        %4612 = vrot.lane.b32.xlu0 %v4517, 16
        %v4613 = vpop.permute.xlu0 %4612
        %4614 = vrot.lane.b32.xlu0 %v4518, 16
        %v4615 = vpop.permute.xlu0 %4614
        %4616 = vrot.lane.b32.xlu0 %v4519, 16
        %v4617 = vpop.permute.xlu0 %4616
        %4618 = vrot.lane.b32.xlu0 %v4520, 16
        %v4619 = vpop.permute.xlu0 %4618
        %4620 = vrot.lane.b32.xlu0 %v4521, 16
        %v4621 = vpop.permute.xlu0 %4620
        %4622 = vrot.lane.b32.xlu0 %v4522, 16
        %v4623 = vpop.permute.xlu0 %4622
        %4624 = vrot.lane.b32.xlu0 %v4523, 16
        %v4625 = vpop.permute.xlu0 %4624
        %4626 = vrot.lane.b32.xlu0 %v4524, 16
        %v4627 = vpop.permute.xlu0 %4626
        %4628 = vrot.lane.b32.xlu0 %v4525, 16
        %v4629 = vpop.permute.xlu0 %4628
        %4630 = vrot.lane.b32.xlu0 %v4526, 16
        %v4631 = vpop.permute.xlu0 %4630
        %4632 = vrot.lane.b32.xlu0 %v4527, 16
        %v4633 = vpop.permute.xlu0 %4632
        %4634 = vrot.lane.b32.xlu0 %v4528, 16
        %v4635 = vpop.permute.xlu0 %4634
        %4636 = vrot.lane.b32.xlu0 %v4529, 16
        %v4637 = vpop.permute.xlu0 %4636
        %4638 = vrot.lane.b32.xlu0 %v4530, 16
        %v4639 = vpop.permute.xlu0 %4638
        %4640 = vrot.lane.b32.xlu0 %v4531, 16
        %v4641 = vpop.permute.xlu0 %4640
        %4642 = vrot.lane.b32.xlu0 %v4532, 16
        %v4643 = vpop.permute.xlu0 %4642
        %4644 = vrot.lane.b32.xlu0 %v4533, 16
        %v4645 = vpop.permute.xlu0 %4644
        %4646 = vrot.lane.b32.xlu0 %v4534, 16
        %v4647 = vpop.permute.xlu0 %4646
        %v4648 = vsel %vm1895, %v4577, %v4579
        %v4649 = vsel %vm1895, %v4579, %v4581
        %v4650 = vsel %vm1895, %v4583, %v4585
        %v4651 = vsel %vm1895, %v4585, %v4587
        %v4652 = vsel %vm1895, %v4589, %v4591
        %v4653 = vsel %vm1895, %v4591, %v4593
        %v4654 = vsel %vm1895, %v4595, %v4597
        %v4655 = vsel %vm1895, %v4597, %v4599
        %v4656 = vsel %vm1895, %v4601, %v4603
        %v4657 = vsel %vm1895, %v4603, %v4605
        %v4658 = vsel %vm1895, %v4607, %v4609
        %v4659 = vsel %vm1895, %v4609, %v4611
        %v4660 = vsel %vm1895, %v4613, %v4615
        %v4661 = vsel %vm1895, %v4615, %v4617
        %v4662 = vsel %vm1895, %v4619, %v4621
        %v4663 = vsel %vm1895, %v4621, %v4623
        %v4664 = vsel %vm1895, %v4625, %v4627
        %v4665 = vsel %vm1895, %v4627, %v4629
        %v4666 = vsel %vm1895, %v4631, %v4633
        %v4667 = vsel %vm1895, %v4633, %v4635
        %v4668 = vsel %vm1895, %v4637, %v4639
        %v4669 = vsel %vm1895, %v4639, %v4641
        %v4670 = vsel %vm1895, %v4643, %v4645
        %v4671 = vsel %vm1895, %v4645, %v4647
        %vm4696 = vcmask 785408
        %v4698 = vsel %vm4696, %v4536, 0
        %v4701 = vsel %vm4696, %v4537, 0
        %v4704 = vsel %vm4696, %v4538, 0
        %v4707 = vsel %vm4696, %v4539, 0
        %4709 = vmatprep.subr.mxu0 %v4649
        %4710 = vmatpush1.msra.mxu0 %v4648
        %4711 = vmatprep.subr.mxu0 %v4651
        %4712 = vmatpush1.msra.mxu0 %v4650
        %4713 = vmatprep.subr.mxu0 %v4653
        %4714 = vmatpush1.msra.mxu0 %v4652
        %4715 = vmatprep.subr.mxu0 %v4655
        %4716 = vmatpush1.msra.mxu0 %v4654
        %4717 = vmatprep.subr.mxu0 %v4657
        %4718 = vmatpush1.msra.mxu0 %v4656
        %4719 = vmatprep.subr.mxu0 %v4659
        %4720 = vmatpush1.msra.mxu0 %v4658
        %4721 = vmatprep.subr.mxu0 %v4661
        %4722 = vmatpush1.msra.mxu0 %v4660
        %4723 = vmatprep.subr.mxu0 %v4663
        %4724 = vmatpush1.msra.mxu0 %v4662
        %4725 = vmatprep.subr.mxu0 %v4665
        %4726 = vmatpush1.msra.mxu0 %v4664
        %4727 = vmatprep.subr.mxu0 %v4667
        %4728 = vmatpush1.msra.mxu0 %v4666
        %4729 = vmatprep.subr.mxu0 %v4669
        %4730 = vmatpush1.msra.mxu0 %v4668
        %4731 = vmatprep.subr.mxu0 %v4671
        %4732 = vmatpush1.msra.mxu0 %v4670
        %4733 = vmatprep.subr.mxu0 0.0
        %4734 = vmatpush1.msra.mxu0 0.0
        %4735 = vmatprep.subr.mxu0 0.0
        %4736 = vmatpush1.msra.mxu0 0.0
        %4737 = vmatprep.subr.mxu0 0.0
        %4738 = vmatpush1.msra.mxu0 0.0
        %4739 = vmatprep.subr.mxu0 0.0
        %4740 = vmatpush1.msra.mxu0 0.0
        %4741 = vmatprep.subr.mxu0 0.0
        %4742 = vmatpush1.msra.mxu0 0.0
        %4743 = vmatprep.subr.mxu0 0.0
        %4744 = vmatpush1.msra.mxu0 0.0
        %4745 = vmatprep.subr.mxu0 0.0
        %4746 = vmatpush1.msra.mxu0 0.0
        %4747 = vmatprep.subr.mxu0 0.0
        %4748 = vmatpush1.msra.mxu0 0.0
        %4749 = vmatprep.subr.mxu0 0.0
        %4750 = vmatpush1.msra.mxu0 0.0
        %4751 = vmatprep.subr.mxu0 0.0
        %4752 = vmatpush1.msra.mxu0 0.0
        %4753 = vmatprep.subr.mxu0 0.0
        %4754 = vmatpush1.msra.mxu0 0.0
        %4755 = vmatprep.subr.mxu0 0.0
        %4756 = vmatpush1.msra.mxu0 0.0
        %4757 = vmatprep.subr.mxu0 0.0
        %4758 = vmatpush1.msra.mxu0 0.0
        %4759 = vmatprep.subr.mxu0 0.0
        %4760 = vmatpush1.msra.mxu0 0.0
        %4761 = vmatprep.subr.mxu0 0.0
        %4762 = vmatpush1.msra.mxu0 0.0
        %4763 = vmatprep.subr.mxu0 0.0
        %4764 = vmatpush1.msra.mxu0 0.0
        %4765 = vmatprep.subr.mxu0 0.0
        %4766 = vmatpush1.msra.mxu0 0.0
        %4767 = vmatprep.subr.mxu0 0.0
        %4768 = vmatpush1.msra.mxu0 0.0
        %4769 = vmatprep.subr.mxu0 0.0
        %4770 = vmatpush1.msra.mxu0 0.0
        %4771 = vmatprep.subr.mxu0 0.0
        %4772 = vmatpush1.msra.mxu0 0.0
        %4773 = vmatprep.mubr.f32.mxu0 0.0
        %4774 = vmatmul.mubr.f32.gmra.mrb[0].mxu0 %v4698
        %v4775 = vpop.f32.mrb[0].mxu0
        %v4776 = vadd.f32 0.0, %v4775
        %v4777 = vpop.f32.mrb[0].mxu0
        %v4778 = vadd.f32 0.0, %v4777
        %4779 = vmatprep.mubr.f32.mxu0 0.0
        %4780 = vmatmul.mubr.f32.gmra.mrb[0].mxu0 %v4701
        %v4781 = vpop.f32.mrb[0].mxu0
        %v4782 = vadd.f32 0.0, %v4781
        %v4783 = vpop.f32.mrb[0].mxu0
        %v4784 = vadd.f32 0.0, %v4783
        %4785 = vmatprep.mubr.f32.mxu0 0.0
        %4786 = vmatmul.mubr.f32.gmra.mrb[0].mxu0 %v4704
        %v4787 = vpop.f32.mrb[0].mxu0
        %v4788 = vadd.f32 0.0, %v4787
        %v4789 = vpop.f32.mrb[0].mxu0
        %v4790 = vadd.f32 0.0, %v4789
        %4791 = vmatprep.mubr.f32.mxu0 0.0
        %4792 = vmatmul.mubr.f32.gmra.mrb[0].mxu0 %v4707
        %v4793 = vpop.f32.mrb[0].mxu0
        %v4794 = vadd.f32 0.0, %v4793
        %v4795 = vpop.f32.mrb[0].mxu0
        %v4796 = vadd.f32 0.0, %v4795
        %4797 = vdwg.mxu0
        %4834 = vrot.lane.b32.xlu0 %v4439, 17
        %v4835 = vpop.permute.xlu0 %4834
        %4836 = vrot.lane.b32.xlu0 %v4440, 17
        %v4837 = vpop.permute.xlu0 %4836
        %4838 = vrot.lane.b32.xlu0 %v4441, 17
        %v4839 = vpop.permute.xlu0 %4838
        %4840 = vrot.lane.b32.xlu0 %v4442, 17
        %v4841 = vpop.permute.xlu0 %4840
        %4842 = vrot.lane.b32.xlu0 %v4443, 17
        %v4843 = vpop.permute.xlu0 %4842
        %4844 = vrot.lane.b32.xlu0 %v4444, 17
        %v4845 = vpop.permute.xlu0 %4844
        %4846 = vrot.lane.b32.xlu0 %v4445, 17
        %v4847 = vpop.permute.xlu0 %4846
        %4848 = vrot.lane.b32.xlu0 %v4446, 17
        %v4849 = vpop.permute.xlu0 %4848
        %4850 = vrot.lane.b32.xlu0 %v4447, 17
        %v4851 = vpop.permute.xlu0 %4850
        %4852 = vrot.lane.b32.xlu0 %v4448, 17
        %v4853 = vpop.permute.xlu0 %4852
        %4854 = vrot.lane.b32.xlu0 %v4449, 17
        %v4855 = vpop.permute.xlu0 %4854
        %4856 = vrot.lane.b32.xlu0 %v4450, 17
        %v4857 = vpop.permute.xlu0 %4856
        %4858 = vrot.lane.b32.xlu0 %v4451, 17
        %v4859 = vpop.permute.xlu0 %4858
        %4860 = vrot.lane.b32.xlu0 %v4452, 17
        %v4861 = vpop.permute.xlu0 %4860
        %4862 = vrot.lane.b32.xlu0 %v4453, 17
        %v4863 = vpop.permute.xlu0 %4862
        %4864 = vrot.lane.b32.xlu0 %v4454, 17
        %v4865 = vpop.permute.xlu0 %4864
        %4866 = vrot.lane.b32.xlu0 %v4455, 17
        %v4867 = vpop.permute.xlu0 %4866
        %4868 = vrot.lane.b32.xlu0 %v4456, 17
        %v4869 = vpop.permute.xlu0 %4868
        %4870 = vrot.lane.b32.xlu0 %v4457, 17
        %v4871 = vpop.permute.xlu0 %4870
        %4872 = vrot.lane.b32.xlu0 %v4458, 17
        %v4873 = vpop.permute.xlu0 %4872
        %4874 = vrot.lane.b32.xlu0 %v4459, 17
        %v4875 = vpop.permute.xlu0 %4874
        %4876 = vrot.lane.b32.xlu0 %v4460, 17
        %v4877 = vpop.permute.xlu0 %4876
        %4878 = vrot.lane.b32.xlu0 %v4461, 17
        %v4879 = vpop.permute.xlu0 %4878
        %4880 = vrot.lane.b32.xlu0 %v4462, 17
        %v4881 = vpop.permute.xlu0 %4880
        %4882 = vrot.lane.b32.xlu0 %v4463, 17
        %v4883 = vpop.permute.xlu0 %4882
        %4884 = vrot.lane.b32.xlu0 %v4464, 17
        %v4885 = vpop.permute.xlu0 %4884
        %4886 = vrot.lane.b32.xlu0 %v4465, 17
        %v4887 = vpop.permute.xlu0 %4886
        %4888 = vrot.lane.b32.xlu0 %v4466, 17
        %v4889 = vpop.permute.xlu0 %4888
        %4890 = vrot.lane.b32.xlu0 %v4467, 17
        %v4891 = vpop.permute.xlu0 %4890
        %4892 = vrot.lane.b32.xlu0 %v4468, 17
        %v4893 = vpop.permute.xlu0 %4892
        %4894 = vrot.lane.b32.xlu0 %v4469, 17
        %v4895 = vpop.permute.xlu0 %4894
        %4896 = vrot.lane.b32.xlu0 %v4470, 17
        %v4897 = vpop.permute.xlu0 %4896
        %4898 = vrot.lane.b32.xlu0 %v4471, 17
        %v4899 = vpop.permute.xlu0 %4898
        %4900 = vrot.lane.b32.xlu0 %v4472, 17
        %v4901 = vpop.permute.xlu0 %4900
        %4902 = vrot.lane.b32.xlu0 %v4473, 17
        %v4903 = vpop.permute.xlu0 %4902
        %4904 = vrot.lane.b32.xlu0 %v4474, 17
        %v4905 = vpop.permute.xlu0 %4904
        %vm4906 = vcmask 138240
        %v4907 = vsel %vm4906, %v4835, %v4837
        %v4908 = vsel %vm4906, %v4837, %v4839
        %v4909 = vsel %vm4906, %v4841, %v4843
        %v4910 = vsel %vm4906, %v4843, %v4845
        %v4911 = vsel %vm4906, %v4847, %v4849
        %v4912 = vsel %vm4906, %v4849, %v4851
        %v4913 = vsel %vm4906, %v4853, %v4855
        %v4914 = vsel %vm4906, %v4855, %v4857
        %v4915 = vsel %vm4906, %v4859, %v4861
        %v4916 = vsel %vm4906, %v4861, %v4863
        %v4917 = vsel %vm4906, %v4865, %v4867
        %v4918 = vsel %vm4906, %v4867, %v4869
        %v4919 = vsel %vm4906, %v4871, %v4873
        %v4920 = vsel %vm4906, %v4873, %v4875
        %v4921 = vsel %vm4906, %v4877, %v4879
        %v4922 = vsel %vm4906, %v4879, %v4881
        %v4923 = vsel %vm4906, %v4883, %v4885
        %v4924 = vsel %vm4906, %v4885, %v4887
        %v4925 = vsel %vm4906, %v4889, %v4891
        %v4926 = vsel %vm4906, %v4891, %v4893
        %v4927 = vsel %vm4906, %v4895, %v4897
        %v4928 = vsel %vm4906, %v4897, %v4899
        %v4929 = vsel %vm4906, %v4901, %v4903
        %v4930 = vsel %vm4906, %v4903, %v4905
        %v4956 = vsel %vm4696, %v4475, 0
        %v4959 = vsel %vm4696, %v4476, 0
        %v4962 = vsel %vm4696, %v4477, 0
        %v4965 = vsel %vm4696, %v4478, 0
        %4967 = vmatprep.subr.mxu0 %v4908
        %4968 = vmatpush1.msra.mxu0 %v4907
        %4969 = vmatprep.subr.mxu0 %v4910
        %4970 = vmatpush1.msra.mxu0 %v4909
        %4971 = vmatprep.subr.mxu0 %v4912
        %4972 = vmatpush1.msra.mxu0 %v4911
        %4973 = vmatprep.subr.mxu0 %v4914
        %4974 = vmatpush1.msra.mxu0 %v4913
        %4975 = vmatprep.subr.mxu0 %v4916
        %4976 = vmatpush1.msra.mxu0 %v4915
        %4977 = vmatprep.subr.mxu0 %v4918
        %4978 = vmatpush1.msra.mxu0 %v4917
        %4979 = vmatprep.subr.mxu0 %v4920
        %4980 = vmatpush1.msra.mxu0 %v4919
        %4981 = vmatprep.subr.mxu0 %v4922
        %4982 = vmatpush1.msra.mxu0 %v4921
        %4983 = vmatprep.subr.mxu0 %v4924
        %4984 = vmatpush1.msra.mxu0 %v4923
        %4985 = vmatprep.subr.mxu0 %v4926
        %4986 = vmatpush1.msra.mxu0 %v4925
        %4987 = vmatprep.subr.mxu0 %v4928
        %4988 = vmatpush1.msra.mxu0 %v4927
        %4989 = vmatprep.subr.mxu0 %v4930
        %4990 = vmatpush1.msra.mxu0 %v4929
        %4991 = vmatprep.subr.mxu0 0.0
        %4992 = vmatpush1.msra.mxu0 0.0
        %4993 = vmatprep.subr.mxu0 0.0
        %4994 = vmatpush1.msra.mxu0 0.0
        %4995 = vmatprep.subr.mxu0 0.0
        %4996 = vmatpush1.msra.mxu0 0.0
        %4997 = vmatprep.subr.mxu0 0.0
        %4998 = vmatpush1.msra.mxu0 0.0
        %4999 = vmatprep.subr.mxu0 0.0
        %5000 = vmatpush1.msra.mxu0 0.0
        %5001 = vmatprep.subr.mxu0 0.0
        %5002 = vmatpush1.msra.mxu0 0.0
        %5003 = vmatprep.subr.mxu0 0.0
        %5004 = vmatpush1.msra.mxu0 0.0
        %5005 = vmatprep.subr.mxu0 0.0
        %5006 = vmatpush1.msra.mxu0 0.0
        %5007 = vmatprep.subr.mxu0 0.0
        %5008 = vmatpush1.msra.mxu0 0.0
        %5009 = vmatprep.subr.mxu0 0.0
        %5010 = vmatpush1.msra.mxu0 0.0
        %5011 = vmatprep.subr.mxu0 0.0
        %5012 = vmatpush1.msra.mxu0 0.0
        %5013 = vmatprep.subr.mxu0 0.0
        %5014 = vmatpush1.msra.mxu0 0.0
        %5015 = vmatprep.subr.mxu0 0.0
        %5016 = vmatpush1.msra.mxu0 0.0
        %5017 = vmatprep.subr.mxu0 0.0
        %5018 = vmatpush1.msra.mxu0 0.0
        %5019 = vmatprep.subr.mxu0 0.0
        %5020 = vmatpush1.msra.mxu0 0.0
        %5021 = vmatprep.subr.mxu0 0.0
        %5022 = vmatpush1.msra.mxu0 0.0
        %5023 = vmatprep.subr.mxu0 0.0
        %5024 = vmatpush1.msra.mxu0 0.0
        %5025 = vmatprep.subr.mxu0 0.0
        %5026 = vmatpush1.msra.mxu0 0.0
        %5027 = vmatprep.subr.mxu0 0.0
        %5028 = vmatpush1.msra.mxu0 0.0
        %5029 = vmatprep.subr.mxu0 0.0
        %5030 = vmatpush1.msra.mxu0 0.0
        %5031 = vmatprep.mubr.f32.mxu0 0.0
        %5032 = vmatmul.mubr.f32.gmra.mrb[0].mxu0 %v4956
        %v5033 = vpop.f32.mrb[0].mxu0
        %v5034 = vadd.f32 %v4776, %v5033
        %v5035 = vpop.f32.mrb[0].mxu0
        %v5036 = vadd.f32 %v4778, %v5035
        %5037 = vmatprep.mubr.f32.mxu0 0.0
        %5038 = vmatmul.mubr.f32.gmra.mrb[0].mxu0 %v4959
        %v5039 = vpop.f32.mrb[0].mxu0
        %v5040 = vadd.f32 %v4782, %v5039
        %v5041 = vpop.f32.mrb[0].mxu0
        %v5042 = vadd.f32 %v4784, %v5041
        %5043 = vmatprep.mubr.f32.mxu0 0.0
        %5044 = vmatmul.mubr.f32.gmra.mrb[0].mxu0 %v4962
        %v5045 = vpop.f32.mrb[0].mxu0
        %v5046 = vadd.f32 %v4788, %v5045
        %v5047 = vpop.f32.mrb[0].mxu0
        %v5048 = vadd.f32 %v4790, %v5047
        %5049 = vmatprep.mubr.f32.mxu0 0.0
        %5050 = vmatmul.mubr.f32.gmra.mrb[0].mxu0 %v4965
        %v5051 = vpop.f32.mrb[0].mxu0
        %v5052 = vadd.f32 %v4794, %v5051
        %v5053 = vpop.f32.mrb[0].mxu0
        %v5054 = vadd.f32 %v4796, %v5053
        %5055 = vdwg.mxu0
        %s5056 = scalar_lea.vmem %s23, 4
        %v5057 = vld [vmem:[%s5056] sm:$0x3]
        %v5059 = vlaneseq
        %v5060 = vshrl.u32 %v5059, 7
        %v5061 = vsub.s32 0, %v5060
        %v5062 = vrot.slane %v5057, %v5061
        %v5063 = vlaneseq
        %v5064 = vshrl.u32 %v5063, 7
        %v5065 = vsub.s32 1, %v5064
        %v5066 = vrot.slane %v5057, %v5065
        %5067 = vrot.lane.b32.xlu0 %v5062, 113
        %v5068 = vpop.permute.xlu0 %5067
        %5069 = vrot.lane.b32.xlu0 %v5066, 113
        %v5070 = vpop.permute.xlu0 %5069
        %vm5071 = vcmask 924672
        %v5072 = vsel %vm5071, %v5068, %v5070
        %v5076 = vmul.f32 %v4384, %v5068
        %v5077 = vmul.f32 %v4385, %v5072
        %v5078 = vmul.f32 %v4386, %v5070
        %v5079 = vmul.f32 %v4387, %v5068
        %v5080 = vmul.f32 %v4388, %v5072
        %v5081 = vmul.f32 %v4389, %v5070
        %v5082 = vmul.f32 %v4390, %v5068
        %v5083 = vmul.f32 %v4391, %v5072
        %v5084 = vmul.f32 %v4392, %v5070
        %v5085 = vmul.f32 %v4393, %v5068
        %v5086 = vmul.f32 %v4394, %v5072
        %v5087 = vmul.f32 %v4395, %v5070
        %v5088 = vmul.f32 %v4396, %v5068
        %v5089 = vmul.f32 %v4397, %v5072
        %v5090 = vmul.f32 %v4398, %v5070
        %v5091 = vmul.f32 %v4399, %v5068
        %v5092 = vmul.f32 %v4400, %v5072
        %v5093 = vmul.f32 %v4401, %v5070
        %v5094 = vmul.f32 %v4402, %v5068
        %v5095 = vmul.f32 %v4403, %v5072
        %v5096 = vmul.f32 %v4404, %v5070
        %v5097 = vmul.f32 %v4405, %v5068
        %v5098 = vmul.f32 %v4406, %v5072
        %v5099 = vmul.f32 %v4407, %v5070
        %v5100 = vmul.f32 %v4408, %v5068
        %v5101 = vmul.f32 %v4409, %v5072
        %v5102 = vmul.f32 %v4410, %v5070
        %v5103 = vmul.f32 %v4411, %v5068
        %v5104 = vmul.f32 %v4412, %v5072
        %v5105 = vmul.f32 %v4413, %v5070
        %v5106 = vmul.f32 %v4414, %v5068
        %v5107 = vmul.f32 %v4415, %v5072
        %v5108 = vmul.f32 %v4416, %v5070
        %v5109 = vmul.f32 %v4417, %v5068
        %v5110 = vmul.f32 %v4418, %v5072
        %v5111 = vmul.f32 %v4419, %v5070
        %s5112 = scalar_lea.vmem %s20, 64
        %v5113 = vld [vmem:[%s5112] sm:$0xff]
        %v5114 = vld [vmem:[%s5112 + $0x8] sm:$0xff]
        %v5115 = vld [vmem:[%s5112 + $0x10] sm:$0xff]
        %v5116 = vld [vmem:[%s5112 + $0x18] sm:$0xff]
        %5153 = vrot.lane.b32.xlu0 %v5076, 15
        %v5154 = vpop.permute.xlu0 %5153
        %5155 = vrot.lane.b32.xlu0 %v5077, 15
        %v5156 = vpop.permute.xlu0 %5155
        %5157 = vrot.lane.b32.xlu0 %v5078, 15
        %v5158 = vpop.permute.xlu0 %5157
        %5159 = vrot.lane.b32.xlu0 %v5079, 15
        %v5160 = vpop.permute.xlu0 %5159
        %5161 = vrot.lane.b32.xlu0 %v5080, 15
        %v5162 = vpop.permute.xlu0 %5161
        %5163 = vrot.lane.b32.xlu0 %v5081, 15
        %v5164 = vpop.permute.xlu0 %5163
        %5165 = vrot.lane.b32.xlu0 %v5082, 15
        %v5166 = vpop.permute.xlu0 %5165
        %5167 = vrot.lane.b32.xlu0 %v5083, 15
        %v5168 = vpop.permute.xlu0 %5167
        %5169 = vrot.lane.b32.xlu0 %v5084, 15
        %v5170 = vpop.permute.xlu0 %5169
        %5171 = vrot.lane.b32.xlu0 %v5085, 15
        %v5172 = vpop.permute.xlu0 %5171
        %5173 = vrot.lane.b32.xlu0 %v5086, 15
        %v5174 = vpop.permute.xlu0 %5173
        %5175 = vrot.lane.b32.xlu0 %v5087, 15
        %v5176 = vpop.permute.xlu0 %5175
        %5177 = vrot.lane.b32.xlu0 %v5088, 15
        %v5178 = vpop.permute.xlu0 %5177
        %5179 = vrot.lane.b32.xlu0 %v5089, 15
        %v5180 = vpop.permute.xlu0 %5179
        %5181 = vrot.lane.b32.xlu0 %v5090, 15
        %v5182 = vpop.permute.xlu0 %5181
        %5183 = vrot.lane.b32.xlu0 %v5091, 15
        %v5184 = vpop.permute.xlu0 %5183
        %5185 = vrot.lane.b32.xlu0 %v5092, 15
        %v5186 = vpop.permute.xlu0 %5185
        %5187 = vrot.lane.b32.xlu0 %v5093, 15
        %v5188 = vpop.permute.xlu0 %5187
        %5189 = vrot.lane.b32.xlu0 %v5094, 15
        %v5190 = vpop.permute.xlu0 %5189
        %5191 = vrot.lane.b32.xlu0 %v5095, 15
        %v5192 = vpop.permute.xlu0 %5191
        %5193 = vrot.lane.b32.xlu0 %v5096, 15
        %v5194 = vpop.permute.xlu0 %5193
        %5195 = vrot.lane.b32.xlu0 %v5097, 15
        %v5196 = vpop.permute.xlu0 %5195
        %5197 = vrot.lane.b32.xlu0 %v5098, 15
        %v5198 = vpop.permute.xlu0 %5197
        %5199 = vrot.lane.b32.xlu0 %v5099, 15
        %v5200 = vpop.permute.xlu0 %5199
        %5201 = vrot.lane.b32.xlu0 %v5100, 15
        %v5202 = vpop.permute.xlu0 %5201
        %5203 = vrot.lane.b32.xlu0 %v5101, 15
        %v5204 = vpop.permute.xlu0 %5203
        %5205 = vrot.lane.b32.xlu0 %v5102, 15
        %v5206 = vpop.permute.xlu0 %5205
        %5207 = vrot.lane.b32.xlu0 %v5103, 15
        %v5208 = vpop.permute.xlu0 %5207
        %5209 = vrot.lane.b32.xlu0 %v5104, 15
        %v5210 = vpop.permute.xlu0 %5209
        %5211 = vrot.lane.b32.xlu0 %v5105, 15
        %v5212 = vpop.permute.xlu0 %5211
        %5213 = vrot.lane.b32.xlu0 %v5106, 15
        %v5214 = vpop.permute.xlu0 %5213
        %5215 = vrot.lane.b32.xlu0 %v5107, 15
        %v5216 = vpop.permute.xlu0 %5215
        %5217 = vrot.lane.b32.xlu0 %v5108, 15
        %v5218 = vpop.permute.xlu0 %5217
        %5219 = vrot.lane.b32.xlu0 %v5109, 15
        %v5220 = vpop.permute.xlu0 %5219
        %5221 = vrot.lane.b32.xlu0 %v5110, 15
        %v5222 = vpop.permute.xlu0 %5221
        %5223 = vrot.lane.b32.xlu0 %v5111, 15
        %v5224 = vpop.permute.xlu0 %5223
        %vm5225 = vcmask 121856
        %v5226 = vsel %vm5225, %v5154, %v5156
        %v5227 = vsel %vm5225, %v5156, %v5158
        %v5228 = vsel %vm5225, %v5160, %v5162
        %v5229 = vsel %vm5225, %v5162, %v5164
        %v5230 = vsel %vm5225, %v5166, %v5168
        %v5231 = vsel %vm5225, %v5168, %v5170
        %v5232 = vsel %vm5225, %v5172, %v5174
        %v5233 = vsel %vm5225, %v5174, %v5176
        %v5234 = vsel %vm5225, %v5178, %v5180
        %v5235 = vsel %vm5225, %v5180, %v5182
        %v5236 = vsel %vm5225, %v5184, %v5186
        %v5237 = vsel %vm5225, %v5186, %v5188
        %v5238 = vsel %vm5225, %v5190, %v5192
        %v5239 = vsel %vm5225, %v5192, %v5194
        %v5240 = vsel %vm5225, %v5196, %v5198
        %v5241 = vsel %vm5225, %v5198, %v5200
        %v5242 = vsel %vm5225, %v5202, %v5204
        %v5243 = vsel %vm5225, %v5204, %v5206
        %v5244 = vsel %vm5225, %v5208, %v5210
        %v5245 = vsel %vm5225, %v5210, %v5212
        %v5246 = vsel %vm5225, %v5214, %v5216
        %v5247 = vsel %vm5225, %v5216, %v5218
        %v5248 = vsel %vm5225, %v5220, %v5222
        %v5249 = vsel %vm5225, %v5222, %v5224
        %v5275 = vsel %vm4696, %v5113, 0
        %v5278 = vsel %vm4696, %v5114, 0
        %v5281 = vsel %vm4696, %v5115, 0
        %v5284 = vsel %vm4696, %v5116, 0
        %5286 = vmatprep.subr.mxu0 %v5227
        %5287 = vmatpush1.msra.mxu0 %v5226
        %5288 = vmatprep.subr.mxu0 %v5229
        %5289 = vmatpush1.msra.mxu0 %v5228
        %5290 = vmatprep.subr.mxu0 %v5231
        %5291 = vmatpush1.msra.mxu0 %v5230
        %5292 = vmatprep.subr.mxu0 %v5233
        %5293 = vmatpush1.msra.mxu0 %v5232
        %5294 = vmatprep.subr.mxu0 %v5235
        %5295 = vmatpush1.msra.mxu0 %v5234
        %5296 = vmatprep.subr.mxu0 %v5237
        %5297 = vmatpush1.msra.mxu0 %v5236
        %5298 = vmatprep.subr.mxu0 %v5239
        %5299 = vmatpush1.msra.mxu0 %v5238
        %5300 = vmatprep.subr.mxu0 %v5241
        %5301 = vmatpush1.msra.mxu0 %v5240
        %5302 = vmatprep.subr.mxu0 %v5243
        %5303 = vmatpush1.msra.mxu0 %v5242
        %5304 = vmatprep.subr.mxu0 %v5245
        %5305 = vmatpush1.msra.mxu0 %v5244
        %5306 = vmatprep.subr.mxu0 %v5247
        %5307 = vmatpush1.msra.mxu0 %v5246
        %5308 = vmatprep.subr.mxu0 %v5249
        %5309 = vmatpush1.msra.mxu0 %v5248
        %5310 = vmatprep.subr.mxu0 0.0
        %5311 = vmatpush1.msra.mxu0 0.0
        %5312 = vmatprep.subr.mxu0 0.0
        %5313 = vmatpush1.msra.mxu0 0.0
        %5314 = vmatprep.subr.mxu0 0.0
        %5315 = vmatpush1.msra.mxu0 0.0
        %5316 = vmatprep.subr.mxu0 0.0
        %5317 = vmatpush1.msra.mxu0 0.0
        %5318 = vmatprep.subr.mxu0 0.0
        %5319 = vmatpush1.msra.mxu0 0.0
        %5320 = vmatprep.subr.mxu0 0.0
        %5321 = vmatpush1.msra.mxu0 0.0
        %5322 = vmatprep.subr.mxu0 0.0
        %5323 = vmatpush1.msra.mxu0 0.0
        %5324 = vmatprep.subr.mxu0 0.0
        %5325 = vmatpush1.msra.mxu0 0.0
        %5326 = vmatprep.subr.mxu0 0.0
        %5327 = vmatpush1.msra.mxu0 0.0
        %5328 = vmatprep.subr.mxu0 0.0
        %5329 = vmatpush1.msra.mxu0 0.0
        %5330 = vmatprep.subr.mxu0 0.0
        %5331 = vmatpush1.msra.mxu0 0.0
        %5332 = vmatprep.subr.mxu0 0.0
        %5333 = vmatpush1.msra.mxu0 0.0
        %5334 = vmatprep.subr.mxu0 0.0
        %5335 = vmatpush1.msra.mxu0 0.0
        %5336 = vmatprep.subr.mxu0 0.0
        %5337 = vmatpush1.msra.mxu0 0.0
        %5338 = vmatprep.subr.mxu0 0.0
        %5339 = vmatpush1.msra.mxu0 0.0
        %5340 = vmatprep.subr.mxu0 0.0
        %5341 = vmatpush1.msra.mxu0 0.0
        %5342 = vmatprep.subr.mxu0 0.0
        %5343 = vmatpush1.msra.mxu0 0.0
        %5344 = vmatprep.subr.mxu0 0.0
        %5345 = vmatpush1.msra.mxu0 0.0
        %5346 = vmatprep.subr.mxu0 0.0
        %5347 = vmatpush1.msra.mxu0 0.0
        %5348 = vmatprep.subr.mxu0 0.0
        %5349 = vmatpush1.msra.mxu0 0.0
        %5350 = vmatprep.mubr.f32.mxu0 0.0
        %5351 = vmatmul.mubr.f32.gmra.mrb[0].mxu0 %v5275
        %v5352 = vpop.f32.mrb[0].mxu0
        %v5353 = vadd.f32 0.0, %v5352
        %v5354 = vpop.f32.mrb[0].mxu0
        %v5355 = vadd.f32 0.0, %v5354
        %5356 = vmatprep.mubr.f32.mxu0 0.0
        %5357 = vmatmul.mubr.f32.gmra.mrb[0].mxu0 %v5278
        %v5358 = vpop.f32.mrb[0].mxu0
        %v5359 = vadd.f32 0.0, %v5358
        %v5360 = vpop.f32.mrb[0].mxu0
        %v5361 = vadd.f32 0.0, %v5360
        %5362 = vmatprep.mubr.f32.mxu0 0.0
        %5363 = vmatmul.mubr.f32.gmra.mrb[0].mxu0 %v5281
        %v5364 = vpop.f32.mrb[0].mxu0
        %v5365 = vadd.f32 0.0, %v5364
        %v5366 = vpop.f32.mrb[0].mxu0
        %v5367 = vadd.f32 0.0, %v5366
        %5368 = vmatprep.mubr.f32.mxu0 0.0
        %5369 = vmatmul.mubr.f32.gmra.mrb[0].mxu0 %v5284
        %v5370 = vpop.f32.mrb[0].mxu0
        %v5371 = vadd.f32 0.0, %v5370
        %v5372 = vpop.f32.mrb[0].mxu0
        %v5373 = vadd.f32 0.0, %v5372
        %5374 = vdwg.mxu0
        %v5375 = vadd.f32 %v5034, %v5353
        %v5376 = vadd.f32 %v5036, %v5355
        %v5377 = vadd.f32 %v5040, %v5359
        %v5378 = vadd.f32 %v5042, %v5361
        %v5379 = vadd.f32 %v5046, %v5365
        %v5380 = vadd.f32 %v5048, %v5367
        %v5381 = vadd.f32 %v5052, %v5371
        %v5382 = vadd.f32 %v5054, %v5373
        %s5383 = scalar_lea.vmem %s23, 6
        %v5384 = vld [vmem:[%s5383] sm:$0x3]
        %v5386 = vlaneseq
        %v5387 = vshrl.u32 %v5386, 7
        %v5388 = vsub.s32 0, %v5387
        %v5389 = vrot.slane %v5384, %v5388
        %v5390 = vlaneseq
        %v5391 = vshrl.u32 %v5390, 7
        %v5392 = vsub.s32 1, %v5391
        %v5393 = vrot.slane %v5384, %v5392
        %5394 = vrot.lane.b32.xlu0 %v5389, 127
        %v5395 = vpop.permute.xlu0 %5394
        %5396 = vrot.lane.b32.xlu0 %v5393, 127
        %v5397 = vpop.permute.xlu0 %5396
        %vm5398 = vcmask 1039360
        %v5399 = vsel %vm5398, %v5395, %v5397
        %v5403 = vmul.f32 %v4384, %v5395
        %v5404 = vmul.f32 %v4385, %v5399
        %v5405 = vmul.f32 %v4386, %v5397
        %v5406 = vmul.f32 %v4387, %v5395
        %v5407 = vmul.f32 %v4388, %v5399
        %v5408 = vmul.f32 %v4389, %v5397
        %v5409 = vmul.f32 %v4390, %v5395
        %v5410 = vmul.f32 %v4391, %v5399
        %v5411 = vmul.f32 %v4392, %v5397
        %v5412 = vmul.f32 %v4393, %v5395
        %v5413 = vmul.f32 %v4394, %v5399
        %v5414 = vmul.f32 %v4395, %v5397
        %v5415 = vmul.f32 %v4396, %v5395
        %v5416 = vmul.f32 %v4397, %v5399
        %v5417 = vmul.f32 %v4398, %v5397
        %v5418 = vmul.f32 %v4399, %v5395
        %v5419 = vmul.f32 %v4400, %v5399
        %v5420 = vmul.f32 %v4401, %v5397
        %v5421 = vmul.f32 %v4402, %v5395
        %v5422 = vmul.f32 %v4403, %v5399
        %v5423 = vmul.f32 %v4404, %v5397
        %v5424 = vmul.f32 %v4405, %v5395
        %v5425 = vmul.f32 %v4406, %v5399
        %v5426 = vmul.f32 %v4407, %v5397
        %v5427 = vmul.f32 %v4408, %v5395
        %v5428 = vmul.f32 %v4409, %v5399
        %v5429 = vmul.f32 %v4410, %v5397
        %v5430 = vmul.f32 %v4411, %v5395
        %v5431 = vmul.f32 %v4412, %v5399
        %v5432 = vmul.f32 %v4413, %v5397
        %v5433 = vmul.f32 %v4414, %v5395
        %v5434 = vmul.f32 %v4415, %v5399
        %v5435 = vmul.f32 %v4416, %v5397
        %v5436 = vmul.f32 %v4417, %v5395
        %v5437 = vmul.f32 %v4418, %v5399
        %v5438 = vmul.f32 %v4419, %v5397
        %s5439 = scalar_lea.vmem %s20, 96
        %v5440 = vld [vmem:[%s5439] sm:$0xff]
        %v5441 = vld [vmem:[%s5439 + $0x8] sm:$0xff]
        %v5442 = vld [vmem:[%s5439 + $0x10] sm:$0xff]
        %v5443 = vld [vmem:[%s5439 + $0x18] sm:$0xff]
        %5480 = vrot.lane.b32.xlu0 %v5403, 1
        %v5481 = vpop.permute.xlu0 %5480
        %5482 = vrot.lane.b32.xlu0 %v5404, 1
        %v5483 = vpop.permute.xlu0 %5482
        %5484 = vrot.lane.b32.xlu0 %v5405, 1
        %v5485 = vpop.permute.xlu0 %5484
        %5486 = vrot.lane.b32.xlu0 %v5406, 1
        %v5487 = vpop.permute.xlu0 %5486
        %5488 = vrot.lane.b32.xlu0 %v5407, 1
        %v5489 = vpop.permute.xlu0 %5488
        %5490 = vrot.lane.b32.xlu0 %v5408, 1
        %v5491 = vpop.permute.xlu0 %5490
        %5492 = vrot.lane.b32.xlu0 %v5409, 1
        %v5493 = vpop.permute.xlu0 %5492
        %5494 = vrot.lane.b32.xlu0 %v5410, 1
        %v5495 = vpop.permute.xlu0 %5494
        %5496 = vrot.lane.b32.xlu0 %v5411, 1
        %v5497 = vpop.permute.xlu0 %5496
        %5498 = vrot.lane.b32.xlu0 %v5412, 1
        %v5499 = vpop.permute.xlu0 %5498
        %5500 = vrot.lane.b32.xlu0 %v5413, 1
        %v5501 = vpop.permute.xlu0 %5500
        %5502 = vrot.lane.b32.xlu0 %v5414, 1
        %v5503 = vpop.permute.xlu0 %5502
        %5504 = vrot.lane.b32.xlu0 %v5415, 1
        %v5505 = vpop.permute.xlu0 %5504
        %5506 = vrot.lane.b32.xlu0 %v5416, 1
        %v5507 = vpop.permute.xlu0 %5506
        %5508 = vrot.lane.b32.xlu0 %v5417, 1
        %v5509 = vpop.permute.xlu0 %5508
        %5510 = vrot.lane.b32.xlu0 %v5418, 1
        %v5511 = vpop.permute.xlu0 %5510
        %5512 = vrot.lane.b32.xlu0 %v5419, 1
        %v5513 = vpop.permute.xlu0 %5512
        %5514 = vrot.lane.b32.xlu0 %v5420, 1
        %v5515 = vpop.permute.xlu0 %5514
        %5516 = vrot.lane.b32.xlu0 %v5421, 1
        %v5517 = vpop.permute.xlu0 %5516
        %5518 = vrot.lane.b32.xlu0 %v5422, 1
        %v5519 = vpop.permute.xlu0 %5518
        %5520 = vrot.lane.b32.xlu0 %v5423, 1
        %v5521 = vpop.permute.xlu0 %5520
        %5522 = vrot.lane.b32.xlu0 %v5424, 1
        %v5523 = vpop.permute.xlu0 %5522
        %5524 = vrot.lane.b32.xlu0 %v5425, 1
        %v5525 = vpop.permute.xlu0 %5524
        %5526 = vrot.lane.b32.xlu0 %v5426, 1
        %v5527 = vpop.permute.xlu0 %5526
        %5528 = vrot.lane.b32.xlu0 %v5427, 1
        %v5529 = vpop.permute.xlu0 %5528
        %5530 = vrot.lane.b32.xlu0 %v5428, 1
        %v5531 = vpop.permute.xlu0 %5530
        %5532 = vrot.lane.b32.xlu0 %v5429, 1
        %v5533 = vpop.permute.xlu0 %5532
        %5534 = vrot.lane.b32.xlu0 %v5430, 1
        %v5535 = vpop.permute.xlu0 %5534
        %5536 = vrot.lane.b32.xlu0 %v5431, 1
        %v5537 = vpop.permute.xlu0 %5536
        %5538 = vrot.lane.b32.xlu0 %v5432, 1
        %v5539 = vpop.permute.xlu0 %5538
        %5540 = vrot.lane.b32.xlu0 %v5433, 1
        %v5541 = vpop.permute.xlu0 %5540
        %5542 = vrot.lane.b32.xlu0 %v5434, 1
        %v5543 = vpop.permute.xlu0 %5542
        %5544 = vrot.lane.b32.xlu0 %v5435, 1
        %v5545 = vpop.permute.xlu0 %5544
        %5546 = vrot.lane.b32.xlu0 %v5436, 1
        %v5547 = vpop.permute.xlu0 %5546
        %5548 = vrot.lane.b32.xlu0 %v5437, 1
        %v5549 = vpop.permute.xlu0 %5548
        %5550 = vrot.lane.b32.xlu0 %v5438, 1
        %v5551 = vpop.permute.xlu0 %5550
        %vm5552 = vcmask 7168
        %v5553 = vsel %vm5552, %v5481, %v5483
        %v5554 = vsel %vm5552, %v5483, %v5485
        %v5555 = vsel %vm5552, %v5487, %v5489
        %v5556 = vsel %vm5552, %v5489, %v5491
        %v5557 = vsel %vm5552, %v5493, %v5495
        %v5558 = vsel %vm5552, %v5495, %v5497
        %v5559 = vsel %vm5552, %v5499, %v5501
        %v5560 = vsel %vm5552, %v5501, %v5503
        %v5561 = vsel %vm5552, %v5505, %v5507
        %v5562 = vsel %vm5552, %v5507, %v5509
        %v5563 = vsel %vm5552, %v5511, %v5513
        %v5564 = vsel %vm5552, %v5513, %v5515
        %v5565 = vsel %vm5552, %v5517, %v5519
        %v5566 = vsel %vm5552, %v5519, %v5521
        %v5567 = vsel %vm5552, %v5523, %v5525
        %v5568 = vsel %vm5552, %v5525, %v5527
        %v5569 = vsel %vm5552, %v5529, %v5531
        %v5570 = vsel %vm5552, %v5531, %v5533
        %v5571 = vsel %vm5552, %v5535, %v5537
        %v5572 = vsel %vm5552, %v5537, %v5539
        %v5573 = vsel %vm5552, %v5541, %v5543
        %v5574 = vsel %vm5552, %v5543, %v5545
        %v5575 = vsel %vm5552, %v5547, %v5549
        %v5576 = vsel %vm5552, %v5549, %v5551
        %v5602 = vsel %vm4696, %v5440, 0
        %v5605 = vsel %vm4696, %v5441, 0
        %v5608 = vsel %vm4696, %v5442, 0
        %v5611 = vsel %vm4696, %v5443, 0
        %5613 = vmatprep.subr.mxu0 %v5554
        %5614 = vmatpush1.msra.mxu0 %v5553
        %5615 = vmatprep.subr.mxu0 %v5556
        %5616 = vmatpush1.msra.mxu0 %v5555
        %5617 = vmatprep.subr.mxu0 %v5558
        %5618 = vmatpush1.msra.mxu0 %v5557
        %5619 = vmatprep.subr.mxu0 %v5560
        %5620 = vmatpush1.msra.mxu0 %v5559
        %5621 = vmatprep.subr.mxu0 %v5562
        %5622 = vmatpush1.msra.mxu0 %v5561
        %5623 = vmatprep.subr.mxu0 %v5564
        %5624 = vmatpush1.msra.mxu0 %v5563
        %5625 = vmatprep.subr.mxu0 %v5566
        %5626 = vmatpush1.msra.mxu0 %v5565
        %5627 = vmatprep.subr.mxu0 %v5568
        %5628 = vmatpush1.msra.mxu0 %v5567
        %5629 = vmatprep.subr.mxu0 %v5570
        %5630 = vmatpush1.msra.mxu0 %v5569
        %5631 = vmatprep.subr.mxu0 %v5572
        %5632 = vmatpush1.msra.mxu0 %v5571
        %5633 = vmatprep.subr.mxu0 %v5574
        %5634 = vmatpush1.msra.mxu0 %v5573
        %5635 = vmatprep.subr.mxu0 %v5576
        %5636 = vmatpush1.msra.mxu0 %v5575
        %5637 = vmatprep.subr.mxu0 0.0
        %5638 = vmatpush1.msra.mxu0 0.0
        %5639 = vmatprep.subr.mxu0 0.0
        %5640 = vmatpush1.msra.mxu0 0.0
        %5641 = vmatprep.subr.mxu0 0.0
        %5642 = vmatpush1.msra.mxu0 0.0
        %5643 = vmatprep.subr.mxu0 0.0
        %5644 = vmatpush1.msra.mxu0 0.0
        %5645 = vmatprep.subr.mxu0 0.0
        %5646 = vmatpush1.msra.mxu0 0.0
        %5647 = vmatprep.subr.mxu0 0.0
        %5648 = vmatpush1.msra.mxu0 0.0
        %5649 = vmatprep.subr.mxu0 0.0
        %5650 = vmatpush1.msra.mxu0 0.0
        %5651 = vmatprep.subr.mxu0 0.0
        %5652 = vmatpush1.msra.mxu0 0.0
        %5653 = vmatprep.subr.mxu0 0.0
        %5654 = vmatpush1.msra.mxu0 0.0
        %5655 = vmatprep.subr.mxu0 0.0
        %5656 = vmatpush1.msra.mxu0 0.0
        %5657 = vmatprep.subr.mxu0 0.0
        %5658 = vmatpush1.msra.mxu0 0.0
        %5659 = vmatprep.subr.mxu0 0.0
        %5660 = vmatpush1.msra.mxu0 0.0
        %5661 = vmatprep.subr.mxu0 0.0
        %5662 = vmatpush1.msra.mxu0 0.0
        %5663 = vmatprep.subr.mxu0 0.0
        %5664 = vmatpush1.msra.mxu0 0.0
        %5665 = vmatprep.subr.mxu0 0.0
        %5666 = vmatpush1.msra.mxu0 0.0
        %5667 = vmatprep.subr.mxu0 0.0
        %5668 = vmatpush1.msra.mxu0 0.0
        %5669 = vmatprep.subr.mxu0 0.0
        %5670 = vmatpush1.msra.mxu0 0.0
        %5671 = vmatprep.subr.mxu0 0.0
        %5672 = vmatpush1.msra.mxu0 0.0
        %5673 = vmatprep.subr.mxu0 0.0
        %5674 = vmatpush1.msra.mxu0 0.0
        %5675 = vmatprep.subr.mxu0 0.0
        %5676 = vmatpush1.msra.mxu0 0.0
        %5677 = vmatprep.mubr.f32.mxu0 0.0
        %5678 = vmatmul.mubr.f32.gmra.mrb[0].mxu0 %v5602
        %v5679 = vpop.f32.mrb[0].mxu0
        %v5680 = vadd.f32 0.0, %v5679
        %v5681 = vpop.f32.mrb[0].mxu0
        %v5682 = vadd.f32 0.0, %v5681
        %5683 = vmatprep.mubr.f32.mxu0 0.0
        %5684 = vmatmul.mubr.f32.gmra.mrb[0].mxu0 %v5605
        %v5685 = vpop.f32.mrb[0].mxu0
        %v5686 = vadd.f32 0.0, %v5685
        %v5687 = vpop.f32.mrb[0].mxu0
        %v5688 = vadd.f32 0.0, %v5687
        %5689 = vmatprep.mubr.f32.mxu0 0.0
        %5690 = vmatmul.mubr.f32.gmra.mrb[0].mxu0 %v5608
        %v5691 = vpop.f32.mrb[0].mxu0
        %v5692 = vadd.f32 0.0, %v5691
        %v5693 = vpop.f32.mrb[0].mxu0
        %v5694 = vadd.f32 0.0, %v5693
        %5695 = vmatprep.mubr.f32.mxu0 0.0
        %5696 = vmatmul.mubr.f32.gmra.mrb[0].mxu0 %v5611
        %v5697 = vpop.f32.mrb[0].mxu0
        %v5698 = vadd.f32 0.0, %v5697
        %v5699 = vpop.f32.mrb[0].mxu0
        %v5700 = vadd.f32 0.0, %v5699
        %5701 = vdwg.mxu0
        %v5702 = vadd.f32 %v5375, %v5680
        %v5703 = vadd.f32 %v5376, %v5682
        %v5704 = vadd.f32 %v5377, %v5686
        %v5705 = vadd.f32 %v5378, %v5688
        %v5706 = vadd.f32 %v5379, %v5692
        %v5707 = vadd.f32 %v5380, %v5694
        %v5708 = vadd.f32 %v5381, %v5698
        %v5709 = vadd.f32 %v5382, %v5700
        %s5710 = scalar_lea.vmem %s23, 8
        %v5711 = vld [vmem:[%s5710] sm:$0x3]
        %v5713 = vlaneseq
        %v5714 = vshrl.u32 %v5713, 7
        %v5715 = vsub.s32 0, %v5714
        %v5716 = vrot.slane %v5711, %v5715
        %v5717 = vlaneseq
        %v5718 = vshrl.u32 %v5717, 7
        %v5719 = vsub.s32 1, %v5718
        %v5720 = vrot.slane %v5711, %v5719
        %v5723 = vmul.f32 %v4385, %v5716
        %v5724 = vmul.f32 %v4386, %v5720
        %v5725 = vmul.f32 %v4388, %v5716
        %v5726 = vmul.f32 %v4389, %v5720
        %v5727 = vmul.f32 %v4391, %v5716
        %v5728 = vmul.f32 %v4392, %v5720
        %v5729 = vmul.f32 %v4394, %v5716
        %v5730 = vmul.f32 %v4395, %v5720
        %v5731 = vmul.f32 %v4397, %v5716
        %v5732 = vmul.f32 %v4398, %v5720
        %v5733 = vmul.f32 %v4400, %v5716
        %v5734 = vmul.f32 %v4401, %v5720
        %v5735 = vmul.f32 %v4403, %v5716
        %v5736 = vmul.f32 %v4404, %v5720
        %v5737 = vmul.f32 %v4406, %v5716
        %v5738 = vmul.f32 %v4407, %v5720
        %v5739 = vmul.f32 %v4409, %v5716
        %v5740 = vmul.f32 %v4410, %v5720
        %v5741 = vmul.f32 %v4412, %v5716
        %v5742 = vmul.f32 %v4413, %v5720
        %v5743 = vmul.f32 %v4415, %v5716
        %v5744 = vmul.f32 %v4416, %v5720
        %v5745 = vmul.f32 %v4418, %v5716
        %v5746 = vmul.f32 %v4419, %v5720
        %s5747 = scalar_lea.vmem %s20, 128
        %v5748 = vld [vmem:[%s5747] sm:$0xff]
        %v5749 = vld [vmem:[%s5747 + $0x8] sm:$0xff]
        %v5750 = vld [vmem:[%s5747 + $0x10] sm:$0xff]
        %v5751 = vld [vmem:[%s5747 + $0x18] sm:$0xff]
        %v5753 = vsel %vm4696, %v5748, 0
        %v5756 = vsel %vm4696, %v5749, 0
        %v5759 = vsel %vm4696, %v5750, 0
        %v5762 = vsel %vm4696, %v5751, 0
        %5764 = vmatprep.subr.mxu0 %v5724
        %5765 = vmatpush1.msra.mxu0 %v5723
        %5766 = vmatprep.subr.mxu0 %v5726
        %5767 = vmatpush1.msra.mxu0 %v5725
        %5768 = vmatprep.subr.mxu0 %v5728
        %5769 = vmatpush1.msra.mxu0 %v5727
        %5770 = vmatprep.subr.mxu0 %v5730
        %5771 = vmatpush1.msra.mxu0 %v5729
        %5772 = vmatprep.subr.mxu0 %v5732
        %5773 = vmatpush1.msra.mxu0 %v5731
        %5774 = vmatprep.subr.mxu0 %v5734
        %5775 = vmatpush1.msra.mxu0 %v5733
        %5776 = vmatprep.subr.mxu0 %v5736
        %5777 = vmatpush1.msra.mxu0 %v5735
        %5778 = vmatprep.subr.mxu0 %v5738
        %5779 = vmatpush1.msra.mxu0 %v5737
        %5780 = vmatprep.subr.mxu0 %v5740
        %5781 = vmatpush1.msra.mxu0 %v5739
        %5782 = vmatprep.subr.mxu0 %v5742
        %5783 = vmatpush1.msra.mxu0 %v5741
        %5784 = vmatprep.subr.mxu0 %v5744
        %5785 = vmatpush1.msra.mxu0 %v5743
        %5786 = vmatprep.subr.mxu0 %v5746
        %5787 = vmatpush1.msra.mxu0 %v5745
        %5788 = vmatprep.subr.mxu0 0.0
        %5789 = vmatpush1.msra.mxu0 0.0
        %5790 = vmatprep.subr.mxu0 0.0
        %5791 = vmatpush1.msra.mxu0 0.0
        %5792 = vmatprep.subr.mxu0 0.0
        %5793 = vmatpush1.msra.mxu0 0.0
        %5794 = vmatprep.subr.mxu0 0.0
        %5795 = vmatpush1.msra.mxu0 0.0
        %5796 = vmatprep.subr.mxu0 0.0
        %5797 = vmatpush1.msra.mxu0 0.0
        %5798 = vmatprep.subr.mxu0 0.0
        %5799 = vmatpush1.msra.mxu0 0.0
        %5800 = vmatprep.subr.mxu0 0.0
        %5801 = vmatpush1.msra.mxu0 0.0
        %5802 = vmatprep.subr.mxu0 0.0
        %5803 = vmatpush1.msra.mxu0 0.0
        %5804 = vmatprep.subr.mxu0 0.0
        %5805 = vmatpush1.msra.mxu0 0.0
        %5806 = vmatprep.subr.mxu0 0.0
        %5807 = vmatpush1.msra.mxu0 0.0
        %5808 = vmatprep.subr.mxu0 0.0
        %5809 = vmatpush1.msra.mxu0 0.0
        %5810 = vmatprep.subr.mxu0 0.0
        %5811 = vmatpush1.msra.mxu0 0.0
        %5812 = vmatprep.subr.mxu0 0.0
        %5813 = vmatpush1.msra.mxu0 0.0
        %5814 = vmatprep.subr.mxu0 0.0
        %5815 = vmatpush1.msra.mxu0 0.0
        %5816 = vmatprep.subr.mxu0 0.0
        %5817 = vmatpush1.msra.mxu0 0.0
        %5818 = vmatprep.subr.mxu0 0.0
        %5819 = vmatpush1.msra.mxu0 0.0
        %5820 = vmatprep.subr.mxu0 0.0
        %5821 = vmatpush1.msra.mxu0 0.0
        %5822 = vmatprep.subr.mxu0 0.0
        %5823 = vmatpush1.msra.mxu0 0.0
        %5824 = vmatprep.subr.mxu0 0.0
        %5825 = vmatpush1.msra.mxu0 0.0
        %5826 = vmatprep.subr.mxu0 0.0
        %5827 = vmatpush1.msra.mxu0 0.0
        %5828 = vmatprep.mubr.f32.mxu0 0.0
        %5829 = vmatmul.mubr.f32.gmra.mrb[0].mxu0 %v5753
        %v5830 = vpop.f32.mrb[0].mxu0
        %v5831 = vadd.f32 0.0, %v5830
        %v5832 = vpop.f32.mrb[0].mxu0
        %v5833 = vadd.f32 0.0, %v5832
        %5834 = vmatprep.mubr.f32.mxu0 0.0
        %5835 = vmatmul.mubr.f32.gmra.mrb[0].mxu0 %v5756
        %v5836 = vpop.f32.mrb[0].mxu0
        %v5837 = vadd.f32 0.0, %v5836
        %v5838 = vpop.f32.mrb[0].mxu0
        %v5839 = vadd.f32 0.0, %v5838
        %5840 = vmatprep.mubr.f32.mxu0 0.0
        %5841 = vmatmul.mubr.f32.gmra.mrb[0].mxu0 %v5759
        %v5842 = vpop.f32.mrb[0].mxu0
        %v5843 = vadd.f32 0.0, %v5842
        %v5844 = vpop.f32.mrb[0].mxu0
        %v5845 = vadd.f32 0.0, %v5844
        %5846 = vmatprep.mubr.f32.mxu0 0.0
        %5847 = vmatmul.mubr.f32.gmra.mrb[0].mxu0 %v5762
        %v5848 = vpop.f32.mrb[0].mxu0
        %v5849 = vadd.f32 0.0, %v5848
        %v5850 = vpop.f32.mrb[0].mxu0
        %v5851 = vadd.f32 0.0, %v5850
        %5852 = vdwg.mxu0
        %v5853 = vadd.f32 %v5702, %v5831
        %v5854 = vadd.f32 %v5703, %v5833
        %v5855 = vadd.f32 %v5704, %v5837
        %v5856 = vadd.f32 %v5705, %v5839
        %v5857 = vadd.f32 %v5706, %v5843
        %v5858 = vadd.f32 %v5707, %v5845
        %v5859 = vadd.f32 %v5708, %v5849
        %v5860 = vadd.f32 %v5709, %v5851
        %v5861 = vld [vmem:[#allocation6 + $0x8] sm:$0xff]
        %v5862 = vld [vmem:[#allocation6 + $0x10] sm:$0xff]
        %v5863 = vld [vmem:[#allocation6 + $0x18] sm:$0xff]
        %v5864 = vld [vmem:[#allocation6 + $0x28] sm:$0xff]
        %v5865 = vld [vmem:[#allocation6 + $0x30] sm:$0xff]
        %v5866 = vld [vmem:[#allocation6 + $0x38] sm:$0xff]
        %v5867 = vld [vmem:[#allocation6 + $0x48] sm:$0xff]
        %v5868 = vld [vmem:[#allocation6 + $0x50] sm:$0xff]
        %v5869 = vld [vmem:[#allocation6 + $0x58] sm:$0xff]
        %v5870 = vld [vmem:[#allocation6 + $0x68] sm:$0xff]
        %v5871 = vld [vmem:[#allocation6 + $0x70] sm:$0xff]
        %v5872 = vld [vmem:[#allocation6 + $0x78] sm:$0xff]
        %v5873 = vld [vmem:[#allocation6 + $0x88] sm:$0xff]
        %v5874 = vld [vmem:[#allocation6 + $0x90] sm:$0xff]
        %v5875 = vld [vmem:[#allocation6 + $0x98] sm:$0xff]
        %v5876 = vld [vmem:[#allocation6 + $0xa8] sm:$0xff]
        %v5877 = vld [vmem:[#allocation6 + $0xb0] sm:$0xff]
        %v5878 = vld [vmem:[#allocation6 + $0xb8] sm:$0xff]
        %v5879 = vld [vmem:[#allocation6 + $0xc8] sm:$0xff]
        %v5880 = vld [vmem:[#allocation6 + $0xd0] sm:$0xff]
        %v5881 = vld [vmem:[#allocation6 + $0xd8] sm:$0xff]
        %v5882 = vld [vmem:[#allocation6 + $0xe8] sm:$0xff]
        %v5883 = vld [vmem:[#allocation6 + $0xf0] sm:$0xff]
        %v5884 = vld [vmem:[#allocation6 + $0xf8] sm:$0xff]
        %v5885 = vld [vmem:[#allocation6 + $0x108] sm:$0xff]
        %v5886 = vld [vmem:[#allocation6 + $0x110] sm:$0xff]
        %v5887 = vld [vmem:[#allocation6 + $0x118] sm:$0xff]
        %v5888 = vld [vmem:[#allocation6 + $0x128] sm:$0xff]
        %v5889 = vld [vmem:[#allocation6 + $0x130] sm:$0xff]
        %v5890 = vld [vmem:[#allocation6 + $0x138] sm:$0xff]
        %v5891 = vld [vmem:[#allocation6 + $0x148] sm:$0xff]
        %v5892 = vld [vmem:[#allocation6 + $0x150] sm:$0xff]
        %v5893 = vld [vmem:[#allocation6 + $0x158] sm:$0xff]
        %v5894 = vld [vmem:[#allocation6 + $0x168] sm:$0xff]
        %v5895 = vld [vmem:[#allocation6 + $0x170] sm:$0xff]
        %v5896 = vld [vmem:[#allocation6 + $0x178] sm:$0xff]
        %s5897 = scalar_lea.vmem %s23, 10
        %v5898 = vld [vmem:[%s5897] sm:$0x3]
        %v5900 = vlaneseq
        %v5901 = vshrl.u32 %v5900, 7
        %v5902 = vsub.s32 0, %v5901
        %v5903 = vrot.slane %v5898, %v5902
        %v5904 = vlaneseq
        %v5905 = vshrl.u32 %v5904, 7
        %v5906 = vsub.s32 1, %v5905
        %v5907 = vrot.slane %v5898, %v5906
        %5908 = vrot.lane.b32.xlu0 %v5903, 1
        %v5909 = vpop.permute.xlu0 %5908
        %5910 = vrot.lane.b32.xlu0 %v5907, 1
        %v5911 = vpop.permute.xlu0 %5910
        %v5912 = vsel %vm5552, %v5909, %v5911
        %v5916 = vmul.f32 %v5861, %v5909
        %v5917 = vmul.f32 %v5862, %v5912
        %v5918 = vmul.f32 %v5863, %v5911
        %v5919 = vmul.f32 %v5864, %v5909
        %v5920 = vmul.f32 %v5865, %v5912
        %v5921 = vmul.f32 %v5866, %v5911
        %v5922 = vmul.f32 %v5867, %v5909
        %v5923 = vmul.f32 %v5868, %v5912
        %v5924 = vmul.f32 %v5869, %v5911
        %v5925 = vmul.f32 %v5870, %v5909
        %v5926 = vmul.f32 %v5871, %v5912
        %v5927 = vmul.f32 %v5872, %v5911
        %v5928 = vmul.f32 %v5873, %v5909
        %v5929 = vmul.f32 %v5874, %v5912
        %v5930 = vmul.f32 %v5875, %v5911
        %v5931 = vmul.f32 %v5876, %v5909
        %v5932 = vmul.f32 %v5877, %v5912
        %v5933 = vmul.f32 %v5878, %v5911
        %v5934 = vmul.f32 %v5879, %v5909
        %v5935 = vmul.f32 %v5880, %v5912
        %v5936 = vmul.f32 %v5881, %v5911
        %v5937 = vmul.f32 %v5882, %v5909
        %v5938 = vmul.f32 %v5883, %v5912
        %v5939 = vmul.f32 %v5884, %v5911
        %v5940 = vmul.f32 %v5885, %v5909
        %v5941 = vmul.f32 %v5886, %v5912
        %v5942 = vmul.f32 %v5887, %v5911
        %v5943 = vmul.f32 %v5888, %v5909
        %v5944 = vmul.f32 %v5889, %v5912
        %v5945 = vmul.f32 %v5890, %v5911
        %v5946 = vmul.f32 %v5891, %v5909
        %v5947 = vmul.f32 %v5892, %v5912
        %v5948 = vmul.f32 %v5893, %v5911
        %v5949 = vmul.f32 %v5894, %v5909
        %v5950 = vmul.f32 %v5895, %v5912
        %v5951 = vmul.f32 %v5896, %v5911
        %s5952 = scalar_lea.vmem %s20, 160
        %v5953 = vld [vmem:[%s5952] sm:$0xff]
        %v5954 = vld [vmem:[%s5952 + $0x8] sm:$0xff]
        %v5955 = vld [vmem:[%s5952 + $0x10] sm:$0xff]
        %v5956 = vld [vmem:[%s5952 + $0x18] sm:$0xff]
        %5993 = vrot.lane.b32.xlu0 %v5916, 127
        %v5994 = vpop.permute.xlu0 %5993
        %5995 = vrot.lane.b32.xlu0 %v5917, 127
        %v5996 = vpop.permute.xlu0 %5995
        %5997 = vrot.lane.b32.xlu0 %v5918, 127
        %v5998 = vpop.permute.xlu0 %5997
        %5999 = vrot.lane.b32.xlu0 %v5919, 127
        %v6000 = vpop.permute.xlu0 %5999
        %6001 = vrot.lane.b32.xlu0 %v5920, 127
        %v6002 = vpop.permute.xlu0 %6001
        %6003 = vrot.lane.b32.xlu0 %v5921, 127
        %v6004 = vpop.permute.xlu0 %6003
        %6005 = vrot.lane.b32.xlu0 %v5922, 127
        %v6006 = vpop.permute.xlu0 %6005
        %6007 = vrot.lane.b32.xlu0 %v5923, 127
        %v6008 = vpop.permute.xlu0 %6007
        %6009 = vrot.lane.b32.xlu0 %v5924, 127
        %v6010 = vpop.permute.xlu0 %6009
        %6011 = vrot.lane.b32.xlu0 %v5925, 127
        %v6012 = vpop.permute.xlu0 %6011
        %6013 = vrot.lane.b32.xlu0 %v5926, 127
        %v6014 = vpop.permute.xlu0 %6013
        %6015 = vrot.lane.b32.xlu0 %v5927, 127
        %v6016 = vpop.permute.xlu0 %6015
        %6017 = vrot.lane.b32.xlu0 %v5928, 127
        %v6018 = vpop.permute.xlu0 %6017
        %6019 = vrot.lane.b32.xlu0 %v5929, 127
        %v6020 = vpop.permute.xlu0 %6019
        %6021 = vrot.lane.b32.xlu0 %v5930, 127
        %v6022 = vpop.permute.xlu0 %6021
        %6023 = vrot.lane.b32.xlu0 %v5931, 127
        %v6024 = vpop.permute.xlu0 %6023
        %6025 = vrot.lane.b32.xlu0 %v5932, 127
        %v6026 = vpop.permute.xlu0 %6025
        %6027 = vrot.lane.b32.xlu0 %v5933, 127
        %v6028 = vpop.permute.xlu0 %6027
        %6029 = vrot.lane.b32.xlu0 %v5934, 127
        %v6030 = vpop.permute.xlu0 %6029
        %6031 = vrot.lane.b32.xlu0 %v5935, 127
        %v6032 = vpop.permute.xlu0 %6031
        %6033 = vrot.lane.b32.xlu0 %v5936, 127
        %v6034 = vpop.permute.xlu0 %6033
        %6035 = vrot.lane.b32.xlu0 %v5937, 127
        %v6036 = vpop.permute.xlu0 %6035
        %6037 = vrot.lane.b32.xlu0 %v5938, 127
        %v6038 = vpop.permute.xlu0 %6037
        %6039 = vrot.lane.b32.xlu0 %v5939, 127
        %v6040 = vpop.permute.xlu0 %6039
        %6041 = vrot.lane.b32.xlu0 %v5940, 127
        %v6042 = vpop.permute.xlu0 %6041
        %6043 = vrot.lane.b32.xlu0 %v5941, 127
        %v6044 = vpop.permute.xlu0 %6043
        %6045 = vrot.lane.b32.xlu0 %v5942, 127
        %v6046 = vpop.permute.xlu0 %6045
        %6047 = vrot.lane.b32.xlu0 %v5943, 127
        %v6048 = vpop.permute.xlu0 %6047
        %6049 = vrot.lane.b32.xlu0 %v5944, 127
        %v6050 = vpop.permute.xlu0 %6049
        %6051 = vrot.lane.b32.xlu0 %v5945, 127
        %v6052 = vpop.permute.xlu0 %6051
        %6053 = vrot.lane.b32.xlu0 %v5946, 127
        %v6054 = vpop.permute.xlu0 %6053
        %6055 = vrot.lane.b32.xlu0 %v5947, 127
        %v6056 = vpop.permute.xlu0 %6055
        %6057 = vrot.lane.b32.xlu0 %v5948, 127
        %v6058 = vpop.permute.xlu0 %6057
        %6059 = vrot.lane.b32.xlu0 %v5949, 127
        %v6060 = vpop.permute.xlu0 %6059
        %6061 = vrot.lane.b32.xlu0 %v5950, 127
        %v6062 = vpop.permute.xlu0 %6061
        %6063 = vrot.lane.b32.xlu0 %v5951, 127
        %v6064 = vpop.permute.xlu0 %6063
        %v6065 = vsel %vm5398, %v5994, %v5996
        %v6066 = vsel %vm5398, %v5996, %v5998
        %v6067 = vsel %vm5398, %v6000, %v6002
        %v6068 = vsel %vm5398, %v6002, %v6004
        %v6069 = vsel %vm5398, %v6006, %v6008
        %v6070 = vsel %vm5398, %v6008, %v6010
        %v6071 = vsel %vm5398, %v6012, %v6014
        %v6072 = vsel %vm5398, %v6014, %v6016
        %v6073 = vsel %vm5398, %v6018, %v6020
        %v6074 = vsel %vm5398, %v6020, %v6022
        %v6075 = vsel %vm5398, %v6024, %v6026
        %v6076 = vsel %vm5398, %v6026, %v6028
        %v6077 = vsel %vm5398, %v6030, %v6032
        %v6078 = vsel %vm5398, %v6032, %v6034
        %v6079 = vsel %vm5398, %v6036, %v6038
        %v6080 = vsel %vm5398, %v6038, %v6040
        %v6081 = vsel %vm5398, %v6042, %v6044
        %v6082 = vsel %vm5398, %v6044, %v6046
        %v6083 = vsel %vm5398, %v6048, %v6050
        %v6084 = vsel %vm5398, %v6050, %v6052
        %v6085 = vsel %vm5398, %v6054, %v6056
        %v6086 = vsel %vm5398, %v6056, %v6058
        %v6087 = vsel %vm5398, %v6060, %v6062
        %v6088 = vsel %vm5398, %v6062, %v6064
        %v6114 = vsel %vm4696, %v5953, 0
        %v6117 = vsel %vm4696, %v5954, 0
        %v6120 = vsel %vm4696, %v5955, 0
        %v6123 = vsel %vm4696, %v5956, 0
        %6125 = vmatprep.subr.mxu0 %v6066
        %6126 = vmatpush1.msra.mxu0 %v6065
        %6127 = vmatprep.subr.mxu0 %v6068
        %6128 = vmatpush1.msra.mxu0 %v6067
        %6129 = vmatprep.subr.mxu0 %v6070
        %6130 = vmatpush1.msra.mxu0 %v6069
        %6131 = vmatprep.subr.mxu0 %v6072
        %6132 = vmatpush1.msra.mxu0 %v6071
        %6133 = vmatprep.subr.mxu0 %v6074
        %6134 = vmatpush1.msra.mxu0 %v6073
        %6135 = vmatprep.subr.mxu0 %v6076
        %6136 = vmatpush1.msra.mxu0 %v6075
        %6137 = vmatprep.subr.mxu0 %v6078
        %6138 = vmatpush1.msra.mxu0 %v6077
        %6139 = vmatprep.subr.mxu0 %v6080
        %6140 = vmatpush1.msra.mxu0 %v6079
        %6141 = vmatprep.subr.mxu0 %v6082
        %6142 = vmatpush1.msra.mxu0 %v6081
        %6143 = vmatprep.subr.mxu0 %v6084
        %6144 = vmatpush1.msra.mxu0 %v6083
        %6145 = vmatprep.subr.mxu0 %v6086
        %6146 = vmatpush1.msra.mxu0 %v6085
        %6147 = vmatprep.subr.mxu0 %v6088
        %6148 = vmatpush1.msra.mxu0 %v6087
        %6149 = vmatprep.subr.mxu0 0.0
        %6150 = vmatpush1.msra.mxu0 0.0
        %6151 = vmatprep.subr.mxu0 0.0
        %6152 = vmatpush1.msra.mxu0 0.0
        %6153 = vmatprep.subr.mxu0 0.0
        %6154 = vmatpush1.msra.mxu0 0.0
        %6155 = vmatprep.subr.mxu0 0.0
        %6156 = vmatpush1.msra.mxu0 0.0
        %6157 = vmatprep.subr.mxu0 0.0
        %6158 = vmatpush1.msra.mxu0 0.0
        %6159 = vmatprep.subr.mxu0 0.0
        %6160 = vmatpush1.msra.mxu0 0.0
        %6161 = vmatprep.subr.mxu0 0.0
        %6162 = vmatpush1.msra.mxu0 0.0
        %6163 = vmatprep.subr.mxu0 0.0
        %6164 = vmatpush1.msra.mxu0 0.0
        %6165 = vmatprep.subr.mxu0 0.0
        %6166 = vmatpush1.msra.mxu0 0.0
        %6167 = vmatprep.subr.mxu0 0.0
        %6168 = vmatpush1.msra.mxu0 0.0
        %6169 = vmatprep.subr.mxu0 0.0
        %6170 = vmatpush1.msra.mxu0 0.0
        %6171 = vmatprep.subr.mxu0 0.0
        %6172 = vmatpush1.msra.mxu0 0.0
        %6173 = vmatprep.subr.mxu0 0.0
        %6174 = vmatpush1.msra.mxu0 0.0
        %6175 = vmatprep.subr.mxu0 0.0
        %6176 = vmatpush1.msra.mxu0 0.0
        %6177 = vmatprep.subr.mxu0 0.0
        %6178 = vmatpush1.msra.mxu0 0.0
        %6179 = vmatprep.subr.mxu0 0.0
        %6180 = vmatpush1.msra.mxu0 0.0
        %6181 = vmatprep.subr.mxu0 0.0
        %6182 = vmatpush1.msra.mxu0 0.0
        %6183 = vmatprep.subr.mxu0 0.0
        %6184 = vmatpush1.msra.mxu0 0.0
        %6185 = vmatprep.subr.mxu0 0.0
        %6186 = vmatpush1.msra.mxu0 0.0
        %6187 = vmatprep.subr.mxu0 0.0
        %6188 = vmatpush1.msra.mxu0 0.0
        %6189 = vmatprep.mubr.f32.mxu0 0.0
        %6190 = vmatmul.mubr.f32.gmra.mrb[0].mxu0 %v6114
        %v6191 = vpop.f32.mrb[0].mxu0
        %v6192 = vadd.f32 0.0, %v6191
        %v6193 = vpop.f32.mrb[0].mxu0
        %v6194 = vadd.f32 0.0, %v6193
        %6195 = vmatprep.mubr.f32.mxu0 0.0
        %6196 = vmatmul.mubr.f32.gmra.mrb[0].mxu0 %v6117
        %v6197 = vpop.f32.mrb[0].mxu0
        %v6198 = vadd.f32 0.0, %v6197
        %v6199 = vpop.f32.mrb[0].mxu0
        %v6200 = vadd.f32 0.0, %v6199
        %6201 = vmatprep.mubr.f32.mxu0 0.0
        %6202 = vmatmul.mubr.f32.gmra.mrb[0].mxu0 %v6120
        %v6203 = vpop.f32.mrb[0].mxu0
        %v6204 = vadd.f32 0.0, %v6203
        %v6205 = vpop.f32.mrb[0].mxu0
        %v6206 = vadd.f32 0.0, %v6205
        %6207 = vmatprep.mubr.f32.mxu0 0.0
        %6208 = vmatmul.mubr.f32.gmra.mrb[0].mxu0 %v6123
        %v6209 = vpop.f32.mrb[0].mxu0
        %v6210 = vadd.f32 0.0, %v6209
        %v6211 = vpop.f32.mrb[0].mxu0
        %v6212 = vadd.f32 0.0, %v6211
        %6213 = vdwg.mxu0
        %v6214 = vadd.f32 %v5853, %v6192
        %v6215 = vadd.f32 %v5854, %v6194
        %v6216 = vadd.f32 %v5855, %v6198
        %v6217 = vadd.f32 %v5856, %v6200
        %v6218 = vadd.f32 %v5857, %v6204
        %v6219 = vadd.f32 %v5858, %v6206
        %v6220 = vadd.f32 %v5859, %v6210
        %v6221 = vadd.f32 %v5860, %v6212
        %s6222 = scalar_lea.vmem %s23, 12
        %v6223 = vld [vmem:[%s6222] sm:$0x3]
        %v6225 = vlaneseq
        %v6226 = vshrl.u32 %v6225, 7
        %v6227 = vsub.s32 0, %v6226
        %v6228 = vrot.slane %v6223, %v6227
        %v6229 = vlaneseq
        %v6230 = vshrl.u32 %v6229, 7
        %v6231 = vsub.s32 1, %v6230
        %v6232 = vrot.slane %v6223, %v6231
        %6233 = vrot.lane.b32.xlu0 %v6228, 15
        %v6234 = vpop.permute.xlu0 %6233
        %6235 = vrot.lane.b32.xlu0 %v6232, 15
        %v6236 = vpop.permute.xlu0 %6235
        %v6237 = vsel %vm5225, %v6234, %v6236
        %v6241 = vmul.f32 %v5861, %v6234
        %v6242 = vmul.f32 %v5862, %v6237
        %v6243 = vmul.f32 %v5863, %v6236
        %v6244 = vmul.f32 %v5864, %v6234
        %v6245 = vmul.f32 %v5865, %v6237
        %v6246 = vmul.f32 %v5866, %v6236
        %v6247 = vmul.f32 %v5867, %v6234
        %v6248 = vmul.f32 %v5868, %v6237
        %v6249 = vmul.f32 %v5869, %v6236
        %v6250 = vmul.f32 %v5870, %v6234
        %v6251 = vmul.f32 %v5871, %v6237
        %v6252 = vmul.f32 %v5872, %v6236
        %v6253 = vmul.f32 %v5873, %v6234
        %v6254 = vmul.f32 %v5874, %v6237
        %v6255 = vmul.f32 %v5875, %v6236
        %v6256 = vmul.f32 %v5876, %v6234
        %v6257 = vmul.f32 %v5877, %v6237
        %v6258 = vmul.f32 %v5878, %v6236
        %v6259 = vmul.f32 %v5879, %v6234
        %v6260 = vmul.f32 %v5880, %v6237
        %v6261 = vmul.f32 %v5881, %v6236
        %v6262 = vmul.f32 %v5882, %v6234
        %v6263 = vmul.f32 %v5883, %v6237
        %v6264 = vmul.f32 %v5884, %v6236
        %v6265 = vmul.f32 %v5885, %v6234
        %v6266 = vmul.f32 %v5886, %v6237
        %v6267 = vmul.f32 %v5887, %v6236
        %v6268 = vmul.f32 %v5888, %v6234
        %v6269 = vmul.f32 %v5889, %v6237
        %v6270 = vmul.f32 %v5890, %v6236
        %v6271 = vmul.f32 %v5891, %v6234
        %v6272 = vmul.f32 %v5892, %v6237
        %v6273 = vmul.f32 %v5893, %v6236
        %v6274 = vmul.f32 %v5894, %v6234
        %v6275 = vmul.f32 %v5895, %v6237
        %v6276 = vmul.f32 %v5896, %v6236
        %s6277 = scalar_lea.vmem %s20, 192
        %v6278 = vld [vmem:[%s6277] sm:$0xff]
        %v6279 = vld [vmem:[%s6277 + $0x8] sm:$0xff]
        %v6280 = vld [vmem:[%s6277 + $0x10] sm:$0xff]
        %v6281 = vld [vmem:[%s6277 + $0x18] sm:$0xff]
        %6318 = vrot.lane.b32.xlu0 %v6241, 113
        %v6319 = vpop.permute.xlu0 %6318
        %6320 = vrot.lane.b32.xlu0 %v6242, 113
        %v6321 = vpop.permute.xlu0 %6320
        %6322 = vrot.lane.b32.xlu0 %v6243, 113
        %v6323 = vpop.permute.xlu0 %6322
        %6324 = vrot.lane.b32.xlu0 %v6244, 113
        %v6325 = vpop.permute.xlu0 %6324
        %6326 = vrot.lane.b32.xlu0 %v6245, 113
        %v6327 = vpop.permute.xlu0 %6326
        %6328 = vrot.lane.b32.xlu0 %v6246, 113
        %v6329 = vpop.permute.xlu0 %6328
        %6330 = vrot.lane.b32.xlu0 %v6247, 113
        %v6331 = vpop.permute.xlu0 %6330
        %6332 = vrot.lane.b32.xlu0 %v6248, 113
        %v6333 = vpop.permute.xlu0 %6332
        %6334 = vrot.lane.b32.xlu0 %v6249, 113
        %v6335 = vpop.permute.xlu0 %6334
        %6336 = vrot.lane.b32.xlu0 %v6250, 113
        %v6337 = vpop.permute.xlu0 %6336
        %6338 = vrot.lane.b32.xlu0 %v6251, 113
        %v6339 = vpop.permute.xlu0 %6338
        %6340 = vrot.lane.b32.xlu0 %v6252, 113
        %v6341 = vpop.permute.xlu0 %6340
        %6342 = vrot.lane.b32.xlu0 %v6253, 113
        %v6343 = vpop.permute.xlu0 %6342
        %6344 = vrot.lane.b32.xlu0 %v6254, 113
        %v6345 = vpop.permute.xlu0 %6344
        %6346 = vrot.lane.b32.xlu0 %v6255, 113
        %v6347 = vpop.permute.xlu0 %6346
        %6348 = vrot.lane.b32.xlu0 %v6256, 113
        %v6349 = vpop.permute.xlu0 %6348
        %6350 = vrot.lane.b32.xlu0 %v6257, 113
        %v6351 = vpop.permute.xlu0 %6350
        %6352 = vrot.lane.b32.xlu0 %v6258, 113
        %v6353 = vpop.permute.xlu0 %6352
        %6354 = vrot.lane.b32.xlu0 %v6259, 113
        %v6355 = vpop.permute.xlu0 %6354
        %6356 = vrot.lane.b32.xlu0 %v6260, 113
        %v6357 = vpop.permute.xlu0 %6356
        %6358 = vrot.lane.b32.xlu0 %v6261, 113
        %v6359 = vpop.permute.xlu0 %6358
        %6360 = vrot.lane.b32.xlu0 %v6262, 113
        %v6361 = vpop.permute.xlu0 %6360
        %6362 = vrot.lane.b32.xlu0 %v6263, 113
        %v6363 = vpop.permute.xlu0 %6362
        %6364 = vrot.lane.b32.xlu0 %v6264, 113
        %v6365 = vpop.permute.xlu0 %6364
        %6366 = vrot.lane.b32.xlu0 %v6265, 113
        %v6367 = vpop.permute.xlu0 %6366
        %6368 = vrot.lane.b32.xlu0 %v6266, 113
        %v6369 = vpop.permute.xlu0 %6368
        %6370 = vrot.lane.b32.xlu0 %v6267, 113
        %v6371 = vpop.permute.xlu0 %6370
        %6372 = vrot.lane.b32.xlu0 %v6268, 113
        %v6373 = vpop.permute.xlu0 %6372
        %6374 = vrot.lane.b32.xlu0 %v6269, 113
        %v6375 = vpop.permute.xlu0 %6374
        %6376 = vrot.lane.b32.xlu0 %v6270, 113
        %v6377 = vpop.permute.xlu0 %6376
        %6378 = vrot.lane.b32.xlu0 %v6271, 113
        %v6379 = vpop.permute.xlu0 %6378
        %6380 = vrot.lane.b32.xlu0 %v6272, 113
        %v6381 = vpop.permute.xlu0 %6380
        %6382 = vrot.lane.b32.xlu0 %v6273, 113
        %v6383 = vpop.permute.xlu0 %6382
        %6384 = vrot.lane.b32.xlu0 %v6274, 113
        %v6385 = vpop.permute.xlu0 %6384
        %6386 = vrot.lane.b32.xlu0 %v6275, 113
        %v6387 = vpop.permute.xlu0 %6386
        %6388 = vrot.lane.b32.xlu0 %v6276, 113
        %v6389 = vpop.permute.xlu0 %6388
        %v6390 = vsel %vm5071, %v6319, %v6321
        %v6391 = vsel %vm5071, %v6321, %v6323
        %v6392 = vsel %vm5071, %v6325, %v6327
        %v6393 = vsel %vm5071, %v6327, %v6329
        %v6394 = vsel %vm5071, %v6331, %v6333
        %v6395 = vsel %vm5071, %v6333, %v6335
        %v6396 = vsel %vm5071, %v6337, %v6339
        %v6397 = vsel %vm5071, %v6339, %v6341
        %v6398 = vsel %vm5071, %v6343, %v6345
        %v6399 = vsel %vm5071, %v6345, %v6347
        %v6400 = vsel %vm5071, %v6349, %v6351
        %v6401 = vsel %vm5071, %v6351, %v6353
        %v6402 = vsel %vm5071, %v6355, %v6357
        %v6403 = vsel %vm5071, %v6357, %v6359
        %v6404 = vsel %vm5071, %v6361, %v6363
        %v6405 = vsel %vm5071, %v6363, %v6365
        %v6406 = vsel %vm5071, %v6367, %v6369
        %v6407 = vsel %vm5071, %v6369, %v6371
        %v6408 = vsel %vm5071, %v6373, %v6375
        %v6409 = vsel %vm5071, %v6375, %v6377
        %v6410 = vsel %vm5071, %v6379, %v6381
        %v6411 = vsel %vm5071, %v6381, %v6383
        %v6412 = vsel %vm5071, %v6385, %v6387
        %v6413 = vsel %vm5071, %v6387, %v6389
        %v6439 = vsel %vm4696, %v6278, 0
        %v6442 = vsel %vm4696, %v6279, 0
        %v6445 = vsel %vm4696, %v6280, 0
        %v6448 = vsel %vm4696, %v6281, 0
        %6450 = vmatprep.subr.mxu0 %v6391
        %6451 = vmatpush1.msra.mxu0 %v6390
        %6452 = vmatprep.subr.mxu0 %v6393
        %6453 = vmatpush1.msra.mxu0 %v6392
        %6454 = vmatprep.subr.mxu0 %v6395
        %6455 = vmatpush1.msra.mxu0 %v6394
        %6456 = vmatprep.subr.mxu0 %v6397
        %6457 = vmatpush1.msra.mxu0 %v6396
        %6458 = vmatprep.subr.mxu0 %v6399
        %6459 = vmatpush1.msra.mxu0 %v6398
        %6460 = vmatprep.subr.mxu0 %v6401
        %6461 = vmatpush1.msra.mxu0 %v6400
        %6462 = vmatprep.subr.mxu0 %v6403
        %6463 = vmatpush1.msra.mxu0 %v6402
        %6464 = vmatprep.subr.mxu0 %v6405
        %6465 = vmatpush1.msra.mxu0 %v6404
        %6466 = vmatprep.subr.mxu0 %v6407
        %6467 = vmatpush1.msra.mxu0 %v6406
        %6468 = vmatprep.subr.mxu0 %v6409
        %6469 = vmatpush1.msra.mxu0 %v6408
        %6470 = vmatprep.subr.mxu0 %v6411
        %6471 = vmatpush1.msra.mxu0 %v6410
        %6472 = vmatprep.subr.mxu0 %v6413
        %6473 = vmatpush1.msra.mxu0 %v6412
        %6474 = vmatprep.subr.mxu0 0.0
        %6475 = vmatpush1.msra.mxu0 0.0
        %6476 = vmatprep.subr.mxu0 0.0
        %6477 = vmatpush1.msra.mxu0 0.0
        %6478 = vmatprep.subr.mxu0 0.0
        %6479 = vmatpush1.msra.mxu0 0.0
        %6480 = vmatprep.subr.mxu0 0.0
        %6481 = vmatpush1.msra.mxu0 0.0
        %6482 = vmatprep.subr.mxu0 0.0
        %6483 = vmatpush1.msra.mxu0 0.0
        %6484 = vmatprep.subr.mxu0 0.0
        %6485 = vmatpush1.msra.mxu0 0.0
        %6486 = vmatprep.subr.mxu0 0.0
        %6487 = vmatpush1.msra.mxu0 0.0
        %6488 = vmatprep.subr.mxu0 0.0
        %6489 = vmatpush1.msra.mxu0 0.0
        %6490 = vmatprep.subr.mxu0 0.0
        %6491 = vmatpush1.msra.mxu0 0.0
        %6492 = vmatprep.subr.mxu0 0.0
        %6493 = vmatpush1.msra.mxu0 0.0
        %6494 = vmatprep.subr.mxu0 0.0
        %6495 = vmatpush1.msra.mxu0 0.0
        %6496 = vmatprep.subr.mxu0 0.0
        %6497 = vmatpush1.msra.mxu0 0.0
        %6498 = vmatprep.subr.mxu0 0.0
        %6499 = vmatpush1.msra.mxu0 0.0
        %6500 = vmatprep.subr.mxu0 0.0
        %6501 = vmatpush1.msra.mxu0 0.0
        %6502 = vmatprep.subr.mxu0 0.0
        %6503 = vmatpush1.msra.mxu0 0.0
        %6504 = vmatprep.subr.mxu0 0.0
        %6505 = vmatpush1.msra.mxu0 0.0
        %6506 = vmatprep.subr.mxu0 0.0
        %6507 = vmatpush1.msra.mxu0 0.0
        %6508 = vmatprep.subr.mxu0 0.0
        %6509 = vmatpush1.msra.mxu0 0.0
        %6510 = vmatprep.subr.mxu0 0.0
        %6511 = vmatpush1.msra.mxu0 0.0
        %6512 = vmatprep.subr.mxu0 0.0
        %6513 = vmatpush1.msra.mxu0 0.0
        %6514 = vmatprep.mubr.f32.mxu0 0.0
        %6515 = vmatmul.mubr.f32.gmra.mrb[0].mxu0 %v6439
        %v6516 = vpop.f32.mrb[0].mxu0
        %v6517 = vadd.f32 0.0, %v6516
        %v6518 = vpop.f32.mrb[0].mxu0
        %v6519 = vadd.f32 0.0, %v6518
        %6520 = vmatprep.mubr.f32.mxu0 0.0
        %6521 = vmatmul.mubr.f32.gmra.mrb[0].mxu0 %v6442
        %v6522 = vpop.f32.mrb[0].mxu0
        %v6523 = vadd.f32 0.0, %v6522
        %v6524 = vpop.f32.mrb[0].mxu0
        %v6525 = vadd.f32 0.0, %v6524
        %6526 = vmatprep.mubr.f32.mxu0 0.0
        %6527 = vmatmul.mubr.f32.gmra.mrb[0].mxu0 %v6445
        %v6528 = vpop.f32.mrb[0].mxu0
        %v6529 = vadd.f32 0.0, %v6528
        %v6530 = vpop.f32.mrb[0].mxu0
        %v6531 = vadd.f32 0.0, %v6530
        %6532 = vmatprep.mubr.f32.mxu0 0.0
        %6533 = vmatmul.mubr.f32.gmra.mrb[0].mxu0 %v6448
        %v6534 = vpop.f32.mrb[0].mxu0
        %v6535 = vadd.f32 0.0, %v6534
        %v6536 = vpop.f32.mrb[0].mxu0
        %v6537 = vadd.f32 0.0, %v6536
        %6538 = vdwg.mxu0
        %v6539 = vadd.f32 %v6214, %v6517
        %v6540 = vadd.f32 %v6215, %v6519
        %v6541 = vadd.f32 %v6216, %v6523
        %v6542 = vadd.f32 %v6217, %v6525
        %v6543 = vadd.f32 %v6218, %v6529
        %v6544 = vadd.f32 %v6219, %v6531
        %v6545 = vadd.f32 %v6220, %v6535
        %v6546 = vadd.f32 %v6221, %v6537
        %s6547 = scalar_lea.vmem %s23, 14
        %v6548 = vld [vmem:[%s6547] sm:$0x3]
        %v6550 = vlaneseq
        %v6551 = vshrl.u32 %v6550, 7
        %v6552 = vsub.s32 0, %v6551
        %v6553 = vrot.slane %v6548, %v6552
        %v6554 = vlaneseq
        %v6555 = vshrl.u32 %v6554, 7
        %v6556 = vsub.s32 1, %v6555
        %v6557 = vrot.slane %v6548, %v6556
        %6558 = vrot.lane.b32.xlu0 %v6553, 16
        %v6559 = vpop.permute.xlu0 %6558
        %6560 = vrot.lane.b32.xlu0 %v6557, 16
        %v6561 = vpop.permute.xlu0 %6560
        %v6562 = vsel %vm1895, %v6559, %v6561
        %v6566 = vmul.f32 %v5861, %v6559
        %v6567 = vmul.f32 %v5862, %v6562
        %v6568 = vmul.f32 %v5863, %v6561
        %v6569 = vmul.f32 %v5864, %v6559
        %v6570 = vmul.f32 %v5865, %v6562
        %v6571 = vmul.f32 %v5866, %v6561
        %v6572 = vmul.f32 %v5867, %v6559
        %v6573 = vmul.f32 %v5868, %v6562
        %v6574 = vmul.f32 %v5869, %v6561
        %v6575 = vmul.f32 %v5870, %v6559
        %v6576 = vmul.f32 %v5871, %v6562
        %v6577 = vmul.f32 %v5872, %v6561
        %v6578 = vmul.f32 %v5873, %v6559
        %v6579 = vmul.f32 %v5874, %v6562
        %v6580 = vmul.f32 %v5875, %v6561
        %v6581 = vmul.f32 %v5876, %v6559
        %v6582 = vmul.f32 %v5877, %v6562
        %v6583 = vmul.f32 %v5878, %v6561
        %v6584 = vmul.f32 %v5879, %v6559
        %v6585 = vmul.f32 %v5880, %v6562
        %v6586 = vmul.f32 %v5881, %v6561
        %v6587 = vmul.f32 %v5882, %v6559
        %v6588 = vmul.f32 %v5883, %v6562
        %v6589 = vmul.f32 %v5884, %v6561
        %v6590 = vmul.f32 %v5885, %v6559
        %v6591 = vmul.f32 %v5886, %v6562
        %v6592 = vmul.f32 %v5887, %v6561
        %v6593 = vmul.f32 %v5888, %v6559
        %v6594 = vmul.f32 %v5889, %v6562
        %v6595 = vmul.f32 %v5890, %v6561
        %v6596 = vmul.f32 %v5891, %v6559
        %v6597 = vmul.f32 %v5892, %v6562
        %v6598 = vmul.f32 %v5893, %v6561
        %v6599 = vmul.f32 %v5894, %v6559
        %v6600 = vmul.f32 %v5895, %v6562
        %v6601 = vmul.f32 %v5896, %v6561
        %s6602 = scalar_lea.vmem %s20, 224
        %v6603 = vld [vmem:[%s6602] sm:$0xff]
        %v6604 = vld [vmem:[%s6602 + $0x8] sm:$0xff]
        %v6605 = vld [vmem:[%s6602 + $0x10] sm:$0xff]
        %v6606 = vld [vmem:[%s6602 + $0x18] sm:$0xff]
        %6643 = vrot.lane.b32.xlu0 %v6566, 112
        %v6644 = vpop.permute.xlu0 %6643
        %6645 = vrot.lane.b32.xlu0 %v6567, 112
        %v6646 = vpop.permute.xlu0 %6645
        %6647 = vrot.lane.b32.xlu0 %v6568, 112
        %v6648 = vpop.permute.xlu0 %6647
        %6649 = vrot.lane.b32.xlu0 %v6569, 112
        %v6650 = vpop.permute.xlu0 %6649
        %6651 = vrot.lane.b32.xlu0 %v6570, 112
        %v6652 = vpop.permute.xlu0 %6651
        %6653 = vrot.lane.b32.xlu0 %v6571, 112
        %v6654 = vpop.permute.xlu0 %6653
        %6655 = vrot.lane.b32.xlu0 %v6572, 112
        %v6656 = vpop.permute.xlu0 %6655
        %6657 = vrot.lane.b32.xlu0 %v6573, 112
        %v6658 = vpop.permute.xlu0 %6657
        %6659 = vrot.lane.b32.xlu0 %v6574, 112
        %v6660 = vpop.permute.xlu0 %6659
        %6661 = vrot.lane.b32.xlu0 %v6575, 112
        %v6662 = vpop.permute.xlu0 %6661
        %6663 = vrot.lane.b32.xlu0 %v6576, 112
        %v6664 = vpop.permute.xlu0 %6663
        %6665 = vrot.lane.b32.xlu0 %v6577, 112
        %v6666 = vpop.permute.xlu0 %6665
        %6667 = vrot.lane.b32.xlu0 %v6578, 112
        %v6668 = vpop.permute.xlu0 %6667
        %6669 = vrot.lane.b32.xlu0 %v6579, 112
        %v6670 = vpop.permute.xlu0 %6669
        %6671 = vrot.lane.b32.xlu0 %v6580, 112
        %v6672 = vpop.permute.xlu0 %6671
        %6673 = vrot.lane.b32.xlu0 %v6581, 112
        %v6674 = vpop.permute.xlu0 %6673
        %6675 = vrot.lane.b32.xlu0 %v6582, 112
        %v6676 = vpop.permute.xlu0 %6675
        %6677 = vrot.lane.b32.xlu0 %v6583, 112
        %v6678 = vpop.permute.xlu0 %6677
        %6679 = vrot.lane.b32.xlu0 %v6584, 112
        %v6680 = vpop.permute.xlu0 %6679
        %6681 = vrot.lane.b32.xlu0 %v6585, 112
        %v6682 = vpop.permute.xlu0 %6681
        %6683 = vrot.lane.b32.xlu0 %v6586, 112
        %v6684 = vpop.permute.xlu0 %6683
        %6685 = vrot.lane.b32.xlu0 %v6587, 112
        %v6686 = vpop.permute.xlu0 %6685
        %6687 = vrot.lane.b32.xlu0 %v6588, 112
        %v6688 = vpop.permute.xlu0 %6687
        %6689 = vrot.lane.b32.xlu0 %v6589, 112
        %v6690 = vpop.permute.xlu0 %6689
        %6691 = vrot.lane.b32.xlu0 %v6590, 112
        %v6692 = vpop.permute.xlu0 %6691
        %6693 = vrot.lane.b32.xlu0 %v6591, 112
        %v6694 = vpop.permute.xlu0 %6693
        %6695 = vrot.lane.b32.xlu0 %v6592, 112
        %v6696 = vpop.permute.xlu0 %6695
        %6697 = vrot.lane.b32.xlu0 %v6593, 112
        %v6698 = vpop.permute.xlu0 %6697
        %6699 = vrot.lane.b32.xlu0 %v6594, 112
        %v6700 = vpop.permute.xlu0 %6699
        %6701 = vrot.lane.b32.xlu0 %v6595, 112
        %v6702 = vpop.permute.xlu0 %6701
        %6703 = vrot.lane.b32.xlu0 %v6596, 112
        %v6704 = vpop.permute.xlu0 %6703
        %6705 = vrot.lane.b32.xlu0 %v6597, 112
        %v6706 = vpop.permute.xlu0 %6705
        %6707 = vrot.lane.b32.xlu0 %v6598, 112
        %v6708 = vpop.permute.xlu0 %6707
        %6709 = vrot.lane.b32.xlu0 %v6599, 112
        %v6710 = vpop.permute.xlu0 %6709
        %6711 = vrot.lane.b32.xlu0 %v6600, 112
        %v6712 = vpop.permute.xlu0 %6711
        %6713 = vrot.lane.b32.xlu0 %v6601, 112
        %v6714 = vpop.permute.xlu0 %6713
        %v6715 = vsel %vm4494, %v6644, %v6646
        %v6716 = vsel %vm4494, %v6646, %v6648
        %v6717 = vsel %vm4494, %v6650, %v6652
        %v6718 = vsel %vm4494, %v6652, %v6654
        %v6719 = vsel %vm4494, %v6656, %v6658
        %v6720 = vsel %vm4494, %v6658, %v6660
        %v6721 = vsel %vm4494, %v6662, %v6664
        %v6722 = vsel %vm4494, %v6664, %v6666
        %v6723 = vsel %vm4494, %v6668, %v6670
        %v6724 = vsel %vm4494, %v6670, %v6672
        %v6725 = vsel %vm4494, %v6674, %v6676
        %v6726 = vsel %vm4494, %v6676, %v6678
        %v6727 = vsel %vm4494, %v6680, %v6682
        %v6728 = vsel %vm4494, %v6682, %v6684
        %v6729 = vsel %vm4494, %v6686, %v6688
        %v6730 = vsel %vm4494, %v6688, %v6690
        %v6731 = vsel %vm4494, %v6692, %v6694
        %v6732 = vsel %vm4494, %v6694, %v6696
        %v6733 = vsel %vm4494, %v6698, %v6700
        %v6734 = vsel %vm4494, %v6700, %v6702
        %v6735 = vsel %vm4494, %v6704, %v6706
        %v6736 = vsel %vm4494, %v6706, %v6708
        %v6737 = vsel %vm4494, %v6710, %v6712
        %v6738 = vsel %vm4494, %v6712, %v6714
        %v6764 = vsel %vm4696, %v6603, 0
        %v6767 = vsel %vm4696, %v6604, 0
        %v6770 = vsel %vm4696, %v6605, 0
        %v6773 = vsel %vm4696, %v6606, 0
        %6775 = vmatprep.subr.mxu0 %v6716
        %6776 = vmatpush1.msra.mxu0 %v6715
        %6777 = vmatprep.subr.mxu0 %v6718
        %6778 = vmatpush1.msra.mxu0 %v6717
        %6779 = vmatprep.subr.mxu0 %v6720
        %6780 = vmatpush1.msra.mxu0 %v6719
        %6781 = vmatprep.subr.mxu0 %v6722
        %6782 = vmatpush1.msra.mxu0 %v6721
        %6783 = vmatprep.subr.mxu0 %v6724
        %6784 = vmatpush1.msra.mxu0 %v6723
        %6785 = vmatprep.subr.mxu0 %v6726
        %6786 = vmatpush1.msra.mxu0 %v6725
        %6787 = vmatprep.subr.mxu0 %v6728
        %6788 = vmatpush1.msra.mxu0 %v6727
        %6789 = vmatprep.subr.mxu0 %v6730
        %6790 = vmatpush1.msra.mxu0 %v6729
        %6791 = vmatprep.subr.mxu0 %v6732
        %6792 = vmatpush1.msra.mxu0 %v6731
        %6793 = vmatprep.subr.mxu0 %v6734
        %6794 = vmatpush1.msra.mxu0 %v6733
        %6795 = vmatprep.subr.mxu0 %v6736
        %6796 = vmatpush1.msra.mxu0 %v6735
        %6797 = vmatprep.subr.mxu0 %v6738
        %6798 = vmatpush1.msra.mxu0 %v6737
        %6799 = vmatprep.subr.mxu0 0.0
        %6800 = vmatpush1.msra.mxu0 0.0
        %6801 = vmatprep.subr.mxu0 0.0
        %6802 = vmatpush1.msra.mxu0 0.0
        %6803 = vmatprep.subr.mxu0 0.0
        %6804 = vmatpush1.msra.mxu0 0.0
        %6805 = vmatprep.subr.mxu0 0.0
        %6806 = vmatpush1.msra.mxu0 0.0
        %6807 = vmatprep.subr.mxu0 0.0
        %6808 = vmatpush1.msra.mxu0 0.0
        %6809 = vmatprep.subr.mxu0 0.0
        %6810 = vmatpush1.msra.mxu0 0.0
        %6811 = vmatprep.subr.mxu0 0.0
        %6812 = vmatpush1.msra.mxu0 0.0
        %6813 = vmatprep.subr.mxu0 0.0
        %6814 = vmatpush1.msra.mxu0 0.0
        %6815 = vmatprep.subr.mxu0 0.0
        %6816 = vmatpush1.msra.mxu0 0.0
        %6817 = vmatprep.subr.mxu0 0.0
        %6818 = vmatpush1.msra.mxu0 0.0
        %6819 = vmatprep.subr.mxu0 0.0
        %6820 = vmatpush1.msra.mxu0 0.0
        %6821 = vmatprep.subr.mxu0 0.0
        %6822 = vmatpush1.msra.mxu0 0.0
        %6823 = vmatprep.subr.mxu0 0.0
        %6824 = vmatpush1.msra.mxu0 0.0
        %6825 = vmatprep.subr.mxu0 0.0
        %6826 = vmatpush1.msra.mxu0 0.0
        %6827 = vmatprep.subr.mxu0 0.0
        %6828 = vmatpush1.msra.mxu0 0.0
        %6829 = vmatprep.subr.mxu0 0.0
        %6830 = vmatpush1.msra.mxu0 0.0
        %6831 = vmatprep.subr.mxu0 0.0
        %6832 = vmatpush1.msra.mxu0 0.0
        %6833 = vmatprep.subr.mxu0 0.0
        %6834 = vmatpush1.msra.mxu0 0.0
        %6835 = vmatprep.subr.mxu0 0.0
        %6836 = vmatpush1.msra.mxu0 0.0
        %6837 = vmatprep.subr.mxu0 0.0
        %6838 = vmatpush1.msra.mxu0 0.0
        %6839 = vmatprep.mubr.f32.mxu0 0.0
        %6840 = vmatmul.mubr.f32.gmra.mrb[0].mxu0 %v6764
        %v6841 = vpop.f32.mrb[0].mxu0
        %v6842 = vadd.f32 0.0, %v6841
        %v6843 = vpop.f32.mrb[0].mxu0
        %v6844 = vadd.f32 0.0, %v6843
        %6845 = vmatprep.mubr.f32.mxu0 0.0
        %6846 = vmatmul.mubr.f32.gmra.mrb[0].mxu0 %v6767
        %v6847 = vpop.f32.mrb[0].mxu0
        %v6848 = vadd.f32 0.0, %v6847
        %v6849 = vpop.f32.mrb[0].mxu0
        %v6850 = vadd.f32 0.0, %v6849
        %6851 = vmatprep.mubr.f32.mxu0 0.0
        %6852 = vmatmul.mubr.f32.gmra.mrb[0].mxu0 %v6770
        %v6853 = vpop.f32.mrb[0].mxu0
        %v6854 = vadd.f32 0.0, %v6853
        %v6855 = vpop.f32.mrb[0].mxu0
        %v6856 = vadd.f32 0.0, %v6855
        %6857 = vmatprep.mubr.f32.mxu0 0.0
        %6858 = vmatmul.mubr.f32.gmra.mrb[0].mxu0 %v6773
        %v6859 = vpop.f32.mrb[0].mxu0
        %v6860 = vadd.f32 0.0, %v6859
        %v6861 = vpop.f32.mrb[0].mxu0
        %v6862 = vadd.f32 0.0, %v6861
        %6863 = vdwg.mxu0
        %v6864 = vadd.f32 %v6539, %v6842
        %v6865 = vadd.f32 %v6540, %v6844
        %v6866 = vadd.f32 %v6541, %v6848
        %v6867 = vadd.f32 %v6542, %v6850
        %v6868 = vadd.f32 %v6543, %v6854
        %v6869 = vadd.f32 %v6544, %v6856
        %v6870 = vadd.f32 %v6545, %v6860
        %v6871 = vadd.f32 %v6546, %v6862
        %s6872 = scalar_lea.vmem %s23, 16
        %v6873 = vld [vmem:[%s6872] sm:$0x3]
        %v6875 = vlaneseq
        %v6876 = vshrl.u32 %v6875, 7
        %v6877 = vsub.s32 0, %v6876
        %v6878 = vrot.slane %v6873, %v6877
        %v6879 = vlaneseq
        %v6880 = vshrl.u32 %v6879, 7
        %v6881 = vsub.s32 1, %v6880
        %v6882 = vrot.slane %v6873, %v6881
        %6883 = vrot.lane.b32.xlu0 %v6878, 17
        %v6884 = vpop.permute.xlu0 %6883
        %6885 = vrot.lane.b32.xlu0 %v6882, 17
        %v6886 = vpop.permute.xlu0 %6885
        %v6887 = vsel %vm4906, %v6884, %v6886
        %v6891 = vmul.f32 %v5861, %v6884
        %v6892 = vmul.f32 %v5862, %v6887
        %v6893 = vmul.f32 %v5863, %v6886
        %v6894 = vmul.f32 %v5864, %v6884
        %v6895 = vmul.f32 %v5865, %v6887
        %v6896 = vmul.f32 %v5866, %v6886
        %v6897 = vmul.f32 %v5867, %v6884
        %v6898 = vmul.f32 %v5868, %v6887
        %v6899 = vmul.f32 %v5869, %v6886
        %v6900 = vmul.f32 %v5870, %v6884
        %v6901 = vmul.f32 %v5871, %v6887
        %v6902 = vmul.f32 %v5872, %v6886
        %v6903 = vmul.f32 %v5873, %v6884
        %v6904 = vmul.f32 %v5874, %v6887
        %v6905 = vmul.f32 %v5875, %v6886
        %v6906 = vmul.f32 %v5876, %v6884
        %v6907 = vmul.f32 %v5877, %v6887
        %v6908 = vmul.f32 %v5878, %v6886
        %v6909 = vmul.f32 %v5879, %v6884
        %v6910 = vmul.f32 %v5880, %v6887
        %v6911 = vmul.f32 %v5881, %v6886
        %v6912 = vmul.f32 %v5882, %v6884
        %v6913 = vmul.f32 %v5883, %v6887
        %v6914 = vmul.f32 %v5884, %v6886
        %v6915 = vmul.f32 %v5885, %v6884
        %v6916 = vmul.f32 %v5886, %v6887
        %v6917 = vmul.f32 %v5887, %v6886
        %v6918 = vmul.f32 %v5888, %v6884
        %v6919 = vmul.f32 %v5889, %v6887
        %v6920 = vmul.f32 %v5890, %v6886
        %v6921 = vmul.f32 %v5891, %v6884
        %v6922 = vmul.f32 %v5892, %v6887
        %v6923 = vmul.f32 %v5893, %v6886
        %v6924 = vmul.f32 %v5894, %v6884
        %v6925 = vmul.f32 %v5895, %v6887
        %v6926 = vmul.f32 %v5896, %v6886
        %s6927 = scalar_lea.vmem %s20, 256
        %v6928 = vld [vmem:[%s6927] sm:$0xff]
        %v6929 = vld [vmem:[%s6927 + $0x8] sm:$0xff]
        %v6930 = vld [vmem:[%s6927 + $0x10] sm:$0xff]
        %v6931 = vld [vmem:[%s6927 + $0x18] sm:$0xff]
        %6968 = vrot.lane.b32.xlu0 %v6891, 111
        %v6969 = vpop.permute.xlu0 %6968
        %6970 = vrot.lane.b32.xlu0 %v6892, 111
        %v6971 = vpop.permute.xlu0 %6970
        %6972 = vrot.lane.b32.xlu0 %v6893, 111
        %v6973 = vpop.permute.xlu0 %6972
        %6974 = vrot.lane.b32.xlu0 %v6894, 111
        %v6975 = vpop.permute.xlu0 %6974
        %6976 = vrot.lane.b32.xlu0 %v6895, 111
        %v6977 = vpop.permute.xlu0 %6976
        %6978 = vrot.lane.b32.xlu0 %v6896, 111
        %v6979 = vpop.permute.xlu0 %6978
        %6980 = vrot.lane.b32.xlu0 %v6897, 111
        %v6981 = vpop.permute.xlu0 %6980
        %6982 = vrot.lane.b32.xlu0 %v6898, 111
        %v6983 = vpop.permute.xlu0 %6982
        %6984 = vrot.lane.b32.xlu0 %v6899, 111
        %v6985 = vpop.permute.xlu0 %6984
        %6986 = vrot.lane.b32.xlu0 %v6900, 111
        %v6987 = vpop.permute.xlu0 %6986
        %6988 = vrot.lane.b32.xlu0 %v6901, 111
        %v6989 = vpop.permute.xlu0 %6988
        %6990 = vrot.lane.b32.xlu0 %v6902, 111
        %v6991 = vpop.permute.xlu0 %6990
        %6992 = vrot.lane.b32.xlu0 %v6903, 111
        %v6993 = vpop.permute.xlu0 %6992
        %6994 = vrot.lane.b32.xlu0 %v6904, 111
        %v6995 = vpop.permute.xlu0 %6994
        %6996 = vrot.lane.b32.xlu0 %v6905, 111
        %v6997 = vpop.permute.xlu0 %6996
        %6998 = vrot.lane.b32.xlu0 %v6906, 111
        %v6999 = vpop.permute.xlu0 %6998
        %7000 = vrot.lane.b32.xlu0 %v6907, 111
        %v7001 = vpop.permute.xlu0 %7000
        %7002 = vrot.lane.b32.xlu0 %v6908, 111
        %v7003 = vpop.permute.xlu0 %7002
        %7004 = vrot.lane.b32.xlu0 %v6909, 111
        %v7005 = vpop.permute.xlu0 %7004
        %7006 = vrot.lane.b32.xlu0 %v6910, 111
        %v7007 = vpop.permute.xlu0 %7006
        %7008 = vrot.lane.b32.xlu0 %v6911, 111
        %v7009 = vpop.permute.xlu0 %7008
        %7010 = vrot.lane.b32.xlu0 %v6912, 111
        %v7011 = vpop.permute.xlu0 %7010
        %7012 = vrot.lane.b32.xlu0 %v6913, 111
        %v7013 = vpop.permute.xlu0 %7012
        %7014 = vrot.lane.b32.xlu0 %v6914, 111
        %v7015 = vpop.permute.xlu0 %7014
        %7016 = vrot.lane.b32.xlu0 %v6915, 111
        %v7017 = vpop.permute.xlu0 %7016
        %7018 = vrot.lane.b32.xlu0 %v6916, 111
        %v7019 = vpop.permute.xlu0 %7018
        %7020 = vrot.lane.b32.xlu0 %v6917, 111
        %v7021 = vpop.permute.xlu0 %7020
        %7022 = vrot.lane.b32.xlu0 %v6918, 111
        %v7023 = vpop.permute.xlu0 %7022
        %7024 = vrot.lane.b32.xlu0 %v6919, 111
        %v7025 = vpop.permute.xlu0 %7024
        %7026 = vrot.lane.b32.xlu0 %v6920, 111
        %v7027 = vpop.permute.xlu0 %7026
        %7028 = vrot.lane.b32.xlu0 %v6921, 111
        %v7029 = vpop.permute.xlu0 %7028
        %7030 = vrot.lane.b32.xlu0 %v6922, 111
        %v7031 = vpop.permute.xlu0 %7030
        %7032 = vrot.lane.b32.xlu0 %v6923, 111
        %v7033 = vpop.permute.xlu0 %7032
        %7034 = vrot.lane.b32.xlu0 %v6924, 111
        %v7035 = vpop.permute.xlu0 %7034
        %7036 = vrot.lane.b32.xlu0 %v6925, 111
        %v7037 = vpop.permute.xlu0 %7036
        %7038 = vrot.lane.b32.xlu0 %v6926, 111
        %v7039 = vpop.permute.xlu0 %7038
        %v7040 = vsel %vm4434, %v6969, %v6971
        %v7041 = vsel %vm4434, %v6971, %v6973
        %v7042 = vsel %vm4434, %v6975, %v6977
        %v7043 = vsel %vm4434, %v6977, %v6979
        %v7044 = vsel %vm4434, %v6981, %v6983
        %v7045 = vsel %vm4434, %v6983, %v6985
        %v7046 = vsel %vm4434, %v6987, %v6989
        %v7047 = vsel %vm4434, %v6989, %v6991
        %v7048 = vsel %vm4434, %v6993, %v6995
        %v7049 = vsel %vm4434, %v6995, %v6997
        %v7050 = vsel %vm4434, %v6999, %v7001
        %v7051 = vsel %vm4434, %v7001, %v7003
        %v7052 = vsel %vm4434, %v7005, %v7007
        %v7053 = vsel %vm4434, %v7007, %v7009
        %v7054 = vsel %vm4434, %v7011, %v7013
        %v7055 = vsel %vm4434, %v7013, %v7015
        %v7056 = vsel %vm4434, %v7017, %v7019
        %v7057 = vsel %vm4434, %v7019, %v7021
        %v7058 = vsel %vm4434, %v7023, %v7025
        %v7059 = vsel %vm4434, %v7025, %v7027
        %v7060 = vsel %vm4434, %v7029, %v7031
        %v7061 = vsel %vm4434, %v7031, %v7033
        %v7062 = vsel %vm4434, %v7035, %v7037
        %v7063 = vsel %vm4434, %v7037, %v7039
        %v7089 = vsel %vm4696, %v6928, 0
        %v7092 = vsel %vm4696, %v6929, 0
        %v7095 = vsel %vm4696, %v6930, 0
        %v7098 = vsel %vm4696, %v6931, 0
        %7100 = vmatprep.subr.mxu0 %v7041
        %7101 = vmatpush1.msra.mxu0 %v7040
        %7102 = vmatprep.subr.mxu0 %v7043
        %7103 = vmatpush1.msra.mxu0 %v7042
        %7104 = vmatprep.subr.mxu0 %v7045
        %7105 = vmatpush1.msra.mxu0 %v7044
        %7106 = vmatprep.subr.mxu0 %v7047
        %7107 = vmatpush1.msra.mxu0 %v7046
        %7108 = vmatprep.subr.mxu0 %v7049
        %7109 = vmatpush1.msra.mxu0 %v7048
        %7110 = vmatprep.subr.mxu0 %v7051
        %7111 = vmatpush1.msra.mxu0 %v7050
        %7112 = vmatprep.subr.mxu0 %v7053
        %7113 = vmatpush1.msra.mxu0 %v7052
        %7114 = vmatprep.subr.mxu0 %v7055
        %7115 = vmatpush1.msra.mxu0 %v7054
        %7116 = vmatprep.subr.mxu0 %v7057
        %7117 = vmatpush1.msra.mxu0 %v7056
        %7118 = vmatprep.subr.mxu0 %v7059
        %7119 = vmatpush1.msra.mxu0 %v7058
        %7120 = vmatprep.subr.mxu0 %v7061
        %7121 = vmatpush1.msra.mxu0 %v7060
        %7122 = vmatprep.subr.mxu0 %v7063
        %7123 = vmatpush1.msra.mxu0 %v7062
        %7124 = vmatprep.subr.mxu0 0.0
        %7125 = vmatpush1.msra.mxu0 0.0
        %7126 = vmatprep.subr.mxu0 0.0
        %7127 = vmatpush1.msra.mxu0 0.0
        %7128 = vmatprep.subr.mxu0 0.0
        %7129 = vmatpush1.msra.mxu0 0.0
        %7130 = vmatprep.subr.mxu0 0.0
        %7131 = vmatpush1.msra.mxu0 0.0
        %7132 = vmatprep.subr.mxu0 0.0
        %7133 = vmatpush1.msra.mxu0 0.0
        %7134 = vmatprep.subr.mxu0 0.0
        %7135 = vmatpush1.msra.mxu0 0.0
        %7136 = vmatprep.subr.mxu0 0.0
        %7137 = vmatpush1.msra.mxu0 0.0
        %7138 = vmatprep.subr.mxu0 0.0
        %7139 = vmatpush1.msra.mxu0 0.0
        %7140 = vmatprep.subr.mxu0 0.0
        %7141 = vmatpush1.msra.mxu0 0.0
        %7142 = vmatprep.subr.mxu0 0.0
        %7143 = vmatpush1.msra.mxu0 0.0
        %7144 = vmatprep.subr.mxu0 0.0
        %7145 = vmatpush1.msra.mxu0 0.0
        %7146 = vmatprep.subr.mxu0 0.0
        %7147 = vmatpush1.msra.mxu0 0.0
        %7148 = vmatprep.subr.mxu0 0.0
        %7149 = vmatpush1.msra.mxu0 0.0
        %7150 = vmatprep.subr.mxu0 0.0
        %7151 = vmatpush1.msra.mxu0 0.0
        %7152 = vmatprep.subr.mxu0 0.0
        %7153 = vmatpush1.msra.mxu0 0.0
        %7154 = vmatprep.subr.mxu0 0.0
        %7155 = vmatpush1.msra.mxu0 0.0
        %7156 = vmatprep.subr.mxu0 0.0
        %7157 = vmatpush1.msra.mxu0 0.0
        %7158 = vmatprep.subr.mxu0 0.0
        %7159 = vmatpush1.msra.mxu0 0.0
        %7160 = vmatprep.subr.mxu0 0.0
        %7161 = vmatpush1.msra.mxu0 0.0
        %7162 = vmatprep.subr.mxu0 0.0
        %7163 = vmatpush1.msra.mxu0 0.0
        %7164 = vmatprep.mubr.f32.mxu0 0.0
        %7165 = vmatmul.mubr.f32.gmra.mrb[0].mxu0 %v7089
        %v7166 = vpop.f32.mrb[0].mxu0
        %v7167 = vadd.f32 0.0, %v7166
        %v7168 = vpop.f32.mrb[0].mxu0
        %v7169 = vadd.f32 0.0, %v7168
        %7170 = vmatprep.mubr.f32.mxu0 0.0
        %7171 = vmatmul.mubr.f32.gmra.mrb[0].mxu0 %v7092
        %v7172 = vpop.f32.mrb[0].mxu0
        %v7173 = vadd.f32 0.0, %v7172
        %v7174 = vpop.f32.mrb[0].mxu0
        %v7175 = vadd.f32 0.0, %v7174
        %7176 = vmatprep.mubr.f32.mxu0 0.0
        %7177 = vmatmul.mubr.f32.gmra.mrb[0].mxu0 %v7095
        %v7178 = vpop.f32.mrb[0].mxu0
        %v7179 = vadd.f32 0.0, %v7178
        %v7180 = vpop.f32.mrb[0].mxu0
        %v7181 = vadd.f32 0.0, %v7180
        %7182 = vmatprep.mubr.f32.mxu0 0.0
        %7183 = vmatmul.mubr.f32.gmra.mrb[0].mxu0 %v7098
        %v7184 = vpop.f32.mrb[0].mxu0
        %v7185 = vadd.f32 0.0, %v7184
        %v7186 = vpop.f32.mrb[0].mxu0
        %v7187 = vadd.f32 0.0, %v7186
        %7188 = vdwg.mxu0
        %v7189 = vadd.f32 %v6864, %v7167
        %v7190 = vadd.f32 %v6865, %v7169
        %v7191 = vadd.f32 %v6866, %v7173
        %v7192 = vadd.f32 %v6867, %v7175
        %v7193 = vadd.f32 %v6868, %v7179
        %v7194 = vadd.f32 %v6869, %v7181
        %v7195 = vadd.f32 %v6870, %v7185
        %v7196 = vadd.f32 %v6871, %v7187
        %v7197 = vld [vmem:[%s21] sm:$0xff]
        %v7198 = vld [vmem:[%s21 + $0x8] sm:$0xff]
        %v7199 = vld [vmem:[%s21 + $0x10] sm:$0xff]
        %v7200 = vld [vmem:[%s21 + $0x18] sm:$0xff]
        %7202 = vset.pattern.permute.xlu0 0
        %7203 = vperm.xlu0 %7202, %v7197
        %v7204 = vpop.permute.xlu0 %7203
        %7207 = vset.pattern.permute.xlu0 0
        %7208 = vperm.xlu0 %7207, %v7198
        %v7209 = vpop.permute.xlu0 %7208
        %7212 = vset.pattern.permute.xlu0 0
        %7213 = vperm.xlu0 %7212, %v7199
        %v7214 = vpop.permute.xlu0 %7213
        %7217 = vset.pattern.permute.xlu0 0
        %7218 = vperm.xlu0 %7217, %v7200
        %v7219 = vpop.permute.xlu0 %7218
        %v7221 = vmul.f32 %v7189, %v7204
        %v7222 = vmul.f32 %v7190, %v7204
        %v7223 = vmul.f32 %v7191, %v7209
        %v7224 = vmul.f32 %v7192, %v7209
        %v7225 = vmul.f32 %v7193, %v7214
        %v7226 = vmul.f32 %v7194, %v7214
        %v7227 = vmul.f32 %v7195, %v7219
        %v7228 = vmul.f32 %v7196, %v7219
        %v7229 = vld [vmem:[%s22] sm:$0xff]
        %v7230 = vld [vmem:[%s22 + $0x8] sm:$0xff]
        %v7231 = vld [vmem:[%s22 + $0x10] sm:$0xff]
        %v7232 = vld [vmem:[%s22 + $0x18] sm:$0xff]
        %7234 = vset.pattern.permute.xlu0 0
        %7235 = vperm.xlu0 %7234, %v7229
        %v7236 = vpop.permute.xlu0 %7235
        %7239 = vset.pattern.permute.xlu0 0
        %7240 = vperm.xlu0 %7239, %v7230
        %v7241 = vpop.permute.xlu0 %7240
        %7244 = vset.pattern.permute.xlu0 0
        %7245 = vperm.xlu0 %7244, %v7231
        %v7246 = vpop.permute.xlu0 %7245
        %7249 = vset.pattern.permute.xlu0 0
        %7250 = vperm.xlu0 %7249, %v7232
        %v7251 = vpop.permute.xlu0 %7250
        %v7253 = vadd.f32 %v7221, %v7236
        %v7254 = vadd.f32 %v7222, %v7236
        %v7255 = vadd.f32 %v7223, %v7241
        %v7256 = vadd.f32 %v7224, %v7241
        %v7257 = vadd.f32 %v7225, %v7246
        %v7258 = vadd.f32 %v7226, %v7246
        %v7259 = vadd.f32 %v7227, %v7251
        %v7260 = vadd.f32 %v7228, %v7251
        %v7261 = vmax.f32 %v7253, 0.0
        %v7262 = vmax.f32 %v7254, 0.0
        %v7263 = vmax.f32 %v7255, 0.0
        %v7264 = vmax.f32 %v7256, 0.0
        %v7265 = vmax.f32 %v7257, 0.0
        %v7266 = vmax.f32 %v7258, 0.0
        %v7267 = vmax.f32 %v7259, 0.0
        %v7268 = vmax.f32 %v7260, 0.0
        %7269 = vst [vmem:[%s814] sm:$0xff] %v7261
        %7270 = vst [vmem:[%s814 + $0x8] sm:$0xff] %v7262
        %7271 = vst [vmem:[%s814 + $0x10] sm:$0xff] %v7263
        %7272 = vst [vmem:[%s814 + $0x18] sm:$0xff] %v7264
        %7273 = vst [vmem:[%s814 + $0x20] sm:$0xff] %v7265
        %7274 = vst [vmem:[%s814 + $0x28] sm:$0xff] %v7266
        %7275 = vst [vmem:[%s814 + $0x30] sm:$0xff] %v7267
        %7276 = vst [vmem:[%s814 + $0x38] sm:$0xff] %v7268
        %p7277 = scmp.lt.s32.totalorder %s46, 1
        %s7278 = scalar_select %p7277, %s46, 1
        %s7279 = smul.addr %s7278, 8
        %s7280 = smul.addr %s7279, 8
        %s7281 = scalar_lea.vmem %s24, %s7280
        %s7282 = sand.u32 %s589, 1
        %s7283 = scalar_lea.sflag [#allocation10], %s7282
        %s7284 = sand.u32 %s589, 1
        %s7285 = smul.addr %s7284, 8
        %s7286 = scalar_lea.vmem [#allocation9], %s7285
        %s7287 = sand.u32 %s615, 1
        %s7288 = scalar_lea.sflag [#allocation12], %s7287
        %s7289 = sand.u32 %s615, 1
        %s7290 = smul.addr %s7289, 8
        %s7291 = scalar_lea.vmem [#allocation11], %s7290
        // Predicated region
        $region117: #{cdg_attention_forward.1} parent=115 // pred_check
          %p7292 = pneg %p573
        $region118: #{cdg_attention_forward.1} parent=115 // pred_check_branch
          %7294 = sbr.rel (%p7292) target = $region120
        $region119: #{cdg_attention_forward.1} parent=115 // pred_region
          _
        $region120: #{cdg_attention_forward.1} parent=115 // pred_fallthru
          _
        // Predicated region
        $region121: #{cdg_attention_forward.1} parent=115 // pred_check
          %p7295 = pneg %p599
        $region122: #{cdg_attention_forward.1} parent=115 // pred_check_branch
          %7297 = sbr.rel (%p7295) target = $region124
        $region123: #{cdg_attention_forward.1} parent=115 // pred_region
          %s7299 = ssub.s32 128, 128
          %7300 = vsyncadd %s7283, %s7299
          %s7301 = smul.addr %s46, 128
          %s7302 = scalar_lea.hbm %s25, %s7301
          %s7304 = sshll.u32 %s7286, 4
          %s7305 = int_to_ptr.vmem [resolvable:$true] %s7304
          %7307 = dma.vmem_to_hbm [thread:$0]  %s7305, 128, %s7302, %s7283
        $region124: #{cdg_attention_forward.1} parent=115 // pred_fallthru
          _
        // Predicated region
        $region125: #{cdg_attention_forward.1} parent=115 // pred_check
          %p7308 = pneg %p625
        $region126: #{cdg_attention_forward.1} parent=115 // pred_check_branch
          %7310 = sbr.rel (%p7308) target = $region128
        $region127: #{cdg_attention_forward.1} parent=115 // pred_region
          %s7312 = ssub.s32 128, 128
          %7313 = vsyncadd %s7288, %s7312
          %s7314 = smul.addr %s46, 128
          %s7315 = scalar_lea.hbm %s26, %s7314
          %s7317 = sshll.u32 %s7291, 4
          %s7318 = int_to_ptr.vmem [resolvable:$true] %s7317
          %7320 = dma.vmem_to_hbm [thread:$0]  %s7318, 128, %s7315, %s7288
        $region128: #{cdg_attention_forward.1} parent=115 // pred_fallthru
          _
      $region116: #{cdg_attention_forward.1} parent=5 // pred_fallthru
        _
      %p7321 = scmp.le.s32.totalorder 2, %s41
      // Predicated region
      $region129: #{cdg_attention_forward.1} parent=5 // pred_check
        %p7322 = pneg %p7321
      $region130: #{cdg_attention_forward.1} parent=5 // pred_check_branch
        %7324 = sbr.rel (%p7322) target = $region132
      $region131: #{cdg_attention_forward.1} parent=5 // pred_region
        %s7325 = ssub.s32 %s41, 2
        // Predicated region
        $region133: #{cdg_attention_forward.1} parent=131 // pred_check
          %p7326 = pneg %p579
        $region134: #{cdg_attention_forward.1} parent=131 // pred_check_branch
          %7328 = sbr.rel (%p7326) target = $region136
        $region135: #{cdg_attention_forward.1} parent=131 // pred_region
          %p7329 = scmp.lt.s32.totalorder %s47, 1
          %s7330 = scalar_select %p7329, %s47, 1
          %s7331 = smul.addr %s7330, 8
          %s7332 = smul.addr %s7331, 8
          %s7333 = scalar_lea.vmem %s24, %s7332
        $region136: #{cdg_attention_forward.1} parent=131 // pred_fallthru
          _
        // Predicated region
        $region137: #{cdg_attention_forward.1} parent=131 // pred_check
          %p7334 = pneg %p605
        $region138: #{cdg_attention_forward.1} parent=131 // pred_check_branch
          %7336 = sbr.rel (%p7334) target = $region140
        $region139: #{cdg_attention_forward.1} parent=131 // pred_region
          %s7337 = sand.u32 %s590, 1
          %s7338 = scalar_lea.sflag [#allocation10], %s7337
          %s7339 = sand.u32 %s590, 1
          %s7340 = smul.addr %s7339, 8
          %s7341 = scalar_lea.vmem [#allocation9], %s7340
          %7342 = dma.done %s7338, 128
        $region140: #{cdg_attention_forward.1} parent=131 // pred_fallthru
          _
        // Predicated region
        $region141: #{cdg_attention_forward.1} parent=131 // pred_check
          %p7343 = pneg %p631
        $region142: #{cdg_attention_forward.1} parent=131 // pred_check_branch
          %7345 = sbr.rel (%p7343) target = $region144
        $region143: #{cdg_attention_forward.1} parent=131 // pred_region
          %s7346 = sand.u32 %s616, 1
          %s7347 = scalar_lea.sflag [#allocation12], %s7346
          %s7348 = sand.u32 %s616, 1
          %s7349 = smul.addr %s7348, 8
          %s7350 = scalar_lea.vmem [#allocation11], %s7349
          %7351 = dma.done %s7347, 128
        $region144: #{cdg_attention_forward.1} parent=131 // pred_fallthru
          _
      $region132: #{cdg_attention_forward.1} parent=5 // pred_fallthru
        _
    $region6: #{cdg_attention_forward.1} parent=1 // loop_footer
      %s45 = sadd.s32 1, %s41
    $region7: #{cdg_attention_forward.1} parent=1 // loop_footer_branch
      %40 = sbr.rel target = $region3
    $region8: #{cdg_attention_forward.1} parent=1 // loop_exit
      _
    %7352 = vsyncpa [#allocation10], 1
    %s7353 = scalar_lea.sflag [#allocation10], 1
    %7354 = vsyncpa %s7353, 1
    %7355 = vsyncpa [#allocation12], 1
    %s7356 = scalar_lea.sflag [#allocation12], 1
    %7357 = vsyncpa %s7356, 1

</llo_original>
